<compile_context>
chip_gen: v7x
topology: tpu7x:2x2x1
jax: 0.10.0
libtpu: 0.0.40
codegen_flags: <defaults>
</compile_context>

<pallas_src>
import functools

import jax
import jax.numpy as jnp
from jax import lax
from jax.experimental import pallas as pl
from jax.experimental.pallas import tpu as pltpu

_BN_EPS = 1e-5


def _round_up(x, m):
    return (x + m - 1) // m * m


# ---------------------------------------------------------------------------
# Pallas kernels
# ---------------------------------------------------------------------------
def _gemm_bn_silu_kernel(x_ref, w_ref, scale_ref, bias_ref, o_ref, acc_ref):
    """One (tm, tn) tile of silu((patches @ W) * bn_scale + bn_bias)."""
    k = pl.program_id(2)

    @pl.when(k == 0)
    def _():
        acc_ref[...] = jnp.zeros_like(acc_ref)

    acc_ref[...] += jnp.dot(x_ref[...], w_ref[...],
                            preferred_element_type=jnp.float32)

    @pl.when(k == pl.num_programs(2) - 1)
    def _():
        y = acc_ref[...] * scale_ref[...] + bias_ref[...]          # folded BatchNorm
        o_ref[...] = (y * (1.0 / (1.0 + jnp.exp(-y)))).astype(o_ref.dtype)  # SiLU


def _fused_conv_gemm(patches, w_mat, scale, bias, *, max_tk=2048):
    """silu((patches @ w_mat) * scale + bias) via a tiled Pallas MXU GEMM.

    patches: (M, K) f32, w_mat: (K, Cout) f32, scale/bias: (Cout,) f32  ->  (M, Cout) f32
    """
    m, k = patches.shape
    cout = w_mat.shape[1]

    tn = 128
    n_pad = _round_up(cout, tn)
    tm = min(256, _round_up(m, 8))
    m_pad = _round_up(m, tm)
    k_pad = _round_up(k, 128)
    if k_pad <= max_tk:
        tk = k_pad
    else:
        tk = max_tk
        k_pad = _round_up(k_pad, tk)
    nk = k_pad // tk

    # bf16 operands (native MXU rate, halves streamed bytes); f32 accumulation.
    x_p = jnp.pad(patches, ((0, m_pad - m), (0, k_pad - k))).astype(jnp.bfloat16)
    w_p = jnp.pad(w_mat, ((0, k_pad - k), (0, n_pad - cout))).astype(jnp.bfloat16)
    scale_p = jnp.pad(scale.reshape(1, cout), ((0, 0), (0, n_pad - cout)))
    bias_p = jnp.pad(bias.reshape(1, cout), ((0, 0), (0, n_pad - cout)))

    out = pl.pallas_call(
        _gemm_bn_silu_kernel,
        out_shape=jax.ShapeDtypeStruct((m_pad, n_pad), jnp.float32),
        grid=(m_pad // tm, n_pad // tn, nk),
        in_specs=[
            pl.BlockSpec((tm, tk), lambda i, j, kk: (i, kk)),
            pl.BlockSpec((tk, tn), lambda i, j, kk: (kk, j)),
            pl.BlockSpec((1, tn), lambda i, j, kk: (0, j)),
            pl.BlockSpec((1, tn), lambda i, j, kk: (0, j)),
        ],
        out_specs=pl.BlockSpec((tm, tn), lambda i, j, kk: (i, j)),
        scratch_shapes=[pltpu.VMEM((tm, tn), jnp.float32)],
        compiler_params=pltpu.CompilerParams(
            dimension_semantics=("parallel", "parallel", "arbitrary")),
    )(x_p, w_p, scale_p, bias_p)
    return out[:m, :cout]


def _maxpool_kernel(x_ref, o_ref, *, ksize, oh, ow):
    x = x_ref[...]                              # (1, oh+ksize-1, ow+ksize-1, C)
    out = x[:, 0:oh, 0:ow, :]
    for dh in range(ksize):
        for dw in range(ksize):
            if dh == 0 and dw == 0:
                continue
            out = jnp.maximum(out, x[:, dh:dh + oh, dw:dw + ow, :])
    o_ref[...] = out


def _maxpool2d_pallas(x, ksize=5):
    """MaxPool2d(kernel=ksize, stride=1, padding=ksize//2) on NHWC (PyTorch semantics)."""
    n, h, w, c = x.shape
    pad = ksize // 2
    neg = jnp.finfo(x.dtype).min
    xp = jnp.pad(x, ((0, 0), (pad, pad), (pad, pad), (0, 0)), constant_values=neg)
    kern = functools.partial(_maxpool_kernel, ksize=ksize, oh=h, ow=w)
    return pl.pallas_call(
        kern,
        out_shape=jax.ShapeDtypeStruct((n, h, w, c), x.dtype),
        grid=(n,),
        in_specs=[pl.BlockSpec((1, h + 2 * pad, w + 2 * pad, c),
                               lambda b: (b, 0, 0, 0))],
        out_specs=pl.BlockSpec((1, h, w, c), lambda b: (b, 0, 0, 0)),
        compiler_params=pltpu.CompilerParams(dimension_semantics=("parallel",)),
    )(xp)


# ---------------------------------------------------------------------------
# Conv + BN + SiLU layer (Pallas path, NHWC) and pure-XLA reference (NCHW)
# ---------------------------------------------------------------------------
def _im2col(x, kh, kw, stride, pad):
    """NHWC -> (N, OH, OW, kh*kw*C) patches, last axis ordered (kh, kw, cin)."""
    n, h, w, c = x.shape
    if kh == 1 and kw == 1 and stride == 1 and pad == 0:
        return x, h, w
    if pad:
        x = jnp.pad(x, ((0, 0), (pad, pad), (pad, pad), (0, 0)))
    hp, wp = h + 2 * pad, w + 2 * pad
    oh = (hp - kh) // stride + 1
    ow = (wp - kw) // stride + 1
    cols = []
    for i in range(kh):
        for j in range(kw):
            cols.append(lax.slice(
                x, (0, i, j, 0),
                (n, i + (oh - 1) * stride + 1, j + (ow - 1) * stride + 1, c),
                (1, stride, stride, 1)))
    return jnp.concatenate(cols, axis=-1), oh, ow


def _fold_bn(p):
    scale = p['gamma'] / jnp.sqrt(p['var'] + _BN_EPS)
    return scale, p['beta'] - p['mean'] * scale


def _conv_bn_silu_pallas(x, p):
    """Fused Conv2d(bias=False) + BatchNorm2d + SiLU, NHWC activations."""
    w = p['w']                                       # (Cout, Cin, KH, KW) torch layout
    cout, cin, kh, kw = w.shape
    patches, oh, ow = _im2col(x, kh, kw, p['s'], p['p'])
    n = x.shape[0]
    m = n * oh * ow
    kdim = kh * kw * cin
    w_mat = jnp.transpose(w, (2, 3, 1, 0)).reshape(kdim, cout)   # (kh,kw,cin) major
    scale, bias = _fold_bn(p)
    y = _fused_conv_gemm(patches.reshape(m, kdim), w_mat, scale, bias)
    return y.reshape(n, oh, ow, cout)


def _conv_bn_silu_ref(x, p):
    """Pure-JAX reference (NCHW, lax.conv) with the same bf16 operand rounding."""
    y = lax.conv_general_dilated(
        x.astype(jnp.bfloat16), p['w'].astype(jnp.bfloat16),
        window_strides=(p['s'], p['s']),
        padding=((p['p'], p['p']), (p['p'], p['p'])),
        dimension_numbers=('NCHW', 'OIHW', 'NCHW'),
        preferred_element_type=jnp.float32)
    scale, bias = _fold_bn(p)
    y = y * scale[None, :, None, None] + bias[None, :, None, None]
    return y * (1.0 / (1.0 + jnp.exp(-y)))


def _maxpool2d_ref(x, ksize=5):
    pad = ksize // 2
    return lax.reduce_window(x, jnp.array(-jnp.inf, x.dtype), lax.max,
                             window_dimensions=(1, 1, ksize, ksize),
                             window_strides=(1, 1, 1, 1),
                             padding=((0, 0), (0, 0), (pad, pad), (pad, pad)))


_PALLAS_OPS = dict(conv=_conv_bn_silu_pallas, maxpool=_maxpool2d_pallas,
                   cat=lambda xs: jnp.concatenate(xs, axis=-1))      # NHWC channels
_REF_OPS = dict(conv=_conv_bn_silu_ref, maxpool=_maxpool2d_ref,
                cat=lambda xs: jnp.concatenate(xs, axis=1))          # NCHW channels


# ---------------------------------------------------------------------------
# CSPDarknet forward (stem YOLOConv -> 4x YOLOLayer -> SPP)
# ---------------------------------------------------------------------------
def _forward_cspdarknet(x, params, ops):
    conv, maxpool, cat = ops['conv'], ops['maxpool'], ops['cat']
    x = conv(x, params['stem'])                       # YOLOConv(in, bs[0], k=6, s=2, p=2)
    for layer in params['layers']:                    # YOLOLayer = YOLOConv + CSPBottleneck
        x = conv(x, layer['conv'])
        csp = layer['csp']
        m = conv(x, csp['cv1'])
        for b in csp['m']:                            # Bottleneck (c1 == c2 -> residual)
            m = m + conv(conv(m, b['cv1']), b['cv2'])
        x2 = conv(x, csp['cv2'])
        x = conv(cat([m, x2]), csp['cv3'])
    spp = params['spp']                               # SPP
    x1 = conv(x, spp['cv1'])
    y1 = maxpool(x1)
    y2 = maxpool(y1)
    y3 = maxpool(y2)
    return conv(cat([x1, y1, y2, y3]), spp['cv2'])


def cspdarknet_forward_pallas(x_nchw, params):
    x = jnp.transpose(x_nchw, (0, 2, 3, 1))           # NCHW -> NHWC (channels on lanes)
    y = _forward_cspdarknet(x, params, _PALLAS_OPS)
    return jnp.transpose(y, (0, 3, 1, 2))             # back to the module's NCHW layout


def cspdarknet_forward_reference(x_nchw, params):
    return _forward_cspdarknet(x_nchw, params, _REF_OPS)


# ---------------------------------------------------------------------------
# Deterministic parameter construction mirroring the PyTorch constructor
# ---------------------------------------------------------------------------
def _init_conv_params(key, cin, cout, k, s, p):
    kw_, kg, kb, km, kv = jax.random.split(key, 5)
    fan_in = cin * k * k
    return dict(
        w=jax.random.normal(kw_, (cout, cin, k, k), jnp.float32) * (2.0 / fan_in) ** 0.5,
        gamma=1.0 + 0.1 * jax.random.normal(kg, (cout,), jnp.float32),
        beta=0.1 * jax.random.normal(kb, (cout,), jnp.float32),
        mean=0.1 * jax.random.normal(km, (cout,), jnp.float32),
        var=(1.0 + 0.1 * jax.random.normal(kv, (cout,), jnp.float32)) ** 2,
        s=s, p=p)


def build_cspdarknet_params(key, in_channels=3, out_channels=64,
                            in_kernel=6, in_stride=2, in_padding=2,
                            blocks_sizes=(8, 16, 32, 64), kernels=(3, 3, 3, 3),
                            strides=(2, 2, 2, 2), paddings=(1, 1, 1, 1),
                            bottlenecks=(1, 1, 1, 1)):
    n_keys = 8 * (len(blocks_sizes) + 2) + 8 * sum(bottlenecks)
    keys = iter(jax.random.split(key, n_keys))
    params = dict(stem=_init_conv_params(next(keys), in_channels, blocks_sizes[0],
                                         in_kernel, in_stride, in_padding))
    c2_sizes = list(blocks_sizes[1:]) + [out_channels]
    layers = []
    for c1, c2, k, s, p, bn in zip(blocks_sizes, c2_sizes, kernels,
                                   strides, paddings, bottlenecks):
        downsampling = 2 if c1 != c2 else 1
        h = int(c2 * (1.0 / downsampling))
        csp = dict(cv1=_init_conv_params(next(keys), c2, h, 1, 1, 0),
                   cv2=_init_conv_params(next(keys), c2, h, 1, 1, 0),
                   cv3=_init_conv_params(next(keys), 2 * h, c2, 1, 1, 0),
                   m=[dict(cv1=_init_conv_params(next(keys), h, h, 1, 1, 0),
                           cv2=_init_conv_params(next(keys), h, h, 3, 1, 1))
                      for _ in range(bn)])
        layers.append(dict(conv=_init_conv_params(next(keys), c1, c2, k, s, p),
                           csp=csp))
    params['layers'] = layers
    h = out_channels // 2
    params['spp'] = dict(cv1=_init_conv_params(next(keys), out_channels, h, 1, 1, 0),
                         cv2=_init_conv_params(next(keys), 4 * h, out_channels, 1, 1, 0))
    return params


if __name__ == "__main__":
    key = jax.random.PRNGKey(0)
    k_params, k_x = jax.random.split(key)

    N, CIN, H, W = 2, 3, 64, 64
    OUT = 64
    # Small CSPDarknet instantiation: same 4-stage structure as the default config,
    # with narrow channels and one bottleneck per stage to keep the smoke test small.
    params = build_cspdarknet_params(k_params, in_channels=CIN, out_channels=OUT,
                                     blocks_sizes=(8, 16, 32, 64),
                                     bottlenecks=(1, 1, 1, 1))
    x = jax.random.normal(k_x, (N, CIN, H, W), jnp.float32)

    fwd = jax.jit(lambda inp: cspdarknet_forward_pallas(inp, params))
    out = jax.block_until_ready(fwd(x))

    ref_fwd = jax.jit(lambda inp: cspdarknet_forward_reference(inp, params))
    ref = jax.block_until_ready(ref_fwd(x))

    assert out.shape == (N, OUT, H // 32, W // 32), out.shape
    max_err = float(jnp.max(jnp.abs(out - ref)))
    assert jnp.allclose(out, ref, atol=1e-2, rtol=1e-2), max_err
    print("KERNEL_OK")
</pallas_src>

<mosaic_0001>
module attributes {stable_mosaic.version = 11 : i64} {
  func.func @_gemm_bn_silu_kernel(%arg0: i32, %arg1: i32, %arg2: i32, %arg3: memref<256x128xbf16, #tpu.memory_space<vmem>>, %arg4: memref<128x128xbf16, #tpu.memory_space<vmem>>, %arg5: memref<1x128xf32, #tpu.memory_space<vmem>>, %arg6: memref<1x128xf32, #tpu.memory_space<vmem>>, %arg7: memref<256x128xf32, #tpu.memory_space<vmem>>, %arg8: memref<256x128xf32, #tpu.memory_space<vmem>>) attributes {dimension_semantics = [#tpu.dimension_semantics<parallel>, #tpu.dimension_semantics<parallel>, #tpu.dimension_semantics<arbitrary>], iteration_bounds = array<i64: 8, 1, 1>, scalar_prefetch = 0 : i64, scratch_operands = 1 : i64, tpu.core_type = #tpu.core_type<tc>, window_params = [{transform_indices = @transform_0, window_bounds = array<i64: 256, 128>}, {transform_indices = @transform_1, window_bounds = array<i64: 128, 128>}, {transform_indices = @transform_2, window_bounds = array<i64: 1, 128>}, {transform_indices = @transform_3, window_bounds = array<i64: 1, 128>}, {transform_indices = @transform_4, window_bounds = array<i64: 256, 128>}]} {
    %c0_i32 = arith.constant 0 : i32
    %0 = arith.cmpi eq, %arg2, %c0_i32 : i32
    %1 = arith.extui %0 : i1 to i32
    %c0_i32_0 = arith.constant 0 : i32
    %2 = arith.cmpi ne, %1, %c0_i32_0 : i32
    scf.if %2 {
      %cst_10 = arith.constant 0.000000e+00 : f32
      %12 = vector.broadcast %cst_10 : f32 to vector<256x128xf32>
      %c0_11 = arith.constant 0 : index
      %c0_12 = arith.constant 0 : index
      %13 = vector.load %arg8[%c0_11, %c0_12] : memref<256x128xf32, #tpu.memory_space<vmem>>, vector<256x128xf32>
      tpu.vector_store %arg8[%c0_11, %c0_12], %12 {strides = array<i32>} : memref<256x128xf32, #tpu.memory_space<vmem>>, vector<256x128xf32>,
    } else {
    }
    %c0 = arith.constant 0 : index
    %c0_1 = arith.constant 0 : index
    %3 = vector.load %arg8[%c0, %c0_1] : memref<256x128xf32, #tpu.memory_space<vmem>>, vector<256x128xf32>
    %c0_2 = arith.constant 0 : index
    %c0_3 = arith.constant 0 : index
    %4 = vector.load %arg3[%c0_2, %c0_3] : memref<256x128xbf16, #tpu.memory_space<vmem>>, vector<256x128xbf16>
    %c0_4 = arith.constant 0 : index
    %c0_5 = arith.constant 0 : index
    %5 = vector.load %arg4[%c0_4, %c0_5] : memref<128x128xbf16, #tpu.memory_space<vmem>>, vector<128x128xbf16>
    %cst = arith.constant dense<0.000000e+00> : vector<256x128xf32>
    %6 = tpu.matmul %4, %5, %cst {dimension_numbers = #tpu.dot_dimension_numbers<[1], [0], [0], [1], [0, 0, 1, 1], [], []>} : vector<256x128xbf16>, vector<128x128xbf16>, vector<256x128xf32> -> vector<256x128xf32>
    %7 = arith.addf %3, %6 : vector<256x128xf32>
    %c0_6 = arith.constant 0 : index
    %c0_7 = arith.constant 0 : index
    %8 = vector.load %arg8[%c0_6, %c0_7] : memref<256x128xf32, #tpu.memory_space<vmem>>, vector<256x128xf32>
    tpu.vector_store %arg8[%c0_6, %c0_7], %7 {strides = array<i32>} : memref<256x128xf32, #tpu.memory_space<vmem>>, vector<256x128xf32>,
    %c0_i32_8 = arith.constant 0 : i32
    %9 = arith.cmpi eq, %arg2, %c0_i32_8 : i32
    %10 = arith.extui %9 : i1 to i32
    %c0_i32_9 = arith.constant 0 : i32
    %11 = arith.cmpi ne, %10, %c0_i32_9 : i32
    scf.if %11 {
      %c0_10 = arith.constant 0 : index
      %c0_11 = arith.constant 0 : index
      %12 = vector.load %arg8[%c0_10, %c0_11] : memref<256x128xf32, #tpu.memory_space<vmem>>, vector<256x128xf32>
      %c0_12 = arith.constant 0 : index
      %c0_13 = arith.constant 0 : index
      %13 = vector.load %arg5[%c0_12, %c0_13] : memref<1x128xf32, #tpu.memory_space<vmem>>, vector<1x128xf32>
      %14 = vector.broadcast %13 : vector<1x128xf32> to vector<256x128xf32>
      %15 = arith.mulf %12, %14 : vector<256x128xf32>
      %c0_14 = arith.constant 0 : index
      %c0_15 = arith.constant 0 : index
      %16 = vector.load %arg6[%c0_14, %c0_15] : memref<1x128xf32, #tpu.memory_space<vmem>>, vector<1x128xf32>
      %17 = vector.broadcast %16 : vector<1x128xf32> to vector<256x128xf32>
      %18 = arith.addf %15, %17 : vector<256x128xf32>
      %cst_16 = arith.constant 0.000000e+00 : f32
      %19 = vector.broadcast %cst_16 : f32 to vector<256x128xf32>
      %20 = arith.subf %19, %18 : vector<256x128xf32>
      %21 = math.exp %20 : vector<256x128xf32>
      %cst_17 = arith.constant 1.000000e+00 : f32
      %22 = vector.broadcast %cst_17 : f32 to vector<256x128xf32>
      %23 = arith.addf %22, %21 : vector<256x128xf32>
      %cst_18 = arith.constant 1.000000e+00 : f32
      %24 = vector.broadcast %cst_18 : f32 to vector<256x128xf32>
      %25 = arith.divf %24, %23 : vector<256x128xf32>
      %26 = arith.mulf %18, %25 : vector<256x128xf32>
      %c0_19 = arith.constant 0 : index
      %c0_20 = arith.constant 0 : index
      %27 = vector.load %arg7[%c0_19, %c0_20] : memref<256x128xf32, #tpu.memory_space<vmem>>, vector<256x128xf32>
      tpu.vector_store %arg7[%c0_19, %c0_20], %26 {strides = array<i32>} : memref<256x128xf32, #tpu.memory_space<vmem>>, vector<256x128xf32>,
    } else {
    }
    return
  }
  func.func @transform_0(%arg0: i32, %arg1: i32, %arg2: i32) -> (i32, i32) {
    %c0_i32 = arith.constant 0 : i32
    return %arg0, %arg2 : i32, i32
  }
  func.func @transform_1(%arg0: i32, %arg1: i32, %arg2: i32) -> (i32, i32) {
    %c0_i32 = arith.constant 0 : i32
    return %arg2, %arg1 : i32, i32
  }
  func.func @transform_2(%arg0: i32, %arg1: i32, %arg2: i32) -> (i32, i32) {
    %c0_i32 = arith.constant 0 : i32
    %c0_i32_0 = arith.constant 0 : i32
    return %c0_i32, %arg1 : i32, i32
  }
  func.func @transform_3(%arg0: i32, %arg1: i32, %arg2: i32) -> (i32, i32) {
    %c0_i32 = arith.constant 0 : i32
    %c0_i32_0 = arith.constant 0 : i32
    return %c0_i32, %arg1 : i32, i32
  }
  func.func @transform_4(%arg0: i32, %arg1: i32, %arg2: i32) -> (i32, i32) {
    %c0_i32 = arith.constant 0 : i32
    return %arg0, %arg1 : i32, i32
  }
}

module attributes {stable_mosaic.version = 11 : i64} {
  func.func @_gemm_bn_silu_kernel(%arg0: i32, %arg1: i32, %arg2: i32, %arg3: memref<256x128xbf16, #tpu.memory_space<vmem>>, %arg4: memref<128x128xbf16, #tpu.memory_space<vmem>>, %arg5: memref<1x128xf32, #tpu.memory_space<vmem>>, %arg6: memref<1x128xf32, #tpu.memory_space<vmem>>, %arg7: memref<256x128xf32, #tpu.memory_space<vmem>>, %arg8: memref<256x128xf32, #tpu.memory_space<vmem>>) attributes {dimension_semantics = [#tpu.dimension_semantics<parallel>, #tpu.dimension_semantics<parallel>, #tpu.dimension_semantics<arbitrary>], iteration_bounds = array<i64: 2, 1, 1>, scalar_prefetch = 0 : i64, scratch_operands = 1 : i64, tpu.core_type = #tpu.core_type<tc>, window_params = [{transform_indices = @transform_0, window_bounds = array<i64: 256, 128>}, {transform_indices = @transform_1, window_bounds = array<i64: 128, 128>}, {transform_indices = @transform_2, window_bounds = array<i64: 1, 128>}, {transform_indices = @transform_3, window_bounds = array<i64: 1, 128>}, {transform_indices = @transform_4, window_bounds = array<i64: 256, 128>}]} {
    %c0_i32 = arith.constant 0 : i32
    %0 = arith.cmpi eq, %arg2, %c0_i32 : i32
    %1 = arith.extui %0 : i1 to i32
    %c0_i32_0 = arith.constant 0 : i32
    %2 = arith.cmpi ne, %1, %c0_i32_0 : i32
    scf.if %2 {
      %cst_10 = arith.constant 0.000000e+00 : f32
      %12 = vector.broadcast %cst_10 : f32 to vector<256x128xf32>
      %c0_11 = arith.constant 0 : index
      %c0_12 = arith.constant 0 : index
      %13 = vector.load %arg8[%c0_11, %c0_12] : memref<256x128xf32, #tpu.memory_space<vmem>>, vector<256x128xf32>
      tpu.vector_store %arg8[%c0_11, %c0_12], %12 {strides = array<i32>} : memref<256x128xf32, #tpu.memory_space<vmem>>, vector<256x128xf32>,
    } else {
    }
    %c0 = arith.constant 0 : index
    %c0_1 = arith.constant 0 : index
    %3 = vector.load %arg8[%c0, %c0_1] : memref<256x128xf32, #tpu.memory_space<vmem>>, vector<256x128xf32>
    %c0_2 = arith.constant 0 : index
    %c0_3 = arith.constant 0 : index
    %4 = vector.load %arg3[%c0_2, %c0_3] : memref<256x128xbf16, #tpu.memory_space<vmem>>, vector<256x128xbf16>
    %c0_4 = arith.constant 0 : index
    %c0_5 = arith.constant 0 : index
    %5 = vector.load %arg4[%c0_4, %c0_5] : memref<128x128xbf16, #tpu.memory_space<vmem>>, vector<128x128xbf16>
    %cst = arith.constant dense<0.000000e+00> : vector<256x128xf32>
    %6 = tpu.matmul %4, %5, %cst {dimension_numbers = #tpu.dot_dimension_numbers<[1], [0], [0], [1], [0, 0, 1, 1], [], []>} : vector<256x128xbf16>, vector<128x128xbf16>, vector<256x128xf32> -> vector<256x128xf32>
    %7 = arith.addf %3, %6 : vector<256x128xf32>
    %c0_6 = arith.constant 0 : index
    %c0_7 = arith.constant 0 : index
    %8 = vector.load %arg8[%c0_6, %c0_7] : memref<256x128xf32, #tpu.memory_space<vmem>>, vector<256x128xf32>
    tpu.vector_store %arg8[%c0_6, %c0_7], %7 {strides = array<i32>} : memref<256x128xf32, #tpu.memory_space<vmem>>, vector<256x128xf32>,
    %c0_i32_8 = arith.constant 0 : i32
    %9 = arith.cmpi eq, %arg2, %c0_i32_8 : i32
    %10 = arith.extui %9 : i1 to i32
    %c0_i32_9 = arith.constant 0 : i32
    %11 = arith.cmpi ne, %10, %c0_i32_9 : i32
    scf.if %11 {
      %c0_10 = arith.constant 0 : index
      %c0_11 = arith.constant 0 : index
      %12 = vector.load %arg8[%c0_10, %c0_11] : memref<256x128xf32, #tpu.memory_space<vmem>>, vector<256x128xf32>
      %c0_12 = arith.constant 0 : index
      %c0_13 = arith.constant 0 : index
      %13 = vector.load %arg5[%c0_12, %c0_13] : memref<1x128xf32, #tpu.memory_space<vmem>>, vector<1x128xf32>
      %14 = vector.broadcast %13 : vector<1x128xf32> to vector<256x128xf32>
      %15 = arith.mulf %12, %14 : vector<256x128xf32>
      %c0_14 = arith.constant 0 : index
      %c0_15 = arith.constant 0 : index
      %16 = vector.load %arg6[%c0_14, %c0_15] : memref<1x128xf32, #tpu.memory_space<vmem>>, vector<1x128xf32>
      %17 = vector.broadcast %16 : vector<1x128xf32> to vector<256x128xf32>
      %18 = arith.addf %15, %17 : vector<256x128xf32>
      %cst_16 = arith.constant 0.000000e+00 : f32
      %19 = vector.broadcast %cst_16 : f32 to vector<256x128xf32>
      %20 = arith.subf %19, %18 : vector<256x128xf32>
      %21 = math.exp %20 : vector<256x128xf32>
      %cst_17 = arith.constant 1.000000e+00 : f32
      %22 = vector.broadcast %cst_17 : f32 to vector<256x128xf32>
      %23 = arith.addf %22, %21 : vector<256x128xf32>
      %cst_18 = arith.constant 1.000000e+00 : f32
      %24 = vector.broadcast %cst_18 : f32 to vector<256x128xf32>
      %25 = arith.divf %24, %23 : vector<256x128xf32>
      %26 = arith.mulf %18, %25 : vector<256x128xf32>
      %c0_19 = arith.constant 0 : index
      %c0_20 = arith.constant 0 : index
      %27 = vector.load %arg7[%c0_19, %c0_20] : memref<256x128xf32, #tpu.memory_space<vmem>>, vector<256x128xf32>
      tpu.vector_store %arg7[%c0_19, %c0_20], %26 {strides = array<i32>} : memref<256x128xf32, #tpu.memory_space<vmem>>, vector<256x128xf32>,
    } else {
    }
    return
  }
  func.func @transform_0(%arg0: i32, %arg1: i32, %arg2: i32) -> (i32, i32) {
    %c0_i32 = arith.constant 0 : i32
    return %arg0, %arg2 : i32, i32
  }
  func.func @transform_1(%arg0: i32, %arg1: i32, %arg2: i32) -> (i32, i32) {
    %c0_i32 = arith.constant 0 : i32
    return %arg2, %arg1 : i32, i32
  }
  func.func @transform_2(%arg0: i32, %arg1: i32, %arg2: i32) -> (i32, i32) {
    %c0_i32 = arith.constant 0 : i32
    %c0_i32_0 = arith.constant 0 : i32
    return %c0_i32, %arg1 : i32, i32
  }
  func.func @transform_3(%arg0: i32, %arg1: i32, %arg2: i32) -> (i32, i32) {
    %c0_i32 = arith.constant 0 : i32
    %c0_i32_0 = arith.constant 0 : i32
    return %c0_i32, %arg1 : i32, i32
  }
  func.func @transform_4(%arg0: i32, %arg1: i32, %arg2: i32) -> (i32, i32) {
    %c0_i32 = arith.constant 0 : i32
    return %arg0, %arg1 : i32, i32
  }
}

module attributes {stable_mosaic.version = 11 : i64} {
  func.func @_gemm_bn_silu_kernel(%arg0: i32, %arg1: i32, %arg2: i32, %arg3: memref<128x256xbf16, #tpu.memory_space<vmem>>, %arg4: memref<256x128xbf16, #tpu.memory_space<vmem>>, %arg5: memref<1x128xf32, #tpu.memory_space<vmem>>, %arg6: memref<1x128xf32, #tpu.memory_space<vmem>>, %arg7: memref<128x128xf32, #tpu.memory_space<vmem>>, %arg8: memref<128x128xf32, #tpu.memory_space<vmem>>) attributes {dimension_semantics = [#tpu.dimension_semantics<parallel>, #tpu.dimension_semantics<parallel>, #tpu.dimension_semantics<arbitrary>], iteration_bounds = array<i64: 1, 1, 1>, scalar_prefetch = 0 : i64, scratch_operands = 1 : i64, tpu.core_type = #tpu.core_type<tc>, window_params = [{transform_indices = @transform_0, window_bounds = array<i64: 128, 256>}, {transform_indices = @transform_1, window_bounds = array<i64: 256, 128>}, {transform_indices = @transform_2, window_bounds = array<i64: 1, 128>}, {transform_indices = @transform_3, window_bounds = array<i64: 1, 128>}, {transform_indices = @transform_4, window_bounds = array<i64: 128, 128>}]} {
    %c0_i32 = arith.constant 0 : i32
    %0 = arith.cmpi eq, %arg2, %c0_i32 : i32
    %1 = arith.extui %0 : i1 to i32
    %c0_i32_0 = arith.constant 0 : i32
    %2 = arith.cmpi ne, %1, %c0_i32_0 : i32
    scf.if %2 {
      %cst_10 = arith.constant 0.000000e+00 : f32
      %12 = vector.broadcast %cst_10 : f32 to vector<128x128xf32>
      %c0_11 = arith.constant 0 : index
      %c0_12 = arith.constant 0 : index
      %13 = vector.load %arg8[%c0_11, %c0_12] : memref<128x128xf32, #tpu.memory_space<vmem>>, vector<128x128xf32>
      tpu.vector_store %arg8[%c0_11, %c0_12], %12 {strides = array<i32>} : memref<128x128xf32, #tpu.memory_space<vmem>>, vector<128x128xf32>,
    } else {
    }
    %c0 = arith.constant 0 : index
    %c0_1 = arith.constant 0 : index
    %3 = vector.load %arg8[%c0, %c0_1] : memref<128x128xf32, #tpu.memory_space<vmem>>, vector<128x128xf32>
    %c0_2 = arith.constant 0 : index
    %c0_3 = arith.constant 0 : index
    %4 = vector.load %arg3[%c0_2, %c0_3] : memref<128x256xbf16, #tpu.memory_space<vmem>>, vector<128x256xbf16>
    %c0_4 = arith.constant 0 : index
    %c0_5 = arith.constant 0 : index
    %5 = vector.load %arg4[%c0_4, %c0_5] : memref<256x128xbf16, #tpu.memory_space<vmem>>, vector<256x128xbf16>
    %cst = arith.constant dense<0.000000e+00> : vector<128x128xf32>
    %6 = tpu.matmul %4, %5, %cst {dimension_numbers = #tpu.dot_dimension_numbers<[1], [0], [0], [1], [0, 0, 1, 1], [], []>} : vector<128x256xbf16>, vector<256x128xbf16>, vector<128x128xf32> -> vector<128x128xf32>
    %7 = arith.addf %3, %6 : vector<128x128xf32>
    %c0_6 = arith.constant 0 : index
    %c0_7 = arith.constant 0 : index
    %8 = vector.load %arg8[%c0_6, %c0_7] : memref<128x128xf32, #tpu.memory_space<vmem>>, vector<128x128xf32>
    tpu.vector_store %arg8[%c0_6, %c0_7], %7 {strides = array<i32>} : memref<128x128xf32, #tpu.memory_space<vmem>>, vector<128x128xf32>,
    %c0_i32_8 = arith.constant 0 : i32
    %9 = arith.cmpi eq, %arg2, %c0_i32_8 : i32
    %10 = arith.extui %9 : i1 to i32
    %c0_i32_9 = arith.constant 0 : i32
    %11 = arith.cmpi ne, %10, %c0_i32_9 : i32
    scf.if %11 {
      %c0_10 = arith.constant 0 : index
      %c0_11 = arith.constant 0 : index
      %12 = vector.load %arg8[%c0_10, %c0_11] : memref<128x128xf32, #tpu.memory_space<vmem>>, vector<128x128xf32>
      %c0_12 = arith.constant 0 : index
      %c0_13 = arith.constant 0 : index
      %13 = vector.load %arg5[%c0_12, %c0_13] : memref<1x128xf32, #tpu.memory_space<vmem>>, vector<1x128xf32>
      %14 = vector.broadcast %13 : vector<1x128xf32> to vector<128x128xf32>
      %15 = arith.mulf %12, %14 : vector<128x128xf32>
      %c0_14 = arith.constant 0 : index
      %c0_15 = arith.constant 0 : index
      %16 = vector.load %arg6[%c0_14, %c0_15] : memref<1x128xf32, #tpu.memory_space<vmem>>, vector<1x128xf32>
      %17 = vector.broadcast %16 : vector<1x128xf32> to vector<128x128xf32>
      %18 = arith.addf %15, %17 : vector<128x128xf32>
      %cst_16 = arith.constant 0.000000e+00 : f32
      %19 = vector.broadcast %cst_16 : f32 to vector<128x128xf32>
      %20 = arith.subf %19, %18 : vector<128x128xf32>
      %21 = math.exp %20 : vector<128x128xf32>
      %cst_17 = arith.constant 1.000000e+00 : f32
      %22 = vector.broadcast %cst_17 : f32 to vector<128x128xf32>
      %23 = arith.addf %22, %21 : vector<128x128xf32>
      %cst_18 = arith.constant 1.000000e+00 : f32
      %24 = vector.broadcast %cst_18 : f32 to vector<128x128xf32>
      %25 = arith.divf %24, %23 : vector<128x128xf32>
      %26 = arith.mulf %18, %25 : vector<128x128xf32>
      %c0_19 = arith.constant 0 : index
      %c0_20 = arith.constant 0 : index
      %27 = vector.load %arg7[%c0_19, %c0_20] : memref<128x128xf32, #tpu.memory_space<vmem>>, vector<128x128xf32>
      tpu.vector_store %arg7[%c0_19, %c0_20], %26 {strides = array<i32>} : memref<128x128xf32, #tpu.memory_space<vmem>>, vector<128x128xf32>,
    } else {
    }
    return
  }
  func.func @transform_0(%arg0: i32, %arg1: i32, %arg2: i32) -> (i32, i32) {
    %c0_i32 = arith.constant 0 : i32
    return %arg0, %arg2 : i32, i32
  }
  func.func @transform_1(%arg0: i32, %arg1: i32, %arg2: i32) -> (i32, i32) {
    %c0_i32 = arith.constant 0 : i32
    return %arg2, %arg1 : i32, i32
  }
  func.func @transform_2(%arg0: i32, %arg1: i32, %arg2: i32) -> (i32, i32) {
    %c0_i32 = arith.constant 0 : i32
    %c0_i32_0 = arith.constant 0 : i32
    return %c0_i32, %arg1 : i32, i32
  }
  func.func @transform_3(%arg0: i32, %arg1: i32, %arg2: i32) -> (i32, i32) {
    %c0_i32 = arith.constant 0 : i32
    %c0_i32_0 = arith.constant 0 : i32
    return %c0_i32, %arg1 : i32, i32
  }
  func.func @transform_4(%arg0: i32, %arg1: i32, %arg2: i32) -> (i32, i32) {
    %c0_i32 = arith.constant 0 : i32
    return %arg0, %arg1 : i32, i32
  }
}

module attributes {stable_mosaic.version = 11 : i64} {
  func.func @_gemm_bn_silu_kernel(%arg0: i32, %arg1: i32, %arg2: i32, %arg3: memref<128x128xbf16, #tpu.memory_space<vmem>>, %arg4: memref<128x128xbf16, #tpu.memory_space<vmem>>, %arg5: memref<1x128xf32, #tpu.memory_space<vmem>>, %arg6: memref<1x128xf32, #tpu.memory_space<vmem>>, %arg7: memref<128x128xf32, #tpu.memory_space<vmem>>, %arg8: memref<128x128xf32, #tpu.memory_space<vmem>>) attributes {dimension_semantics = [#tpu.dimension_semantics<parallel>, #tpu.dimension_semantics<parallel>, #tpu.dimension_semantics<arbitrary>], iteration_bounds = array<i64: 1, 1, 1>, scalar_prefetch = 0 : i64, scratch_operands = 1 : i64, tpu.core_type = #tpu.core_type<tc>, window_params = [{transform_indices = @transform_0, window_bounds = array<i64: 128, 128>}, {transform_indices = @transform_1, window_bounds = array<i64: 128, 128>}, {transform_indices = @transform_2, window_bounds = array<i64: 1, 128>}, {transform_indices = @transform_3, window_bounds = array<i64: 1, 128>}, {transform_indices = @transform_4, window_bounds = array<i64: 128, 128>}]} {
    %c0_i32 = arith.constant 0 : i32
    %0 = arith.cmpi eq, %arg2, %c0_i32 : i32
    %1 = arith.extui %0 : i1 to i32
    %c0_i32_0 = arith.constant 0 : i32
    %2 = arith.cmpi ne, %1, %c0_i32_0 : i32
    scf.if %2 {
      %cst_10 = arith.constant 0.000000e+00 : f32
      %12 = vector.broadcast %cst_10 : f32 to vector<128x128xf32>
      %c0_11 = arith.constant 0 : index
      %c0_12 = arith.constant 0 : index
      %13 = vector.load %arg8[%c0_11, %c0_12] : memref<128x128xf32, #tpu.memory_space<vmem>>, vector<128x128xf32>
      tpu.vector_store %arg8[%c0_11, %c0_12], %12 {strides = array<i32>} : memref<128x128xf32, #tpu.memory_space<vmem>>, vector<128x128xf32>,
    } else {
    }
    %c0 = arith.constant 0 : index
    %c0_1 = arith.constant 0 : index
    %3 = vector.load %arg8[%c0, %c0_1] : memref<128x128xf32, #tpu.memory_space<vmem>>, vector<128x128xf32>
    %c0_2 = arith.constant 0 : index
    %c0_3 = arith.constant 0 : index
    %4 = vector.load %arg3[%c0_2, %c0_3] : memref<128x128xbf16, #tpu.memory_space<vmem>>, vector<128x128xbf16>
    %c0_4 = arith.constant 0 : index
    %c0_5 = arith.constant 0 : index
    %5 = vector.load %arg4[%c0_4, %c0_5] : memref<128x128xbf16, #tpu.memory_space<vmem>>, vector<128x128xbf16>
    %cst = arith.constant dense<0.000000e+00> : vector<128x128xf32>
    %6 = tpu.matmul %4, %5, %cst {dimension_numbers = #tpu.dot_dimension_numbers<[1], [0], [0], [1], [0, 0, 1, 1], [], []>} : vector<128x128xbf16>, vector<128x128xbf16>, vector<128x128xf32> -> vector<128x128xf32>
    %7 = arith.addf %3, %6 : vector<128x128xf32>
    %c0_6 = arith.constant 0 : index
    %c0_7 = arith.constant 0 : index
    %8 = vector.load %arg8[%c0_6, %c0_7] : memref<128x128xf32, #tpu.memory_space<vmem>>, vector<128x128xf32>
    tpu.vector_store %arg8[%c0_6, %c0_7], %7 {strides = array<i32>} : memref<128x128xf32, #tpu.memory_space<vmem>>, vector<128x128xf32>,
    %c0_i32_8 = arith.constant 0 : i32
    %9 = arith.cmpi eq, %arg2, %c0_i32_8 : i32
    %10 = arith.extui %9 : i1 to i32
    %c0_i32_9 = arith.constant 0 : i32
    %11 = arith.cmpi ne, %10, %c0_i32_9 : i32
    scf.if %11 {
      %c0_10 = arith.constant 0 : index
      %c0_11 = arith.constant 0 : index
      %12 = vector.load %arg8[%c0_10, %c0_11] : memref<128x128xf32, #tpu.memory_space<vmem>>, vector<128x128xf32>
      %c0_12 = arith.constant 0 : index
      %c0_13 = arith.constant 0 : index
      %13 = vector.load %arg5[%c0_12, %c0_13] : memref<1x128xf32, #tpu.memory_space<vmem>>, vector<1x128xf32>
      %14 = vector.broadcast %13 : vector<1x128xf32> to vector<128x128xf32>
      %15 = arith.mulf %12, %14 : vector<128x128xf32>
      %c0_14 = arith.constant 0 : index
      %c0_15 = arith.constant 0 : index
      %16 = vector.load %arg6[%c0_14, %c0_15] : memref<1x128xf32, #tpu.memory_space<vmem>>, vector<1x128xf32>
      %17 = vector.broadcast %16 : vector<1x128xf32> to vector<128x128xf32>
      %18 = arith.addf %15, %17 : vector<128x128xf32>
      %cst_16 = arith.constant 0.000000e+00 : f32
      %19 = vector.broadcast %cst_16 : f32 to vector<128x128xf32>
      %20 = arith.subf %19, %18 : vector<128x128xf32>
      %21 = math.exp %20 : vector<128x128xf32>
      %cst_17 = arith.constant 1.000000e+00 : f32
      %22 = vector.broadcast %cst_17 : f32 to vector<128x128xf32>
      %23 = arith.addf %22, %21 : vector<128x128xf32>
      %cst_18 = arith.constant 1.000000e+00 : f32
      %24 = vector.broadcast %cst_18 : f32 to vector<128x128xf32>
      %25 = arith.divf %24, %23 : vector<128x128xf32>
      %26 = arith.mulf %18, %25 : vector<128x128xf32>
      %c0_19 = arith.constant 0 : index
      %c0_20 = arith.constant 0 : index
      %27 = vector.load %arg7[%c0_19, %c0_20] : memref<128x128xf32, #tpu.memory_space<vmem>>, vector<128x128xf32>
      tpu.vector_store %arg7[%c0_19, %c0_20], %26 {strides = array<i32>} : memref<128x128xf32, #tpu.memory_space<vmem>>, vector<128x128xf32>,
    } else {
    }
    return
  }
  func.func @transform_0(%arg0: i32, %arg1: i32, %arg2: i32) -> (i32, i32) {
    %c0_i32 = arith.constant 0 : i32
    return %arg0, %arg2 : i32, i32
  }
  func.func @transform_1(%arg0: i32, %arg1: i32, %arg2: i32) -> (i32, i32) {
    %c0_i32 = arith.constant 0 : i32
    return %arg2, %arg1 : i32, i32
  }
  func.func @transform_2(%arg0: i32, %arg1: i32, %arg2: i32) -> (i32, i32) {
    %c0_i32 = arith.constant 0 : i32
    %c0_i32_0 = arith.constant 0 : i32
    return %c0_i32, %arg1 : i32, i32
  }
  func.func @transform_3(%arg0: i32, %arg1: i32, %arg2: i32) -> (i32, i32) {
    %c0_i32 = arith.constant 0 : i32
    %c0_i32_0 = arith.constant 0 : i32
    return %c0_i32, %arg1 : i32, i32
  }
  func.func @transform_4(%arg0: i32, %arg1: i32, %arg2: i32) -> (i32, i32) {
    %c0_i32 = arith.constant 0 : i32
    return %arg0, %arg1 : i32, i32
  }
}

module attributes {stable_mosaic.version = 11 : i64} {
  func.func @_gemm_bn_silu_kernel(%arg0: i32, %arg1: i32, %arg2: i32, %arg3: memref<128x128xbf16, #tpu.memory_space<vmem>>, %arg4: memref<128x128xbf16, #tpu.memory_space<vmem>>, %arg5: memref<1x128xf32, #tpu.memory_space<vmem>>, %arg6: memref<1x128xf32, #tpu.memory_space<vmem>>, %arg7: memref<128x128xf32, #tpu.memory_space<vmem>>, %arg8: memref<128x128xf32, #tpu.memory_space<vmem>>) attributes {dimension_semantics = [#tpu.dimension_semantics<parallel>, #tpu.dimension_semantics<parallel>, #tpu.dimension_semantics<arbitrary>], iteration_bounds = array<i64: 1, 1, 1>, scalar_prefetch = 0 : i64, scratch_operands = 1 : i64, tpu.core_type = #tpu.core_type<tc>, window_params = [{transform_indices = @transform_0, window_bounds = array<i64: 128, 128>}, {transform_indices = @transform_1, window_bounds = array<i64: 128, 128>}, {transform_indices = @transform_2, window_bounds = array<i64: 1, 128>}, {transform_indices = @transform_3, window_bounds = array<i64: 1, 128>}, {transform_indices = @transform_4, window_bounds = array<i64: 128, 128>}]} {
    %c0_i32 = arith.constant 0 : i32
    %0 = arith.cmpi eq, %arg2, %c0_i32 : i32
    %1 = arith.extui %0 : i1 to i32
    %c0_i32_0 = arith.constant 0 : i32
    %2 = arith.cmpi ne, %1, %c0_i32_0 : i32
    scf.if %2 {
      %cst_10 = arith.constant 0.000000e+00 : f32
      %12 = vector.broadcast %cst_10 : f32 to vector<128x128xf32>
      %c0_11 = arith.constant 0 : index
      %c0_12 = arith.constant 0 : index
      %13 = vector.load %arg8[%c0_11, %c0_12] : memref<128x128xf32, #tpu.memory_space<vmem>>, vector<128x128xf32>
      tpu.vector_store %arg8[%c0_11, %c0_12], %12 {strides = array<i32>} : memref<128x128xf32, #tpu.memory_space<vmem>>, vector<128x128xf32>,
    } else {
    }
    %c0 = arith.constant 0 : index
    %c0_1 = arith.constant 0 : index
    %3 = vector.load %arg8[%c0, %c0_1] : memref<128x128xf32, #tpu.memory_space<vmem>>, vector<128x128xf32>
    %c0_2 = arith.constant 0 : index
    %c0_3 = arith.constant 0 : index
    %4 = vector.load %arg3[%c0_2, %c0_3] : memref<128x128xbf16, #tpu.memory_space<vmem>>, vector<128x128xbf16>
    %c0_4 = arith.constant 0 : index
    %c0_5 = arith.constant 0 : index
    %5 = vector.load %arg4[%c0_4, %c0_5] : memref<128x128xbf16, #tpu.memory_space<vmem>>, vector<128x128xbf16>
    %cst = arith.constant dense<0.000000e+00> : vector<128x128xf32>
    %6 = tpu.matmul %4, %5, %cst {dimension_numbers = #tpu.dot_dimension_numbers<[1], [0], [0], [1], [0, 0, 1, 1], [], []>} : vector<128x128xbf16>, vector<128x128xbf16>, vector<128x128xf32> -> vector<128x128xf32>
    %7 = arith.addf %3, %6 : vector<128x128xf32>
    %c0_6 = arith.constant 0 : index
    %c0_7 = arith.constant 0 : index
    %8 = vector.load %arg8[%c0_6, %c0_7] : memref<128x128xf32, #tpu.memory_space<vmem>>, vector<128x128xf32>
    tpu.vector_store %arg8[%c0_6, %c0_7], %7 {strides = array<i32>} : memref<128x128xf32, #tpu.memory_space<vmem>>, vector<128x128xf32>,
    %c0_i32_8 = arith.constant 0 : i32
    %9 = arith.cmpi eq, %arg2, %c0_i32_8 : i32
    %10 = arith.extui %9 : i1 to i32
    %c0_i32_9 = arith.constant 0 : i32
    %11 = arith.cmpi ne, %10, %c0_i32_9 : i32
    scf.if %11 {
      %c0_10 = arith.constant 0 : index
      %c0_11 = arith.constant 0 : index
      %12 = vector.load %arg8[%c0_10, %c0_11] : memref<128x128xf32, #tpu.memory_space<vmem>>, vector<128x128xf32>
      %c0_12 = arith.constant 0 : index
      %c0_13 = arith.constant 0 : index
      %13 = vector.load %arg5[%c0_12, %c0_13] : memref<1x128xf32, #tpu.memory_space<vmem>>, vector<1x128xf32>
      %14 = vector.broadcast %13 : vector<1x128xf32> to vector<128x128xf32>
      %15 = arith.mulf %12, %14 : vector<128x128xf32>
      %c0_14 = arith.constant 0 : index
      %c0_15 = arith.constant 0 : index
      %16 = vector.load %arg6[%c0_14, %c0_15] : memref<1x128xf32, #tpu.memory_space<vmem>>, vector<1x128xf32>
      %17 = vector.broadcast %16 : vector<1x128xf32> to vector<128x128xf32>
      %18 = arith.addf %15, %17 : vector<128x128xf32>
      %cst_16 = arith.constant 0.000000e+00 : f32
      %19 = vector.broadcast %cst_16 : f32 to vector<128x128xf32>
      %20 = arith.subf %19, %18 : vector<128x128xf32>
      %21 = math.exp %20 : vector<128x128xf32>
      %cst_17 = arith.constant 1.000000e+00 : f32
      %22 = vector.broadcast %cst_17 : f32 to vector<128x128xf32>
      %23 = arith.addf %22, %21 : vector<128x128xf32>
      %cst_18 = arith.constant 1.000000e+00 : f32
      %24 = vector.broadcast %cst_18 : f32 to vector<128x128xf32>
      %25 = arith.divf %24, %23 : vector<128x128xf32>
      %26 = arith.mulf %18, %25 : vector<128x128xf32>
      %c0_19 = arith.constant 0 : index
      %c0_20 = arith.constant 0 : index
      %27 = vector.load %arg7[%c0_19, %c0_20] : memref<128x128xf32, #tpu.memory_space<vmem>>, vector<128x128xf32>
      tpu.vector_store %arg7[%c0_19, %c0_20], %26 {strides = array<i32>} : memref<128x128xf32, #tpu.memory_space<vmem>>, vector<128x128xf32>,
    } else {
    }
    return
  }
  func.func @transform_0(%arg0: i32, %arg1: i32, %arg2: i32) -> (i32, i32) {
    %c0_i32 = arith.constant 0 : i32
    return %arg0, %arg2 : i32, i32
  }
  func.func @transform_1(%arg0: i32, %arg1: i32, %arg2: i32) -> (i32, i32) {
    %c0_i32 = arith.constant 0 : i32
    return %arg2, %arg1 : i32, i32
  }
  func.func @transform_2(%arg0: i32, %arg1: i32, %arg2: i32) -> (i32, i32) {
    %c0_i32 = arith.constant 0 : i32
    %c0_i32_0 = arith.constant 0 : i32
    return %c0_i32, %arg1 : i32, i32
  }
  func.func @transform_3(%arg0: i32, %arg1: i32, %arg2: i32) -> (i32, i32) {
    %c0_i32 = arith.constant 0 : i32
    %c0_i32_0 = arith.constant 0 : i32
    return %c0_i32, %arg1 : i32, i32
  }
  func.func @transform_4(%arg0: i32, %arg1: i32, %arg2: i32) -> (i32, i32) {
    %c0_i32 = arith.constant 0 : i32
    return %arg0, %arg1 : i32, i32
  }
}

module attributes {stable_mosaic.version = 11 : i64} {
  func.func @_gemm_bn_silu_kernel(%arg0: i32, %arg1: i32, %arg2: i32, %arg3: memref<128x256xbf16, #tpu.memory_space<vmem>>, %arg4: memref<256x128xbf16, #tpu.memory_space<vmem>>, %arg5: memref<1x128xf32, #tpu.memory_space<vmem>>, %arg6: memref<1x128xf32, #tpu.memory_space<vmem>>, %arg7: memref<128x128xf32, #tpu.memory_space<vmem>>, %arg8: memref<128x128xf32, #tpu.memory_space<vmem>>) attributes {dimension_semantics = [#tpu.dimension_semantics<parallel>, #tpu.dimension_semantics<parallel>, #tpu.dimension_semantics<arbitrary>], iteration_bounds = array<i64: 1, 1, 1>, scalar_prefetch = 0 : i64, scratch_operands = 1 : i64, tpu.core_type = #tpu.core_type<tc>, window_params = [{transform_indices = @transform_0, window_bounds = array<i64: 128, 256>}, {transform_indices = @transform_1, window_bounds = array<i64: 256, 128>}, {transform_indices = @transform_2, window_bounds = array<i64: 1, 128>}, {transform_indices = @transform_3, window_bounds = array<i64: 1, 128>}, {transform_indices = @transform_4, window_bounds = array<i64: 128, 128>}]} {
    %c0_i32 = arith.constant 0 : i32
    %0 = arith.cmpi eq, %arg2, %c0_i32 : i32
    %1 = arith.extui %0 : i1 to i32
    %c0_i32_0 = arith.constant 0 : i32
    %2 = arith.cmpi ne, %1, %c0_i32_0 : i32
    scf.if %2 {
      %cst_10 = arith.constant 0.000000e+00 : f32
      %12 = vector.broadcast %cst_10 : f32 to vector<128x128xf32>
      %c0_11 = arith.constant 0 : index
      %c0_12 = arith.constant 0 : index
      %13 = vector.load %arg8[%c0_11, %c0_12] : memref<128x128xf32, #tpu.memory_space<vmem>>, vector<128x128xf32>
      tpu.vector_store %arg8[%c0_11, %c0_12], %12 {strides = array<i32>} : memref<128x128xf32, #tpu.memory_space<vmem>>, vector<128x128xf32>,
    } else {
    }
    %c0 = arith.constant 0 : index
    %c0_1 = arith.constant 0 : index
    %3 = vector.load %arg8[%c0, %c0_1] : memref<128x128xf32, #tpu.memory_space<vmem>>, vector<128x128xf32>
    %c0_2 = arith.constant 0 : index
    %c0_3 = arith.constant 0 : index
    %4 = vector.load %arg3[%c0_2, %c0_3] : memref<128x256xbf16, #tpu.memory_space<vmem>>, vector<128x256xbf16>
    %c0_4 = arith.constant 0 : index
    %c0_5 = arith.constant 0 : index
    %5 = vector.load %arg4[%c0_4, %c0_5] : memref<256x128xbf16, #tpu.memory_space<vmem>>, vector<256x128xbf16>
    %cst = arith.constant dense<0.000000e+00> : vector<128x128xf32>
    %6 = tpu.matmul %4, %5, %cst {dimension_numbers = #tpu.dot_dimension_numbers<[1], [0], [0], [1], [0, 0, 1, 1], [], []>} : vector<128x256xbf16>, vector<256x128xbf16>, vector<128x128xf32> -> vector<128x128xf32>
    %7 = arith.addf %3, %6 : vector<128x128xf32>
    %c0_6 = arith.constant 0 : index
    %c0_7 = arith.constant 0 : index
    %8 = vector.load %arg8[%c0_6, %c0_7] : memref<128x128xf32, #tpu.memory_space<vmem>>, vector<128x128xf32>
    tpu.vector_store %arg8[%c0_6, %c0_7], %7 {strides = array<i32>} : memref<128x128xf32, #tpu.memory_space<vmem>>, vector<128x128xf32>,
    %c0_i32_8 = arith.constant 0 : i32
    %9 = arith.cmpi eq, %arg2, %c0_i32_8 : i32
    %10 = arith.extui %9 : i1 to i32
    %c0_i32_9 = arith.constant 0 : i32
    %11 = arith.cmpi ne, %10, %c0_i32_9 : i32
    scf.if %11 {
      %c0_10 = arith.constant 0 : index
      %c0_11 = arith.constant 0 : index
      %12 = vector.load %arg8[%c0_10, %c0_11] : memref<128x128xf32, #tpu.memory_space<vmem>>, vector<128x128xf32>
      %c0_12 = arith.constant 0 : index
      %c0_13 = arith.constant 0 : index
      %13 = vector.load %arg5[%c0_12, %c0_13] : memref<1x128xf32, #tpu.memory_space<vmem>>, vector<1x128xf32>
      %14 = vector.broadcast %13 : vector<1x128xf32> to vector<128x128xf32>
      %15 = arith.mulf %12, %14 : vector<128x128xf32>
      %c0_14 = arith.constant 0 : index
      %c0_15 = arith.constant 0 : index
      %16 = vector.load %arg6[%c0_14, %c0_15] : memref<1x128xf32, #tpu.memory_space<vmem>>, vector<1x128xf32>
      %17 = vector.broadcast %16 : vector<1x128xf32> to vector<128x128xf32>
      %18 = arith.addf %15, %17 : vector<128x128xf32>
      %cst_16 = arith.constant 0.000000e+00 : f32
      %19 = vector.broadcast %cst_16 : f32 to vector<128x128xf32>
      %20 = arith.subf %19, %18 : vector<128x128xf32>
      %21 = math.exp %20 : vector<128x128xf32>
      %cst_17 = arith.constant 1.000000e+00 : f32
      %22 = vector.broadcast %cst_17 : f32 to vector<128x128xf32>
      %23 = arith.addf %22, %21 : vector<128x128xf32>
      %cst_18 = arith.constant 1.000000e+00 : f32
      %24 = vector.broadcast %cst_18 : f32 to vector<128x128xf32>
      %25 = arith.divf %24, %23 : vector<128x128xf32>
      %26 = arith.mulf %18, %25 : vector<128x128xf32>
      %c0_19 = arith.constant 0 : index
      %c0_20 = arith.constant 0 : index
      %27 = vector.load %arg7[%c0_19, %c0_20] : memref<128x128xf32, #tpu.memory_space<vmem>>, vector<128x128xf32>
      tpu.vector_store %arg7[%c0_19, %c0_20], %26 {strides = array<i32>} : memref<128x128xf32, #tpu.memory_space<vmem>>, vector<128x128xf32>,
    } else {
    }
    return
  }
  func.func @transform_0(%arg0: i32, %arg1: i32, %arg2: i32) -> (i32, i32) {
    %c0_i32 = arith.constant 0 : i32
    return %arg0, %arg2 : i32, i32
  }
  func.func @transform_1(%arg0: i32, %arg1: i32, %arg2: i32) -> (i32, i32) {
    %c0_i32 = arith.constant 0 : i32
    return %arg2, %arg1 : i32, i32
  }
  func.func @transform_2(%arg0: i32, %arg1: i32, %arg2: i32) -> (i32, i32) {
    %c0_i32 = arith.constant 0 : i32
    %c0_i32_0 = arith.constant 0 : i32
    return %c0_i32, %arg1 : i32, i32
  }
  func.func @transform_3(%arg0: i32, %arg1: i32, %arg2: i32) -> (i32, i32) {
    %c0_i32 = arith.constant 0 : i32
    %c0_i32_0 = arith.constant 0 : i32
    return %c0_i32, %arg1 : i32, i32
  }
  func.func @transform_4(%arg0: i32, %arg1: i32, %arg2: i32) -> (i32, i32) {
    %c0_i32 = arith.constant 0 : i32
    return %arg0, %arg1 : i32, i32
  }
}

module attributes {stable_mosaic.version = 11 : i64} {
  func.func @_gemm_bn_silu_kernel(%arg0: i32, %arg1: i32, %arg2: i32, %arg3: memref<32x128xbf16, #tpu.memory_space<vmem>>, %arg4: memref<128x128xbf16, #tpu.memory_space<vmem>>, %arg5: memref<1x128xf32, #tpu.memory_space<vmem>>, %arg6: memref<1x128xf32, #tpu.memory_space<vmem>>, %arg7: memref<32x128xf32, #tpu.memory_space<vmem>>, %arg8: memref<32x128xf32, #tpu.memory_space<vmem>>) attributes {dimension_semantics = [#tpu.dimension_semantics<parallel>, #tpu.dimension_semantics<parallel>, #tpu.dimension_semantics<arbitrary>], iteration_bounds = array<i64: 1, 1, 1>, scalar_prefetch = 0 : i64, scratch_operands = 1 : i64, tpu.core_type = #tpu.core_type<tc>, window_params = [{transform_indices = @transform_0, window_bounds = array<i64: 32, 128>}, {transform_indices = @transform_1, window_bounds = array<i64: 128, 128>}, {transform_indices = @transform_2, window_bounds = array<i64: 1, 128>}, {transform_indices = @transform_3, window_bounds = array<i64: 1, 128>}, {transform_indices = @transform_4, window_bounds = array<i64: 32, 128>}]} {
    %c0_i32 = arith.constant 0 : i32
    %0 = arith.cmpi eq, %arg2, %c0_i32 : i32
    %1 = arith.extui %0 : i1 to i32
    %c0_i32_0 = arith.constant 0 : i32
    %2 = arith.cmpi ne, %1, %c0_i32_0 : i32
    scf.if %2 {
      %cst_10 = arith.constant 0.000000e+00 : f32
      %12 = vector.broadcast %cst_10 : f32 to vector<32x128xf32>
      %c0_11 = arith.constant 0 : index
      %c0_12 = arith.constant 0 : index
      %13 = vector.load %arg8[%c0_11, %c0_12] : memref<32x128xf32, #tpu.memory_space<vmem>>, vector<32x128xf32>
      tpu.vector_store %arg8[%c0_11, %c0_12], %12 {strides = array<i32>} : memref<32x128xf32, #tpu.memory_space<vmem>>, vector<32x128xf32>,
    } else {
    }
    %c0 = arith.constant 0 : index
    %c0_1 = arith.constant 0 : index
    %3 = vector.load %arg8[%c0, %c0_1] : memref<32x128xf32, #tpu.memory_space<vmem>>, vector<32x128xf32>
    %c0_2 = arith.constant 0 : index
    %c0_3 = arith.constant 0 : index
    %4 = vector.load %arg3[%c0_2, %c0_3] : memref<32x128xbf16, #tpu.memory_space<vmem>>, vector<32x128xbf16>
    %c0_4 = arith.constant 0 : index
    %c0_5 = arith.constant 0 : index
    %5 = vector.load %arg4[%c0_4, %c0_5] : memref<128x128xbf16, #tpu.memory_space<vmem>>, vector<128x128xbf16>
    %cst = arith.constant dense<0.000000e+00> : vector<32x128xf32>
    %6 = tpu.matmul %4, %5, %cst {dimension_numbers = #tpu.dot_dimension_numbers<[1], [0], [0], [1], [0, 0, 1, 1], [], []>} : vector<32x128xbf16>, vector<128x128xbf16>, vector<32x128xf32> -> vector<32x128xf32>
    %7 = arith.addf %3, %6 : vector<32x128xf32>
    %c0_6 = arith.constant 0 : index
    %c0_7 = arith.constant 0 : index
    %8 = vector.load %arg8[%c0_6, %c0_7] : memref<32x128xf32, #tpu.memory_space<vmem>>, vector<32x128xf32>
    tpu.vector_store %arg8[%c0_6, %c0_7], %7 {strides = array<i32>} : memref<32x128xf32, #tpu.memory_space<vmem>>, vector<32x128xf32>,
    %c0_i32_8 = arith.constant 0 : i32
    %9 = arith.cmpi eq, %arg2, %c0_i32_8 : i32
    %10 = arith.extui %9 : i1 to i32
    %c0_i32_9 = arith.constant 0 : i32
    %11 = arith.cmpi ne, %10, %c0_i32_9 : i32
    scf.if %11 {
      %c0_10 = arith.constant 0 : index
      %c0_11 = arith.constant 0 : index
      %12 = vector.load %arg8[%c0_10, %c0_11] : memref<32x128xf32, #tpu.memory_space<vmem>>, vector<32x128xf32>
      %c0_12 = arith.constant 0 : index
      %c0_13 = arith.constant 0 : index
      %13 = vector.load %arg5[%c0_12, %c0_13] : memref<1x128xf32, #tpu.memory_space<vmem>>, vector<1x128xf32>
      %14 = vector.broadcast %13 : vector<1x128xf32> to vector<32x128xf32>
      %15 = arith.mulf %12, %14 : vector<32x128xf32>
      %c0_14 = arith.constant 0 : index
      %c0_15 = arith.constant 0 : index
      %16 = vector.load %arg6[%c0_14, %c0_15] : memref<1x128xf32, #tpu.memory_space<vmem>>, vector<1x128xf32>
      %17 = vector.broadcast %16 : vector<1x128xf32> to vector<32x128xf32>
      %18 = arith.addf %15, %17 : vector<32x128xf32>
      %cst_16 = arith.constant 0.000000e+00 : f32
      %19 = vector.broadcast %cst_16 : f32 to vector<32x128xf32>
      %20 = arith.subf %19, %18 : vector<32x128xf32>
      %21 = math.exp %20 : vector<32x128xf32>
      %cst_17 = arith.constant 1.000000e+00 : f32
      %22 = vector.broadcast %cst_17 : f32 to vector<32x128xf32>
      %23 = arith.addf %22, %21 : vector<32x128xf32>
      %cst_18 = arith.constant 1.000000e+00 : f32
      %24 = vector.broadcast %cst_18 : f32 to vector<32x128xf32>
      %25 = arith.divf %24, %23 : vector<32x128xf32>
      %26 = arith.mulf %18, %25 : vector<32x128xf32>
      %c0_19 = arith.constant 0 : index
      %c0_20 = arith.constant 0 : index
      %27 = vector.load %arg7[%c0_19, %c0_20] : memref<32x128xf32, #tpu.memory_space<vmem>>, vector<32x128xf32>
      tpu.vector_store %arg7[%c0_19, %c0_20], %26 {strides = array<i32>} : memref<32x128xf32, #tpu.memory_space<vmem>>, vector<32x128xf32>,
    } else {
    }
    return
  }
  func.func @transform_0(%arg0: i32, %arg1: i32, %arg2: i32) -> (i32, i32) {
    %c0_i32 = arith.constant 0 : i32
    return %arg0, %arg2 : i32, i32
  }
  func.func @transform_1(%arg0: i32, %arg1: i32, %arg2: i32) -> (i32, i32) {
    %c0_i32 = arith.constant 0 : i32
    return %arg2, %arg1 : i32, i32
  }
  func.func @transform_2(%arg0: i32, %arg1: i32, %arg2: i32) -> (i32, i32) {
    %c0_i32 = arith.constant 0 : i32
    %c0_i32_0 = arith.constant 0 : i32
    return %c0_i32, %arg1 : i32, i32
  }
  func.func @transform_3(%arg0: i32, %arg1: i32, %arg2: i32) -> (i32, i32) {
    %c0_i32 = arith.constant 0 : i32
    %c0_i32_0 = arith.constant 0 : i32
    return %c0_i32, %arg1 : i32, i32
  }
  func.func @transform_4(%arg0: i32, %arg1: i32, %arg2: i32) -> (i32, i32) {
    %c0_i32 = arith.constant 0 : i32
    return %arg0, %arg1 : i32, i32
  }
}

module attributes {stable_mosaic.version = 11 : i64} {
  func.func @_gemm_bn_silu_kernel(%arg0: i32, %arg1: i32, %arg2: i32, %arg3: memref<32x128xbf16, #tpu.memory_space<vmem>>, %arg4: memref<128x128xbf16, #tpu.memory_space<vmem>>, %arg5: memref<1x128xf32, #tpu.memory_space<vmem>>, %arg6: memref<1x128xf32, #tpu.memory_space<vmem>>, %arg7: memref<32x128xf32, #tpu.memory_space<vmem>>, %arg8: memref<32x128xf32, #tpu.memory_space<vmem>>) attributes {dimension_semantics = [#tpu.dimension_semantics<parallel>, #tpu.dimension_semantics<parallel>, #tpu.dimension_semantics<arbitrary>], iteration_bounds = array<i64: 1, 1, 1>, scalar_prefetch = 0 : i64, scratch_operands = 1 : i64, tpu.core_type = #tpu.core_type<tc>, window_params = [{transform_indices = @transform_0, window_bounds = array<i64: 32, 128>}, {transform_indices = @transform_1, window_bounds = array<i64: 128, 128>}, {transform_indices = @transform_2, window_bounds = array<i64: 1, 128>}, {transform_indices = @transform_3, window_bounds = array<i64: 1, 128>}, {transform_indices = @transform_4, window_bounds = array<i64: 32, 128>}]} {
    %c0_i32 = arith.constant 0 : i32
    %0 = arith.cmpi eq, %arg2, %c0_i32 : i32
    %1 = arith.extui %0 : i1 to i32
    %c0_i32_0 = arith.constant 0 : i32
    %2 = arith.cmpi ne, %1, %c0_i32_0 : i32
    scf.if %2 {
      %cst_10 = arith.constant 0.000000e+00 : f32
      %12 = vector.broadcast %cst_10 : f32 to vector<32x128xf32>
      %c0_11 = arith.constant 0 : index
      %c0_12 = arith.constant 0 : index
      %13 = vector.load %arg8[%c0_11, %c0_12] : memref<32x128xf32, #tpu.memory_space<vmem>>, vector<32x128xf32>
      tpu.vector_store %arg8[%c0_11, %c0_12], %12 {strides = array<i32>} : memref<32x128xf32, #tpu.memory_space<vmem>>, vector<32x128xf32>,
    } else {
    }
    %c0 = arith.constant 0 : index
    %c0_1 = arith.constant 0 : index
    %3 = vector.load %arg8[%c0, %c0_1] : memref<32x128xf32, #tpu.memory_space<vmem>>, vector<32x128xf32>
    %c0_2 = arith.constant 0 : index
    %c0_3 = arith.constant 0 : index
    %4 = vector.load %arg3[%c0_2, %c0_3] : memref<32x128xbf16, #tpu.memory_space<vmem>>, vector<32x128xbf16>
    %c0_4 = arith.constant 0 : index
    %c0_5 = arith.constant 0 : index
    %5 = vector.load %arg4[%c0_4, %c0_5] : memref<128x128xbf16, #tpu.memory_space<vmem>>, vector<128x128xbf16>
    %cst = arith.constant dense<0.000000e+00> : vector<32x128xf32>
    %6 = tpu.matmul %4, %5, %cst {dimension_numbers = #tpu.dot_dimension_numbers<[1], [0], [0], [1], [0, 0, 1, 1], [], []>} : vector<32x128xbf16>, vector<128x128xbf16>, vector<32x128xf32> -> vector<32x128xf32>
    %7 = arith.addf %3, %6 : vector<32x128xf32>
    %c0_6 = arith.constant 0 : index
    %c0_7 = arith.constant 0 : index
    %8 = vector.load %arg8[%c0_6, %c0_7] : memref<32x128xf32, #tpu.memory_space<vmem>>, vector<32x128xf32>
    tpu.vector_store %arg8[%c0_6, %c0_7], %7 {strides = array<i32>} : memref<32x128xf32, #tpu.memory_space<vmem>>, vector<32x128xf32>,
    %c0_i32_8 = arith.constant 0 : i32
    %9 = arith.cmpi eq, %arg2, %c0_i32_8 : i32
    %10 = arith.extui %9 : i1 to i32
    %c0_i32_9 = arith.constant 0 : i32
    %11 = arith.cmpi ne, %10, %c0_i32_9 : i32
    scf.if %11 {
      %c0_10 = arith.constant 0 : index
      %c0_11 = arith.constant 0 : index
      %12 = vector.load %arg8[%c0_10, %c0_11] : memref<32x128xf32, #tpu.memory_space<vmem>>, vector<32x128xf32>
      %c0_12 = arith.constant 0 : index
      %c0_13 = arith.constant 0 : index
      %13 = vector.load %arg5[%c0_12, %c0_13] : memref<1x128xf32, #tpu.memory_space<vmem>>, vector<1x128xf32>
      %14 = vector.broadcast %13 : vector<1x128xf32> to vector<32x128xf32>
      %15 = arith.mulf %12, %14 : vector<32x128xf32>
      %c0_14 = arith.constant 0 : index
      %c0_15 = arith.constant 0 : index
      %16 = vector.load %arg6[%c0_14, %c0_15] : memref<1x128xf32, #tpu.memory_space<vmem>>, vector<1x128xf32>
      %17 = vector.broadcast %16 : vector<1x128xf32> to vector<32x128xf32>
      %18 = arith.addf %15, %17 : vector<32x128xf32>
      %cst_16 = arith.constant 0.000000e+00 : f32
      %19 = vector.broadcast %cst_16 : f32 to vector<32x128xf32>
      %20 = arith.subf %19, %18 : vector<32x128xf32>
      %21 = math.exp %20 : vector<32x128xf32>
      %cst_17 = arith.constant 1.000000e+00 : f32
      %22 = vector.broadcast %cst_17 : f32 to vector<32x128xf32>
      %23 = arith.addf %22, %21 : vector<32x128xf32>
      %cst_18 = arith.constant 1.000000e+00 : f32
      %24 = vector.broadcast %cst_18 : f32 to vector<32x128xf32>
      %25 = arith.divf %24, %23 : vector<32x128xf32>
      %26 = arith.mulf %18, %25 : vector<32x128xf32>
      %c0_19 = arith.constant 0 : index
      %c0_20 = arith.constant 0 : index
      %27 = vector.load %arg7[%c0_19, %c0_20] : memref<32x128xf32, #tpu.memory_space<vmem>>, vector<32x128xf32>
      tpu.vector_store %arg7[%c0_19, %c0_20], %26 {strides = array<i32>} : memref<32x128xf32, #tpu.memory_space<vmem>>, vector<32x128xf32>,
    } else {
    }
    return
  }
  func.func @transform_0(%arg0: i32, %arg1: i32, %arg2: i32) -> (i32, i32) {
    %c0_i32 = arith.constant 0 : i32
    return %arg0, %arg2 : i32, i32
  }
  func.func @transform_1(%arg0: i32, %arg1: i32, %arg2: i32) -> (i32, i32) {
    %c0_i32 = arith.constant 0 : i32
    return %arg2, %arg1 : i32, i32
  }
  func.func @transform_2(%arg0: i32, %arg1: i32, %arg2: i32) -> (i32, i32) {
    %c0_i32 = arith.constant 0 : i32
    %c0_i32_0 = arith.constant 0 : i32
    return %c0_i32, %arg1 : i32, i32
  }
  func.func @transform_3(%arg0: i32, %arg1: i32, %arg2: i32) -> (i32, i32) {
    %c0_i32 = arith.constant 0 : i32
    %c0_i32_0 = arith.constant 0 : i32
    return %c0_i32, %arg1 : i32, i32
  }
  func.func @transform_4(%arg0: i32, %arg1: i32, %arg2: i32) -> (i32, i32) {
    %c0_i32 = arith.constant 0 : i32
    return %arg0, %arg1 : i32, i32
  }
}

module attributes {stable_mosaic.version = 11 : i64} {
  func.func @_gemm_bn_silu_kernel(%arg0: i32, %arg1: i32, %arg2: i32, %arg3: memref<32x384xbf16, #tpu.memory_space<vmem>>, %arg4: memref<384x128xbf16, #tpu.memory_space<vmem>>, %arg5: memref<1x128xf32, #tpu.memory_space<vmem>>, %arg6: memref<1x128xf32, #tpu.memory_space<vmem>>, %arg7: memref<32x128xf32, #tpu.memory_space<vmem>>, %arg8: memref<32x128xf32, #tpu.memory_space<vmem>>) attributes {dimension_semantics = [#tpu.dimension_semantics<parallel>, #tpu.dimension_semantics<parallel>, #tpu.dimension_semantics<arbitrary>], iteration_bounds = array<i64: 1, 1, 1>, scalar_prefetch = 0 : i64, scratch_operands = 1 : i64, tpu.core_type = #tpu.core_type<tc>, window_params = [{transform_indices = @transform_0, window_bounds = array<i64: 32, 384>}, {transform_indices = @transform_1, window_bounds = array<i64: 384, 128>}, {transform_indices = @transform_2, window_bounds = array<i64: 1, 128>}, {transform_indices = @transform_3, window_bounds = array<i64: 1, 128>}, {transform_indices = @transform_4, window_bounds = array<i64: 32, 128>}]} {
    %c0_i32 = arith.constant 0 : i32
    %0 = arith.cmpi eq, %arg2, %c0_i32 : i32
    %1 = arith.extui %0 : i1 to i32
    %c0_i32_0 = arith.constant 0 : i32
    %2 = arith.cmpi ne, %1, %c0_i32_0 : i32
    scf.if %2 {
      %cst_10 = arith.constant 0.000000e+00 : f32
      %12 = vector.broadcast %cst_10 : f32 to vector<32x128xf32>
      %c0_11 = arith.constant 0 : index
      %c0_12 = arith.constant 0 : index
      %13 = vector.load %arg8[%c0_11, %c0_12] : memref<32x128xf32, #tpu.memory_space<vmem>>, vector<32x128xf32>
      tpu.vector_store %arg8[%c0_11, %c0_12], %12 {strides = array<i32>} : memref<32x128xf32, #tpu.memory_space<vmem>>, vector<32x128xf32>,
    } else {
    }
    %c0 = arith.constant 0 : index
    %c0_1 = arith.constant 0 : index
    %3 = vector.load %arg8[%c0, %c0_1] : memref<32x128xf32, #tpu.memory_space<vmem>>, vector<32x128xf32>
    %c0_2 = arith.constant 0 : index
    %c0_3 = arith.constant 0 : index
    %4 = vector.load %arg3[%c0_2, %c0_3] : memref<32x384xbf16, #tpu.memory_space<vmem>>, vector<32x384xbf16>
    %c0_4 = arith.constant 0 : index
    %c0_5 = arith.constant 0 : index
    %5 = vector.load %arg4[%c0_4, %c0_5] : memref<384x128xbf16, #tpu.memory_space<vmem>>, vector<384x128xbf16>
    %cst = arith.constant dense<0.000000e+00> : vector<32x128xf32>
    %6 = tpu.matmul %4, %5, %cst {dimension_numbers = #tpu.dot_dimension_numbers<[1], [0], [0], [1], [0, 0, 1, 1], [], []>} : vector<32x384xbf16>, vector<384x128xbf16>, vector<32x128xf32> -> vector<32x128xf32>
    %7 = arith.addf %3, %6 : vector<32x128xf32>
    %c0_6 = arith.constant 0 : index
    %c0_7 = arith.constant 0 : index
    %8 = vector.load %arg8[%c0_6, %c0_7] : memref<32x128xf32, #tpu.memory_space<vmem>>, vector<32x128xf32>
    tpu.vector_store %arg8[%c0_6, %c0_7], %7 {strides = array<i32>} : memref<32x128xf32, #tpu.memory_space<vmem>>, vector<32x128xf32>,
    %c0_i32_8 = arith.constant 0 : i32
    %9 = arith.cmpi eq, %arg2, %c0_i32_8 : i32
    %10 = arith.extui %9 : i1 to i32
    %c0_i32_9 = arith.constant 0 : i32
    %11 = arith.cmpi ne, %10, %c0_i32_9 : i32
    scf.if %11 {
      %c0_10 = arith.constant 0 : index
      %c0_11 = arith.constant 0 : index
      %12 = vector.load %arg8[%c0_10, %c0_11] : memref<32x128xf32, #tpu.memory_space<vmem>>, vector<32x128xf32>
      %c0_12 = arith.constant 0 : index
      %c0_13 = arith.constant 0 : index
      %13 = vector.load %arg5[%c0_12, %c0_13] : memref<1x128xf32, #tpu.memory_space<vmem>>, vector<1x128xf32>
      %14 = vector.broadcast %13 : vector<1x128xf32> to vector<32x128xf32>
      %15 = arith.mulf %12, %14 : vector<32x128xf32>
      %c0_14 = arith.constant 0 : index
      %c0_15 = arith.constant 0 : index
      %16 = vector.load %arg6[%c0_14, %c0_15] : memref<1x128xf32, #tpu.memory_space<vmem>>, vector<1x128xf32>
      %17 = vector.broadcast %16 : vector<1x128xf32> to vector<32x128xf32>
      %18 = arith.addf %15, %17 : vector<32x128xf32>
      %cst_16 = arith.constant 0.000000e+00 : f32
      %19 = vector.broadcast %cst_16 : f32 to vector<32x128xf32>
      %20 = arith.subf %19, %18 : vector<32x128xf32>
      %21 = math.exp %20 : vector<32x128xf32>
      %cst_17 = arith.constant 1.000000e+00 : f32
      %22 = vector.broadcast %cst_17 : f32 to vector<32x128xf32>
      %23 = arith.addf %22, %21 : vector<32x128xf32>
      %cst_18 = arith.constant 1.000000e+00 : f32
      %24 = vector.broadcast %cst_18 : f32 to vector<32x128xf32>
      %25 = arith.divf %24, %23 : vector<32x128xf32>
      %26 = arith.mulf %18, %25 : vector<32x128xf32>
      %c0_19 = arith.constant 0 : index
      %c0_20 = arith.constant 0 : index
      %27 = vector.load %arg7[%c0_19, %c0_20] : memref<32x128xf32, #tpu.memory_space<vmem>>, vector<32x128xf32>
      tpu.vector_store %arg7[%c0_19, %c0_20], %26 {strides = array<i32>} : memref<32x128xf32, #tpu.memory_space<vmem>>, vector<32x128xf32>,
    } else {
    }
    return
  }
  func.func @transform_0(%arg0: i32, %arg1: i32, %arg2: i32) -> (i32, i32) {
    %c0_i32 = arith.constant 0 : i32
    return %arg0, %arg2 : i32, i32
  }
  func.func @transform_1(%arg0: i32, %arg1: i32, %arg2: i32) -> (i32, i32) {
    %c0_i32 = arith.constant 0 : i32
    return %arg2, %arg1 : i32, i32
  }
  func.func @transform_2(%arg0: i32, %arg1: i32, %arg2: i32) -> (i32, i32) {
    %c0_i32 = arith.constant 0 : i32
    %c0_i32_0 = arith.constant 0 : i32
    return %c0_i32, %arg1 : i32, i32
  }
  func.func @transform_3(%arg0: i32, %arg1: i32, %arg2: i32) -> (i32, i32) {
    %c0_i32 = arith.constant 0 : i32
    %c0_i32_0 = arith.constant 0 : i32
    return %c0_i32, %arg1 : i32, i32
  }
  func.func @transform_4(%arg0: i32, %arg1: i32, %arg2: i32) -> (i32, i32) {
    %c0_i32 = arith.constant 0 : i32
    return %arg0, %arg1 : i32, i32
  }
}

module attributes {stable_mosaic.version = 11 : i64} {
  func.func @_gemm_bn_silu_kernel(%arg0: i32, %arg1: i32, %arg2: i32, %arg3: memref<32x384xbf16, #tpu.memory_space<vmem>>, %arg4: memref<384x128xbf16, #tpu.memory_space<vmem>>, %arg5: memref<1x128xf32, #tpu.memory_space<vmem>>, %arg6: memref<1x128xf32, #tpu.memory_space<vmem>>, %arg7: memref<32x128xf32, #tpu.memory_space<vmem>>, %arg8: memref<32x128xf32, #tpu.memory_space<vmem>>) attributes {dimension_semantics = [#tpu.dimension_semantics<parallel>, #tpu.dimension_semantics<parallel>, #tpu.dimension_semantics<arbitrary>], iteration_bounds = array<i64: 1, 1, 1>, scalar_prefetch = 0 : i64, scratch_operands = 1 : i64, tpu.core_type = #tpu.core_type<tc>, window_params = [{transform_indices = @transform_0, window_bounds = array<i64: 32, 384>}, {transform_indices = @transform_1, window_bounds = array<i64: 384, 128>}, {transform_indices = @transform_2, window_bounds = array<i64: 1, 128>}, {transform_indices = @transform_3, window_bounds = array<i64: 1, 128>}, {transform_indices = @transform_4, window_bounds = array<i64: 32, 128>}]} {
    %c0_i32 = arith.constant 0 : i32
    %0 = arith.cmpi eq, %arg2, %c0_i32 : i32
    %1 = arith.extui %0 : i1 to i32
    %c0_i32_0 = arith.constant 0 : i32
    %2 = arith.cmpi ne, %1, %c0_i32_0 : i32
    scf.if %2 {
      %cst_10 = arith.constant 0.000000e+00 : f32
      %12 = vector.broadcast %cst_10 : f32 to vector<32x128xf32>
      %c0_11 = arith.constant 0 : index
      %c0_12 = arith.constant 0 : index
      %13 = vector.load %arg8[%c0_11, %c0_12] : memref<32x128xf32, #tpu.memory_space<vmem>>, vector<32x128xf32>
      tpu.vector_store %arg8[%c0_11, %c0_12], %12 {strides = array<i32>} : memref<32x128xf32, #tpu.memory_space<vmem>>, vector<32x128xf32>,
    } else {
    }
    %c0 = arith.constant 0 : index
    %c0_1 = arith.constant 0 : index
    %3 = vector.load %arg8[%c0, %c0_1] : memref<32x128xf32, #tpu.memory_space<vmem>>, vector<32x128xf32>
    %c0_2 = arith.constant 0 : index
    %c0_3 = arith.constant 0 : index
    %4 = vector.load %arg3[%c0_2, %c0_3] : memref<32x384xbf16, #tpu.memory_space<vmem>>, vector<32x384xbf16>
    %c0_4 = arith.constant 0 : index
    %c0_5 = arith.constant 0 : index
    %5 = vector.load %arg4[%c0_4, %c0_5] : memref<384x128xbf16, #tpu.memory_space<vmem>>, vector<384x128xbf16>
    %cst = arith.constant dense<0.000000e+00> : vector<32x128xf32>
    %6 = tpu.matmul %4, %5, %cst {dimension_numbers = #tpu.dot_dimension_numbers<[1], [0], [0], [1], [0, 0, 1, 1], [], []>} : vector<32x384xbf16>, vector<384x128xbf16>, vector<32x128xf32> -> vector<32x128xf32>
    %7 = arith.addf %3, %6 : vector<32x128xf32>
    %c0_6 = arith.constant 0 : index
    %c0_7 = arith.constant 0 : index
    %8 = vector.load %arg8[%c0_6, %c0_7] : memref<32x128xf32, #tpu.memory_space<vmem>>, vector<32x128xf32>
    tpu.vector_store %arg8[%c0_6, %c0_7], %7 {strides = array<i32>} : memref<32x128xf32, #tpu.memory_space<vmem>>, vector<32x128xf32>,
    %c0_i32_8 = arith.constant 0 : i32
    %9 = arith.cmpi eq, %arg2, %c0_i32_8 : i32
    %10 = arith.extui %9 : i1 to i32
    %c0_i32_9 = arith.constant 0 : i32
    %11 = arith.cmpi ne, %10, %c0_i32_9 : i32
    scf.if %11 {
      %c0_10 = arith.constant 0 : index
      %c0_11 = arith.constant 0 : index
      %12 = vector.load %arg8[%c0_10, %c0_11] : memref<32x128xf32, #tpu.memory_space<vmem>>, vector<32x128xf32>
      %c0_12 = arith.constant 0 : index
      %c0_13 = arith.constant 0 : index
      %13 = vector.load %arg5[%c0_12, %c0_13] : memref<1x128xf32, #tpu.memory_space<vmem>>, vector<1x128xf32>
      %14 = vector.broadcast %13 : vector<1x128xf32> to vector<32x128xf32>
      %15 = arith.mulf %12, %14 : vector<32x128xf32>
      %c0_14 = arith.constant 0 : index
      %c0_15 = arith.constant 0 : index
      %16 = vector.load %arg6[%c0_14, %c0_15] : memref<1x128xf32, #tpu.memory_space<vmem>>, vector<1x128xf32>
      %17 = vector.broadcast %16 : vector<1x128xf32> to vector<32x128xf32>
      %18 = arith.addf %15, %17 : vector<32x128xf32>
      %cst_16 = arith.constant 0.000000e+00 : f32
      %19 = vector.broadcast %cst_16 : f32 to vector<32x128xf32>
      %20 = arith.subf %19, %18 : vector<32x128xf32>
      %21 = math.exp %20 : vector<32x128xf32>
      %cst_17 = arith.constant 1.000000e+00 : f32
      %22 = vector.broadcast %cst_17 : f32 to vector<32x128xf32>
      %23 = arith.addf %22, %21 : vector<32x128xf32>
      %cst_18 = arith.constant 1.000000e+00 : f32
      %24 = vector.broadcast %cst_18 : f32 to vector<32x128xf32>
      %25 = arith.divf %24, %23 : vector<32x128xf32>
      %26 = arith.mulf %18, %25 : vector<32x128xf32>
      %c0_19 = arith.constant 0 : index
      %c0_20 = arith.constant 0 : index
      %27 = vector.load %arg7[%c0_19, %c0_20] : memref<32x128xf32, #tpu.memory_space<vmem>>, vector<32x128xf32>
      tpu.vector_store %arg7[%c0_19, %c0_20], %26 {strides = array<i32>} : memref<32x128xf32, #tpu.memory_space<vmem>>, vector<32x128xf32>,
    } else {
    }
    return
  }
  func.func @transform_0(%arg0: i32, %arg1: i32, %arg2: i32) -> (i32, i32) {
    %c0_i32 = arith.constant 0 : i32
    return %arg0, %arg2 : i32, i32
  }
  func.func @transform_1(%arg0: i32, %arg1: i32, %arg2: i32) -> (i32, i32) {
    %c0_i32 = arith.constant 0 : i32
    return %arg2, %arg1 : i32, i32
  }
  func.func @transform_2(%arg0: i32, %arg1: i32, %arg2: i32) -> (i32, i32) {
    %c0_i32 = arith.constant 0 : i32
    %c0_i32_0 = arith.constant 0 : i32
    return %c0_i32, %arg1 : i32, i32
  }
  func.func @transform_3(%arg0: i32, %arg1: i32, %arg2: i32) -> (i32, i32) {
    %c0_i32 = arith.constant 0 : i32
    %c0_i32_0 = arith.constant 0 : i32
    return %c0_i32, %arg1 : i32, i32
  }
  func.func @transform_4(%arg0: i32, %arg1: i32, %arg2: i32) -> (i32, i32) {
    %c0_i32 = arith.constant 0 : i32
    return %arg0, %arg1 : i32, i32
  }
}

module attributes {stable_mosaic.version = 11 : i64} {
  func.func @_gemm_bn_silu_kernel(%arg0: i32, %arg1: i32, %arg2: i32, %arg3: memref<8x640xbf16, #tpu.memory_space<vmem>>, %arg4: memref<640x128xbf16, #tpu.memory_space<vmem>>, %arg5: memref<1x128xf32, #tpu.memory_space<vmem>>, %arg6: memref<1x128xf32, #tpu.memory_space<vmem>>, %arg7: memref<8x128xf32, #tpu.memory_space<vmem>>, %arg8: memref<8x128xf32, #tpu.memory_space<vmem>>) attributes {dimension_semantics = [#tpu.dimension_semantics<parallel>, #tpu.dimension_semantics<parallel>, #tpu.dimension_semantics<arbitrary>], iteration_bounds = array<i64: 1, 1, 1>, scalar_prefetch = 0 : i64, scratch_operands = 1 : i64, tpu.core_type = #tpu.core_type<tc>, window_params = [{transform_indices = @transform_0, window_bounds = array<i64: 8, 640>}, {transform_indices = @transform_1, window_bounds = array<i64: 640, 128>}, {transform_indices = @transform_2, window_bounds = array<i64: 1, 128>}, {transform_indices = @transform_3, window_bounds = array<i64: 1, 128>}, {transform_indices = @transform_4, window_bounds = array<i64: 8, 128>}]} {
    %c0_i32 = arith.constant 0 : i32
    %0 = arith.cmpi eq, %arg2, %c0_i32 : i32
    %1 = arith.extui %0 : i1 to i32
    %c0_i32_0 = arith.constant 0 : i32
    %2 = arith.cmpi ne, %1, %c0_i32_0 : i32
    scf.if %2 {
      %cst_10 = arith.constant 0.000000e+00 : f32
      %12 = vector.broadcast %cst_10 : f32 to vector<8x128xf32>
      %c0_11 = arith.constant 0 : index
      %c0_12 = arith.constant 0 : index
      %13 = vector.load %arg8[%c0_11, %c0_12] : memref<8x128xf32, #tpu.memory_space<vmem>>, vector<8x128xf32>
      tpu.vector_store %arg8[%c0_11, %c0_12], %12 {strides = array<i32>} : memref<8x128xf32, #tpu.memory_space<vmem>>, vector<8x128xf32>,
    } else {
    }
    %c0 = arith.constant 0 : index
    %c0_1 = arith.constant 0 : index
    %3 = vector.load %arg8[%c0, %c0_1] : memref<8x128xf32, #tpu.memory_space<vmem>>, vector<8x128xf32>
    %c0_2 = arith.constant 0 : index
    %c0_3 = arith.constant 0 : index
    %4 = vector.load %arg3[%c0_2, %c0_3] : memref<8x640xbf16, #tpu.memory_space<vmem>>, vector<8x640xbf16>
    %c0_4 = arith.constant 0 : index
    %c0_5 = arith.constant 0 : index
    %5 = vector.load %arg4[%c0_4, %c0_5] : memref<640x128xbf16, #tpu.memory_space<vmem>>, vector<640x128xbf16>
    %cst = arith.constant dense<0.000000e+00> : vector<8x128xf32>
    %6 = tpu.matmul %4, %5, %cst {dimension_numbers = #tpu.dot_dimension_numbers<[1], [0], [0], [1], [0, 0, 1, 1], [], []>} : vector<8x640xbf16>, vector<640x128xbf16>, vector<8x128xf32> -> vector<8x128xf32>
    %7 = arith.addf %3, %6 : vector<8x128xf32>
    %c0_6 = arith.constant 0 : index
    %c0_7 = arith.constant 0 : index
    %8 = vector.load %arg8[%c0_6, %c0_7] : memref<8x128xf32, #tpu.memory_space<vmem>>, vector<8x128xf32>
    tpu.vector_store %arg8[%c0_6, %c0_7], %7 {strides = array<i32>} : memref<8x128xf32, #tpu.memory_space<vmem>>, vector<8x128xf32>,
    %c0_i32_8 = arith.constant 0 : i32
    %9 = arith.cmpi eq, %arg2, %c0_i32_8 : i32
    %10 = arith.extui %9 : i1 to i32
    %c0_i32_9 = arith.constant 0 : i32
    %11 = arith.cmpi ne, %10, %c0_i32_9 : i32
    scf.if %11 {
      %c0_10 = arith.constant 0 : index
      %c0_11 = arith.constant 0 : index
      %12 = vector.load %arg8[%c0_10, %c0_11] : memref<8x128xf32, #tpu.memory_space<vmem>>, vector<8x128xf32>
      %c0_12 = arith.constant 0 : index
      %c0_13 = arith.constant 0 : index
      %13 = vector.load %arg5[%c0_12, %c0_13] : memref<1x128xf32, #tpu.memory_space<vmem>>, vector<1x128xf32>
      %14 = vector.broadcast %13 : vector<1x128xf32> to vector<8x128xf32>
      %15 = arith.mulf %12, %14 : vector<8x128xf32>
      %c0_14 = arith.constant 0 : index
      %c0_15 = arith.constant 0 : index
      %16 = vector.load %arg6[%c0_14, %c0_15] : memref<1x128xf32, #tpu.memory_space<vmem>>, vector<1x128xf32>
      %17 = vector.broadcast %16 : vector<1x128xf32> to vector<8x128xf32>
      %18 = arith.addf %15, %17 : vector<8x128xf32>
      %cst_16 = arith.constant 0.000000e+00 : f32
      %19 = vector.broadcast %cst_16 : f32 to vector<8x128xf32>
      %20 = arith.subf %19, %18 : vector<8x128xf32>
      %21 = math.exp %20 : vector<8x128xf32>
      %cst_17 = arith.constant 1.000000e+00 : f32
      %22 = vector.broadcast %cst_17 : f32 to vector<8x128xf32>
      %23 = arith.addf %22, %21 : vector<8x128xf32>
      %cst_18 = arith.constant 1.000000e+00 : f32
      %24 = vector.broadcast %cst_18 : f32 to vector<8x128xf32>
      %25 = arith.divf %24, %23 : vector<8x128xf32>
      %26 = arith.mulf %18, %25 : vector<8x128xf32>
      %c0_19 = arith.constant 0 : index
      %c0_20 = arith.constant 0 : index
      %27 = vector.load %arg7[%c0_19, %c0_20] : memref<8x128xf32, #tpu.memory_space<vmem>>, vector<8x128xf32>
      tpu.vector_store %arg7[%c0_19, %c0_20], %26 {strides = array<i32>} : memref<8x128xf32, #tpu.memory_space<vmem>>, vector<8x128xf32>,
    } else {
    }
    return
  }
  func.func @transform_0(%arg0: i32, %arg1: i32, %arg2: i32) -> (i32, i32) {
    %c0_i32 = arith.constant 0 : i32
    return %arg0, %arg2 : i32, i32
  }
  func.func @transform_1(%arg0: i32, %arg1: i32, %arg2: i32) -> (i32, i32) {
    %c0_i32 = arith.constant 0 : i32
    return %arg2, %arg1 : i32, i32
  }
  func.func @transform_2(%arg0: i32, %arg1: i32, %arg2: i32) -> (i32, i32) {
    %c0_i32 = arith.constant 0 : i32
    %c0_i32_0 = arith.constant 0 : i32
    return %c0_i32, %arg1 : i32, i32
  }
  func.func @transform_3(%arg0: i32, %arg1: i32, %arg2: i32) -> (i32, i32) {
    %c0_i32 = arith.constant 0 : i32
    %c0_i32_0 = arith.constant 0 : i32
    return %c0_i32, %arg1 : i32, i32
  }
  func.func @transform_4(%arg0: i32, %arg1: i32, %arg2: i32) -> (i32, i32) {
    %c0_i32 = arith.constant 0 : i32
    return %arg0, %arg1 : i32, i32
  }
}

module attributes {stable_mosaic.version = 11 : i64} {
  func.func @_gemm_bn_silu_kernel(%arg0: i32, %arg1: i32, %arg2: i32, %arg3: memref<8x128xbf16, #tpu.memory_space<vmem>>, %arg4: memref<128x128xbf16, #tpu.memory_space<vmem>>, %arg5: memref<1x128xf32, #tpu.memory_space<vmem>>, %arg6: memref<1x128xf32, #tpu.memory_space<vmem>>, %arg7: memref<8x128xf32, #tpu.memory_space<vmem>>, %arg8: memref<8x128xf32, #tpu.memory_space<vmem>>) attributes {dimension_semantics = [#tpu.dimension_semantics<parallel>, #tpu.dimension_semantics<parallel>, #tpu.dimension_semantics<arbitrary>], iteration_bounds = array<i64: 1, 1, 1>, scalar_prefetch = 0 : i64, scratch_operands = 1 : i64, tpu.core_type = #tpu.core_type<tc>, window_params = [{transform_indices = @transform_0, window_bounds = array<i64: 8, 128>}, {transform_indices = @transform_1, window_bounds = array<i64: 128, 128>}, {transform_indices = @transform_2, window_bounds = array<i64: 1, 128>}, {transform_indices = @transform_3, window_bounds = array<i64: 1, 128>}, {transform_indices = @transform_4, window_bounds = array<i64: 8, 128>}]} {
    %c0_i32 = arith.constant 0 : i32
    %0 = arith.cmpi eq, %arg2, %c0_i32 : i32
    %1 = arith.extui %0 : i1 to i32
    %c0_i32_0 = arith.constant 0 : i32
    %2 = arith.cmpi ne, %1, %c0_i32_0 : i32
    scf.if %2 {
      %cst_10 = arith.constant 0.000000e+00 : f32
      %12 = vector.broadcast %cst_10 : f32 to vector<8x128xf32>
      %c0_11 = arith.constant 0 : index
      %c0_12 = arith.constant 0 : index
      %13 = vector.load %arg8[%c0_11, %c0_12] : memref<8x128xf32, #tpu.memory_space<vmem>>, vector<8x128xf32>
      tpu.vector_store %arg8[%c0_11, %c0_12], %12 {strides = array<i32>} : memref<8x128xf32, #tpu.memory_space<vmem>>, vector<8x128xf32>,
    } else {
    }
    %c0 = arith.constant 0 : index
    %c0_1 = arith.constant 0 : index
    %3 = vector.load %arg8[%c0, %c0_1] : memref<8x128xf32, #tpu.memory_space<vmem>>, vector<8x128xf32>
    %c0_2 = arith.constant 0 : index
    %c0_3 = arith.constant 0 : index
    %4 = vector.load %arg3[%c0_2, %c0_3] : memref<8x128xbf16, #tpu.memory_space<vmem>>, vector<8x128xbf16>
    %c0_4 = arith.constant 0 : index
    %c0_5 = arith.constant 0 : index
    %5 = vector.load %arg4[%c0_4, %c0_5] : memref<128x128xbf16, #tpu.memory_space<vmem>>, vector<128x128xbf16>
    %cst = arith.constant dense<0.000000e+00> : vector<8x128xf32>
    %6 = tpu.matmul %4, %5, %cst {dimension_numbers = #tpu.dot_dimension_numbers<[1], [0], [0], [1], [0, 0, 1, 1], [], []>} : vector<8x128xbf16>, vector<128x128xbf16>, vector<8x128xf32> -> vector<8x128xf32>
    %7 = arith.addf %3, %6 : vector<8x128xf32>
    %c0_6 = arith.constant 0 : index
    %c0_7 = arith.constant 0 : index
    %8 = vector.load %arg8[%c0_6, %c0_7] : memref<8x128xf32, #tpu.memory_space<vmem>>, vector<8x128xf32>
    tpu.vector_store %arg8[%c0_6, %c0_7], %7 {strides = array<i32>} : memref<8x128xf32, #tpu.memory_space<vmem>>, vector<8x128xf32>,
    %c0_i32_8 = arith.constant 0 : i32
    %9 = arith.cmpi eq, %arg2, %c0_i32_8 : i32
    %10 = arith.extui %9 : i1 to i32
    %c0_i32_9 = arith.constant 0 : i32
    %11 = arith.cmpi ne, %10, %c0_i32_9 : i32
    scf.if %11 {
      %c0_10 = arith.constant 0 : index
      %c0_11 = arith.constant 0 : index
      %12 = vector.load %arg8[%c0_10, %c0_11] : memref<8x128xf32, #tpu.memory_space<vmem>>, vector<8x128xf32>
      %c0_12 = arith.constant 0 : index
      %c0_13 = arith.constant 0 : index
      %13 = vector.load %arg5[%c0_12, %c0_13] : memref<1x128xf32, #tpu.memory_space<vmem>>, vector<1x128xf32>
      %14 = vector.broadcast %13 : vector<1x128xf32> to vector<8x128xf32>
      %15 = arith.mulf %12, %14 : vector<8x128xf32>
      %c0_14 = arith.constant 0 : index
      %c0_15 = arith.constant 0 : index
      %16 = vector.load %arg6[%c0_14, %c0_15] : memref<1x128xf32, #tpu.memory_space<vmem>>, vector<1x128xf32>
      %17 = vector.broadcast %16 : vector<1x128xf32> to vector<8x128xf32>
      %18 = arith.addf %15, %17 : vector<8x128xf32>
      %cst_16 = arith.constant 0.000000e+00 : f32
      %19 = vector.broadcast %cst_16 : f32 to vector<8x128xf32>
      %20 = arith.subf %19, %18 : vector<8x128xf32>
      %21 = math.exp %20 : vector<8x128xf32>
      %cst_17 = arith.constant 1.000000e+00 : f32
      %22 = vector.broadcast %cst_17 : f32 to vector<8x128xf32>
      %23 = arith.addf %22, %21 : vector<8x128xf32>
      %cst_18 = arith.constant 1.000000e+00 : f32
      %24 = vector.broadcast %cst_18 : f32 to vector<8x128xf32>
      %25 = arith.divf %24, %23 : vector<8x128xf32>
      %26 = arith.mulf %18, %25 : vector<8x128xf32>
      %c0_19 = arith.constant 0 : index
      %c0_20 = arith.constant 0 : index
      %27 = vector.load %arg7[%c0_19, %c0_20] : memref<8x128xf32, #tpu.memory_space<vmem>>, vector<8x128xf32>
      tpu.vector_store %arg7[%c0_19, %c0_20], %26 {strides = array<i32>} : memref<8x128xf32, #tpu.memory_space<vmem>>, vector<8x128xf32>,
    } else {
    }
    return
  }
  func.func @transform_0(%arg0: i32, %arg1: i32, %arg2: i32) -> (i32, i32) {
    %c0_i32 = arith.constant 0 : i32
    return %arg0, %arg2 : i32, i32
  }
  func.func @transform_1(%arg0: i32, %arg1: i32, %arg2: i32) -> (i32, i32) {
    %c0_i32 = arith.constant 0 : i32
    return %arg2, %arg1 : i32, i32
  }
  func.func @transform_2(%arg0: i32, %arg1: i32, %arg2: i32) -> (i32, i32) {
    %c0_i32 = arith.constant 0 : i32
    %c0_i32_0 = arith.constant 0 : i32
    return %c0_i32, %arg1 : i32, i32
  }
  func.func @transform_3(%arg0: i32, %arg1: i32, %arg2: i32) -> (i32, i32) {
    %c0_i32 = arith.constant 0 : i32
    %c0_i32_0 = arith.constant 0 : i32
    return %c0_i32, %arg1 : i32, i32
  }
  func.func @transform_4(%arg0: i32, %arg1: i32, %arg2: i32) -> (i32, i32) {
    %c0_i32 = arith.constant 0 : i32
    return %arg0, %arg1 : i32, i32
  }
}

module attributes {stable_mosaic.version = 11 : i64} {
  func.func @_gemm_bn_silu_kernel(%arg0: i32, %arg1: i32, %arg2: i32, %arg3: memref<8x128xbf16, #tpu.memory_space<vmem>>, %arg4: memref<128x128xbf16, #tpu.memory_space<vmem>>, %arg5: memref<1x128xf32, #tpu.memory_space<vmem>>, %arg6: memref<1x128xf32, #tpu.memory_space<vmem>>, %arg7: memref<8x128xf32, #tpu.memory_space<vmem>>, %arg8: memref<8x128xf32, #tpu.memory_space<vmem>>) attributes {dimension_semantics = [#tpu.dimension_semantics<parallel>, #tpu.dimension_semantics<parallel>, #tpu.dimension_semantics<arbitrary>], iteration_bounds = array<i64: 1, 1, 1>, scalar_prefetch = 0 : i64, scratch_operands = 1 : i64, tpu.core_type = #tpu.core_type<tc>, window_params = [{transform_indices = @transform_0, window_bounds = array<i64: 8, 128>}, {transform_indices = @transform_1, window_bounds = array<i64: 128, 128>}, {transform_indices = @transform_2, window_bounds = array<i64: 1, 128>}, {transform_indices = @transform_3, window_bounds = array<i64: 1, 128>}, {transform_indices = @transform_4, window_bounds = array<i64: 8, 128>}]} {
    %c0_i32 = arith.constant 0 : i32
    %0 = arith.cmpi eq, %arg2, %c0_i32 : i32
    %1 = arith.extui %0 : i1 to i32
    %c0_i32_0 = arith.constant 0 : i32
    %2 = arith.cmpi ne, %1, %c0_i32_0 : i32
    scf.if %2 {
      %cst_10 = arith.constant 0.000000e+00 : f32
      %12 = vector.broadcast %cst_10 : f32 to vector<8x128xf32>
      %c0_11 = arith.constant 0 : index
      %c0_12 = arith.constant 0 : index
      %13 = vector.load %arg8[%c0_11, %c0_12] : memref<8x128xf32, #tpu.memory_space<vmem>>, vector<8x128xf32>
      tpu.vector_store %arg8[%c0_11, %c0_12], %12 {strides = array<i32>} : memref<8x128xf32, #tpu.memory_space<vmem>>, vector<8x128xf32>,
    } else {
    }
    %c0 = arith.constant 0 : index
    %c0_1 = arith.constant 0 : index
    %3 = vector.load %arg8[%c0, %c0_1] : memref<8x128xf32, #tpu.memory_space<vmem>>, vector<8x128xf32>
    %c0_2 = arith.constant 0 : index
    %c0_3 = arith.constant 0 : index
    %4 = vector.load %arg3[%c0_2, %c0_3] : memref<8x128xbf16, #tpu.memory_space<vmem>>, vector<8x128xbf16>
    %c0_4 = arith.constant 0 : index
    %c0_5 = arith.constant 0 : index
    %5 = vector.load %arg4[%c0_4, %c0_5] : memref<128x128xbf16, #tpu.memory_space<vmem>>, vector<128x128xbf16>
    %cst = arith.constant dense<0.000000e+00> : vector<8x128xf32>
    %6 = tpu.matmul %4, %5, %cst {dimension_numbers = #tpu.dot_dimension_numbers<[1], [0], [0], [1], [0, 0, 1, 1], [], []>} : vector<8x128xbf16>, vector<128x128xbf16>, vector<8x128xf32> -> vector<8x128xf32>
    %7 = arith.addf %3, %6 : vector<8x128xf32>
    %c0_6 = arith.constant 0 : index
    %c0_7 = arith.constant 0 : index
    %8 = vector.load %arg8[%c0_6, %c0_7] : memref<8x128xf32, #tpu.memory_space<vmem>>, vector<8x128xf32>
    tpu.vector_store %arg8[%c0_6, %c0_7], %7 {strides = array<i32>} : memref<8x128xf32, #tpu.memory_space<vmem>>, vector<8x128xf32>,
    %c0_i32_8 = arith.constant 0 : i32
    %9 = arith.cmpi eq, %arg2, %c0_i32_8 : i32
    %10 = arith.extui %9 : i1 to i32
    %c0_i32_9 = arith.constant 0 : i32
    %11 = arith.cmpi ne, %10, %c0_i32_9 : i32
    scf.if %11 {
      %c0_10 = arith.constant 0 : index
      %c0_11 = arith.constant 0 : index
      %12 = vector.load %arg8[%c0_10, %c0_11] : memref<8x128xf32, #tpu.memory_space<vmem>>, vector<8x128xf32>
      %c0_12 = arith.constant 0 : index
      %c0_13 = arith.constant 0 : index
      %13 = vector.load %arg5[%c0_12, %c0_13] : memref<1x128xf32, #tpu.memory_space<vmem>>, vector<1x128xf32>
      %14 = vector.broadcast %13 : vector<1x128xf32> to vector<8x128xf32>
      %15 = arith.mulf %12, %14 : vector<8x128xf32>
      %c0_14 = arith.constant 0 : index
      %c0_15 = arith.constant 0 : index
      %16 = vector.load %arg6[%c0_14, %c0_15] : memref<1x128xf32, #tpu.memory_space<vmem>>, vector<1x128xf32>
      %17 = vector.broadcast %16 : vector<1x128xf32> to vector<8x128xf32>
      %18 = arith.addf %15, %17 : vector<8x128xf32>
      %cst_16 = arith.constant 0.000000e+00 : f32
      %19 = vector.broadcast %cst_16 : f32 to vector<8x128xf32>
      %20 = arith.subf %19, %18 : vector<8x128xf32>
      %21 = math.exp %20 : vector<8x128xf32>
      %cst_17 = arith.constant 1.000000e+00 : f32
      %22 = vector.broadcast %cst_17 : f32 to vector<8x128xf32>
      %23 = arith.addf %22, %21 : vector<8x128xf32>
      %cst_18 = arith.constant 1.000000e+00 : f32
      %24 = vector.broadcast %cst_18 : f32 to vector<8x128xf32>
      %25 = arith.divf %24, %23 : vector<8x128xf32>
      %26 = arith.mulf %18, %25 : vector<8x128xf32>
      %c0_19 = arith.constant 0 : index
      %c0_20 = arith.constant 0 : index
      %27 = vector.load %arg7[%c0_19, %c0_20] : memref<8x128xf32, #tpu.memory_space<vmem>>, vector<8x128xf32>
      tpu.vector_store %arg7[%c0_19, %c0_20], %26 {strides = array<i32>} : memref<8x128xf32, #tpu.memory_space<vmem>>, vector<8x128xf32>,
    } else {
    }
    return
  }
  func.func @transform_0(%arg0: i32, %arg1: i32, %arg2: i32) -> (i32, i32) {
    %c0_i32 = arith.constant 0 : i32
    return %arg0, %arg2 : i32, i32
  }
  func.func @transform_1(%arg0: i32, %arg1: i32, %arg2: i32) -> (i32, i32) {
    %c0_i32 = arith.constant 0 : i32
    return %arg2, %arg1 : i32, i32
  }
  func.func @transform_2(%arg0: i32, %arg1: i32, %arg2: i32) -> (i32, i32) {
    %c0_i32 = arith.constant 0 : i32
    %c0_i32_0 = arith.constant 0 : i32
    return %c0_i32, %arg1 : i32, i32
  }
  func.func @transform_3(%arg0: i32, %arg1: i32, %arg2: i32) -> (i32, i32) {
    %c0_i32 = arith.constant 0 : i32
    %c0_i32_0 = arith.constant 0 : i32
    return %c0_i32, %arg1 : i32, i32
  }
  func.func @transform_4(%arg0: i32, %arg1: i32, %arg2: i32) -> (i32, i32) {
    %c0_i32 = arith.constant 0 : i32
    return %arg0, %arg1 : i32, i32
  }
}

module attributes {stable_mosaic.version = 11 : i64} {
  func.func @_maxpool_kernel(%arg0: i32, %arg1: memref<1x6x6x32xf32, #tpu.memory_space<vmem>>, %arg2: memref<1x2x2x32xf32, #tpu.memory_space<vmem>>) attributes {dimension_semantics = [#tpu.dimension_semantics<parallel>], iteration_bounds = array<i64: 2>, scalar_prefetch = 0 : i64, scratch_operands = 0 : i64, tpu.core_type = #tpu.core_type<tc>, window_params = [{transform_indices = @transform_0, window_bounds = array<i64: 1, 6, 6, 32>}, {transform_indices = @transform_1, window_bounds = array<i64: 1, 2, 2, 32>}]} {
    %c0 = arith.constant 0 : index
    %c0_0 = arith.constant 0 : index
    %c0_1 = arith.constant 0 : index
    %c0_2 = arith.constant 0 : index
    %0 = vector.load %arg1[%c0, %c0_0, %c0_1, %c0_2] : memref<1x6x6x32xf32, #tpu.memory_space<vmem>>, vector<1x6x6x32xf32>
    %1 = vector.extract_strided_slice %0 {offsets = [0, 0, 0, 0], sizes = [1, 2, 2, 32], strides = [1, 1, 1, 1]} : vector<1x6x6x32xf32> to vector<1x2x2x32xf32>
    %2 = vector.extract_strided_slice %0 {offsets = [0, 0, 1, 0], sizes = [1, 2, 2, 32], strides = [1, 1, 1, 1]} : vector<1x6x6x32xf32> to vector<1x2x2x32xf32>
    %3 = arith.maximumf %1, %2 : vector<1x2x2x32xf32>
    %4 = vector.extract_strided_slice %0 {offsets = [0, 0, 2, 0], sizes = [1, 2, 2, 32], strides = [1, 1, 1, 1]} : vector<1x6x6x32xf32> to vector<1x2x2x32xf32>
    %5 = arith.maximumf %3, %4 : vector<1x2x2x32xf32>
    %6 = vector.extract_strided_slice %0 {offsets = [0, 0, 3, 0], sizes = [1, 2, 2, 32], strides = [1, 1, 1, 1]} : vector<1x6x6x32xf32> to vector<1x2x2x32xf32>
    %7 = arith.maximumf %5, %6 : vector<1x2x2x32xf32>
    %8 = vector.extract_strided_slice %0 {offsets = [0, 0, 4, 0], sizes = [1, 2, 2, 32], strides = [1, 1, 1, 1]} : vector<1x6x6x32xf32> to vector<1x2x2x32xf32>
    %9 = arith.maximumf %7, %8 : vector<1x2x2x32xf32>
    %10 = vector.extract_strided_slice %0 {offsets = [0, 1, 0, 0], sizes = [1, 2, 2, 32], strides = [1, 1, 1, 1]} : vector<1x6x6x32xf32> to vector<1x2x2x32xf32>
    %11 = arith.maximumf %9, %10 : vector<1x2x2x32xf32>
    %12 = vector.extract_strided_slice %0 {offsets = [0, 1, 1, 0], sizes = [1, 2, 2, 32], strides = [1, 1, 1, 1]} : vector<1x6x6x32xf32> to vector<1x2x2x32xf32>
    %13 = arith.maximumf %11, %12 : vector<1x2x2x32xf32>
    %14 = vector.extract_strided_slice %0 {offsets = [0, 1, 2, 0], sizes = [1, 2, 2, 32], strides = [1, 1, 1, 1]} : vector<1x6x6x32xf32> to vector<1x2x2x32xf32>
    %15 = arith.maximumf %13, %14 : vector<1x2x2x32xf32>
    %16 = vector.extract_strided_slice %0 {offsets = [0, 1, 3, 0], sizes = [1, 2, 2, 32], strides = [1, 1, 1, 1]} : vector<1x6x6x32xf32> to vector<1x2x2x32xf32>
    %17 = arith.maximumf %15, %16 : vector<1x2x2x32xf32>
    %18 = vector.extract_strided_slice %0 {offsets = [0, 1, 4, 0], sizes = [1, 2, 2, 32], strides = [1, 1, 1, 1]} : vector<1x6x6x32xf32> to vector<1x2x2x32xf32>
    %19 = arith.maximumf %17, %18 : vector<1x2x2x32xf32>
    %20 = vector.extract_strided_slice %0 {offsets = [0, 2, 0, 0], sizes = [1, 2, 2, 32], strides = [1, 1, 1, 1]} : vector<1x6x6x32xf32> to vector<1x2x2x32xf32>
    %21 = arith.maximumf %19, %20 : vector<1x2x2x32xf32>
    %22 = vector.extract_strided_slice %0 {offsets = [0, 2, 1, 0], sizes = [1, 2, 2, 32], strides = [1, 1, 1, 1]} : vector<1x6x6x32xf32> to vector<1x2x2x32xf32>
    %23 = arith.maximumf %21, %22 : vector<1x2x2x32xf32>
    %24 = vector.extract_strided_slice %0 {offsets = [0, 2, 2, 0], sizes = [1, 2, 2, 32], strides = [1, 1, 1, 1]} : vector<1x6x6x32xf32> to vector<1x2x2x32xf32>
    %25 = arith.maximumf %23, %24 : vector<1x2x2x32xf32>
    %26 = vector.extract_strided_slice %0 {offsets = [0, 2, 3, 0], sizes = [1, 2, 2, 32], strides = [1, 1, 1, 1]} : vector<1x6x6x32xf32> to vector<1x2x2x32xf32>
    %27 = arith.maximumf %25, %26 : vector<1x2x2x32xf32>
    %28 = vector.extract_strided_slice %0 {offsets = [0, 2, 4, 0], sizes = [1, 2, 2, 32], strides = [1, 1, 1, 1]} : vector<1x6x6x32xf32> to vector<1x2x2x32xf32>
    %29 = arith.maximumf %27, %28 : vector<1x2x2x32xf32>
    %30 = vector.extract_strided_slice %0 {offsets = [0, 3, 0, 0], sizes = [1, 2, 2, 32], strides = [1, 1, 1, 1]} : vector<1x6x6x32xf32> to vector<1x2x2x32xf32>
    %31 = arith.maximumf %29, %30 : vector<1x2x2x32xf32>
    %32 = vector.extract_strided_slice %0 {offsets = [0, 3, 1, 0], sizes = [1, 2, 2, 32], strides = [1, 1, 1, 1]} : vector<1x6x6x32xf32> to vector<1x2x2x32xf32>
    %33 = arith.maximumf %31, %32 : vector<1x2x2x32xf32>
    %34 = vector.extract_strided_slice %0 {offsets = [0, 3, 2, 0], sizes = [1, 2, 2, 32], strides = [1, 1, 1, 1]} : vector<1x6x6x32xf32> to vector<1x2x2x32xf32>
    %35 = arith.maximumf %33, %34 : vector<1x2x2x32xf32>
    %36 = vector.extract_strided_slice %0 {offsets = [0, 3, 3, 0], sizes = [1, 2, 2, 32], strides = [1, 1, 1, 1]} : vector<1x6x6x32xf32> to vector<1x2x2x32xf32>
    %37 = arith.maximumf %35, %36 : vector<1x2x2x32xf32>
    %38 = vector.extract_strided_slice %0 {offsets = [0, 3, 4, 0], sizes = [1, 2, 2, 32], strides = [1, 1, 1, 1]} : vector<1x6x6x32xf32> to vector<1x2x2x32xf32>
    %39 = arith.maximumf %37, %38 : vector<1x2x2x32xf32>
    %40 = vector.extract_strided_slice %0 {offsets = [0, 4, 0, 0], sizes = [1, 2, 2, 32], strides = [1, 1, 1, 1]} : vector<1x6x6x32xf32> to vector<1x2x2x32xf32>
    %41 = arith.maximumf %39, %40 : vector<1x2x2x32xf32>
    %42 = vector.extract_strided_slice %0 {offsets = [0, 4, 1, 0], sizes = [1, 2, 2, 32], strides = [1, 1, 1, 1]} : vector<1x6x6x32xf32> to vector<1x2x2x32xf32>
    %43 = arith.maximumf %41, %42 : vector<1x2x2x32xf32>
    %44 = vector.extract_strided_slice %0 {offsets = [0, 4, 2, 0], sizes = [1, 2, 2, 32], strides = [1, 1, 1, 1]} : vector<1x6x6x32xf32> to vector<1x2x2x32xf32>
    %45 = arith.maximumf %43, %44 : vector<1x2x2x32xf32>
    %46 = vector.extract_strided_slice %0 {offsets = [0, 4, 3, 0], sizes = [1, 2, 2, 32], strides = [1, 1, 1, 1]} : vector<1x6x6x32xf32> to vector<1x2x2x32xf32>
    %47 = arith.maximumf %45, %46 : vector<1x2x2x32xf32>
    %48 = vector.extract_strided_slice %0 {offsets = [0, 4, 4, 0], sizes = [1, 2, 2, 32], strides = [1, 1, 1, 1]} : vector<1x6x6x32xf32> to vector<1x2x2x32xf32>
    %49 = arith.maximumf %47, %48 : vector<1x2x2x32xf32>
    %c0_3 = arith.constant 0 : index
    %c0_4 = arith.constant 0 : index
    %c0_5 = arith.constant 0 : index
    %c0_6 = arith.constant 0 : index
    %50 = vector.load %arg2[%c0_3, %c0_4, %c0_5, %c0_6] : memref<1x2x2x32xf32, #tpu.memory_space<vmem>>, vector<1x2x2x32xf32>
    tpu.vector_store %arg2[%c0_3, %c0_4, %c0_5, %c0_6], %49 {strides = array<i32>} : memref<1x2x2x32xf32, #tpu.memory_space<vmem>>, vector<1x2x2x32xf32>,
    return
  }
  func.func @transform_0(%arg0: i32) -> (i32, i32, i32, i32) {
    %c0_i32 = arith.constant 0 : i32
    %c0_i32_0 = arith.constant 0 : i32
    %c0_i32_1 = arith.constant 0 : i32
    %c0_i32_2 = arith.constant 0 : i32
    return %arg0, %c0_i32, %c0_i32_0, %c0_i32_1 : i32, i32, i32, i32
  }
  func.func @transform_1(%arg0: i32) -> (i32, i32, i32, i32) {
    %c0_i32 = arith.constant 0 : i32
    %c0_i32_0 = arith.constant 0 : i32
    %c0_i32_1 = arith.constant 0 : i32
    %c0_i32_2 = arith.constant 0 : i32
    return %arg0, %c0_i32, %c0_i32_0, %c0_i32_1 : i32, i32, i32, i32
  }
}

</mosaic_0001>

<llo_original>
// kernel: _lambda_.30
$region0: #{_lambda_.30}
  #allocation0 [shape = 'u32[]', space=smem, size = 0x4, offset = 0x4, fixed_abs, tag = 'smem constant byte address 0x4 - core index']
  #allocation1 [shape = 'u32[144,128]{1,0:T(1,128)}', space=vmem, size = 0x12000, scoped, tag = 'internal scratch']
  #allocation2 [shape = 'f32[256,128]{1,0:T(8,128)}', space=vmem, size = 0x20000, scoped, tag = 'scratch operand']
  %s0 = inlined_call_operand.vmem [shape: bf16[2048,128], index: 0, kind: input, shape index: {}]
  %s1 = inlined_call_operand.vmem [shape: bf16[128,128], index: 1, kind: input, shape index: {}]
  %s2 = inlined_call_operand.vmem [shape: f32[1,128], index: 2, kind: input, shape index: {}]
  %s3 = inlined_call_operand.vmem [shape: f32[1,128], index: 3, kind: input, shape index: {}]
  %s4 = inlined_call_operand.vmem [shape: f32[2048,128], index: 4, kind: output, shape index: {}]
  %s5 = sld [smem:[#allocation0]]
  $region57: #{_lambda_.30} parent=0
    _
  %s7 = ssub.s32 1, %s5
  %s8 = scalar_select 0, %s7, %s5
  loop: start=0, step=1, limit=10
  $region2: #{_lambda_.30} parent=0 // loop_pre_header
    _
  $region3: #{_lambda_.30} parent=0 // loop_header
    %s10 = sphi 0, %s14
    %p11 = scmp.ge.s32.totalorder %s10, 10
    %s17 = sphi 0, %s36
    %s18 = sphi 0, %s32
    %s19 = sphi 0, %s28
    %s20 = sphi 0, %s17
    %s21 = sphi 0, %s18
    %s22 = sphi 0, %s19
    %s23 = sphi 0, %s20
    %s24 = sphi 0, %s21
    %s25 = sphi 0, %s22
    %s41 = sphi 0, %s43
    %s44 = sphi 0, %s41
    %s45 = sphi 0, %s44
    %s61 = sphi 0, %s45
    %s69 = sphi 0, %s71
    %s72 = sphi 0, %s69
    %s73 = sphi 0, %s72
    %s89 = sphi 0, %s73
    %s95 = sphi 0, %s97
    %s98 = sphi 0, %s95
    %s99 = sphi 0, %s98
    %s115 = sphi 0, %s99
    %s121 = sphi 0, %s123
    %s124 = sphi 0, %s121
    %s125 = sphi 0, %s124
    %s141 = sphi 0, %s125
    %s149 = sphi 0, %s151
    %s152 = sphi 0, %s149
    %s153 = sphi 0, %s152
    %s169 = sphi 0, %s153
  $region4: #{_lambda_.30} parent=0 // loop_header_branch
    %13 = sbr.rel (%p11) target = $region8
  $region5: #{_lambda_.30} parent=0 // loop_body
    %s15 = ssub.s32 %s10, 1
    %s16 = ssub.s32 %s10, 2
    %s26 = sadd.s32 1, %s19
    %p27 = scmp.ge.s32.totalorder %s26, 1
    %s28 = scalar_select %p27, 0, %s26
    %s29 = sadd.s32 1, %s18
    %s30 = scalar_select %p27, %s29, %s18
    %p31 = scmp.ge.s32.totalorder %s30, 1
    %s32 = scalar_select %p31, 0, %s30
    %s33 = sadd.s32 1, %s17
    %s34 = scalar_select %p31, %s33, %s17
    %p35 = scmp.ge.s32.totalorder %s34, 8
    %s36 = scalar_select %p35, 0, %s34
    %s37 = ssub.s32 %s17, %s36
    %s38 = ssub.s32 %s19, %s28
    %s39 = sor.u32 %s37, %s38
    %p40 = scmp.eq.s32.totalorder %s39, 0
    %s42 = sadd.s32 %s41, 1
    %s43 = scalar_select %p40, %s41, %s42
    %p46 = pneg %p40
    %p47 = scmp.eq.s32.totalorder %s10, 7
    %p48 = por %p46, %p47
    %p49 = scmp.ne.s32.totalorder %s41, %s44
    %p50 = scmp.eq.s32.totalorder %s10, 0
    %p51 = por %p49, %p50
    %p52 = scmp.ne.s32.totalorder %s41, %s44
    %p53 = scmp.eq.s32.totalorder %s15, 7
    %p54 = por %p52, %p53
    %p55 = scmp.ne.s32.totalorder %s44, %s45
    %p56 = scmp.eq.s32.totalorder %s15, 0
    %p57 = por %p55, %p56
    %p58 = scmp.ne.s32.totalorder %s44, %s45
    %p59 = scmp.eq.s32.totalorder %s16, 7
    %p60 = por %p58, %p59
    %p62 = scmp.ne.s32.totalorder %s45, %s61
    %p63 = scmp.eq.s32.totalorder %s16, 0
    %p64 = por %p62, %p63
    %s65 = ssub.s32 %s19, %s28
    %s66 = ssub.s32 %s18, %s32
    %s67 = sor.u32 %s65, %s66
    %p68 = scmp.eq.s32.totalorder %s67, 0
    %s70 = sadd.s32 %s69, 1
    %s71 = scalar_select %p68, %s69, %s70
    %p74 = pneg %p68
    %p75 = scmp.eq.s32.totalorder %s10, 7
    %p76 = por %p74, %p75
    %p77 = scmp.ne.s32.totalorder %s69, %s72
    %p78 = scmp.eq.s32.totalorder %s10, 0
    %p79 = por %p77, %p78
    %p80 = scmp.ne.s32.totalorder %s69, %s72
    %p81 = scmp.eq.s32.totalorder %s15, 7
    %p82 = por %p80, %p81
    %p83 = scmp.ne.s32.totalorder %s72, %s73
    %p84 = scmp.eq.s32.totalorder %s15, 0
    %p85 = por %p83, %p84
    %p86 = scmp.ne.s32.totalorder %s72, %s73
    %p87 = scmp.eq.s32.totalorder %s16, 7
    %p88 = por %p86, %p87
    %p90 = scmp.ne.s32.totalorder %s73, %s89
    %p91 = scmp.eq.s32.totalorder %s16, 0
    %p92 = por %p90, %p91
    %s93 = ssub.s32 %s18, %s32
    %p94 = scmp.eq.s32.totalorder %s93, 0
    %s96 = sadd.s32 %s95, 1
    %s97 = scalar_select %p94, %s95, %s96
    %p100 = pneg %p94
    %p101 = scmp.eq.s32.totalorder %s10, 7
    %p102 = por %p100, %p101
    %p103 = scmp.ne.s32.totalorder %s95, %s98
    %p104 = scmp.eq.s32.totalorder %s10, 0
    %p105 = por %p103, %p104
    %p106 = scmp.ne.s32.totalorder %s95, %s98
    %p107 = scmp.eq.s32.totalorder %s15, 7
    %p108 = por %p106, %p107
    %p109 = scmp.ne.s32.totalorder %s98, %s99
    %p110 = scmp.eq.s32.totalorder %s15, 0
    %p111 = por %p109, %p110
    %p112 = scmp.ne.s32.totalorder %s98, %s99
    %p113 = scmp.eq.s32.totalorder %s16, 7
    %p114 = por %p112, %p113
    %p116 = scmp.ne.s32.totalorder %s99, %s115
    %p117 = scmp.eq.s32.totalorder %s16, 0
    %p118 = por %p116, %p117
    %s119 = ssub.s32 %s18, %s32
    %p120 = scmp.eq.s32.totalorder %s119, 0
    %s122 = sadd.s32 %s121, 1
    %s123 = scalar_select %p120, %s121, %s122
    %p126 = pneg %p120
    %p127 = scmp.eq.s32.totalorder %s10, 7
    %p128 = por %p126, %p127
    %p129 = scmp.ne.s32.totalorder %s121, %s124
    %p130 = scmp.eq.s32.totalorder %s10, 0
    %p131 = por %p129, %p130
    %p132 = scmp.ne.s32.totalorder %s121, %s124
    %p133 = scmp.eq.s32.totalorder %s15, 7
    %p134 = por %p132, %p133
    %p135 = scmp.ne.s32.totalorder %s124, %s125
    %p136 = scmp.eq.s32.totalorder %s15, 0
    %p137 = por %p135, %p136
    %p138 = scmp.ne.s32.totalorder %s124, %s125
    %p139 = scmp.eq.s32.totalorder %s16, 7
    %p140 = por %p138, %p139
    %p142 = scmp.ne.s32.totalorder %s125, %s141
    %p143 = scmp.eq.s32.totalorder %s16, 0
    %p144 = por %p142, %p143
    %s145 = ssub.s32 %s17, %s36
    %s146 = ssub.s32 %s18, %s32
    %s147 = sor.u32 %s145, %s146
    %p148 = scmp.eq.s32.totalorder %s147, 0
    %s150 = sadd.s32 %s149, 1
    %s151 = scalar_select %p148, %s149, %s150
    %p154 = pneg %p148
    %p155 = scmp.eq.s32.totalorder %s10, 7
    %p156 = por %p154, %p155
    %p157 = scmp.ne.s32.totalorder %s149, %s152
    %p158 = scmp.eq.s32.totalorder %s10, 0
    %p159 = por %p157, %p158
    %p160 = scmp.ne.s32.totalorder %s149, %s152
    %p161 = scmp.eq.s32.totalorder %s15, 7
    %p162 = por %p160, %p161
    %p163 = scmp.ne.s32.totalorder %s152, %s153
    %p164 = scmp.eq.s32.totalorder %s15, 0
    %p165 = por %p163, %p164
    %p166 = scmp.ne.s32.totalorder %s152, %s153
    %p167 = scmp.eq.s32.totalorder %s16, 7
    %p168 = por %p166, %p167
    %p170 = scmp.ne.s32.totalorder %s153, %s169
    %p171 = scmp.eq.s32.totalorder %s16, 0
    %p172 = por %p170, %p171
    %p173 = scmp.le.s32.totalorder 1, %s10
    %p174 = scmp.lt.s32.totalorder %s10, 9
    %p175 = pnand %p173, %p174
    %p176 = pneg %p175
    // Predicated region
    $region9: #{_lambda_.30} parent=5 // pred_check
      _
    $region10: #{_lambda_.30} parent=5 // pred_check_branch
      %178 = sbr.rel (%p175) target = $region12
    $region11: #{_lambda_.30} parent=5 // pred_region
      %s179 = ssub.s32 %s10, 1
      // Predicated region
      $region13: #{_lambda_.30} parent=11 // pred_check
        %p180 = pneg %p85
      $region14: #{_lambda_.30} parent=11 // pred_check_branch
        %182 = sbr.rel (%p180) target = $region16
      $region15: #{_lambda_.30} parent=11 // pred_region
        %s183 = smul.u32 16, %s22
        %p184 = scmp.lt.s32.totalorder %s183, 15
        %s185 = scalar_select %p184, %s183, 15
        %p186 = scmp.lt.s32.totalorder %s21, 0
        %s187 = scalar_select %p186, %s21, 0
        %s188 = sadd.s32 %s187, %s185
        %s189 = smul.addr %s188, 4
        %s190 = scalar_lea.vmem %s1, %s189
        %s191 = smul.u32 16, %s22
      $region16: #{_lambda_.30} parent=11 // pred_fallthru
        _
      // Predicated region
      $region17: #{_lambda_.30} parent=11 // pred_check
        %p192 = pneg %p111
      $region18: #{_lambda_.30} parent=11 // pred_check_branch
        %194 = sbr.rel (%p192) target = $region20
      $region19: #{_lambda_.30} parent=11 // pred_region
        %p195 = scmp.lt.s32.totalorder %s21, 0
        %s196 = scalar_select %p195, %s21, 0
        %s197 = scalar_lea.vmem %s2, %s196
      $region20: #{_lambda_.30} parent=11 // pred_fallthru
        _
      // Predicated region
      $region21: #{_lambda_.30} parent=11 // pred_check
        %p198 = pneg %p137
      $region22: #{_lambda_.30} parent=11 // pred_check_branch
        %200 = sbr.rel (%p198) target = $region24
      $region23: #{_lambda_.30} parent=11 // pred_region
        %p201 = scmp.lt.s32.totalorder %s21, 0
        %s202 = scalar_select %p201, %s21, 0
        %s203 = scalar_lea.vmem %s3, %s202
      $region24: #{_lambda_.30} parent=11 // pred_fallthru
        _
    $region12: #{_lambda_.30} parent=5 // pred_fallthru
      _
    %p204 = scmp.lt.s32.totalorder %s10, 8
    // Predicated region
    $region25: #{_lambda_.30} parent=5 // pred_check
      %p205 = pneg %p204
    $region26: #{_lambda_.30} parent=5 // pred_check_branch
      %207 = sbr.rel (%p205) target = $region28
    $region27: #{_lambda_.30} parent=5 // pred_region
      // Predicated region
      $region29: #{_lambda_.30} parent=27 // pred_check
        %p208 = pneg %p51
      $region30: #{_lambda_.30} parent=27 // pred_check_branch
        %210 = sbr.rel (%p208) target = $region32
      $region31: #{_lambda_.30} parent=27 // pred_region
        %s211 = smul.u32 32, %s17
        %p212 = scmp.lt.s32.totalorder %s211, 255
        %s213 = scalar_select %p212, %s211, 255
        %p214 = scmp.lt.s32.totalorder %s19, 0
        %s215 = scalar_select %p214, %s19, 0
        %s216 = sadd.s32 %s215, %s213
        %s217 = smul.addr %s216, 4
        %s218 = scalar_lea.vmem %s0, %s217
        %s219 = smul.u32 32, %s17
      $region32: #{_lambda_.30} parent=27 // pred_fallthru
        _
    $region28: #{_lambda_.30} parent=5 // pred_fallthru
      _
    %p220 = scmp.le.s32.totalorder 1, %s10
    %p221 = scmp.lt.s32.totalorder %s10, 9
    %p222 = pnand %p220, %p221
    %p223 = pneg %p222
    // Predicated region
    $region33: #{_lambda_.30} parent=5 // pred_check
      _
    $region34: #{_lambda_.30} parent=5 // pred_check_branch
      %225 = sbr.rel (%p222) target = $region36
    $region35: #{_lambda_.30} parent=5 // pred_region
      %s226 = ssub.s32 %s10, 1
      %s227 = smul.u32 32, %s20
      %p228 = scmp.lt.s32.totalorder %s227, 255
      %s229 = scalar_select %p228, %s227, 255
      %p230 = scmp.lt.s32.totalorder %s22, 0
      %s231 = scalar_select %p230, %s22, 0
      %s232 = sadd.s32 %s231, %s229
      %s233 = smul.addr %s232, 4
      %s234 = scalar_lea.vmem %s0, %s233
      %p235 = pneg %p57
      %p236 = pneg %p54
      %s237 = smul.u32 16, %s22
      %p238 = scmp.lt.s32.totalorder %s237, 15
      %s239 = scalar_select %p238, %s237, 15
      %p240 = scmp.lt.s32.totalorder %s21, 0
      %s241 = scalar_select %p240, %s21, 0
      %s242 = sadd.s32 %s241, %s239
      %s243 = smul.addr %s242, 4
      %s244 = scalar_lea.vmem %s1, %s243
      %p245 = pneg %p85
      %p246 = pneg %p82
      %p247 = scmp.lt.s32.totalorder %s21, 0
      %s248 = scalar_select %p247, %s21, 0
      %s249 = scalar_lea.vmem %s2, %s248
      %p250 = pneg %p111
      %p251 = pneg %p108
      %p252 = scmp.lt.s32.totalorder %s21, 0
      %s253 = scalar_select %p252, %s21, 0
      %s254 = scalar_lea.vmem %s3, %s253
      %p255 = pneg %p137
      %p256 = pneg %p134
      %p257 = pneg %p165
      %p258 = pneg %p162
      %s259 = smul.u32 32, %s20
      %p260 = scmp.lt.s32.totalorder %s259, 255
      %s261 = scalar_select %p260, %s259, 255
      %p262 = scmp.lt.s32.totalorder %s21, 0
      %s263 = scalar_select %p262, %s21, 0
      %s264 = sadd.s32 %s263, %s261
      %s265 = smul.addr %s264, 8
      %s266 = scalar_lea.vmem %s4, %s265
      %s267 = smul.u32 32, %s20
      %p268 = scmp.lt.s32.totalorder %s267, 255
      %s269 = scalar_select %p268, %s267, 255
      %p270 = scmp.lt.s32.totalorder %s22, 0
      %s271 = scalar_select %p270, %s22, 0
      %s272 = sadd.s32 %s271, %s269
      %s273 = smul.addr %s272, 4
      %s274 = scalar_lea.vmem %s0, %s273
      %s275 = smul.u32 32, %s20
      %s276 = smul.u32 16, %s22
      %p277 = scmp.lt.s32.totalorder %s276, 15
      %s278 = scalar_select %p277, %s276, 15
      %p279 = scmp.lt.s32.totalorder %s21, 0
      %s280 = scalar_select %p279, %s21, 0
      %s281 = sadd.s32 %s280, %s278
      %s282 = smul.addr %s281, 4
      %s283 = scalar_lea.vmem %s1, %s282
      %s284 = smul.u32 16, %s22
      %p285 = scmp.lt.s32.totalorder %s21, 0
      %s286 = scalar_select %p285, %s21, 0
      %s287 = scalar_lea.vmem %s2, %s286
      %p288 = scmp.lt.s32.totalorder %s21, 0
      %s289 = scalar_select %p288, %s21, 0
      %s290 = scalar_lea.vmem %s3, %s289
      %s291 = smul.u32 32, %s20
      %p292 = scmp.lt.s32.totalorder %s291, 255
      %s293 = scalar_select %p292, %s291, 255
      %p294 = scmp.lt.s32.totalorder %s21, 0
      %s295 = scalar_select %p294, %s21, 0
      %s296 = sadd.s32 %s295, %s293
      %s297 = smul.addr %s296, 8
      %s298 = scalar_lea.vmem %s4, %s297
      %s299 = smul.u32 32, %s20
      %p301 = scmp.eq.s32.totalorder %s22, 0
      // Predicated region
      $region37: #{_lambda_.30} parent=35 // pred_check
        %p302 = pneg %p301
      $region38: #{_lambda_.30} parent=35 // pred_check_branch
        %304 = sbr.rel (%p302) target = $region40
      $region39: #{_lambda_.30} parent=35 // pred_region
        %305 = vst [vmem:[#allocation2] sm:$0xff] 0.0
        %306 = vst [vmem:[#allocation2 + $0x8] sm:$0xff] 0.0
        %307 = vst [vmem:[#allocation2 + $0x10] sm:$0xff] 0.0
        %308 = vst [vmem:[#allocation2 + $0x18] sm:$0xff] 0.0
        %309 = vst [vmem:[#allocation2 + $0x20] sm:$0xff] 0.0
        %310 = vst [vmem:[#allocation2 + $0x28] sm:$0xff] 0.0
        %311 = vst [vmem:[#allocation2 + $0x30] sm:$0xff] 0.0
        %312 = vst [vmem:[#allocation2 + $0x38] sm:$0xff] 0.0
        %313 = vst [vmem:[#allocation2 + $0x40] sm:$0xff] 0.0
        %314 = vst [vmem:[#allocation2 + $0x48] sm:$0xff] 0.0
        %315 = vst [vmem:[#allocation2 + $0x50] sm:$0xff] 0.0
        %316 = vst [vmem:[#allocation2 + $0x58] sm:$0xff] 0.0
        %317 = vst [vmem:[#allocation2 + $0x60] sm:$0xff] 0.0
        %318 = vst [vmem:[#allocation2 + $0x68] sm:$0xff] 0.0
        %319 = vst [vmem:[#allocation2 + $0x70] sm:$0xff] 0.0
        %320 = vst [vmem:[#allocation2 + $0x78] sm:$0xff] 0.0
        %321 = vst [vmem:[#allocation2 + $0x80] sm:$0xff] 0.0
        %322 = vst [vmem:[#allocation2 + $0x88] sm:$0xff] 0.0
        %323 = vst [vmem:[#allocation2 + $0x90] sm:$0xff] 0.0
        %324 = vst [vmem:[#allocation2 + $0x98] sm:$0xff] 0.0
        %325 = vst [vmem:[#allocation2 + $0xa0] sm:$0xff] 0.0
        %326 = vst [vmem:[#allocation2 + $0xa8] sm:$0xff] 0.0
        %327 = vst [vmem:[#allocation2 + $0xb0] sm:$0xff] 0.0
        %328 = vst [vmem:[#allocation2 + $0xb8] sm:$0xff] 0.0
        %329 = vst [vmem:[#allocation2 + $0xc0] sm:$0xff] 0.0
        %330 = vst [vmem:[#allocation2 + $0xc8] sm:$0xff] 0.0
        %331 = vst [vmem:[#allocation2 + $0xd0] sm:$0xff] 0.0
        %332 = vst [vmem:[#allocation2 + $0xd8] sm:$0xff] 0.0
        %333 = vst [vmem:[#allocation2 + $0xe0] sm:$0xff] 0.0
        %334 = vst [vmem:[#allocation2 + $0xe8] sm:$0xff] 0.0
        %335 = vst [vmem:[#allocation2 + $0xf0] sm:$0xff] 0.0
        %336 = vst [vmem:[#allocation2 + $0xf8] sm:$0xff] 0.0
      $region40: #{_lambda_.30} parent=35 // pred_fallthru
        _
      %v337 = vld [vmem:[#allocation2] sm:$0xff]
      %v338 = vld [vmem:[#allocation2 + $0x8] sm:$0xff]
      %v339 = vld [vmem:[#allocation2 + $0x10] sm:$0xff]
      %v340 = vld [vmem:[#allocation2 + $0x18] sm:$0xff]
      %v341 = vld [vmem:[#allocation2 + $0x20] sm:$0xff]
      %v342 = vld [vmem:[#allocation2 + $0x28] sm:$0xff]
      %v343 = vld [vmem:[#allocation2 + $0x30] sm:$0xff]
      %v344 = vld [vmem:[#allocation2 + $0x38] sm:$0xff]
      %v345 = vld [vmem:[#allocation2 + $0x40] sm:$0xff]
      %v346 = vld [vmem:[#allocation2 + $0x48] sm:$0xff]
      %v347 = vld [vmem:[#allocation2 + $0x50] sm:$0xff]
      %v348 = vld [vmem:[#allocation2 + $0x58] sm:$0xff]
      %v349 = vld [vmem:[#allocation2 + $0x60] sm:$0xff]
      %v350 = vld [vmem:[#allocation2 + $0x68] sm:$0xff]
      %v351 = vld [vmem:[#allocation2 + $0x70] sm:$0xff]
      %v352 = vld [vmem:[#allocation2 + $0x78] sm:$0xff]
      %v353 = vld [vmem:[#allocation2 + $0x80] sm:$0xff]
      %v354 = vld [vmem:[#allocation2 + $0x88] sm:$0xff]
      %v355 = vld [vmem:[#allocation2 + $0x90] sm:$0xff]
      %v356 = vld [vmem:[#allocation2 + $0x98] sm:$0xff]
      %v357 = vld [vmem:[#allocation2 + $0xa0] sm:$0xff]
      %v358 = vld [vmem:[#allocation2 + $0xa8] sm:$0xff]
      %v359 = vld [vmem:[#allocation2 + $0xb0] sm:$0xff]
      %v360 = vld [vmem:[#allocation2 + $0xb8] sm:$0xff]
      %v361 = vld [vmem:[#allocation2 + $0xc0] sm:$0xff]
      %v362 = vld [vmem:[#allocation2 + $0xc8] sm:$0xff]
      %v363 = vld [vmem:[#allocation2 + $0xd0] sm:$0xff]
      %v364 = vld [vmem:[#allocation2 + $0xd8] sm:$0xff]
      %v365 = vld [vmem:[#allocation2 + $0xe0] sm:$0xff]
      %v366 = vld [vmem:[#allocation2 + $0xe8] sm:$0xff]
      %v367 = vld [vmem:[#allocation2 + $0xf0] sm:$0xff]
      %v368 = vld [vmem:[#allocation2 + $0xf8] sm:$0xff]
      %v369 = vld [vmem:[%s274] sm:$0xf]
      %v370 = vld [vmem:[%s274 + $0x4] sm:$0xf]
      %v371 = vld [vmem:[%s274 + $0x8] sm:$0xf]
      %v372 = vld [vmem:[%s274 + $0xc] sm:$0xf]
      %v373 = vld [vmem:[%s274 + $0x10] sm:$0xf]
      %v374 = vld [vmem:[%s274 + $0x14] sm:$0xf]
      %v375 = vld [vmem:[%s274 + $0x18] sm:$0xf]
      %v376 = vld [vmem:[%s274 + $0x1c] sm:$0xf]
      %v377 = vld [vmem:[%s274 + $0x20] sm:$0xf]
      %v378 = vld [vmem:[%s274 + $0x24] sm:$0xf]
      %v379 = vld [vmem:[%s274 + $0x28] sm:$0xf]
      %v380 = vld [vmem:[%s274 + $0x2c] sm:$0xf]
      %v381 = vld [vmem:[%s274 + $0x30] sm:$0xf]
      %v382 = vld [vmem:[%s274 + $0x34] sm:$0xf]
      %v383 = vld [vmem:[%s274 + $0x38] sm:$0xf]
      %v384 = vld [vmem:[%s274 + $0x3c] sm:$0xf]
      %v385 = vld [vmem:[%s274 + $0x40] sm:$0xf]
      %v386 = vld [vmem:[%s274 + $0x44] sm:$0xf]
      %v387 = vld [vmem:[%s274 + $0x48] sm:$0xf]
      %v388 = vld [vmem:[%s274 + $0x4c] sm:$0xf]
      %v389 = vld [vmem:[%s274 + $0x50] sm:$0xf]
      %v390 = vld [vmem:[%s274 + $0x54] sm:$0xf]
      %v391 = vld [vmem:[%s274 + $0x58] sm:$0xf]
      %v392 = vld [vmem:[%s274 + $0x5c] sm:$0xf]
      %v393 = vld [vmem:[%s274 + $0x60] sm:$0xf]
      %v394 = vld [vmem:[%s274 + $0x64] sm:$0xf]
      %v395 = vld [vmem:[%s274 + $0x68] sm:$0xf]
      %v396 = vld [vmem:[%s274 + $0x6c] sm:$0xf]
      %v397 = vld [vmem:[%s274 + $0x70] sm:$0xf]
      %v398 = vld [vmem:[%s274 + $0x74] sm:$0xf]
      %v399 = vld [vmem:[%s274 + $0x78] sm:$0xf]
      %v400 = vld [vmem:[%s274 + $0x7c] sm:$0xf]
      %v401 = vld [vmem:[%s283] sm:$0xf]
      %v402 = vld [vmem:[%s283 + $0x4] sm:$0xf]
      %v403 = vld [vmem:[%s283 + $0x8] sm:$0xf]
      %v404 = vld [vmem:[%s283 + $0xc] sm:$0xf]
      %v405 = vld [vmem:[%s283 + $0x10] sm:$0xf]
      %v406 = vld [vmem:[%s283 + $0x14] sm:$0xf]
      %v407 = vld [vmem:[%s283 + $0x18] sm:$0xf]
      %v408 = vld [vmem:[%s283 + $0x1c] sm:$0xf]
      %v409 = vld [vmem:[%s283 + $0x20] sm:$0xf]
      %v410 = vld [vmem:[%s283 + $0x24] sm:$0xf]
      %v411 = vld [vmem:[%s283 + $0x28] sm:$0xf]
      %v412 = vld [vmem:[%s283 + $0x2c] sm:$0xf]
      %v413 = vld [vmem:[%s283 + $0x30] sm:$0xf]
      %v414 = vld [vmem:[%s283 + $0x34] sm:$0xf]
      %v415 = vld [vmem:[%s283 + $0x38] sm:$0xf]
      %v416 = vld [vmem:[%s283 + $0x3c] sm:$0xf]
      %v449 = vunpack.c.l.b16 %v369
      %v450 = vunpack.c.l.b16 %v370
      %v451 = vunpack.c.l.b16 %v371
      %v452 = vunpack.c.l.b16 %v372
      %v453 = vunpack.c.l.b16 %v373
      %v454 = vunpack.c.l.b16 %v374
      %v455 = vunpack.c.l.b16 %v375
      %v456 = vunpack.c.l.b16 %v376
      %v457 = vunpack.c.l.b16 %v377
      %v458 = vunpack.c.l.b16 %v378
      %v459 = vunpack.c.l.b16 %v379
      %v460 = vunpack.c.l.b16 %v380
      %v461 = vunpack.c.l.b16 %v381
      %v462 = vunpack.c.l.b16 %v382
      %v463 = vunpack.c.l.b16 %v383
      %v464 = vunpack.c.l.b16 %v384
      %v465 = vunpack.c.l.b16 %v385
      %v466 = vunpack.c.l.b16 %v386
      %v467 = vunpack.c.l.b16 %v387
      %v468 = vunpack.c.l.b16 %v388
      %v469 = vunpack.c.l.b16 %v389
      %v470 = vunpack.c.l.b16 %v390
      %v471 = vunpack.c.l.b16 %v391
      %v472 = vunpack.c.l.b16 %v392
      %v473 = vunpack.c.l.b16 %v393
      %v474 = vunpack.c.l.b16 %v394
      %v475 = vunpack.c.l.b16 %v395
      %v476 = vunpack.c.l.b16 %v396
      %v477 = vunpack.c.l.b16 %v397
      %v478 = vunpack.c.l.b16 %v398
      %v479 = vunpack.c.l.b16 %v399
      %v480 = vunpack.c.l.b16 %v400
      %v481 = vpack.c.b16 %v450, %v449
      %v482 = vpack.c.b16 %v452, %v451
      %v483 = vpack.c.b16 %v454, %v453
      %v484 = vpack.c.b16 %v456, %v455
      %v485 = vpack.c.b16 %v458, %v457
      %v486 = vpack.c.b16 %v460, %v459
      %v487 = vpack.c.b16 %v462, %v461
      %v488 = vpack.c.b16 %v464, %v463
      %v489 = vpack.c.b16 %v466, %v465
      %v490 = vpack.c.b16 %v468, %v467
      %v491 = vpack.c.b16 %v470, %v469
      %v492 = vpack.c.b16 %v472, %v471
      %v493 = vpack.c.b16 %v474, %v473
      %v494 = vpack.c.b16 %v476, %v475
      %v495 = vpack.c.b16 %v478, %v477
      %v496 = vpack.c.b16 %v480, %v479
      %v529 = vunpack.c.l.b16 %v401
      %v530 = vunpack.c.l.b16 %v402
      %v531 = vunpack.c.l.b16 %v403
      %v532 = vunpack.c.l.b16 %v404
      %v533 = vunpack.c.l.b16 %v405
      %v534 = vunpack.c.l.b16 %v406
      %v535 = vunpack.c.l.b16 %v407
      %v536 = vunpack.c.l.b16 %v408
      %v537 = vunpack.c.l.b16 %v409
      %v538 = vunpack.c.l.b16 %v410
      %v539 = vunpack.c.l.b16 %v411
      %v540 = vunpack.c.l.b16 %v412
      %v541 = vunpack.c.l.b16 %v413
      %v542 = vunpack.c.l.b16 %v414
      %v543 = vunpack.c.l.b16 %v415
      %v544 = vunpack.c.l.b16 %v416
      %v545 = vpack.c.b16 %v530, %v529
      %v546 = vpack.c.b16 %v532, %v531
      %v547 = vpack.c.b16 %v534, %v533
      %v548 = vpack.c.b16 %v536, %v535
      %v549 = vpack.c.b16 %v538, %v537
      %v550 = vpack.c.b16 %v540, %v539
      %v551 = vpack.c.b16 %v542, %v541
      %v552 = vpack.c.b16 %v544, %v543
      %561 = vmatprep.subr.bf16.mxu0 0
      %562 = vmatpush1.bf16.msra.mxu0 %v545
      %563 = vmatprep.subr.bf16.mxu0 0
      %564 = vmatpush1.bf16.msra.mxu0 %v546
      %565 = vmatprep.subr.bf16.mxu0 0
      %566 = vmatpush1.bf16.msra.mxu0 %v547
      %567 = vmatprep.subr.bf16.mxu0 0
      %568 = vmatpush1.bf16.msra.mxu0 %v548
      %569 = vmatprep.subr.bf16.mxu0 0
      %570 = vmatpush1.bf16.msra.mxu0 %v549
      %571 = vmatprep.subr.bf16.mxu0 0
      %572 = vmatpush1.bf16.msra.mxu0 %v550
      %573 = vmatprep.subr.bf16.mxu0 0
      %574 = vmatpush1.bf16.msra.mxu0 %v551
      %575 = vmatprep.subr.bf16.mxu0 0
      %576 = vmatpush1.bf16.msra.mxu0 %v552
      %577 = vmatprep.subr.bf16.mxu0 0
      %578 = vmatpush1.bf16.msra.mxu0 0
      %579 = vmatprep.subr.bf16.mxu0 0
      %580 = vmatpush1.bf16.msra.mxu0 0
      %581 = vmatprep.subr.bf16.mxu0 0
      %582 = vmatpush1.bf16.msra.mxu0 0
      %583 = vmatprep.subr.bf16.mxu0 0
      %584 = vmatpush1.bf16.msra.mxu0 0
      %585 = vmatprep.subr.bf16.mxu0 0
      %586 = vmatpush1.bf16.msra.mxu0 0
      %587 = vmatprep.subr.bf16.mxu0 0
      %588 = vmatpush1.bf16.msra.mxu0 0
      %589 = vmatprep.subr.bf16.mxu0 0
      %590 = vmatpush1.bf16.msra.mxu0 0
      %591 = vmatprep.subr.bf16.mxu0 0
      %592 = vmatpush1.bf16.msra.mxu0 0
      %593 = vmatprep.mubr.bf16.mxu0 0
      %594 = vmatmul.mubr.bf16.gmra.mrb[0].mxu0 %v481
      %v595 = vpop.f32.mrb[0].mxu0
      %v596 = vadd.f32 0.0, %v595
      %v597 = vpop.f32.mrb[0].mxu0
      %v598 = vpop.f32.mrb[0].mxu0
      %v599 = vadd.f32 0.0, %v598
      %v600 = vpop.f32.mrb[0].mxu0
      %601 = vmatprep.mubr.bf16.mxu0 0
      %602 = vmatmul.mubr.bf16.gmra.mrb[0].mxu0 %v482
      %v603 = vpop.f32.mrb[0].mxu0
      %v604 = vadd.f32 0.0, %v603
      %v605 = vpop.f32.mrb[0].mxu0
      %v606 = vpop.f32.mrb[0].mxu0
      %v607 = vadd.f32 0.0, %v606
      %v608 = vpop.f32.mrb[0].mxu0
      %609 = vmatprep.mubr.bf16.mxu0 0
      %610 = vmatmul.mubr.bf16.gmra.mrb[0].mxu0 %v483
      %v611 = vpop.f32.mrb[0].mxu0
      %v612 = vadd.f32 0.0, %v611
      %v613 = vpop.f32.mrb[0].mxu0
      %v614 = vpop.f32.mrb[0].mxu0
      %v615 = vadd.f32 0.0, %v614
      %v616 = vpop.f32.mrb[0].mxu0
      %617 = vmatprep.mubr.bf16.mxu0 0
      %618 = vmatmul.mubr.bf16.gmra.mrb[0].mxu0 %v484
      %v619 = vpop.f32.mrb[0].mxu0
      %v620 = vadd.f32 0.0, %v619
      %v621 = vpop.f32.mrb[0].mxu0
      %v622 = vpop.f32.mrb[0].mxu0
      %v623 = vadd.f32 0.0, %v622
      %v624 = vpop.f32.mrb[0].mxu0
      %625 = vmatprep.mubr.bf16.mxu0 0
      %626 = vmatmul.mubr.bf16.gmra.mrb[0].mxu0 %v485
      %v627 = vpop.f32.mrb[0].mxu0
      %v628 = vadd.f32 0.0, %v627
      %v629 = vpop.f32.mrb[0].mxu0
      %v630 = vpop.f32.mrb[0].mxu0
      %v631 = vadd.f32 0.0, %v630
      %v632 = vpop.f32.mrb[0].mxu0
      %633 = vmatprep.mubr.bf16.mxu0 0
      %634 = vmatmul.mubr.bf16.gmra.mrb[0].mxu0 %v486
      %v635 = vpop.f32.mrb[0].mxu0
      %v636 = vadd.f32 0.0, %v635
      %v637 = vpop.f32.mrb[0].mxu0
      %v638 = vpop.f32.mrb[0].mxu0
      %v639 = vadd.f32 0.0, %v638
      %v640 = vpop.f32.mrb[0].mxu0
      %641 = vmatprep.mubr.bf16.mxu0 0
      %642 = vmatmul.mubr.bf16.gmra.mrb[0].mxu0 %v487
      %v643 = vpop.f32.mrb[0].mxu0
      %v644 = vadd.f32 0.0, %v643
      %v645 = vpop.f32.mrb[0].mxu0
      %v646 = vpop.f32.mrb[0].mxu0
      %v647 = vadd.f32 0.0, %v646
      %v648 = vpop.f32.mrb[0].mxu0
      %649 = vmatprep.mubr.bf16.mxu0 0
      %650 = vmatmul.mubr.bf16.gmra.mrb[0].mxu0 %v488
      %v651 = vpop.f32.mrb[0].mxu0
      %v652 = vadd.f32 0.0, %v651
      %v653 = vpop.f32.mrb[0].mxu0
      %v654 = vpop.f32.mrb[0].mxu0
      %v655 = vadd.f32 0.0, %v654
      %v656 = vpop.f32.mrb[0].mxu0
      %657 = vmatprep.mubr.bf16.mxu0 0
      %658 = vmatmul.mubr.bf16.gmra.mrb[0].mxu0 %v489
      %v659 = vpop.f32.mrb[0].mxu0
      %v660 = vadd.f32 0.0, %v659
      %v661 = vpop.f32.mrb[0].mxu0
      %v662 = vpop.f32.mrb[0].mxu0
      %v663 = vadd.f32 0.0, %v662
      %v664 = vpop.f32.mrb[0].mxu0
      %665 = vmatprep.mubr.bf16.mxu0 0
      %666 = vmatmul.mubr.bf16.gmra.mrb[0].mxu0 %v490
      %v667 = vpop.f32.mrb[0].mxu0
      %v668 = vadd.f32 0.0, %v667
      %v669 = vpop.f32.mrb[0].mxu0
      %v670 = vpop.f32.mrb[0].mxu0
      %v671 = vadd.f32 0.0, %v670
      %v672 = vpop.f32.mrb[0].mxu0
      %673 = vmatprep.mubr.bf16.mxu0 0
      %674 = vmatmul.mubr.bf16.gmra.mrb[0].mxu0 %v491
      %v675 = vpop.f32.mrb[0].mxu0
      %v676 = vadd.f32 0.0, %v675
      %v677 = vpop.f32.mrb[0].mxu0
      %v678 = vpop.f32.mrb[0].mxu0
      %v679 = vadd.f32 0.0, %v678
      %v680 = vpop.f32.mrb[0].mxu0
      %681 = vmatprep.mubr.bf16.mxu0 0
      %682 = vmatmul.mubr.bf16.gmra.mrb[0].mxu0 %v492
      %v683 = vpop.f32.mrb[0].mxu0
      %v684 = vadd.f32 0.0, %v683
      %v685 = vpop.f32.mrb[0].mxu0
      %v686 = vpop.f32.mrb[0].mxu0
      %v687 = vadd.f32 0.0, %v686
      %v688 = vpop.f32.mrb[0].mxu0
      %689 = vmatprep.mubr.bf16.mxu0 0
      %690 = vmatmul.mubr.bf16.gmra.mrb[0].mxu0 %v493
      %v691 = vpop.f32.mrb[0].mxu0
      %v692 = vadd.f32 0.0, %v691
      %v693 = vpop.f32.mrb[0].mxu0
      %v694 = vpop.f32.mrb[0].mxu0
      %v695 = vadd.f32 0.0, %v694
      %v696 = vpop.f32.mrb[0].mxu0
      %697 = vmatprep.mubr.bf16.mxu0 0
      %698 = vmatmul.mubr.bf16.gmra.mrb[0].mxu0 %v494
      %v699 = vpop.f32.mrb[0].mxu0
      %v700 = vadd.f32 0.0, %v699
      %v701 = vpop.f32.mrb[0].mxu0
      %v702 = vpop.f32.mrb[0].mxu0
      %v703 = vadd.f32 0.0, %v702
      %v704 = vpop.f32.mrb[0].mxu0
      %705 = vmatprep.mubr.bf16.mxu0 0
      %706 = vmatmul.mubr.bf16.gmra.mrb[0].mxu0 %v495
      %v707 = vpop.f32.mrb[0].mxu0
      %v708 = vadd.f32 0.0, %v707
      %v709 = vpop.f32.mrb[0].mxu0
      %v710 = vpop.f32.mrb[0].mxu0
      %v711 = vadd.f32 0.0, %v710
      %v712 = vpop.f32.mrb[0].mxu0
      %713 = vmatprep.mubr.bf16.mxu0 0
      %714 = vmatmul.mubr.bf16.gmra.mrb[0].mxu0 %v496
      %v715 = vpop.f32.mrb[0].mxu0
      %v716 = vadd.f32 0.0, %v715
      %v717 = vpop.f32.mrb[0].mxu0
      %v718 = vpop.f32.mrb[0].mxu0
      %v719 = vadd.f32 0.0, %v718
      %v720 = vpop.f32.mrb[0].mxu0
      %721 = vdwg.mxu0
      %v722 = vadd.f32 %v337, %v596
      %v723 = vadd.f32 %v338, %v599
      %v724 = vadd.f32 %v339, %v604
      %v725 = vadd.f32 %v340, %v607
      %v726 = vadd.f32 %v341, %v612
      %v727 = vadd.f32 %v342, %v615
      %v728 = vadd.f32 %v343, %v620
      %v729 = vadd.f32 %v344, %v623
      %v730 = vadd.f32 %v345, %v628
      %v731 = vadd.f32 %v346, %v631
      %v732 = vadd.f32 %v347, %v636
      %v733 = vadd.f32 %v348, %v639
      %v734 = vadd.f32 %v349, %v644
      %v735 = vadd.f32 %v350, %v647
      %v736 = vadd.f32 %v351, %v652
      %v737 = vadd.f32 %v352, %v655
      %v738 = vadd.f32 %v353, %v660
      %v739 = vadd.f32 %v354, %v663
      %v740 = vadd.f32 %v355, %v668
      %v741 = vadd.f32 %v356, %v671
      %v742 = vadd.f32 %v357, %v676
      %v743 = vadd.f32 %v358, %v679
      %v744 = vadd.f32 %v359, %v684
      %v745 = vadd.f32 %v360, %v687
      %v746 = vadd.f32 %v361, %v692
      %v747 = vadd.f32 %v362, %v695
      %v748 = vadd.f32 %v363, %v700
      %v749 = vadd.f32 %v364, %v703
      %v750 = vadd.f32 %v365, %v708
      %v751 = vadd.f32 %v366, %v711
      %v752 = vadd.f32 %v367, %v716
      %v753 = vadd.f32 %v368, %v719
      %754 = vst [vmem:[#allocation2] sm:$0xff] %v722
      %755 = vst [vmem:[#allocation2 + $0x8] sm:$0xff] %v723
      %756 = vst [vmem:[#allocation2 + $0x10] sm:$0xff] %v724
      %757 = vst [vmem:[#allocation2 + $0x18] sm:$0xff] %v725
      %758 = vst [vmem:[#allocation2 + $0x20] sm:$0xff] %v726
      %759 = vst [vmem:[#allocation2 + $0x28] sm:$0xff] %v727
      %760 = vst [vmem:[#allocation2 + $0x30] sm:$0xff] %v728
      %761 = vst [vmem:[#allocation2 + $0x38] sm:$0xff] %v729
      %762 = vst [vmem:[#allocation2 + $0x40] sm:$0xff] %v730
      %763 = vst [vmem:[#allocation2 + $0x48] sm:$0xff] %v731
      %764 = vst [vmem:[#allocation2 + $0x50] sm:$0xff] %v732
      %765 = vst [vmem:[#allocation2 + $0x58] sm:$0xff] %v733
      %766 = vst [vmem:[#allocation2 + $0x60] sm:$0xff] %v734
      %767 = vst [vmem:[#allocation2 + $0x68] sm:$0xff] %v735
      %768 = vst [vmem:[#allocation2 + $0x70] sm:$0xff] %v736
      %769 = vst [vmem:[#allocation2 + $0x78] sm:$0xff] %v737
      %770 = vst [vmem:[#allocation2 + $0x80] sm:$0xff] %v738
      %771 = vst [vmem:[#allocation2 + $0x88] sm:$0xff] %v739
      %772 = vst [vmem:[#allocation2 + $0x90] sm:$0xff] %v740
      %773 = vst [vmem:[#allocation2 + $0x98] sm:$0xff] %v741
      %774 = vst [vmem:[#allocation2 + $0xa0] sm:$0xff] %v742
      %775 = vst [vmem:[#allocation2 + $0xa8] sm:$0xff] %v743
      %776 = vst [vmem:[#allocation2 + $0xb0] sm:$0xff] %v744
      %777 = vst [vmem:[#allocation2 + $0xb8] sm:$0xff] %v745
      %778 = vst [vmem:[#allocation2 + $0xc0] sm:$0xff] %v746
      %779 = vst [vmem:[#allocation2 + $0xc8] sm:$0xff] %v747
      %780 = vst [vmem:[#allocation2 + $0xd0] sm:$0xff] %v748
      %781 = vst [vmem:[#allocation2 + $0xd8] sm:$0xff] %v749
      %782 = vst [vmem:[#allocation2 + $0xe0] sm:$0xff] %v750
      %783 = vst [vmem:[#allocation2 + $0xe8] sm:$0xff] %v751
      %784 = vst [vmem:[#allocation2 + $0xf0] sm:$0xff] %v752
      %785 = vst [vmem:[#allocation2 + $0xf8] sm:$0xff] %v753
      // Predicated region
      $region41: #{_lambda_.30} parent=35 // pred_check
        %p786 = pneg %p301
      $region42: #{_lambda_.30} parent=35 // pred_check_branch
        %788 = sbr.rel (%p786) target = $region44
      $region43: #{_lambda_.30} parent=35 // pred_region
        %v789 = vld [vmem:[#allocation2] sm:$0xff]
        %v790 = vld [vmem:[#allocation2 + $0x8] sm:$0xff]
        %v791 = vld [vmem:[#allocation2 + $0x10] sm:$0xff]
        %v792 = vld [vmem:[#allocation2 + $0x18] sm:$0xff]
        %v793 = vld [vmem:[#allocation2 + $0x20] sm:$0xff]
        %v794 = vld [vmem:[#allocation2 + $0x28] sm:$0xff]
        %v795 = vld [vmem:[#allocation2 + $0x30] sm:$0xff]
        %v796 = vld [vmem:[#allocation2 + $0x38] sm:$0xff]
        %v797 = vld [vmem:[#allocation2 + $0x40] sm:$0xff]
        %v798 = vld [vmem:[#allocation2 + $0x48] sm:$0xff]
        %v799 = vld [vmem:[#allocation2 + $0x50] sm:$0xff]
        %v800 = vld [vmem:[#allocation2 + $0x58] sm:$0xff]
        %v801 = vld [vmem:[#allocation2 + $0x60] sm:$0xff]
        %v802 = vld [vmem:[#allocation2 + $0x68] sm:$0xff]
        %v803 = vld [vmem:[#allocation2 + $0x70] sm:$0xff]
        %v804 = vld [vmem:[#allocation2 + $0x78] sm:$0xff]
        %v805 = vld [vmem:[#allocation2 + $0x80] sm:$0xff]
        %v806 = vld [vmem:[#allocation2 + $0x88] sm:$0xff]
        %v807 = vld [vmem:[#allocation2 + $0x90] sm:$0xff]
        %v808 = vld [vmem:[#allocation2 + $0x98] sm:$0xff]
        %v809 = vld [vmem:[#allocation2 + $0xa0] sm:$0xff]
        %v810 = vld [vmem:[#allocation2 + $0xa8] sm:$0xff]
        %v811 = vld [vmem:[#allocation2 + $0xb0] sm:$0xff]
        %v812 = vld [vmem:[#allocation2 + $0xb8] sm:$0xff]
        %v813 = vld [vmem:[#allocation2 + $0xc0] sm:$0xff]
        %v814 = vld [vmem:[#allocation2 + $0xc8] sm:$0xff]
        %v815 = vld [vmem:[#allocation2 + $0xd0] sm:$0xff]
        %v816 = vld [vmem:[#allocation2 + $0xd8] sm:$0xff]
        %v817 = vld [vmem:[#allocation2 + $0xe0] sm:$0xff]
        %v818 = vld [vmem:[#allocation2 + $0xe8] sm:$0xff]
        %v819 = vld [vmem:[#allocation2 + $0xf0] sm:$0xff]
        %v820 = vld [vmem:[#allocation2 + $0xf8] sm:$0xff]
        %v821 = vld [vmem:[%s287] sm:$0x1]
        %v823 = vlaneseq
        %v824 = vshrl.u32 %v823, 7
        %v825 = vsub.s32 0, %v824
        %v826 = vrot.slane %v821, %v825
        %v828 = vmul.f32 %v789, %v826
        %v829 = vmul.f32 %v790, %v826
        %v830 = vmul.f32 %v791, %v826
        %v831 = vmul.f32 %v792, %v826
        %v832 = vmul.f32 %v793, %v826
        %v833 = vmul.f32 %v794, %v826
        %v834 = vmul.f32 %v795, %v826
        %v835 = vmul.f32 %v796, %v826
        %v836 = vmul.f32 %v797, %v826
        %v837 = vmul.f32 %v798, %v826
        %v838 = vmul.f32 %v799, %v826
        %v839 = vmul.f32 %v800, %v826
        %v840 = vmul.f32 %v801, %v826
        %v841 = vmul.f32 %v802, %v826
        %v842 = vmul.f32 %v803, %v826
        %v843 = vmul.f32 %v804, %v826
        %v844 = vmul.f32 %v805, %v826
        %v845 = vmul.f32 %v806, %v826
        %v846 = vmul.f32 %v807, %v826
        %v847 = vmul.f32 %v808, %v826
        %v848 = vmul.f32 %v809, %v826
        %v849 = vmul.f32 %v810, %v826
        %v850 = vmul.f32 %v811, %v826
        %v851 = vmul.f32 %v812, %v826
        %v852 = vmul.f32 %v813, %v826
        %v853 = vmul.f32 %v814, %v826
        %v854 = vmul.f32 %v815, %v826
        %v855 = vmul.f32 %v816, %v826
        %v856 = vmul.f32 %v817, %v826
        %v857 = vmul.f32 %v818, %v826
        %v858 = vmul.f32 %v819, %v826
        %v859 = vmul.f32 %v820, %v826
        %v860 = vld [vmem:[%s290] sm:$0x1]
        %v862 = vlaneseq
        %v863 = vshrl.u32 %v862, 7
        %v864 = vsub.s32 0, %v863
        %v865 = vrot.slane %v860, %v864
        %v867 = vadd.f32 %v828, %v865
        %v868 = vadd.f32 %v829, %v865
        %v869 = vadd.f32 %v830, %v865
        %v870 = vadd.f32 %v831, %v865
        %v871 = vadd.f32 %v832, %v865
        %v872 = vadd.f32 %v833, %v865
        %v873 = vadd.f32 %v834, %v865
        %v874 = vadd.f32 %v835, %v865
        %v875 = vadd.f32 %v836, %v865
        %v876 = vadd.f32 %v837, %v865
        %v877 = vadd.f32 %v838, %v865
        %v878 = vadd.f32 %v839, %v865
        %v879 = vadd.f32 %v840, %v865
        %v880 = vadd.f32 %v841, %v865
        %v881 = vadd.f32 %v842, %v865
        %v882 = vadd.f32 %v843, %v865
        %v883 = vadd.f32 %v844, %v865
        %v884 = vadd.f32 %v845, %v865
        %v885 = vadd.f32 %v846, %v865
        %v886 = vadd.f32 %v847, %v865
        %v887 = vadd.f32 %v848, %v865
        %v888 = vadd.f32 %v849, %v865
        %v889 = vadd.f32 %v850, %v865
        %v890 = vadd.f32 %v851, %v865
        %v891 = vadd.f32 %v852, %v865
        %v892 = vadd.f32 %v853, %v865
        %v893 = vadd.f32 %v854, %v865
        %v894 = vadd.f32 %v855, %v865
        %v895 = vadd.f32 %v856, %v865
        %v896 = vadd.f32 %v857, %v865
        %v897 = vadd.f32 %v858, %v865
        %v898 = vadd.f32 %v859, %v865
        %v899 = vsub.f32 0.0, %v867
        %v900 = vsub.f32 0.0, %v868
        %v901 = vsub.f32 0.0, %v869
        %v902 = vsub.f32 0.0, %v870
        %v903 = vsub.f32 0.0, %v871
        %v904 = vsub.f32 0.0, %v872
        %v905 = vsub.f32 0.0, %v873
        %v906 = vsub.f32 0.0, %v874
        %v907 = vsub.f32 0.0, %v875
        %v908 = vsub.f32 0.0, %v876
        %v909 = vsub.f32 0.0, %v877
        %v910 = vsub.f32 0.0, %v878
        %v911 = vsub.f32 0.0, %v879
        %v912 = vsub.f32 0.0, %v880
        %v913 = vsub.f32 0.0, %v881
        %v914 = vsub.f32 0.0, %v882
        %v915 = vsub.f32 0.0, %v883
        %v916 = vsub.f32 0.0, %v884
        %v917 = vsub.f32 0.0, %v885
        %v918 = vsub.f32 0.0, %v886
        %v919 = vsub.f32 0.0, %v887
        %v920 = vsub.f32 0.0, %v888
        %v921 = vsub.f32 0.0, %v889
        %v922 = vsub.f32 0.0, %v890
        %v923 = vsub.f32 0.0, %v891
        %v924 = vsub.f32 0.0, %v892
        %v925 = vsub.f32 0.0, %v893
        %v926 = vsub.f32 0.0, %v894
        %v927 = vsub.f32 0.0, %v895
        %v928 = vsub.f32 0.0, %v896
        %v929 = vsub.f32 0.0, %v897
        %v930 = vsub.f32 0.0, %v898
        %v931 = vmul.f32 %v899, 1.442695
        %v932 = vpow.pop %v931
        %v933 = vmul.f32 %v900, 1.442695
        %v934 = vpow.pop %v933
        %v935 = vmul.f32 %v901, 1.442695
        %v936 = vpow.pop %v935
        %v937 = vmul.f32 %v902, 1.442695
        %v938 = vpow.pop %v937
        %v939 = vmul.f32 %v903, 1.442695
        %v940 = vpow.pop %v939
        %v941 = vmul.f32 %v904, 1.442695
        %v942 = vpow.pop %v941
        %v943 = vmul.f32 %v905, 1.442695
        %v944 = vpow.pop %v943
        %v945 = vmul.f32 %v906, 1.442695
        %v946 = vpow.pop %v945
        %v947 = vmul.f32 %v907, 1.442695
        %v948 = vpow.pop %v947
        %v949 = vmul.f32 %v908, 1.442695
        %v950 = vpow.pop %v949
        %v951 = vmul.f32 %v909, 1.442695
        %v952 = vpow.pop %v951
        %v953 = vmul.f32 %v910, 1.442695
        %v954 = vpow.pop %v953
        %v955 = vmul.f32 %v911, 1.442695
        %v956 = vpow.pop %v955
        %v957 = vmul.f32 %v912, 1.442695
        %v958 = vpow.pop %v957
        %v959 = vmul.f32 %v913, 1.442695
        %v960 = vpow.pop %v959
        %v961 = vmul.f32 %v914, 1.442695
        %v962 = vpow.pop %v961
        %v963 = vmul.f32 %v915, 1.442695
        %v964 = vpow.pop %v963
        %v965 = vmul.f32 %v916, 1.442695
        %v966 = vpow.pop %v965
        %v967 = vmul.f32 %v917, 1.442695
        %v968 = vpow.pop %v967
        %v969 = vmul.f32 %v918, 1.442695
        %v970 = vpow.pop %v969
        %v971 = vmul.f32 %v919, 1.442695
        %v972 = vpow.pop %v971
        %v973 = vmul.f32 %v920, 1.442695
        %v974 = vpow.pop %v973
        %v975 = vmul.f32 %v921, 1.442695
        %v976 = vpow.pop %v975
        %v977 = vmul.f32 %v922, 1.442695
        %v978 = vpow.pop %v977
        %v979 = vmul.f32 %v923, 1.442695
        %v980 = vpow.pop %v979
        %v981 = vmul.f32 %v924, 1.442695
        %v982 = vpow.pop %v981
        %v983 = vmul.f32 %v925, 1.442695
        %v984 = vpow.pop %v983
        %v985 = vmul.f32 %v926, 1.442695
        %v986 = vpow.pop %v985
        %v987 = vmul.f32 %v927, 1.442695
        %v988 = vpow.pop %v987
        %v989 = vmul.f32 %v928, 1.442695
        %v990 = vpow.pop %v989
        %v991 = vmul.f32 %v929, 1.442695
        %v992 = vpow.pop %v991
        %v993 = vmul.f32 %v930, 1.442695
        %v994 = vpow.pop %v993
        %v995 = vadd.f32 %v932, 1.0
        %v996 = vadd.f32 %v934, 1.0
        %v997 = vadd.f32 %v936, 1.0
        %v998 = vadd.f32 %v938, 1.0
        %v999 = vadd.f32 %v940, 1.0
        %v1000 = vadd.f32 %v942, 1.0
        %v1001 = vadd.f32 %v944, 1.0
        %v1002 = vadd.f32 %v946, 1.0
        %v1003 = vadd.f32 %v948, 1.0
        %v1004 = vadd.f32 %v950, 1.0
        %v1005 = vadd.f32 %v952, 1.0
        %v1006 = vadd.f32 %v954, 1.0
        %v1007 = vadd.f32 %v956, 1.0
        %v1008 = vadd.f32 %v958, 1.0
        %v1009 = vadd.f32 %v960, 1.0
        %v1010 = vadd.f32 %v962, 1.0
        %v1011 = vadd.f32 %v964, 1.0
        %v1012 = vadd.f32 %v966, 1.0
        %v1013 = vadd.f32 %v968, 1.0
        %v1014 = vadd.f32 %v970, 1.0
        %v1015 = vadd.f32 %v972, 1.0
        %v1016 = vadd.f32 %v974, 1.0
        %v1017 = vadd.f32 %v976, 1.0
        %v1018 = vadd.f32 %v978, 1.0
        %v1019 = vadd.f32 %v980, 1.0
        %v1020 = vadd.f32 %v982, 1.0
        %v1021 = vadd.f32 %v984, 1.0
        %v1022 = vadd.f32 %v986, 1.0
        %v1023 = vadd.f32 %v988, 1.0
        %v1024 = vadd.f32 %v990, 1.0
        %v1025 = vadd.f32 %v992, 1.0
        %v1026 = vadd.f32 %v994, 1.0
        %v1027 = vrcp.pop %v995
        %v1028 = vmul.f32 1.0, %v1027
        %v1029 = vrcp.pop %v996
        %v1030 = vmul.f32 1.0, %v1029
        %v1031 = vrcp.pop %v997
        %v1032 = vmul.f32 1.0, %v1031
        %v1033 = vrcp.pop %v998
        %v1034 = vmul.f32 1.0, %v1033
        %v1035 = vrcp.pop %v999
        %v1036 = vmul.f32 1.0, %v1035
        %v1037 = vrcp.pop %v1000
        %v1038 = vmul.f32 1.0, %v1037
        %v1039 = vrcp.pop %v1001
        %v1040 = vmul.f32 1.0, %v1039
        %v1041 = vrcp.pop %v1002
        %v1042 = vmul.f32 1.0, %v1041
        %v1043 = vrcp.pop %v1003
        %v1044 = vmul.f32 1.0, %v1043
        %v1045 = vrcp.pop %v1004
        %v1046 = vmul.f32 1.0, %v1045
        %v1047 = vrcp.pop %v1005
        %v1048 = vmul.f32 1.0, %v1047
        %v1049 = vrcp.pop %v1006
        %v1050 = vmul.f32 1.0, %v1049
        %v1051 = vrcp.pop %v1007
        %v1052 = vmul.f32 1.0, %v1051
        %v1053 = vrcp.pop %v1008
        %v1054 = vmul.f32 1.0, %v1053
        %v1055 = vrcp.pop %v1009
        %v1056 = vmul.f32 1.0, %v1055
        %v1057 = vrcp.pop %v1010
        %v1058 = vmul.f32 1.0, %v1057
        %v1059 = vrcp.pop %v1011
        %v1060 = vmul.f32 1.0, %v1059
        %v1061 = vrcp.pop %v1012
        %v1062 = vmul.f32 1.0, %v1061
        %v1063 = vrcp.pop %v1013
        %v1064 = vmul.f32 1.0, %v1063
        %v1065 = vrcp.pop %v1014
        %v1066 = vmul.f32 1.0, %v1065
        %v1067 = vrcp.pop %v1015
        %v1068 = vmul.f32 1.0, %v1067
        %v1069 = vrcp.pop %v1016
        %v1070 = vmul.f32 1.0, %v1069
        %v1071 = vrcp.pop %v1017
        %v1072 = vmul.f32 1.0, %v1071
        %v1073 = vrcp.pop %v1018
        %v1074 = vmul.f32 1.0, %v1073
        %v1075 = vrcp.pop %v1019
        %v1076 = vmul.f32 1.0, %v1075
        %v1077 = vrcp.pop %v1020
        %v1078 = vmul.f32 1.0, %v1077
        %v1079 = vrcp.pop %v1021
        %v1080 = vmul.f32 1.0, %v1079
        %v1081 = vrcp.pop %v1022
        %v1082 = vmul.f32 1.0, %v1081
        %v1083 = vrcp.pop %v1023
        %v1084 = vmul.f32 1.0, %v1083
        %v1085 = vrcp.pop %v1024
        %v1086 = vmul.f32 1.0, %v1085
        %v1087 = vrcp.pop %v1025
        %v1088 = vmul.f32 1.0, %v1087
        %v1089 = vrcp.pop %v1026
        %v1090 = vmul.f32 1.0, %v1089
        %v1091 = vmul.f32 %v867, %v1028
        %v1092 = vmul.f32 %v868, %v1030
        %v1093 = vmul.f32 %v869, %v1032
        %v1094 = vmul.f32 %v870, %v1034
        %v1095 = vmul.f32 %v871, %v1036
        %v1096 = vmul.f32 %v872, %v1038
        %v1097 = vmul.f32 %v873, %v1040
        %v1098 = vmul.f32 %v874, %v1042
        %v1099 = vmul.f32 %v875, %v1044
        %v1100 = vmul.f32 %v876, %v1046
        %v1101 = vmul.f32 %v877, %v1048
        %v1102 = vmul.f32 %v878, %v1050
        %v1103 = vmul.f32 %v879, %v1052
        %v1104 = vmul.f32 %v880, %v1054
        %v1105 = vmul.f32 %v881, %v1056
        %v1106 = vmul.f32 %v882, %v1058
        %v1107 = vmul.f32 %v883, %v1060
        %v1108 = vmul.f32 %v884, %v1062
        %v1109 = vmul.f32 %v885, %v1064
        %v1110 = vmul.f32 %v886, %v1066
        %v1111 = vmul.f32 %v887, %v1068
        %v1112 = vmul.f32 %v888, %v1070
        %v1113 = vmul.f32 %v889, %v1072
        %v1114 = vmul.f32 %v890, %v1074
        %v1115 = vmul.f32 %v891, %v1076
        %v1116 = vmul.f32 %v892, %v1078
        %v1117 = vmul.f32 %v893, %v1080
        %v1118 = vmul.f32 %v894, %v1082
        %v1119 = vmul.f32 %v895, %v1084
        %v1120 = vmul.f32 %v896, %v1086
        %v1121 = vmul.f32 %v897, %v1088
        %v1122 = vmul.f32 %v898, %v1090
        %1123 = vst [vmem:[%s298] sm:$0xff] %v1091
        %1124 = vst [vmem:[%s298 + $0x8] sm:$0xff] %v1092
        %1125 = vst [vmem:[%s298 + $0x10] sm:$0xff] %v1093
        %1126 = vst [vmem:[%s298 + $0x18] sm:$0xff] %v1094
        %1127 = vst [vmem:[%s298 + $0x20] sm:$0xff] %v1095
        %1128 = vst [vmem:[%s298 + $0x28] sm:$0xff] %v1096
        %1129 = vst [vmem:[%s298 + $0x30] sm:$0xff] %v1097
        %1130 = vst [vmem:[%s298 + $0x38] sm:$0xff] %v1098
        %1131 = vst [vmem:[%s298 + $0x40] sm:$0xff] %v1099
        %1132 = vst [vmem:[%s298 + $0x48] sm:$0xff] %v1100
        %1133 = vst [vmem:[%s298 + $0x50] sm:$0xff] %v1101
        %1134 = vst [vmem:[%s298 + $0x58] sm:$0xff] %v1102
        %1135 = vst [vmem:[%s298 + $0x60] sm:$0xff] %v1103
        %1136 = vst [vmem:[%s298 + $0x68] sm:$0xff] %v1104
        %1137 = vst [vmem:[%s298 + $0x70] sm:$0xff] %v1105
        %1138 = vst [vmem:[%s298 + $0x78] sm:$0xff] %v1106
        %1139 = vst [vmem:[%s298 + $0x80] sm:$0xff] %v1107
        %1140 = vst [vmem:[%s298 + $0x88] sm:$0xff] %v1108
        %1141 = vst [vmem:[%s298 + $0x90] sm:$0xff] %v1109
        %1142 = vst [vmem:[%s298 + $0x98] sm:$0xff] %v1110
        %1143 = vst [vmem:[%s298 + $0xa0] sm:$0xff] %v1111
        %1144 = vst [vmem:[%s298 + $0xa8] sm:$0xff] %v1112
        %1145 = vst [vmem:[%s298 + $0xb0] sm:$0xff] %v1113
        %1146 = vst [vmem:[%s298 + $0xb8] sm:$0xff] %v1114
        %1147 = vst [vmem:[%s298 + $0xc0] sm:$0xff] %v1115
        %1148 = vst [vmem:[%s298 + $0xc8] sm:$0xff] %v1116
        %1149 = vst [vmem:[%s298 + $0xd0] sm:$0xff] %v1117
        %1150 = vst [vmem:[%s298 + $0xd8] sm:$0xff] %v1118
        %1151 = vst [vmem:[%s298 + $0xe0] sm:$0xff] %v1119
        %1152 = vst [vmem:[%s298 + $0xe8] sm:$0xff] %v1120
        %1153 = vst [vmem:[%s298 + $0xf0] sm:$0xff] %v1121
        %1154 = vst [vmem:[%s298 + $0xf8] sm:$0xff] %v1122
      $region44: #{_lambda_.30} parent=35 // pred_fallthru
        _
      %s1155 = smul.u32 32, %s20
      %p1156 = scmp.lt.s32.totalorder %s1155, 255
      %s1157 = scalar_select %p1156, %s1155, 255
      %p1158 = scmp.lt.s32.totalorder %s21, 0
      %s1159 = scalar_select %p1158, %s21, 0
      %s1160 = sadd.s32 %s1159, %s1157
      %s1161 = smul.addr %s1160, 8
      %s1162 = scalar_lea.vmem %s4, %s1161
      // Predicated region
      $region45: #{_lambda_.30} parent=35 // pred_check
        %p1163 = pneg %p162
      $region46: #{_lambda_.30} parent=35 // pred_check_branch
        %1165 = sbr.rel (%p1163) target = $region48
      $region47: #{_lambda_.30} parent=35 // pred_region
        %s1166 = smul.u32 32, %s20
      $region48: #{_lambda_.30} parent=35 // pred_fallthru
        _
    $region36: #{_lambda_.30} parent=5 // pred_fallthru
      _
    %p1167 = scmp.le.s32.totalorder 2, %s10
    // Predicated region
    $region49: #{_lambda_.30} parent=5 // pred_check
      %p1168 = pneg %p1167
    $region50: #{_lambda_.30} parent=5 // pred_check_branch
      %1170 = sbr.rel (%p1168) target = $region52
    $region51: #{_lambda_.30} parent=5 // pred_region
      %s1171 = ssub.s32 %s10, 2
      // Predicated region
      $region53: #{_lambda_.30} parent=51 // pred_check
        %p1172 = pneg %p168
      $region54: #{_lambda_.30} parent=51 // pred_check_branch
        %1174 = sbr.rel (%p1172) target = $region56
      $region55: #{_lambda_.30} parent=51 // pred_region
        %s1175 = smul.u32 32, %s23
        %p1176 = scmp.lt.s32.totalorder %s1175, 255
        %s1177 = scalar_select %p1176, %s1175, 255
        %p1178 = scmp.lt.s32.totalorder %s24, 0
        %s1179 = scalar_select %p1178, %s24, 0
        %s1180 = sadd.s32 %s1179, %s1177
        %s1181 = smul.addr %s1180, 8
        %s1182 = scalar_lea.vmem %s4, %s1181
      $region56: #{_lambda_.30} parent=51 // pred_fallthru
        _
    $region52: #{_lambda_.30} parent=5 // pred_fallthru
      _
  $region6: #{_lambda_.30} parent=0 // loop_footer
    %s14 = sadd.s32 1, %s10
  $region7: #{_lambda_.30} parent=0 // loop_footer_branch
    %9 = sbr.rel target = $region3
  $region8: #{_lambda_.30} parent=0 // loop_exit
    _

// kernel: _lambda_.31
$region0: #{_lambda_.31}
  #allocation0 [shape = 'u32[]', space=smem, size = 0x4, offset = 0x4, fixed_abs, tag = 'smem constant byte address 0x4 - core index']
  #allocation1 [shape = 'u32[144,128]{1,0:T(1,128)}', space=vmem, size = 0x12000, scoped, tag = 'internal scratch']
  #allocation2 [shape = 'f32[256,128]{1,0:T(8,128)}', space=vmem, size = 0x20000, scoped, tag = 'scratch operand']
  %s0 = inlined_call_operand.vmem [shape: bf16[512,128], index: 0, kind: input, shape index: {}]
  %s1 = inlined_call_operand.vmem [shape: bf16[128,128], index: 1, kind: input, shape index: {}]
  %s2 = inlined_call_operand.vmem [shape: f32[1,128], index: 2, kind: input, shape index: {}]
  %s3 = inlined_call_operand.vmem [shape: f32[1,128], index: 3, kind: input, shape index: {}]
  %s4 = inlined_call_operand.vmem [shape: f32[512,128], index: 4, kind: output, shape index: {}]
  %s5 = sld [smem:[#allocation0]]
  $region57: #{_lambda_.31} parent=0
    _
  %s7 = ssub.s32 1, %s5
  %s8 = scalar_select 0, %s7, %s5
  loop: start=0, step=1, limit=4
  $region2: #{_lambda_.31} parent=0 // loop_pre_header
    _
  $region3: #{_lambda_.31} parent=0 // loop_header
    %s10 = sphi 0, %s14
    %p11 = scmp.ge.s32.totalorder %s10, 4
    %s17 = sphi 0, %s36
    %s18 = sphi 0, %s32
    %s19 = sphi 0, %s28
    %s20 = sphi 0, %s17
    %s21 = sphi 0, %s18
    %s22 = sphi 0, %s19
    %s23 = sphi 0, %s20
    %s24 = sphi 0, %s21
    %s25 = sphi 0, %s22
    %s41 = sphi 0, %s43
    %s44 = sphi 0, %s41
    %s45 = sphi 0, %s44
    %s61 = sphi 0, %s45
    %s69 = sphi 0, %s71
    %s72 = sphi 0, %s69
    %s73 = sphi 0, %s72
    %s89 = sphi 0, %s73
    %s95 = sphi 0, %s97
    %s98 = sphi 0, %s95
    %s99 = sphi 0, %s98
    %s115 = sphi 0, %s99
    %s121 = sphi 0, %s123
    %s124 = sphi 0, %s121
    %s125 = sphi 0, %s124
    %s141 = sphi 0, %s125
    %s149 = sphi 0, %s151
    %s152 = sphi 0, %s149
    %s153 = sphi 0, %s152
    %s169 = sphi 0, %s153
  $region4: #{_lambda_.31} parent=0 // loop_header_branch
    %13 = sbr.rel (%p11) target = $region8
  $region5: #{_lambda_.31} parent=0 // loop_body
    %s15 = ssub.s32 %s10, 1
    %s16 = ssub.s32 %s10, 2
    %s26 = sadd.s32 1, %s19
    %p27 = scmp.ge.s32.totalorder %s26, 1
    %s28 = scalar_select %p27, 0, %s26
    %s29 = sadd.s32 1, %s18
    %s30 = scalar_select %p27, %s29, %s18
    %p31 = scmp.ge.s32.totalorder %s30, 1
    %s32 = scalar_select %p31, 0, %s30
    %s33 = sadd.s32 1, %s17
    %s34 = scalar_select %p31, %s33, %s17
    %p35 = scmp.ge.s32.totalorder %s34, 2
    %s36 = scalar_select %p35, 0, %s34
    %s37 = ssub.s32 %s17, %s36
    %s38 = ssub.s32 %s19, %s28
    %s39 = sor.u32 %s37, %s38
    %p40 = scmp.eq.s32.totalorder %s39, 0
    %s42 = sadd.s32 %s41, 1
    %s43 = scalar_select %p40, %s41, %s42
    %p46 = pneg %p40
    %p47 = scmp.eq.s32.totalorder %s10, 1
    %p48 = por %p46, %p47
    %p49 = scmp.ne.s32.totalorder %s41, %s44
    %p50 = scmp.eq.s32.totalorder %s10, 0
    %p51 = por %p49, %p50
    %p52 = scmp.ne.s32.totalorder %s41, %s44
    %p53 = scmp.eq.s32.totalorder %s15, 1
    %p54 = por %p52, %p53
    %p55 = scmp.ne.s32.totalorder %s44, %s45
    %p56 = scmp.eq.s32.totalorder %s15, 0
    %p57 = por %p55, %p56
    %p58 = scmp.ne.s32.totalorder %s44, %s45
    %p59 = scmp.eq.s32.totalorder %s16, 1
    %p60 = por %p58, %p59
    %p62 = scmp.ne.s32.totalorder %s45, %s61
    %p63 = scmp.eq.s32.totalorder %s16, 0
    %p64 = por %p62, %p63
    %s65 = ssub.s32 %s19, %s28
    %s66 = ssub.s32 %s18, %s32
    %s67 = sor.u32 %s65, %s66
    %p68 = scmp.eq.s32.totalorder %s67, 0
    %s70 = sadd.s32 %s69, 1
    %s71 = scalar_select %p68, %s69, %s70
    %p74 = pneg %p68
    %p75 = scmp.eq.s32.totalorder %s10, 1
    %p76 = por %p74, %p75
    %p77 = scmp.ne.s32.totalorder %s69, %s72
    %p78 = scmp.eq.s32.totalorder %s10, 0
    %p79 = por %p77, %p78
    %p80 = scmp.ne.s32.totalorder %s69, %s72
    %p81 = scmp.eq.s32.totalorder %s15, 1
    %p82 = por %p80, %p81
    %p83 = scmp.ne.s32.totalorder %s72, %s73
    %p84 = scmp.eq.s32.totalorder %s15, 0
    %p85 = por %p83, %p84
    %p86 = scmp.ne.s32.totalorder %s72, %s73
    %p87 = scmp.eq.s32.totalorder %s16, 1
    %p88 = por %p86, %p87
    %p90 = scmp.ne.s32.totalorder %s73, %s89
    %p91 = scmp.eq.s32.totalorder %s16, 0
    %p92 = por %p90, %p91
    %s93 = ssub.s32 %s18, %s32
    %p94 = scmp.eq.s32.totalorder %s93, 0
    %s96 = sadd.s32 %s95, 1
    %s97 = scalar_select %p94, %s95, %s96
    %p100 = pneg %p94
    %p101 = scmp.eq.s32.totalorder %s10, 1
    %p102 = por %p100, %p101
    %p103 = scmp.ne.s32.totalorder %s95, %s98
    %p104 = scmp.eq.s32.totalorder %s10, 0
    %p105 = por %p103, %p104
    %p106 = scmp.ne.s32.totalorder %s95, %s98
    %p107 = scmp.eq.s32.totalorder %s15, 1
    %p108 = por %p106, %p107
    %p109 = scmp.ne.s32.totalorder %s98, %s99
    %p110 = scmp.eq.s32.totalorder %s15, 0
    %p111 = por %p109, %p110
    %p112 = scmp.ne.s32.totalorder %s98, %s99
    %p113 = scmp.eq.s32.totalorder %s16, 1
    %p114 = por %p112, %p113
    %p116 = scmp.ne.s32.totalorder %s99, %s115
    %p117 = scmp.eq.s32.totalorder %s16, 0
    %p118 = por %p116, %p117
    %s119 = ssub.s32 %s18, %s32
    %p120 = scmp.eq.s32.totalorder %s119, 0
    %s122 = sadd.s32 %s121, 1
    %s123 = scalar_select %p120, %s121, %s122
    %p126 = pneg %p120
    %p127 = scmp.eq.s32.totalorder %s10, 1
    %p128 = por %p126, %p127
    %p129 = scmp.ne.s32.totalorder %s121, %s124
    %p130 = scmp.eq.s32.totalorder %s10, 0
    %p131 = por %p129, %p130
    %p132 = scmp.ne.s32.totalorder %s121, %s124
    %p133 = scmp.eq.s32.totalorder %s15, 1
    %p134 = por %p132, %p133
    %p135 = scmp.ne.s32.totalorder %s124, %s125
    %p136 = scmp.eq.s32.totalorder %s15, 0
    %p137 = por %p135, %p136
    %p138 = scmp.ne.s32.totalorder %s124, %s125
    %p139 = scmp.eq.s32.totalorder %s16, 1
    %p140 = por %p138, %p139
    %p142 = scmp.ne.s32.totalorder %s125, %s141
    %p143 = scmp.eq.s32.totalorder %s16, 0
    %p144 = por %p142, %p143
    %s145 = ssub.s32 %s17, %s36
    %s146 = ssub.s32 %s18, %s32
    %s147 = sor.u32 %s145, %s146
    %p148 = scmp.eq.s32.totalorder %s147, 0
    %s150 = sadd.s32 %s149, 1
    %s151 = scalar_select %p148, %s149, %s150
    %p154 = pneg %p148
    %p155 = scmp.eq.s32.totalorder %s10, 1
    %p156 = por %p154, %p155
    %p157 = scmp.ne.s32.totalorder %s149, %s152
    %p158 = scmp.eq.s32.totalorder %s10, 0
    %p159 = por %p157, %p158
    %p160 = scmp.ne.s32.totalorder %s149, %s152
    %p161 = scmp.eq.s32.totalorder %s15, 1
    %p162 = por %p160, %p161
    %p163 = scmp.ne.s32.totalorder %s152, %s153
    %p164 = scmp.eq.s32.totalorder %s15, 0
    %p165 = por %p163, %p164
    %p166 = scmp.ne.s32.totalorder %s152, %s153
    %p167 = scmp.eq.s32.totalorder %s16, 1
    %p168 = por %p166, %p167
    %p170 = scmp.ne.s32.totalorder %s153, %s169
    %p171 = scmp.eq.s32.totalorder %s16, 0
    %p172 = por %p170, %p171
    %p173 = scmp.le.s32.totalorder 1, %s10
    %p174 = scmp.lt.s32.totalorder %s10, 3
    %p175 = pnand %p173, %p174
    %p176 = pneg %p175
    // Predicated region
    $region9: #{_lambda_.31} parent=5 // pred_check
      _
    $region10: #{_lambda_.31} parent=5 // pred_check_branch
      %178 = sbr.rel (%p175) target = $region12
    $region11: #{_lambda_.31} parent=5 // pred_region
      %s179 = ssub.s32 %s10, 1
      // Predicated region
      $region13: #{_lambda_.31} parent=11 // pred_check
        %p180 = pneg %p85
      $region14: #{_lambda_.31} parent=11 // pred_check_branch
        %182 = sbr.rel (%p180) target = $region16
      $region15: #{_lambda_.31} parent=11 // pred_region
        %s183 = smul.u32 16, %s22
        %p184 = scmp.lt.s32.totalorder %s183, 15
        %s185 = scalar_select %p184, %s183, 15
        %p186 = scmp.lt.s32.totalorder %s21, 0
        %s187 = scalar_select %p186, %s21, 0
        %s188 = sadd.s32 %s187, %s185
        %s189 = smul.addr %s188, 4
        %s190 = scalar_lea.vmem %s1, %s189
        %s191 = smul.u32 16, %s22
      $region16: #{_lambda_.31} parent=11 // pred_fallthru
        _
      // Predicated region
      $region17: #{_lambda_.31} parent=11 // pred_check
        %p192 = pneg %p111
      $region18: #{_lambda_.31} parent=11 // pred_check_branch
        %194 = sbr.rel (%p192) target = $region20
      $region19: #{_lambda_.31} parent=11 // pred_region
        %p195 = scmp.lt.s32.totalorder %s21, 0
        %s196 = scalar_select %p195, %s21, 0
        %s197 = scalar_lea.vmem %s2, %s196
      $region20: #{_lambda_.31} parent=11 // pred_fallthru
        _
      // Predicated region
      $region21: #{_lambda_.31} parent=11 // pred_check
        %p198 = pneg %p137
      $region22: #{_lambda_.31} parent=11 // pred_check_branch
        %200 = sbr.rel (%p198) target = $region24
      $region23: #{_lambda_.31} parent=11 // pred_region
        %p201 = scmp.lt.s32.totalorder %s21, 0
        %s202 = scalar_select %p201, %s21, 0
        %s203 = scalar_lea.vmem %s3, %s202
      $region24: #{_lambda_.31} parent=11 // pred_fallthru
        _
    $region12: #{_lambda_.31} parent=5 // pred_fallthru
      _
    %p204 = scmp.lt.s32.totalorder %s10, 2
    // Predicated region
    $region25: #{_lambda_.31} parent=5 // pred_check
      %p205 = pneg %p204
    $region26: #{_lambda_.31} parent=5 // pred_check_branch
      %207 = sbr.rel (%p205) target = $region28
    $region27: #{_lambda_.31} parent=5 // pred_region
      // Predicated region
      $region29: #{_lambda_.31} parent=27 // pred_check
        %p208 = pneg %p51
      $region30: #{_lambda_.31} parent=27 // pred_check_branch
        %210 = sbr.rel (%p208) target = $region32
      $region31: #{_lambda_.31} parent=27 // pred_region
        %s211 = smul.u32 32, %s17
        %p212 = scmp.lt.s32.totalorder %s211, 63
        %s213 = scalar_select %p212, %s211, 63
        %p214 = scmp.lt.s32.totalorder %s19, 0
        %s215 = scalar_select %p214, %s19, 0
        %s216 = sadd.s32 %s215, %s213
        %s217 = smul.addr %s216, 4
        %s218 = scalar_lea.vmem %s0, %s217
        %s219 = smul.u32 32, %s17
      $region32: #{_lambda_.31} parent=27 // pred_fallthru
        _
    $region28: #{_lambda_.31} parent=5 // pred_fallthru
      _
    %p220 = scmp.le.s32.totalorder 1, %s10
    %p221 = scmp.lt.s32.totalorder %s10, 3
    %p222 = pnand %p220, %p221
    %p223 = pneg %p222
    // Predicated region
    $region33: #{_lambda_.31} parent=5 // pred_check
      _
    $region34: #{_lambda_.31} parent=5 // pred_check_branch
      %225 = sbr.rel (%p222) target = $region36
    $region35: #{_lambda_.31} parent=5 // pred_region
      %s226 = ssub.s32 %s10, 1
      %s227 = smul.u32 32, %s20
      %p228 = scmp.lt.s32.totalorder %s227, 63
      %s229 = scalar_select %p228, %s227, 63
      %p230 = scmp.lt.s32.totalorder %s22, 0
      %s231 = scalar_select %p230, %s22, 0
      %s232 = sadd.s32 %s231, %s229
      %s233 = smul.addr %s232, 4
      %s234 = scalar_lea.vmem %s0, %s233
      %p235 = pneg %p57
      %p236 = pneg %p54
      %s237 = smul.u32 16, %s22
      %p238 = scmp.lt.s32.totalorder %s237, 15
      %s239 = scalar_select %p238, %s237, 15
      %p240 = scmp.lt.s32.totalorder %s21, 0
      %s241 = scalar_select %p240, %s21, 0
      %s242 = sadd.s32 %s241, %s239
      %s243 = smul.addr %s242, 4
      %s244 = scalar_lea.vmem %s1, %s243
      %p245 = pneg %p85
      %p246 = pneg %p82
      %p247 = scmp.lt.s32.totalorder %s21, 0
      %s248 = scalar_select %p247, %s21, 0
      %s249 = scalar_lea.vmem %s2, %s248
      %p250 = pneg %p111
      %p251 = pneg %p108
      %p252 = scmp.lt.s32.totalorder %s21, 0
      %s253 = scalar_select %p252, %s21, 0
      %s254 = scalar_lea.vmem %s3, %s253
      %p255 = pneg %p137
      %p256 = pneg %p134
      %p257 = pneg %p165
      %p258 = pneg %p162
      %s259 = smul.u32 32, %s20
      %p260 = scmp.lt.s32.totalorder %s259, 63
      %s261 = scalar_select %p260, %s259, 63
      %p262 = scmp.lt.s32.totalorder %s21, 0
      %s263 = scalar_select %p262, %s21, 0
      %s264 = sadd.s32 %s263, %s261
      %s265 = smul.addr %s264, 8
      %s266 = scalar_lea.vmem %s4, %s265
      %s267 = smul.u32 32, %s20
      %p268 = scmp.lt.s32.totalorder %s267, 63
      %s269 = scalar_select %p268, %s267, 63
      %p270 = scmp.lt.s32.totalorder %s22, 0
      %s271 = scalar_select %p270, %s22, 0
      %s272 = sadd.s32 %s271, %s269
      %s273 = smul.addr %s272, 4
      %s274 = scalar_lea.vmem %s0, %s273
      %s275 = smul.u32 32, %s20
      %s276 = smul.u32 16, %s22
      %p277 = scmp.lt.s32.totalorder %s276, 15
      %s278 = scalar_select %p277, %s276, 15
      %p279 = scmp.lt.s32.totalorder %s21, 0
      %s280 = scalar_select %p279, %s21, 0
      %s281 = sadd.s32 %s280, %s278
      %s282 = smul.addr %s281, 4
      %s283 = scalar_lea.vmem %s1, %s282
      %s284 = smul.u32 16, %s22
      %p285 = scmp.lt.s32.totalorder %s21, 0
      %s286 = scalar_select %p285, %s21, 0
      %s287 = scalar_lea.vmem %s2, %s286
      %p288 = scmp.lt.s32.totalorder %s21, 0
      %s289 = scalar_select %p288, %s21, 0
      %s290 = scalar_lea.vmem %s3, %s289
      %s291 = smul.u32 32, %s20
      %p292 = scmp.lt.s32.totalorder %s291, 63
      %s293 = scalar_select %p292, %s291, 63
      %p294 = scmp.lt.s32.totalorder %s21, 0
      %s295 = scalar_select %p294, %s21, 0
      %s296 = sadd.s32 %s295, %s293
      %s297 = smul.addr %s296, 8
      %s298 = scalar_lea.vmem %s4, %s297
      %s299 = smul.u32 32, %s20
      %p301 = scmp.eq.s32.totalorder %s22, 0
      // Predicated region
      $region37: #{_lambda_.31} parent=35 // pred_check
        %p302 = pneg %p301
      $region38: #{_lambda_.31} parent=35 // pred_check_branch
        %304 = sbr.rel (%p302) target = $region40
      $region39: #{_lambda_.31} parent=35 // pred_region
        %305 = vst [vmem:[#allocation2] sm:$0xff] 0.0
        %306 = vst [vmem:[#allocation2 + $0x8] sm:$0xff] 0.0
        %307 = vst [vmem:[#allocation2 + $0x10] sm:$0xff] 0.0
        %308 = vst [vmem:[#allocation2 + $0x18] sm:$0xff] 0.0
        %309 = vst [vmem:[#allocation2 + $0x20] sm:$0xff] 0.0
        %310 = vst [vmem:[#allocation2 + $0x28] sm:$0xff] 0.0
        %311 = vst [vmem:[#allocation2 + $0x30] sm:$0xff] 0.0
        %312 = vst [vmem:[#allocation2 + $0x38] sm:$0xff] 0.0
        %313 = vst [vmem:[#allocation2 + $0x40] sm:$0xff] 0.0
        %314 = vst [vmem:[#allocation2 + $0x48] sm:$0xff] 0.0
        %315 = vst [vmem:[#allocation2 + $0x50] sm:$0xff] 0.0
        %316 = vst [vmem:[#allocation2 + $0x58] sm:$0xff] 0.0
        %317 = vst [vmem:[#allocation2 + $0x60] sm:$0xff] 0.0
        %318 = vst [vmem:[#allocation2 + $0x68] sm:$0xff] 0.0
        %319 = vst [vmem:[#allocation2 + $0x70] sm:$0xff] 0.0
        %320 = vst [vmem:[#allocation2 + $0x78] sm:$0xff] 0.0
        %321 = vst [vmem:[#allocation2 + $0x80] sm:$0xff] 0.0
        %322 = vst [vmem:[#allocation2 + $0x88] sm:$0xff] 0.0
        %323 = vst [vmem:[#allocation2 + $0x90] sm:$0xff] 0.0
        %324 = vst [vmem:[#allocation2 + $0x98] sm:$0xff] 0.0
        %325 = vst [vmem:[#allocation2 + $0xa0] sm:$0xff] 0.0
        %326 = vst [vmem:[#allocation2 + $0xa8] sm:$0xff] 0.0
        %327 = vst [vmem:[#allocation2 + $0xb0] sm:$0xff] 0.0
        %328 = vst [vmem:[#allocation2 + $0xb8] sm:$0xff] 0.0
        %329 = vst [vmem:[#allocation2 + $0xc0] sm:$0xff] 0.0
        %330 = vst [vmem:[#allocation2 + $0xc8] sm:$0xff] 0.0
        %331 = vst [vmem:[#allocation2 + $0xd0] sm:$0xff] 0.0
        %332 = vst [vmem:[#allocation2 + $0xd8] sm:$0xff] 0.0
        %333 = vst [vmem:[#allocation2 + $0xe0] sm:$0xff] 0.0
        %334 = vst [vmem:[#allocation2 + $0xe8] sm:$0xff] 0.0
        %335 = vst [vmem:[#allocation2 + $0xf0] sm:$0xff] 0.0
        %336 = vst [vmem:[#allocation2 + $0xf8] sm:$0xff] 0.0
      $region40: #{_lambda_.31} parent=35 // pred_fallthru
        _
      %v337 = vld [vmem:[#allocation2] sm:$0xff]
      %v338 = vld [vmem:[#allocation2 + $0x8] sm:$0xff]
      %v339 = vld [vmem:[#allocation2 + $0x10] sm:$0xff]
      %v340 = vld [vmem:[#allocation2 + $0x18] sm:$0xff]
      %v341 = vld [vmem:[#allocation2 + $0x20] sm:$0xff]
      %v342 = vld [vmem:[#allocation2 + $0x28] sm:$0xff]
      %v343 = vld [vmem:[#allocation2 + $0x30] sm:$0xff]
      %v344 = vld [vmem:[#allocation2 + $0x38] sm:$0xff]
      %v345 = vld [vmem:[#allocation2 + $0x40] sm:$0xff]
      %v346 = vld [vmem:[#allocation2 + $0x48] sm:$0xff]
      %v347 = vld [vmem:[#allocation2 + $0x50] sm:$0xff]
      %v348 = vld [vmem:[#allocation2 + $0x58] sm:$0xff]
      %v349 = vld [vmem:[#allocation2 + $0x60] sm:$0xff]
      %v350 = vld [vmem:[#allocation2 + $0x68] sm:$0xff]
      %v351 = vld [vmem:[#allocation2 + $0x70] sm:$0xff]
      %v352 = vld [vmem:[#allocation2 + $0x78] sm:$0xff]
      %v353 = vld [vmem:[#allocation2 + $0x80] sm:$0xff]
      %v354 = vld [vmem:[#allocation2 + $0x88] sm:$0xff]
      %v355 = vld [vmem:[#allocation2 + $0x90] sm:$0xff]
      %v356 = vld [vmem:[#allocation2 + $0x98] sm:$0xff]
      %v357 = vld [vmem:[#allocation2 + $0xa0] sm:$0xff]
      %v358 = vld [vmem:[#allocation2 + $0xa8] sm:$0xff]
      %v359 = vld [vmem:[#allocation2 + $0xb0] sm:$0xff]
      %v360 = vld [vmem:[#allocation2 + $0xb8] sm:$0xff]
      %v361 = vld [vmem:[#allocation2 + $0xc0] sm:$0xff]
      %v362 = vld [vmem:[#allocation2 + $0xc8] sm:$0xff]
      %v363 = vld [vmem:[#allocation2 + $0xd0] sm:$0xff]
      %v364 = vld [vmem:[#allocation2 + $0xd8] sm:$0xff]
      %v365 = vld [vmem:[#allocation2 + $0xe0] sm:$0xff]
      %v366 = vld [vmem:[#allocation2 + $0xe8] sm:$0xff]
      %v367 = vld [vmem:[#allocation2 + $0xf0] sm:$0xff]
      %v368 = vld [vmem:[#allocation2 + $0xf8] sm:$0xff]
      %v369 = vld [vmem:[%s274] sm:$0xf]
      %v370 = vld [vmem:[%s274 + $0x4] sm:$0xf]
      %v371 = vld [vmem:[%s274 + $0x8] sm:$0xf]
      %v372 = vld [vmem:[%s274 + $0xc] sm:$0xf]
      %v373 = vld [vmem:[%s274 + $0x10] sm:$0xf]
      %v374 = vld [vmem:[%s274 + $0x14] sm:$0xf]
      %v375 = vld [vmem:[%s274 + $0x18] sm:$0xf]
      %v376 = vld [vmem:[%s274 + $0x1c] sm:$0xf]
      %v377 = vld [vmem:[%s274 + $0x20] sm:$0xf]
      %v378 = vld [vmem:[%s274 + $0x24] sm:$0xf]
      %v379 = vld [vmem:[%s274 + $0x28] sm:$0xf]
      %v380 = vld [vmem:[%s274 + $0x2c] sm:$0xf]
      %v381 = vld [vmem:[%s274 + $0x30] sm:$0xf]
      %v382 = vld [vmem:[%s274 + $0x34] sm:$0xf]
      %v383 = vld [vmem:[%s274 + $0x38] sm:$0xf]
      %v384 = vld [vmem:[%s274 + $0x3c] sm:$0xf]
      %v385 = vld [vmem:[%s274 + $0x40] sm:$0xf]
      %v386 = vld [vmem:[%s274 + $0x44] sm:$0xf]
      %v387 = vld [vmem:[%s274 + $0x48] sm:$0xf]
      %v388 = vld [vmem:[%s274 + $0x4c] sm:$0xf]
      %v389 = vld [vmem:[%s274 + $0x50] sm:$0xf]
      %v390 = vld [vmem:[%s274 + $0x54] sm:$0xf]
      %v391 = vld [vmem:[%s274 + $0x58] sm:$0xf]
      %v392 = vld [vmem:[%s274 + $0x5c] sm:$0xf]
      %v393 = vld [vmem:[%s274 + $0x60] sm:$0xf]
      %v394 = vld [vmem:[%s274 + $0x64] sm:$0xf]
      %v395 = vld [vmem:[%s274 + $0x68] sm:$0xf]
      %v396 = vld [vmem:[%s274 + $0x6c] sm:$0xf]
      %v397 = vld [vmem:[%s274 + $0x70] sm:$0xf]
      %v398 = vld [vmem:[%s274 + $0x74] sm:$0xf]
      %v399 = vld [vmem:[%s274 + $0x78] sm:$0xf]
      %v400 = vld [vmem:[%s274 + $0x7c] sm:$0xf]
      %v401 = vld [vmem:[%s283] sm:$0xf]
      %v402 = vld [vmem:[%s283 + $0x4] sm:$0xf]
      %v403 = vld [vmem:[%s283 + $0x8] sm:$0xf]
      %v404 = vld [vmem:[%s283 + $0xc] sm:$0xf]
      %v405 = vld [vmem:[%s283 + $0x10] sm:$0xf]
      %v406 = vld [vmem:[%s283 + $0x14] sm:$0xf]
      %v407 = vld [vmem:[%s283 + $0x18] sm:$0xf]
      %v408 = vld [vmem:[%s283 + $0x1c] sm:$0xf]
      %v409 = vld [vmem:[%s283 + $0x20] sm:$0xf]
      %v410 = vld [vmem:[%s283 + $0x24] sm:$0xf]
      %v411 = vld [vmem:[%s283 + $0x28] sm:$0xf]
      %v412 = vld [vmem:[%s283 + $0x2c] sm:$0xf]
      %v413 = vld [vmem:[%s283 + $0x30] sm:$0xf]
      %v414 = vld [vmem:[%s283 + $0x34] sm:$0xf]
      %v415 = vld [vmem:[%s283 + $0x38] sm:$0xf]
      %v416 = vld [vmem:[%s283 + $0x3c] sm:$0xf]
      %v449 = vunpack.c.l.b16 %v369
      %v450 = vunpack.c.l.b16 %v370
      %v451 = vunpack.c.l.b16 %v371
      %v452 = vunpack.c.l.b16 %v372
      %v453 = vunpack.c.l.b16 %v373
      %v454 = vunpack.c.l.b16 %v374
      %v455 = vunpack.c.l.b16 %v375
      %v456 = vunpack.c.l.b16 %v376
      %v457 = vunpack.c.l.b16 %v377
      %v458 = vunpack.c.l.b16 %v378
      %v459 = vunpack.c.l.b16 %v379
      %v460 = vunpack.c.l.b16 %v380
      %v461 = vunpack.c.l.b16 %v381
      %v462 = vunpack.c.l.b16 %v382
      %v463 = vunpack.c.l.b16 %v383
      %v464 = vunpack.c.l.b16 %v384
      %v465 = vunpack.c.l.b16 %v385
      %v466 = vunpack.c.l.b16 %v386
      %v467 = vunpack.c.l.b16 %v387
      %v468 = vunpack.c.l.b16 %v388
      %v469 = vunpack.c.l.b16 %v389
      %v470 = vunpack.c.l.b16 %v390
      %v471 = vunpack.c.l.b16 %v391
      %v472 = vunpack.c.l.b16 %v392
      %v473 = vunpack.c.l.b16 %v393
      %v474 = vunpack.c.l.b16 %v394
      %v475 = vunpack.c.l.b16 %v395
      %v476 = vunpack.c.l.b16 %v396
      %v477 = vunpack.c.l.b16 %v397
      %v478 = vunpack.c.l.b16 %v398
      %v479 = vunpack.c.l.b16 %v399
      %v480 = vunpack.c.l.b16 %v400
      %v481 = vpack.c.b16 %v450, %v449
      %v482 = vpack.c.b16 %v452, %v451
      %v483 = vpack.c.b16 %v454, %v453
      %v484 = vpack.c.b16 %v456, %v455
      %v485 = vpack.c.b16 %v458, %v457
      %v486 = vpack.c.b16 %v460, %v459
      %v487 = vpack.c.b16 %v462, %v461
      %v488 = vpack.c.b16 %v464, %v463
      %v489 = vpack.c.b16 %v466, %v465
      %v490 = vpack.c.b16 %v468, %v467
      %v491 = vpack.c.b16 %v470, %v469
      %v492 = vpack.c.b16 %v472, %v471
      %v493 = vpack.c.b16 %v474, %v473
      %v494 = vpack.c.b16 %v476, %v475
      %v495 = vpack.c.b16 %v478, %v477
      %v496 = vpack.c.b16 %v480, %v479
      %v529 = vunpack.c.l.b16 %v401
      %v530 = vunpack.c.l.b16 %v402
      %v531 = vunpack.c.l.b16 %v403
      %v532 = vunpack.c.l.b16 %v404
      %v533 = vunpack.c.l.b16 %v405
      %v534 = vunpack.c.l.b16 %v406
      %v535 = vunpack.c.l.b16 %v407
      %v536 = vunpack.c.l.b16 %v408
      %v537 = vunpack.c.l.b16 %v409
      %v538 = vunpack.c.l.b16 %v410
      %v539 = vunpack.c.l.b16 %v411
      %v540 = vunpack.c.l.b16 %v412
      %v541 = vunpack.c.l.b16 %v413
      %v542 = vunpack.c.l.b16 %v414
      %v543 = vunpack.c.l.b16 %v415
      %v544 = vunpack.c.l.b16 %v416
      %v545 = vpack.c.b16 %v530, %v529
      %v546 = vpack.c.b16 %v532, %v531
      %v547 = vpack.c.b16 %v534, %v533
      %v548 = vpack.c.b16 %v536, %v535
      %v549 = vpack.c.b16 %v538, %v537
      %v550 = vpack.c.b16 %v540, %v539
      %v551 = vpack.c.b16 %v542, %v541
      %v552 = vpack.c.b16 %v544, %v543
      %561 = vmatprep.subr.bf16.mxu0 0
      %562 = vmatpush1.bf16.msra.mxu0 %v545
      %563 = vmatprep.subr.bf16.mxu0 0
      %564 = vmatpush1.bf16.msra.mxu0 %v546
      %565 = vmatprep.subr.bf16.mxu0 0
      %566 = vmatpush1.bf16.msra.mxu0 %v547
      %567 = vmatprep.subr.bf16.mxu0 0
      %568 = vmatpush1.bf16.msra.mxu0 %v548
      %569 = vmatprep.subr.bf16.mxu0 0
      %570 = vmatpush1.bf16.msra.mxu0 %v549
      %571 = vmatprep.subr.bf16.mxu0 0
      %572 = vmatpush1.bf16.msra.mxu0 %v550
      %573 = vmatprep.subr.bf16.mxu0 0
      %574 = vmatpush1.bf16.msra.mxu0 %v551
      %575 = vmatprep.subr.bf16.mxu0 0
      %576 = vmatpush1.bf16.msra.mxu0 %v552
      %577 = vmatprep.subr.bf16.mxu0 0
      %578 = vmatpush1.bf16.msra.mxu0 0
      %579 = vmatprep.subr.bf16.mxu0 0
      %580 = vmatpush1.bf16.msra.mxu0 0
      %581 = vmatprep.subr.bf16.mxu0 0
      %582 = vmatpush1.bf16.msra.mxu0 0
      %583 = vmatprep.subr.bf16.mxu0 0
      %584 = vmatpush1.bf16.msra.mxu0 0
      %585 = vmatprep.subr.bf16.mxu0 0
      %586 = vmatpush1.bf16.msra.mxu0 0
      %587 = vmatprep.subr.bf16.mxu0 0
      %588 = vmatpush1.bf16.msra.mxu0 0
      %589 = vmatprep.subr.bf16.mxu0 0
      %590 = vmatpush1.bf16.msra.mxu0 0
      %591 = vmatprep.subr.bf16.mxu0 0
      %592 = vmatpush1.bf16.msra.mxu0 0
      %593 = vmatprep.mubr.bf16.mxu0 0
      %594 = vmatmul.mubr.bf16.gmra.mrb[0].mxu0 %v481
      %v595 = vpop.f32.mrb[0].mxu0
      %v596 = vadd.f32 0.0, %v595
      %v597 = vpop.f32.mrb[0].mxu0
      %v598 = vpop.f32.mrb[0].mxu0
      %v599 = vadd.f32 0.0, %v598
      %v600 = vpop.f32.mrb[0].mxu0
      %601 = vmatprep.mubr.bf16.mxu0 0
      %602 = vmatmul.mubr.bf16.gmra.mrb[0].mxu0 %v482
      %v603 = vpop.f32.mrb[0].mxu0
      %v604 = vadd.f32 0.0, %v603
      %v605 = vpop.f32.mrb[0].mxu0
      %v606 = vpop.f32.mrb[0].mxu0
      %v607 = vadd.f32 0.0, %v606
      %v608 = vpop.f32.mrb[0].mxu0
      %609 = vmatprep.mubr.bf16.mxu0 0
      %610 = vmatmul.mubr.bf16.gmra.mrb[0].mxu0 %v483
      %v611 = vpop.f32.mrb[0].mxu0
      %v612 = vadd.f32 0.0, %v611
      %v613 = vpop.f32.mrb[0].mxu0
      %v614 = vpop.f32.mrb[0].mxu0
      %v615 = vadd.f32 0.0, %v614
      %v616 = vpop.f32.mrb[0].mxu0
      %617 = vmatprep.mubr.bf16.mxu0 0
      %618 = vmatmul.mubr.bf16.gmra.mrb[0].mxu0 %v484
      %v619 = vpop.f32.mrb[0].mxu0
      %v620 = vadd.f32 0.0, %v619
      %v621 = vpop.f32.mrb[0].mxu0
      %v622 = vpop.f32.mrb[0].mxu0
      %v623 = vadd.f32 0.0, %v622
      %v624 = vpop.f32.mrb[0].mxu0
      %625 = vmatprep.mubr.bf16.mxu0 0
      %626 = vmatmul.mubr.bf16.gmra.mrb[0].mxu0 %v485
      %v627 = vpop.f32.mrb[0].mxu0
      %v628 = vadd.f32 0.0, %v627
      %v629 = vpop.f32.mrb[0].mxu0
      %v630 = vpop.f32.mrb[0].mxu0
      %v631 = vadd.f32 0.0, %v630
      %v632 = vpop.f32.mrb[0].mxu0
      %633 = vmatprep.mubr.bf16.mxu0 0
      %634 = vmatmul.mubr.bf16.gmra.mrb[0].mxu0 %v486
      %v635 = vpop.f32.mrb[0].mxu0
      %v636 = vadd.f32 0.0, %v635
      %v637 = vpop.f32.mrb[0].mxu0
      %v638 = vpop.f32.mrb[0].mxu0
      %v639 = vadd.f32 0.0, %v638
      %v640 = vpop.f32.mrb[0].mxu0
      %641 = vmatprep.mubr.bf16.mxu0 0
      %642 = vmatmul.mubr.bf16.gmra.mrb[0].mxu0 %v487
      %v643 = vpop.f32.mrb[0].mxu0
      %v644 = vadd.f32 0.0, %v643
      %v645 = vpop.f32.mrb[0].mxu0
      %v646 = vpop.f32.mrb[0].mxu0
      %v647 = vadd.f32 0.0, %v646
      %v648 = vpop.f32.mrb[0].mxu0
      %649 = vmatprep.mubr.bf16.mxu0 0
      %650 = vmatmul.mubr.bf16.gmra.mrb[0].mxu0 %v488
      %v651 = vpop.f32.mrb[0].mxu0
      %v652 = vadd.f32 0.0, %v651
      %v653 = vpop.f32.mrb[0].mxu0
      %v654 = vpop.f32.mrb[0].mxu0
      %v655 = vadd.f32 0.0, %v654
      %v656 = vpop.f32.mrb[0].mxu0
      %657 = vmatprep.mubr.bf16.mxu0 0
      %658 = vmatmul.mubr.bf16.gmra.mrb[0].mxu0 %v489
      %v659 = vpop.f32.mrb[0].mxu0
      %v660 = vadd.f32 0.0, %v659
      %v661 = vpop.f32.mrb[0].mxu0
      %v662 = vpop.f32.mrb[0].mxu0
      %v663 = vadd.f32 0.0, %v662
      %v664 = vpop.f32.mrb[0].mxu0
      %665 = vmatprep.mubr.bf16.mxu0 0
      %666 = vmatmul.mubr.bf16.gmra.mrb[0].mxu0 %v490
      %v667 = vpop.f32.mrb[0].mxu0
      %v668 = vadd.f32 0.0, %v667
      %v669 = vpop.f32.mrb[0].mxu0
      %v670 = vpop.f32.mrb[0].mxu0
      %v671 = vadd.f32 0.0, %v670
      %v672 = vpop.f32.mrb[0].mxu0
      %673 = vmatprep.mubr.bf16.mxu0 0
      %674 = vmatmul.mubr.bf16.gmra.mrb[0].mxu0 %v491
      %v675 = vpop.f32.mrb[0].mxu0
      %v676 = vadd.f32 0.0, %v675
      %v677 = vpop.f32.mrb[0].mxu0
      %v678 = vpop.f32.mrb[0].mxu0
      %v679 = vadd.f32 0.0, %v678
      %v680 = vpop.f32.mrb[0].mxu0
      %681 = vmatprep.mubr.bf16.mxu0 0
      %682 = vmatmul.mubr.bf16.gmra.mrb[0].mxu0 %v492
      %v683 = vpop.f32.mrb[0].mxu0
      %v684 = vadd.f32 0.0, %v683
      %v685 = vpop.f32.mrb[0].mxu0
      %v686 = vpop.f32.mrb[0].mxu0
      %v687 = vadd.f32 0.0, %v686
      %v688 = vpop.f32.mrb[0].mxu0
      %689 = vmatprep.mubr.bf16.mxu0 0
      %690 = vmatmul.mubr.bf16.gmra.mrb[0].mxu0 %v493
      %v691 = vpop.f32.mrb[0].mxu0
      %v692 = vadd.f32 0.0, %v691
      %v693 = vpop.f32.mrb[0].mxu0
      %v694 = vpop.f32.mrb[0].mxu0
      %v695 = vadd.f32 0.0, %v694
      %v696 = vpop.f32.mrb[0].mxu0
      %697 = vmatprep.mubr.bf16.mxu0 0
      %698 = vmatmul.mubr.bf16.gmra.mrb[0].mxu0 %v494
      %v699 = vpop.f32.mrb[0].mxu0
      %v700 = vadd.f32 0.0, %v699
      %v701 = vpop.f32.mrb[0].mxu0
      %v702 = vpop.f32.mrb[0].mxu0
      %v703 = vadd.f32 0.0, %v702
      %v704 = vpop.f32.mrb[0].mxu0
      %705 = vmatprep.mubr.bf16.mxu0 0
      %706 = vmatmul.mubr.bf16.gmra.mrb[0].mxu0 %v495
      %v707 = vpop.f32.mrb[0].mxu0
      %v708 = vadd.f32 0.0, %v707
      %v709 = vpop.f32.mrb[0].mxu0
      %v710 = vpop.f32.mrb[0].mxu0
      %v711 = vadd.f32 0.0, %v710
      %v712 = vpop.f32.mrb[0].mxu0
      %713 = vmatprep.mubr.bf16.mxu0 0
      %714 = vmatmul.mubr.bf16.gmra.mrb[0].mxu0 %v496
      %v715 = vpop.f32.mrb[0].mxu0
      %v716 = vadd.f32 0.0, %v715
      %v717 = vpop.f32.mrb[0].mxu0
      %v718 = vpop.f32.mrb[0].mxu0
      %v719 = vadd.f32 0.0, %v718
      %v720 = vpop.f32.mrb[0].mxu0
      %721 = vdwg.mxu0
      %v722 = vadd.f32 %v337, %v596
      %v723 = vadd.f32 %v338, %v599
      %v724 = vadd.f32 %v339, %v604
      %v725 = vadd.f32 %v340, %v607
      %v726 = vadd.f32 %v341, %v612
      %v727 = vadd.f32 %v342, %v615
      %v728 = vadd.f32 %v343, %v620
      %v729 = vadd.f32 %v344, %v623
      %v730 = vadd.f32 %v345, %v628
      %v731 = vadd.f32 %v346, %v631
      %v732 = vadd.f32 %v347, %v636
      %v733 = vadd.f32 %v348, %v639
      %v734 = vadd.f32 %v349, %v644
      %v735 = vadd.f32 %v350, %v647
      %v736 = vadd.f32 %v351, %v652
      %v737 = vadd.f32 %v352, %v655
      %v738 = vadd.f32 %v353, %v660
      %v739 = vadd.f32 %v354, %v663
      %v740 = vadd.f32 %v355, %v668
      %v741 = vadd.f32 %v356, %v671
      %v742 = vadd.f32 %v357, %v676
      %v743 = vadd.f32 %v358, %v679
      %v744 = vadd.f32 %v359, %v684
      %v745 = vadd.f32 %v360, %v687
      %v746 = vadd.f32 %v361, %v692
      %v747 = vadd.f32 %v362, %v695
      %v748 = vadd.f32 %v363, %v700
      %v749 = vadd.f32 %v364, %v703
      %v750 = vadd.f32 %v365, %v708
      %v751 = vadd.f32 %v366, %v711
      %v752 = vadd.f32 %v367, %v716
      %v753 = vadd.f32 %v368, %v719
      %754 = vst [vmem:[#allocation2] sm:$0xff] %v722
      %755 = vst [vmem:[#allocation2 + $0x8] sm:$0xff] %v723
      %756 = vst [vmem:[#allocation2 + $0x10] sm:$0xff] %v724
      %757 = vst [vmem:[#allocation2 + $0x18] sm:$0xff] %v725
      %758 = vst [vmem:[#allocation2 + $0x20] sm:$0xff] %v726
      %759 = vst [vmem:[#allocation2 + $0x28] sm:$0xff] %v727
      %760 = vst [vmem:[#allocation2 + $0x30] sm:$0xff] %v728
      %761 = vst [vmem:[#allocation2 + $0x38] sm:$0xff] %v729
      %762 = vst [vmem:[#allocation2 + $0x40] sm:$0xff] %v730
      %763 = vst [vmem:[#allocation2 + $0x48] sm:$0xff] %v731
      %764 = vst [vmem:[#allocation2 + $0x50] sm:$0xff] %v732
      %765 = vst [vmem:[#allocation2 + $0x58] sm:$0xff] %v733
      %766 = vst [vmem:[#allocation2 + $0x60] sm:$0xff] %v734
      %767 = vst [vmem:[#allocation2 + $0x68] sm:$0xff] %v735
      %768 = vst [vmem:[#allocation2 + $0x70] sm:$0xff] %v736
      %769 = vst [vmem:[#allocation2 + $0x78] sm:$0xff] %v737
      %770 = vst [vmem:[#allocation2 + $0x80] sm:$0xff] %v738
      %771 = vst [vmem:[#allocation2 + $0x88] sm:$0xff] %v739
      %772 = vst [vmem:[#allocation2 + $0x90] sm:$0xff] %v740
      %773 = vst [vmem:[#allocation2 + $0x98] sm:$0xff] %v741
      %774 = vst [vmem:[#allocation2 + $0xa0] sm:$0xff] %v742
      %775 = vst [vmem:[#allocation2 + $0xa8] sm:$0xff] %v743
      %776 = vst [vmem:[#allocation2 + $0xb0] sm:$0xff] %v744
      %777 = vst [vmem:[#allocation2 + $0xb8] sm:$0xff] %v745
      %778 = vst [vmem:[#allocation2 + $0xc0] sm:$0xff] %v746
      %779 = vst [vmem:[#allocation2 + $0xc8] sm:$0xff] %v747
      %780 = vst [vmem:[#allocation2 + $0xd0] sm:$0xff] %v748
      %781 = vst [vmem:[#allocation2 + $0xd8] sm:$0xff] %v749
      %782 = vst [vmem:[#allocation2 + $0xe0] sm:$0xff] %v750
      %783 = vst [vmem:[#allocation2 + $0xe8] sm:$0xff] %v751
      %784 = vst [vmem:[#allocation2 + $0xf0] sm:$0xff] %v752
      %785 = vst [vmem:[#allocation2 + $0xf8] sm:$0xff] %v753
      // Predicated region
      $region41: #{_lambda_.31} parent=35 // pred_check
        %p786 = pneg %p301
      $region42: #{_lambda_.31} parent=35 // pred_check_branch
        %788 = sbr.rel (%p786) target = $region44
      $region43: #{_lambda_.31} parent=35 // pred_region
        %v789 = vld [vmem:[#allocation2] sm:$0xff]
        %v790 = vld [vmem:[#allocation2 + $0x8] sm:$0xff]
        %v791 = vld [vmem:[#allocation2 + $0x10] sm:$0xff]
        %v792 = vld [vmem:[#allocation2 + $0x18] sm:$0xff]
        %v793 = vld [vmem:[#allocation2 + $0x20] sm:$0xff]
        %v794 = vld [vmem:[#allocation2 + $0x28] sm:$0xff]
        %v795 = vld [vmem:[#allocation2 + $0x30] sm:$0xff]
        %v796 = vld [vmem:[#allocation2 + $0x38] sm:$0xff]
        %v797 = vld [vmem:[#allocation2 + $0x40] sm:$0xff]
        %v798 = vld [vmem:[#allocation2 + $0x48] sm:$0xff]
        %v799 = vld [vmem:[#allocation2 + $0x50] sm:$0xff]
        %v800 = vld [vmem:[#allocation2 + $0x58] sm:$0xff]
        %v801 = vld [vmem:[#allocation2 + $0x60] sm:$0xff]
        %v802 = vld [vmem:[#allocation2 + $0x68] sm:$0xff]
        %v803 = vld [vmem:[#allocation2 + $0x70] sm:$0xff]
        %v804 = vld [vmem:[#allocation2 + $0x78] sm:$0xff]
        %v805 = vld [vmem:[#allocation2 + $0x80] sm:$0xff]
        %v806 = vld [vmem:[#allocation2 + $0x88] sm:$0xff]
        %v807 = vld [vmem:[#allocation2 + $0x90] sm:$0xff]
        %v808 = vld [vmem:[#allocation2 + $0x98] sm:$0xff]
        %v809 = vld [vmem:[#allocation2 + $0xa0] sm:$0xff]
        %v810 = vld [vmem:[#allocation2 + $0xa8] sm:$0xff]
        %v811 = vld [vmem:[#allocation2 + $0xb0] sm:$0xff]
        %v812 = vld [vmem:[#allocation2 + $0xb8] sm:$0xff]
        %v813 = vld [vmem:[#allocation2 + $0xc0] sm:$0xff]
        %v814 = vld [vmem:[#allocation2 + $0xc8] sm:$0xff]
        %v815 = vld [vmem:[#allocation2 + $0xd0] sm:$0xff]
        %v816 = vld [vmem:[#allocation2 + $0xd8] sm:$0xff]
        %v817 = vld [vmem:[#allocation2 + $0xe0] sm:$0xff]
        %v818 = vld [vmem:[#allocation2 + $0xe8] sm:$0xff]
        %v819 = vld [vmem:[#allocation2 + $0xf0] sm:$0xff]
        %v820 = vld [vmem:[#allocation2 + $0xf8] sm:$0xff]
        %v821 = vld [vmem:[%s287] sm:$0x1]
        %v823 = vlaneseq
        %v824 = vshrl.u32 %v823, 7
        %v825 = vsub.s32 0, %v824
        %v826 = vrot.slane %v821, %v825
        %v828 = vmul.f32 %v789, %v826
        %v829 = vmul.f32 %v790, %v826
        %v830 = vmul.f32 %v791, %v826
        %v831 = vmul.f32 %v792, %v826
        %v832 = vmul.f32 %v793, %v826
        %v833 = vmul.f32 %v794, %v826
        %v834 = vmul.f32 %v795, %v826
        %v835 = vmul.f32 %v796, %v826
        %v836 = vmul.f32 %v797, %v826
        %v837 = vmul.f32 %v798, %v826
        %v838 = vmul.f32 %v799, %v826
        %v839 = vmul.f32 %v800, %v826
        %v840 = vmul.f32 %v801, %v826
        %v841 = vmul.f32 %v802, %v826
        %v842 = vmul.f32 %v803, %v826
        %v843 = vmul.f32 %v804, %v826
        %v844 = vmul.f32 %v805, %v826
        %v845 = vmul.f32 %v806, %v826
        %v846 = vmul.f32 %v807, %v826
        %v847 = vmul.f32 %v808, %v826
        %v848 = vmul.f32 %v809, %v826
        %v849 = vmul.f32 %v810, %v826
        %v850 = vmul.f32 %v811, %v826
        %v851 = vmul.f32 %v812, %v826
        %v852 = vmul.f32 %v813, %v826
        %v853 = vmul.f32 %v814, %v826
        %v854 = vmul.f32 %v815, %v826
        %v855 = vmul.f32 %v816, %v826
        %v856 = vmul.f32 %v817, %v826
        %v857 = vmul.f32 %v818, %v826
        %v858 = vmul.f32 %v819, %v826
        %v859 = vmul.f32 %v820, %v826
        %v860 = vld [vmem:[%s290] sm:$0x1]
        %v862 = vlaneseq
        %v863 = vshrl.u32 %v862, 7
        %v864 = vsub.s32 0, %v863
        %v865 = vrot.slane %v860, %v864
        %v867 = vadd.f32 %v828, %v865
        %v868 = vadd.f32 %v829, %v865
        %v869 = vadd.f32 %v830, %v865
        %v870 = vadd.f32 %v831, %v865
        %v871 = vadd.f32 %v832, %v865
        %v872 = vadd.f32 %v833, %v865
        %v873 = vadd.f32 %v834, %v865
        %v874 = vadd.f32 %v835, %v865
        %v875 = vadd.f32 %v836, %v865
        %v876 = vadd.f32 %v837, %v865
        %v877 = vadd.f32 %v838, %v865
        %v878 = vadd.f32 %v839, %v865
        %v879 = vadd.f32 %v840, %v865
        %v880 = vadd.f32 %v841, %v865
        %v881 = vadd.f32 %v842, %v865
        %v882 = vadd.f32 %v843, %v865
        %v883 = vadd.f32 %v844, %v865
        %v884 = vadd.f32 %v845, %v865
        %v885 = vadd.f32 %v846, %v865
        %v886 = vadd.f32 %v847, %v865
        %v887 = vadd.f32 %v848, %v865
        %v888 = vadd.f32 %v849, %v865
        %v889 = vadd.f32 %v850, %v865
        %v890 = vadd.f32 %v851, %v865
        %v891 = vadd.f32 %v852, %v865
        %v892 = vadd.f32 %v853, %v865
        %v893 = vadd.f32 %v854, %v865
        %v894 = vadd.f32 %v855, %v865
        %v895 = vadd.f32 %v856, %v865
        %v896 = vadd.f32 %v857, %v865
        %v897 = vadd.f32 %v858, %v865
        %v898 = vadd.f32 %v859, %v865
        %v899 = vsub.f32 0.0, %v867
        %v900 = vsub.f32 0.0, %v868
        %v901 = vsub.f32 0.0, %v869
        %v902 = vsub.f32 0.0, %v870
        %v903 = vsub.f32 0.0, %v871
        %v904 = vsub.f32 0.0, %v872
        %v905 = vsub.f32 0.0, %v873
        %v906 = vsub.f32 0.0, %v874
        %v907 = vsub.f32 0.0, %v875
        %v908 = vsub.f32 0.0, %v876
        %v909 = vsub.f32 0.0, %v877
        %v910 = vsub.f32 0.0, %v878
        %v911 = vsub.f32 0.0, %v879
        %v912 = vsub.f32 0.0, %v880
        %v913 = vsub.f32 0.0, %v881
        %v914 = vsub.f32 0.0, %v882
        %v915 = vsub.f32 0.0, %v883
        %v916 = vsub.f32 0.0, %v884
        %v917 = vsub.f32 0.0, %v885
        %v918 = vsub.f32 0.0, %v886
        %v919 = vsub.f32 0.0, %v887
        %v920 = vsub.f32 0.0, %v888
        %v921 = vsub.f32 0.0, %v889
        %v922 = vsub.f32 0.0, %v890
        %v923 = vsub.f32 0.0, %v891
        %v924 = vsub.f32 0.0, %v892
        %v925 = vsub.f32 0.0, %v893
        %v926 = vsub.f32 0.0, %v894
        %v927 = vsub.f32 0.0, %v895
        %v928 = vsub.f32 0.0, %v896
        %v929 = vsub.f32 0.0, %v897
        %v930 = vsub.f32 0.0, %v898
        %v931 = vmul.f32 %v899, 1.442695
        %v932 = vpow.pop %v931
        %v933 = vmul.f32 %v900, 1.442695
        %v934 = vpow.pop %v933
        %v935 = vmul.f32 %v901, 1.442695
        %v936 = vpow.pop %v935
        %v937 = vmul.f32 %v902, 1.442695
        %v938 = vpow.pop %v937
        %v939 = vmul.f32 %v903, 1.442695
        %v940 = vpow.pop %v939
        %v941 = vmul.f32 %v904, 1.442695
        %v942 = vpow.pop %v941
        %v943 = vmul.f32 %v905, 1.442695
        %v944 = vpow.pop %v943
        %v945 = vmul.f32 %v906, 1.442695
        %v946 = vpow.pop %v945
        %v947 = vmul.f32 %v907, 1.442695
        %v948 = vpow.pop %v947
        %v949 = vmul.f32 %v908, 1.442695
        %v950 = vpow.pop %v949
        %v951 = vmul.f32 %v909, 1.442695
        %v952 = vpow.pop %v951
        %v953 = vmul.f32 %v910, 1.442695
        %v954 = vpow.pop %v953
        %v955 = vmul.f32 %v911, 1.442695
        %v956 = vpow.pop %v955
        %v957 = vmul.f32 %v912, 1.442695
        %v958 = vpow.pop %v957
        %v959 = vmul.f32 %v913, 1.442695
        %v960 = vpow.pop %v959
        %v961 = vmul.f32 %v914, 1.442695
        %v962 = vpow.pop %v961
        %v963 = vmul.f32 %v915, 1.442695
        %v964 = vpow.pop %v963
        %v965 = vmul.f32 %v916, 1.442695
        %v966 = vpow.pop %v965
        %v967 = vmul.f32 %v917, 1.442695
        %v968 = vpow.pop %v967
        %v969 = vmul.f32 %v918, 1.442695
        %v970 = vpow.pop %v969
        %v971 = vmul.f32 %v919, 1.442695
        %v972 = vpow.pop %v971
        %v973 = vmul.f32 %v920, 1.442695
        %v974 = vpow.pop %v973
        %v975 = vmul.f32 %v921, 1.442695
        %v976 = vpow.pop %v975
        %v977 = vmul.f32 %v922, 1.442695
        %v978 = vpow.pop %v977
        %v979 = vmul.f32 %v923, 1.442695
        %v980 = vpow.pop %v979
        %v981 = vmul.f32 %v924, 1.442695
        %v982 = vpow.pop %v981
        %v983 = vmul.f32 %v925, 1.442695
        %v984 = vpow.pop %v983
        %v985 = vmul.f32 %v926, 1.442695
        %v986 = vpow.pop %v985
        %v987 = vmul.f32 %v927, 1.442695
        %v988 = vpow.pop %v987
        %v989 = vmul.f32 %v928, 1.442695
        %v990 = vpow.pop %v989
        %v991 = vmul.f32 %v929, 1.442695
        %v992 = vpow.pop %v991
        %v993 = vmul.f32 %v930, 1.442695
        %v994 = vpow.pop %v993
        %v995 = vadd.f32 %v932, 1.0
        %v996 = vadd.f32 %v934, 1.0
        %v997 = vadd.f32 %v936, 1.0
        %v998 = vadd.f32 %v938, 1.0
        %v999 = vadd.f32 %v940, 1.0
        %v1000 = vadd.f32 %v942, 1.0
        %v1001 = vadd.f32 %v944, 1.0
        %v1002 = vadd.f32 %v946, 1.0
        %v1003 = vadd.f32 %v948, 1.0
        %v1004 = vadd.f32 %v950, 1.0
        %v1005 = vadd.f32 %v952, 1.0
        %v1006 = vadd.f32 %v954, 1.0
        %v1007 = vadd.f32 %v956, 1.0
        %v1008 = vadd.f32 %v958, 1.0
        %v1009 = vadd.f32 %v960, 1.0
        %v1010 = vadd.f32 %v962, 1.0
        %v1011 = vadd.f32 %v964, 1.0
        %v1012 = vadd.f32 %v966, 1.0
        %v1013 = vadd.f32 %v968, 1.0
        %v1014 = vadd.f32 %v970, 1.0
        %v1015 = vadd.f32 %v972, 1.0
        %v1016 = vadd.f32 %v974, 1.0
        %v1017 = vadd.f32 %v976, 1.0
        %v1018 = vadd.f32 %v978, 1.0
        %v1019 = vadd.f32 %v980, 1.0
        %v1020 = vadd.f32 %v982, 1.0
        %v1021 = vadd.f32 %v984, 1.0
        %v1022 = vadd.f32 %v986, 1.0
        %v1023 = vadd.f32 %v988, 1.0
        %v1024 = vadd.f32 %v990, 1.0
        %v1025 = vadd.f32 %v992, 1.0
        %v1026 = vadd.f32 %v994, 1.0
        %v1027 = vrcp.pop %v995
        %v1028 = vmul.f32 1.0, %v1027
        %v1029 = vrcp.pop %v996
        %v1030 = vmul.f32 1.0, %v1029
        %v1031 = vrcp.pop %v997
        %v1032 = vmul.f32 1.0, %v1031
        %v1033 = vrcp.pop %v998
        %v1034 = vmul.f32 1.0, %v1033
        %v1035 = vrcp.pop %v999
        %v1036 = vmul.f32 1.0, %v1035
        %v1037 = vrcp.pop %v1000
        %v1038 = vmul.f32 1.0, %v1037
        %v1039 = vrcp.pop %v1001
        %v1040 = vmul.f32 1.0, %v1039
        %v1041 = vrcp.pop %v1002
        %v1042 = vmul.f32 1.0, %v1041
        %v1043 = vrcp.pop %v1003
        %v1044 = vmul.f32 1.0, %v1043
        %v1045 = vrcp.pop %v1004
        %v1046 = vmul.f32 1.0, %v1045
        %v1047 = vrcp.pop %v1005
        %v1048 = vmul.f32 1.0, %v1047
        %v1049 = vrcp.pop %v1006
        %v1050 = vmul.f32 1.0, %v1049
        %v1051 = vrcp.pop %v1007
        %v1052 = vmul.f32 1.0, %v1051
        %v1053 = vrcp.pop %v1008
        %v1054 = vmul.f32 1.0, %v1053
        %v1055 = vrcp.pop %v1009
        %v1056 = vmul.f32 1.0, %v1055
        %v1057 = vrcp.pop %v1010
        %v1058 = vmul.f32 1.0, %v1057
        %v1059 = vrcp.pop %v1011
        %v1060 = vmul.f32 1.0, %v1059
        %v1061 = vrcp.pop %v1012
        %v1062 = vmul.f32 1.0, %v1061
        %v1063 = vrcp.pop %v1013
        %v1064 = vmul.f32 1.0, %v1063
        %v1065 = vrcp.pop %v1014
        %v1066 = vmul.f32 1.0, %v1065
        %v1067 = vrcp.pop %v1015
        %v1068 = vmul.f32 1.0, %v1067
        %v1069 = vrcp.pop %v1016
        %v1070 = vmul.f32 1.0, %v1069
        %v1071 = vrcp.pop %v1017
        %v1072 = vmul.f32 1.0, %v1071
        %v1073 = vrcp.pop %v1018
        %v1074 = vmul.f32 1.0, %v1073
        %v1075 = vrcp.pop %v1019
        %v1076 = vmul.f32 1.0, %v1075
        %v1077 = vrcp.pop %v1020
        %v1078 = vmul.f32 1.0, %v1077
        %v1079 = vrcp.pop %v1021
        %v1080 = vmul.f32 1.0, %v1079
        %v1081 = vrcp.pop %v1022
        %v1082 = vmul.f32 1.0, %v1081
        %v1083 = vrcp.pop %v1023
        %v1084 = vmul.f32 1.0, %v1083
        %v1085 = vrcp.pop %v1024
        %v1086 = vmul.f32 1.0, %v1085
        %v1087 = vrcp.pop %v1025
        %v1088 = vmul.f32 1.0, %v1087
        %v1089 = vrcp.pop %v1026
        %v1090 = vmul.f32 1.0, %v1089
        %v1091 = vmul.f32 %v867, %v1028
        %v1092 = vmul.f32 %v868, %v1030
        %v1093 = vmul.f32 %v869, %v1032
        %v1094 = vmul.f32 %v870, %v1034
        %v1095 = vmul.f32 %v871, %v1036
        %v1096 = vmul.f32 %v872, %v1038
        %v1097 = vmul.f32 %v873, %v1040
        %v1098 = vmul.f32 %v874, %v1042
        %v1099 = vmul.f32 %v875, %v1044
        %v1100 = vmul.f32 %v876, %v1046
        %v1101 = vmul.f32 %v877, %v1048
        %v1102 = vmul.f32 %v878, %v1050
        %v1103 = vmul.f32 %v879, %v1052
        %v1104 = vmul.f32 %v880, %v1054
        %v1105 = vmul.f32 %v881, %v1056
        %v1106 = vmul.f32 %v882, %v1058
        %v1107 = vmul.f32 %v883, %v1060
        %v1108 = vmul.f32 %v884, %v1062
        %v1109 = vmul.f32 %v885, %v1064
        %v1110 = vmul.f32 %v886, %v1066
        %v1111 = vmul.f32 %v887, %v1068
        %v1112 = vmul.f32 %v888, %v1070
        %v1113 = vmul.f32 %v889, %v1072
        %v1114 = vmul.f32 %v890, %v1074
        %v1115 = vmul.f32 %v891, %v1076
        %v1116 = vmul.f32 %v892, %v1078
        %v1117 = vmul.f32 %v893, %v1080
        %v1118 = vmul.f32 %v894, %v1082
        %v1119 = vmul.f32 %v895, %v1084
        %v1120 = vmul.f32 %v896, %v1086
        %v1121 = vmul.f32 %v897, %v1088
        %v1122 = vmul.f32 %v898, %v1090
        %1123 = vst [vmem:[%s298] sm:$0xff] %v1091
        %1124 = vst [vmem:[%s298 + $0x8] sm:$0xff] %v1092
        %1125 = vst [vmem:[%s298 + $0x10] sm:$0xff] %v1093
        %1126 = vst [vmem:[%s298 + $0x18] sm:$0xff] %v1094
        %1127 = vst [vmem:[%s298 + $0x20] sm:$0xff] %v1095
        %1128 = vst [vmem:[%s298 + $0x28] sm:$0xff] %v1096
        %1129 = vst [vmem:[%s298 + $0x30] sm:$0xff] %v1097
        %1130 = vst [vmem:[%s298 + $0x38] sm:$0xff] %v1098
        %1131 = vst [vmem:[%s298 + $0x40] sm:$0xff] %v1099
        %1132 = vst [vmem:[%s298 + $0x48] sm:$0xff] %v1100
        %1133 = vst [vmem:[%s298 + $0x50] sm:$0xff] %v1101
        %1134 = vst [vmem:[%s298 + $0x58] sm:$0xff] %v1102
        %1135 = vst [vmem:[%s298 + $0x60] sm:$0xff] %v1103
        %1136 = vst [vmem:[%s298 + $0x68] sm:$0xff] %v1104
        %1137 = vst [vmem:[%s298 + $0x70] sm:$0xff] %v1105
        %1138 = vst [vmem:[%s298 + $0x78] sm:$0xff] %v1106
        %1139 = vst [vmem:[%s298 + $0x80] sm:$0xff] %v1107
        %1140 = vst [vmem:[%s298 + $0x88] sm:$0xff] %v1108
        %1141 = vst [vmem:[%s298 + $0x90] sm:$0xff] %v1109
        %1142 = vst [vmem:[%s298 + $0x98] sm:$0xff] %v1110
        %1143 = vst [vmem:[%s298 + $0xa0] sm:$0xff] %v1111
        %1144 = vst [vmem:[%s298 + $0xa8] sm:$0xff] %v1112
        %1145 = vst [vmem:[%s298 + $0xb0] sm:$0xff] %v1113
        %1146 = vst [vmem:[%s298 + $0xb8] sm:$0xff] %v1114
        %1147 = vst [vmem:[%s298 + $0xc0] sm:$0xff] %v1115
        %1148 = vst [vmem:[%s298 + $0xc8] sm:$0xff] %v1116
        %1149 = vst [vmem:[%s298 + $0xd0] sm:$0xff] %v1117
        %1150 = vst [vmem:[%s298 + $0xd8] sm:$0xff] %v1118
        %1151 = vst [vmem:[%s298 + $0xe0] sm:$0xff] %v1119
        %1152 = vst [vmem:[%s298 + $0xe8] sm:$0xff] %v1120
        %1153 = vst [vmem:[%s298 + $0xf0] sm:$0xff] %v1121
        %1154 = vst [vmem:[%s298 + $0xf8] sm:$0xff] %v1122
      $region44: #{_lambda_.31} parent=35 // pred_fallthru
        _
      %s1155 = smul.u32 32, %s20
      %p1156 = scmp.lt.s32.totalorder %s1155, 63
      %s1157 = scalar_select %p1156, %s1155, 63
      %p1158 = scmp.lt.s32.totalorder %s21, 0
      %s1159 = scalar_select %p1158, %s21, 0
      %s1160 = sadd.s32 %s1159, %s1157
      %s1161 = smul.addr %s1160, 8
      %s1162 = scalar_lea.vmem %s4, %s1161
      // Predicated region
      $region45: #{_lambda_.31} parent=35 // pred_check
        %p1163 = pneg %p162
      $region46: #{_lambda_.31} parent=35 // pred_check_branch
        %1165 = sbr.rel (%p1163) target = $region48
      $region47: #{_lambda_.31} parent=35 // pred_region
        %s1166 = smul.u32 32, %s20
      $region48: #{_lambda_.31} parent=35 // pred_fallthru
        _
    $region36: #{_lambda_.31} parent=5 // pred_fallthru
      _
    %p1167 = scmp.le.s32.totalorder 2, %s10
    // Predicated region
    $region49: #{_lambda_.31} parent=5 // pred_check
      %p1168 = pneg %p1167
    $region50: #{_lambda_.31} parent=5 // pred_check_branch
      %1170 = sbr.rel (%p1168) target = $region52
    $region51: #{_lambda_.31} parent=5 // pred_region
      %s1171 = ssub.s32 %s10, 2
      // Predicated region
      $region53: #{_lambda_.31} parent=51 // pred_check
        %p1172 = pneg %p168
      $region54: #{_lambda_.31} parent=51 // pred_check_branch
        %1174 = sbr.rel (%p1172) target = $region56
      $region55: #{_lambda_.31} parent=51 // pred_region
        %s1175 = smul.u32 32, %s23
        %p1176 = scmp.lt.s32.totalorder %s1175, 63
        %s1177 = scalar_select %p1176, %s1175, 63
        %p1178 = scmp.lt.s32.totalorder %s24, 0
        %s1179 = scalar_select %p1178, %s24, 0
        %s1180 = sadd.s32 %s1179, %s1177
        %s1181 = smul.addr %s1180, 8
        %s1182 = scalar_lea.vmem %s4, %s1181
      $region56: #{_lambda_.31} parent=51 // pred_fallthru
        _
    $region52: #{_lambda_.31} parent=5 // pred_fallthru
      _
  $region6: #{_lambda_.31} parent=0 // loop_footer
    %s14 = sadd.s32 1, %s10
  $region7: #{_lambda_.31} parent=0 // loop_footer_branch
    %9 = sbr.rel target = $region3
  $region8: #{_lambda_.31} parent=0 // loop_exit
    _

// kernel: _lambda_.37
$region0: #{_lambda_.37}
  #allocation0 [shape = 'u32[]', space=smem, size = 0x4, offset = 0x4, fixed_abs, tag = 'smem constant byte address 0x4 - core index']
  #allocation1 [shape = 'u32[144,128]{1,0:T(1,128)}', space=vmem, size = 0x12000, scoped, tag = 'internal scratch']
  #allocation2 [shape = 'f32[128,128]{1,0:T(8,128)}', space=vmem, size = 0x10000, scoped, tag = 'scratch operand']
  %s0 = inlined_call_operand.vmem [shape: bf16[128,256], index: 0, kind: input, shape index: {}]
  %s1 = inlined_call_operand.vmem [shape: bf16[256,128], index: 1, kind: input, shape index: {}]
  %s2 = inlined_call_operand.hbm [shape: f32[1,128], index: 2, kind: input, shape index: {}]
  %s3 = inlined_call_operand.vmem [shape: f32[1,128], index: 3, kind: input, shape index: {}]
  %s4 = inlined_call_operand.vmem [shape: f32[128,128], index: 4, kind: output, shape index: {}]
  %s5 = sld [smem:[#allocation0]]
  $region38: #{_lambda_.37} parent=0
    _
  %s7 = ssub.s32 1, %s5
  %s8 = scalar_select 0, %s7, %s5
  $region1: #{_lambda_.37} parent=0
    #allocation3 [shape = 'u8[512]{0}', space=vmem, size = 0x400, scoped, tag = 'input window, operand 2, single buffered']
    #allocation4 [shape = 's32[1]{0}', space=sflag, size = 0x4, scoped, tag = 'scoped memory for _lambda_.37']
    %9 = vsyncpa [#allocation4], 0
    // Predicated region
    $region2: #{_lambda_.37} parent=1 // pred_check
      _
    $region3: #{_lambda_.37} parent=1 // pred_check_branch
      %11 = sbr.rel (0) target = $region5
    $region4: #{_lambda_.37} parent=1 // pred_region
      _
    $region5: #{_lambda_.37} parent=1 // pred_fallthru
      _
    // Predicated region
    $region6: #{_lambda_.37} parent=1 // pred_check
      _
    $region7: #{_lambda_.37} parent=1 // pred_check_branch
      %13 = sbr.rel (0) target = $region9
    $region8: #{_lambda_.37} parent=1 // pred_region
      _
    $region9: #{_lambda_.37} parent=1 // pred_fallthru
      _
    // Predicated region
    $region10: #{_lambda_.37} parent=1 // pred_check
      _
    $region11: #{_lambda_.37} parent=1 // pred_check_branch
      %15 = sbr.rel (0) target = $region13
    $region12: #{_lambda_.37} parent=1 // pred_region
      %s17 = ssub.s32 16, 16
      %18 = vsyncadd [#allocation4], %s17
      %s20 = sshll.u32 [#allocation3], 4
      %s21 = int_to_ptr.vmem [resolvable:$true] %s20
      %23 = dma.hbm_to_vmem [thread:$0]  %s2, 16, %s21, [#allocation4]
    $region13: #{_lambda_.37} parent=1 // pred_fallthru
      _
    // Predicated region
    $region14: #{_lambda_.37} parent=1 // pred_check
      _
    $region15: #{_lambda_.37} parent=1 // pred_check_branch
      %25 = sbr.rel (0) target = $region17
    $region16: #{_lambda_.37} parent=1 // pred_region
      _
    $region17: #{_lambda_.37} parent=1 // pred_fallthru
      _
    // Predicated region
    $region18: #{_lambda_.37} parent=1 // pred_check
      _
    $region19: #{_lambda_.37} parent=1 // pred_check_branch
      %27 = sbr.rel (0) target = $region21
    $region20: #{_lambda_.37} parent=1 // pred_region
      %28 = dma.done [#allocation4], 16
    $region21: #{_lambda_.37} parent=1 // pred_fallthru
      _
    %p30 = scmp.eq.s32.totalorder 0, 0
    // Predicated region
    $region22: #{_lambda_.37} parent=1 // pred_check
      %p31 = pneg %p30
    $region23: #{_lambda_.37} parent=1 // pred_check_branch
      %33 = sbr.rel (%p31) target = $region25
    $region24: #{_lambda_.37} parent=1 // pred_region
      %34 = vst [vmem:[#allocation2] sm:$0xff] 0.0
      %35 = vst [vmem:[#allocation2 + $0x8] sm:$0xff] 0.0
      %36 = vst [vmem:[#allocation2 + $0x10] sm:$0xff] 0.0
      %37 = vst [vmem:[#allocation2 + $0x18] sm:$0xff] 0.0
      %38 = vst [vmem:[#allocation2 + $0x20] sm:$0xff] 0.0
      %39 = vst [vmem:[#allocation2 + $0x28] sm:$0xff] 0.0
      %40 = vst [vmem:[#allocation2 + $0x30] sm:$0xff] 0.0
      %41 = vst [vmem:[#allocation2 + $0x38] sm:$0xff] 0.0
      %42 = vst [vmem:[#allocation2 + $0x40] sm:$0xff] 0.0
      %43 = vst [vmem:[#allocation2 + $0x48] sm:$0xff] 0.0
      %44 = vst [vmem:[#allocation2 + $0x50] sm:$0xff] 0.0
      %45 = vst [vmem:[#allocation2 + $0x58] sm:$0xff] 0.0
      %46 = vst [vmem:[#allocation2 + $0x60] sm:$0xff] 0.0
      %47 = vst [vmem:[#allocation2 + $0x68] sm:$0xff] 0.0
      %48 = vst [vmem:[#allocation2 + $0x70] sm:$0xff] 0.0
      %49 = vst [vmem:[#allocation2 + $0x78] sm:$0xff] 0.0
    $region25: #{_lambda_.37} parent=1 // pred_fallthru
      _
    %v50 = vld [vmem:[#allocation2] sm:$0xff]
    %v51 = vld [vmem:[#allocation2 + $0x8] sm:$0xff]
    %v52 = vld [vmem:[#allocation2 + $0x10] sm:$0xff]
    %v53 = vld [vmem:[#allocation2 + $0x18] sm:$0xff]
    %v54 = vld [vmem:[#allocation2 + $0x20] sm:$0xff]
    %v55 = vld [vmem:[#allocation2 + $0x28] sm:$0xff]
    %v56 = vld [vmem:[#allocation2 + $0x30] sm:$0xff]
    %v57 = vld [vmem:[#allocation2 + $0x38] sm:$0xff]
    %v58 = vld [vmem:[#allocation2 + $0x40] sm:$0xff]
    %v59 = vld [vmem:[#allocation2 + $0x48] sm:$0xff]
    %v60 = vld [vmem:[#allocation2 + $0x50] sm:$0xff]
    %v61 = vld [vmem:[#allocation2 + $0x58] sm:$0xff]
    %v62 = vld [vmem:[#allocation2 + $0x60] sm:$0xff]
    %v63 = vld [vmem:[#allocation2 + $0x68] sm:$0xff]
    %v64 = vld [vmem:[#allocation2 + $0x70] sm:$0xff]
    %v65 = vld [vmem:[#allocation2 + $0x78] sm:$0xff]
    %v66 = vld [vmem:[%s0] sm:$0xff]
    %v67 = vld [vmem:[%s0 + $0x8] sm:$0xff]
    %v68 = vld [vmem:[%s0 + $0x10] sm:$0xff]
    %v69 = vld [vmem:[%s0 + $0x18] sm:$0xff]
    %v70 = vld [vmem:[%s0 + $0x20] sm:$0xff]
    %v71 = vld [vmem:[%s0 + $0x28] sm:$0xff]
    %v72 = vld [vmem:[%s0 + $0x30] sm:$0xff]
    %v73 = vld [vmem:[%s0 + $0x38] sm:$0xff]
    %v74 = vld [vmem:[%s0 + $0x40] sm:$0xff]
    %v75 = vld [vmem:[%s0 + $0x48] sm:$0xff]
    %v76 = vld [vmem:[%s0 + $0x50] sm:$0xff]
    %v77 = vld [vmem:[%s0 + $0x58] sm:$0xff]
    %v78 = vld [vmem:[%s0 + $0x60] sm:$0xff]
    %v79 = vld [vmem:[%s0 + $0x68] sm:$0xff]
    %v80 = vld [vmem:[%s0 + $0x70] sm:$0xff]
    %v81 = vld [vmem:[%s0 + $0x78] sm:$0xff]
    %v82 = vld [vmem:[%s1] sm:$0xf]
    %v83 = vld [vmem:[%s1 + $0x4] sm:$0xf]
    %v84 = vld [vmem:[%s1 + $0x8] sm:$0xf]
    %v85 = vld [vmem:[%s1 + $0xc] sm:$0xf]
    %v86 = vld [vmem:[%s1 + $0x10] sm:$0xf]
    %v87 = vld [vmem:[%s1 + $0x14] sm:$0xf]
    %v88 = vld [vmem:[%s1 + $0x18] sm:$0xf]
    %v89 = vld [vmem:[%s1 + $0x1c] sm:$0xf]
    %v90 = vld [vmem:[%s1 + $0x20] sm:$0xf]
    %v91 = vld [vmem:[%s1 + $0x24] sm:$0xf]
    %v92 = vld [vmem:[%s1 + $0x28] sm:$0xf]
    %v93 = vld [vmem:[%s1 + $0x2c] sm:$0xf]
    %v94 = vld [vmem:[%s1 + $0x30] sm:$0xf]
    %v95 = vld [vmem:[%s1 + $0x34] sm:$0xf]
    %v96 = vld [vmem:[%s1 + $0x38] sm:$0xf]
    %v97 = vld [vmem:[%s1 + $0x3c] sm:$0xf]
    %v98 = vld [vmem:[%s1 + $0x40] sm:$0xf]
    %v99 = vld [vmem:[%s1 + $0x44] sm:$0xf]
    %v100 = vld [vmem:[%s1 + $0x48] sm:$0xf]
    %v101 = vld [vmem:[%s1 + $0x4c] sm:$0xf]
    %v102 = vld [vmem:[%s1 + $0x50] sm:$0xf]
    %v103 = vld [vmem:[%s1 + $0x54] sm:$0xf]
    %v104 = vld [vmem:[%s1 + $0x58] sm:$0xf]
    %v105 = vld [vmem:[%s1 + $0x5c] sm:$0xf]
    %v106 = vld [vmem:[%s1 + $0x60] sm:$0xf]
    %v107 = vld [vmem:[%s1 + $0x64] sm:$0xf]
    %v108 = vld [vmem:[%s1 + $0x68] sm:$0xf]
    %v109 = vld [vmem:[%s1 + $0x6c] sm:$0xf]
    %v110 = vld [vmem:[%s1 + $0x70] sm:$0xf]
    %v111 = vld [vmem:[%s1 + $0x74] sm:$0xf]
    %v112 = vld [vmem:[%s1 + $0x78] sm:$0xf]
    %v113 = vld [vmem:[%s1 + $0x7c] sm:$0xf]
    %v130 = vunpack.c.l.b16 %v66
    %v131 = vunpack.c.h.b16 %v66
    %v132 = vunpack.c.l.b16 %v67
    %v133 = vunpack.c.h.b16 %v67
    %v134 = vunpack.c.l.b16 %v68
    %v135 = vunpack.c.h.b16 %v68
    %v136 = vunpack.c.l.b16 %v69
    %v137 = vunpack.c.h.b16 %v69
    %v138 = vunpack.c.l.b16 %v70
    %v139 = vunpack.c.h.b16 %v70
    %v140 = vunpack.c.l.b16 %v71
    %v141 = vunpack.c.h.b16 %v71
    %v142 = vunpack.c.l.b16 %v72
    %v143 = vunpack.c.h.b16 %v72
    %v144 = vunpack.c.l.b16 %v73
    %v145 = vunpack.c.h.b16 %v73
    %v146 = vunpack.c.l.b16 %v74
    %v147 = vunpack.c.h.b16 %v74
    %v148 = vunpack.c.l.b16 %v75
    %v149 = vunpack.c.h.b16 %v75
    %v150 = vunpack.c.l.b16 %v76
    %v151 = vunpack.c.h.b16 %v76
    %v152 = vunpack.c.l.b16 %v77
    %v153 = vunpack.c.h.b16 %v77
    %v154 = vunpack.c.l.b16 %v78
    %v155 = vunpack.c.h.b16 %v78
    %v156 = vunpack.c.l.b16 %v79
    %v157 = vunpack.c.h.b16 %v79
    %v158 = vunpack.c.l.b16 %v80
    %v159 = vunpack.c.h.b16 %v80
    %v160 = vunpack.c.l.b16 %v81
    %v161 = vunpack.c.h.b16 %v81
    %v162 = vpack.c.b16 %v132, %v130
    %v163 = vpack.c.b16 %v133, %v131
    %v164 = vpack.c.b16 %v136, %v134
    %v165 = vpack.c.b16 %v137, %v135
    %v166 = vpack.c.b16 %v140, %v138
    %v167 = vpack.c.b16 %v141, %v139
    %v168 = vpack.c.b16 %v144, %v142
    %v169 = vpack.c.b16 %v145, %v143
    %v170 = vpack.c.b16 %v148, %v146
    %v171 = vpack.c.b16 %v149, %v147
    %v172 = vpack.c.b16 %v152, %v150
    %v173 = vpack.c.b16 %v153, %v151
    %v174 = vpack.c.b16 %v156, %v154
    %v175 = vpack.c.b16 %v157, %v155
    %v176 = vpack.c.b16 %v160, %v158
    %v177 = vpack.c.b16 %v161, %v159
    %v226 = vunpack.c.l.b16 %v82
    %v227 = vunpack.c.l.b16 %v83
    %v228 = vunpack.c.l.b16 %v84
    %v229 = vunpack.c.l.b16 %v85
    %v230 = vunpack.c.l.b16 %v86
    %v231 = vunpack.c.l.b16 %v87
    %v232 = vunpack.c.l.b16 %v88
    %v233 = vunpack.c.l.b16 %v89
    %v234 = vunpack.c.l.b16 %v90
    %v235 = vunpack.c.l.b16 %v91
    %v236 = vunpack.c.l.b16 %v92
    %v237 = vunpack.c.l.b16 %v93
    %v238 = vunpack.c.l.b16 %v94
    %v239 = vunpack.c.l.b16 %v95
    %v240 = vunpack.c.l.b16 %v96
    %v241 = vunpack.c.l.b16 %v97
    %v242 = vunpack.c.l.b16 %v98
    %v243 = vunpack.c.l.b16 %v99
    %v244 = vunpack.c.l.b16 %v100
    %v245 = vunpack.c.l.b16 %v101
    %v246 = vunpack.c.l.b16 %v102
    %v247 = vunpack.c.l.b16 %v103
    %v248 = vunpack.c.l.b16 %v104
    %v249 = vunpack.c.l.b16 %v105
    %v250 = vunpack.c.l.b16 %v106
    %v251 = vunpack.c.l.b16 %v107
    %v252 = vunpack.c.l.b16 %v108
    %v253 = vunpack.c.l.b16 %v109
    %v254 = vunpack.c.l.b16 %v110
    %v255 = vunpack.c.l.b16 %v111
    %v256 = vunpack.c.l.b16 %v112
    %v257 = vunpack.c.l.b16 %v113
    %v258 = vpack.c.b16 %v227, %v226
    %v259 = vpack.c.b16 %v229, %v228
    %v260 = vpack.c.b16 %v231, %v230
    %v261 = vpack.c.b16 %v233, %v232
    %v262 = vpack.c.b16 %v235, %v234
    %v263 = vpack.c.b16 %v237, %v236
    %v264 = vpack.c.b16 %v239, %v238
    %v265 = vpack.c.b16 %v241, %v240
    %v266 = vpack.c.b16 %v243, %v242
    %v267 = vpack.c.b16 %v245, %v244
    %v268 = vpack.c.b16 %v247, %v246
    %v269 = vpack.c.b16 %v249, %v248
    %v270 = vpack.c.b16 %v251, %v250
    %v271 = vpack.c.b16 %v253, %v252
    %v272 = vpack.c.b16 %v255, %v254
    %v273 = vpack.c.b16 %v257, %v256
    %290 = vmatprep.subr.bf16.mxu0 0
    %291 = vmatpush1.bf16.msra.mxu0 %v258
    %292 = vmatprep.subr.bf16.mxu0 0
    %293 = vmatpush1.bf16.msra.mxu0 %v259
    %294 = vmatprep.subr.bf16.mxu0 0
    %295 = vmatpush1.bf16.msra.mxu0 %v260
    %296 = vmatprep.subr.bf16.mxu0 0
    %297 = vmatpush1.bf16.msra.mxu0 %v261
    %298 = vmatprep.subr.bf16.mxu0 0
    %299 = vmatpush1.bf16.msra.mxu0 %v262
    %300 = vmatprep.subr.bf16.mxu0 0
    %301 = vmatpush1.bf16.msra.mxu0 %v263
    %302 = vmatprep.subr.bf16.mxu0 0
    %303 = vmatpush1.bf16.msra.mxu0 %v264
    %304 = vmatprep.subr.bf16.mxu0 0
    %305 = vmatpush1.bf16.msra.mxu0 %v265
    %306 = vmatprep.subr.bf16.mxu0 0
    %307 = vmatpush1.bf16.msra.mxu0 %v266
    %308 = vmatprep.subr.bf16.mxu0 0
    %309 = vmatpush1.bf16.msra.mxu0 %v267
    %310 = vmatprep.subr.bf16.mxu0 0
    %311 = vmatpush1.bf16.msra.mxu0 %v268
    %312 = vmatprep.subr.bf16.mxu0 0
    %313 = vmatpush1.bf16.msra.mxu0 %v269
    %314 = vmatprep.subr.bf16.mxu0 0
    %315 = vmatpush1.bf16.msra.mxu0 %v270
    %316 = vmatprep.subr.bf16.mxu0 0
    %317 = vmatpush1.bf16.msra.mxu0 %v271
    %318 = vmatprep.subr.bf16.mxu0 0
    %319 = vmatpush1.bf16.msra.mxu0 %v272
    %320 = vmatprep.subr.bf16.mxu0 0
    %321 = vmatpush1.bf16.msra.mxu0 %v273
    %322 = vmatprep.mubr.bf16.mxu0 %v163
    %323 = vmatmul.mubr.bf16.gmra.mrb[0].mxu0 %v162
    %v324 = vpop.f32.mrb[0].mxu0
    %v325 = vadd.f32 0.0, %v324
    %v326 = vpop.f32.mrb[0].mxu0
    %v327 = vpop.f32.mrb[0].mxu0
    %v328 = vadd.f32 0.0, %v327
    %v329 = vpop.f32.mrb[0].mxu0
    %330 = vmatprep.mubr.bf16.mxu0 %v165
    %331 = vmatmul.mubr.bf16.gmra.mrb[0].mxu0 %v164
    %v332 = vpop.f32.mrb[0].mxu0
    %v333 = vadd.f32 0.0, %v332
    %v334 = vpop.f32.mrb[0].mxu0
    %v335 = vpop.f32.mrb[0].mxu0
    %v336 = vadd.f32 0.0, %v335
    %v337 = vpop.f32.mrb[0].mxu0
    %338 = vmatprep.mubr.bf16.mxu0 %v167
    %339 = vmatmul.mubr.bf16.gmra.mrb[0].mxu0 %v166
    %v340 = vpop.f32.mrb[0].mxu0
    %v341 = vadd.f32 0.0, %v340
    %v342 = vpop.f32.mrb[0].mxu0
    %v343 = vpop.f32.mrb[0].mxu0
    %v344 = vadd.f32 0.0, %v343
    %v345 = vpop.f32.mrb[0].mxu0
    %346 = vmatprep.mubr.bf16.mxu0 %v169
    %347 = vmatmul.mubr.bf16.gmra.mrb[0].mxu0 %v168
    %v348 = vpop.f32.mrb[0].mxu0
    %v349 = vadd.f32 0.0, %v348
    %v350 = vpop.f32.mrb[0].mxu0
    %v351 = vpop.f32.mrb[0].mxu0
    %v352 = vadd.f32 0.0, %v351
    %v353 = vpop.f32.mrb[0].mxu0
    %354 = vmatprep.mubr.bf16.mxu0 %v171
    %355 = vmatmul.mubr.bf16.gmra.mrb[0].mxu0 %v170
    %v356 = vpop.f32.mrb[0].mxu0
    %v357 = vadd.f32 0.0, %v356
    %v358 = vpop.f32.mrb[0].mxu0
    %v359 = vpop.f32.mrb[0].mxu0
    %v360 = vadd.f32 0.0, %v359
    %v361 = vpop.f32.mrb[0].mxu0
    %362 = vmatprep.mubr.bf16.mxu0 %v173
    %363 = vmatmul.mubr.bf16.gmra.mrb[0].mxu0 %v172
    %v364 = vpop.f32.mrb[0].mxu0
    %v365 = vadd.f32 0.0, %v364
    %v366 = vpop.f32.mrb[0].mxu0
    %v367 = vpop.f32.mrb[0].mxu0
    %v368 = vadd.f32 0.0, %v367
    %v369 = vpop.f32.mrb[0].mxu0
    %370 = vmatprep.mubr.bf16.mxu0 %v175
    %371 = vmatmul.mubr.bf16.gmra.mrb[0].mxu0 %v174
    %v372 = vpop.f32.mrb[0].mxu0
    %v373 = vadd.f32 0.0, %v372
    %v374 = vpop.f32.mrb[0].mxu0
    %v375 = vpop.f32.mrb[0].mxu0
    %v376 = vadd.f32 0.0, %v375
    %v377 = vpop.f32.mrb[0].mxu0
    %378 = vmatprep.mubr.bf16.mxu0 %v177
    %379 = vmatmul.mubr.bf16.gmra.mrb[0].mxu0 %v176
    %v380 = vpop.f32.mrb[0].mxu0
    %v381 = vadd.f32 0.0, %v380
    %v382 = vpop.f32.mrb[0].mxu0
    %v383 = vpop.f32.mrb[0].mxu0
    %v384 = vadd.f32 0.0, %v383
    %v385 = vpop.f32.mrb[0].mxu0
    %386 = vdwg.mxu0
    %v387 = vadd.f32 %v50, %v325
    %v388 = vadd.f32 %v51, %v328
    %v389 = vadd.f32 %v52, %v333
    %v390 = vadd.f32 %v53, %v336
    %v391 = vadd.f32 %v54, %v341
    %v392 = vadd.f32 %v55, %v344
    %v393 = vadd.f32 %v56, %v349
    %v394 = vadd.f32 %v57, %v352
    %v395 = vadd.f32 %v58, %v357
    %v396 = vadd.f32 %v59, %v360
    %v397 = vadd.f32 %v60, %v365
    %v398 = vadd.f32 %v61, %v368
    %v399 = vadd.f32 %v62, %v373
    %v400 = vadd.f32 %v63, %v376
    %v401 = vadd.f32 %v64, %v381
    %v402 = vadd.f32 %v65, %v384
    %403 = vst [vmem:[#allocation2] sm:$0xff] %v387
    %404 = vst [vmem:[#allocation2 + $0x8] sm:$0xff] %v388
    %405 = vst [vmem:[#allocation2 + $0x10] sm:$0xff] %v389
    %406 = vst [vmem:[#allocation2 + $0x18] sm:$0xff] %v390
    %407 = vst [vmem:[#allocation2 + $0x20] sm:$0xff] %v391
    %408 = vst [vmem:[#allocation2 + $0x28] sm:$0xff] %v392
    %409 = vst [vmem:[#allocation2 + $0x30] sm:$0xff] %v393
    %410 = vst [vmem:[#allocation2 + $0x38] sm:$0xff] %v394
    %411 = vst [vmem:[#allocation2 + $0x40] sm:$0xff] %v395
    %412 = vst [vmem:[#allocation2 + $0x48] sm:$0xff] %v396
    %413 = vst [vmem:[#allocation2 + $0x50] sm:$0xff] %v397
    %414 = vst [vmem:[#allocation2 + $0x58] sm:$0xff] %v398
    %415 = vst [vmem:[#allocation2 + $0x60] sm:$0xff] %v399
    %416 = vst [vmem:[#allocation2 + $0x68] sm:$0xff] %v400
    %417 = vst [vmem:[#allocation2 + $0x70] sm:$0xff] %v401
    %418 = vst [vmem:[#allocation2 + $0x78] sm:$0xff] %v402
    // Predicated region
    $region26: #{_lambda_.37} parent=1 // pred_check
      %p419 = pneg %p30
    $region27: #{_lambda_.37} parent=1 // pred_check_branch
      %421 = sbr.rel (%p419) target = $region29
    $region28: #{_lambda_.37} parent=1 // pred_region
      %v422 = vld [vmem:[#allocation2] sm:$0xff]
      %v423 = vld [vmem:[#allocation2 + $0x8] sm:$0xff]
      %v424 = vld [vmem:[#allocation2 + $0x10] sm:$0xff]
      %v425 = vld [vmem:[#allocation2 + $0x18] sm:$0xff]
      %v426 = vld [vmem:[#allocation2 + $0x20] sm:$0xff]
      %v427 = vld [vmem:[#allocation2 + $0x28] sm:$0xff]
      %v428 = vld [vmem:[#allocation2 + $0x30] sm:$0xff]
      %v429 = vld [vmem:[#allocation2 + $0x38] sm:$0xff]
      %v430 = vld [vmem:[#allocation2 + $0x40] sm:$0xff]
      %v431 = vld [vmem:[#allocation2 + $0x48] sm:$0xff]
      %v432 = vld [vmem:[#allocation2 + $0x50] sm:$0xff]
      %v433 = vld [vmem:[#allocation2 + $0x58] sm:$0xff]
      %v434 = vld [vmem:[#allocation2 + $0x60] sm:$0xff]
      %v435 = vld [vmem:[#allocation2 + $0x68] sm:$0xff]
      %v436 = vld [vmem:[#allocation2 + $0x70] sm:$0xff]
      %v437 = vld [vmem:[#allocation2 + $0x78] sm:$0xff]
      %v438 = vld [vmem:[#allocation3] sm:$0x1]
      %v440 = vlaneseq
      %v441 = vshrl.u32 %v440, 7
      %v442 = vsub.s32 0, %v441
      %v443 = vrot.slane %v438, %v442
      %v445 = vmul.f32 %v422, %v443
      %v446 = vmul.f32 %v423, %v443
      %v447 = vmul.f32 %v424, %v443
      %v448 = vmul.f32 %v425, %v443
      %v449 = vmul.f32 %v426, %v443
      %v450 = vmul.f32 %v427, %v443
      %v451 = vmul.f32 %v428, %v443
      %v452 = vmul.f32 %v429, %v443
      %v453 = vmul.f32 %v430, %v443
      %v454 = vmul.f32 %v431, %v443
      %v455 = vmul.f32 %v432, %v443
      %v456 = vmul.f32 %v433, %v443
      %v457 = vmul.f32 %v434, %v443
      %v458 = vmul.f32 %v435, %v443
      %v459 = vmul.f32 %v436, %v443
      %v460 = vmul.f32 %v437, %v443
      %v461 = vld [vmem:[%s3] sm:$0x1]
      %v463 = vlaneseq
      %v464 = vshrl.u32 %v463, 7
      %v465 = vsub.s32 0, %v464
      %v466 = vrot.slane %v461, %v465
      %v468 = vadd.f32 %v445, %v466
      %v469 = vadd.f32 %v446, %v466
      %v470 = vadd.f32 %v447, %v466
      %v471 = vadd.f32 %v448, %v466
      %v472 = vadd.f32 %v449, %v466
      %v473 = vadd.f32 %v450, %v466
      %v474 = vadd.f32 %v451, %v466
      %v475 = vadd.f32 %v452, %v466
      %v476 = vadd.f32 %v453, %v466
      %v477 = vadd.f32 %v454, %v466
      %v478 = vadd.f32 %v455, %v466
      %v479 = vadd.f32 %v456, %v466
      %v480 = vadd.f32 %v457, %v466
      %v481 = vadd.f32 %v458, %v466
      %v482 = vadd.f32 %v459, %v466
      %v483 = vadd.f32 %v460, %v466
      %v484 = vsub.f32 0.0, %v468
      %v485 = vsub.f32 0.0, %v469
      %v486 = vsub.f32 0.0, %v470
      %v487 = vsub.f32 0.0, %v471
      %v488 = vsub.f32 0.0, %v472
      %v489 = vsub.f32 0.0, %v473
      %v490 = vsub.f32 0.0, %v474
      %v491 = vsub.f32 0.0, %v475
      %v492 = vsub.f32 0.0, %v476
      %v493 = vsub.f32 0.0, %v477
      %v494 = vsub.f32 0.0, %v478
      %v495 = vsub.f32 0.0, %v479
      %v496 = vsub.f32 0.0, %v480
      %v497 = vsub.f32 0.0, %v481
      %v498 = vsub.f32 0.0, %v482
      %v499 = vsub.f32 0.0, %v483
      %v500 = vmul.f32 %v484, 1.442695
      %v501 = vpow.pop %v500
      %v502 = vmul.f32 %v485, 1.442695
      %v503 = vpow.pop %v502
      %v504 = vmul.f32 %v486, 1.442695
      %v505 = vpow.pop %v504
      %v506 = vmul.f32 %v487, 1.442695
      %v507 = vpow.pop %v506
      %v508 = vmul.f32 %v488, 1.442695
      %v509 = vpow.pop %v508
      %v510 = vmul.f32 %v489, 1.442695
      %v511 = vpow.pop %v510
      %v512 = vmul.f32 %v490, 1.442695
      %v513 = vpow.pop %v512
      %v514 = vmul.f32 %v491, 1.442695
      %v515 = vpow.pop %v514
      %v516 = vmul.f32 %v492, 1.442695
      %v517 = vpow.pop %v516
      %v518 = vmul.f32 %v493, 1.442695
      %v519 = vpow.pop %v518
      %v520 = vmul.f32 %v494, 1.442695
      %v521 = vpow.pop %v520
      %v522 = vmul.f32 %v495, 1.442695
      %v523 = vpow.pop %v522
      %v524 = vmul.f32 %v496, 1.442695
      %v525 = vpow.pop %v524
      %v526 = vmul.f32 %v497, 1.442695
      %v527 = vpow.pop %v526
      %v528 = vmul.f32 %v498, 1.442695
      %v529 = vpow.pop %v528
      %v530 = vmul.f32 %v499, 1.442695
      %v531 = vpow.pop %v530
      %v532 = vadd.f32 %v501, 1.0
      %v533 = vadd.f32 %v503, 1.0
      %v534 = vadd.f32 %v505, 1.0
      %v535 = vadd.f32 %v507, 1.0
      %v536 = vadd.f32 %v509, 1.0
      %v537 = vadd.f32 %v511, 1.0
      %v538 = vadd.f32 %v513, 1.0
      %v539 = vadd.f32 %v515, 1.0
      %v540 = vadd.f32 %v517, 1.0
      %v541 = vadd.f32 %v519, 1.0
      %v542 = vadd.f32 %v521, 1.0
      %v543 = vadd.f32 %v523, 1.0
      %v544 = vadd.f32 %v525, 1.0
      %v545 = vadd.f32 %v527, 1.0
      %v546 = vadd.f32 %v529, 1.0
      %v547 = vadd.f32 %v531, 1.0
      %v548 = vrcp.pop %v532
      %v549 = vmul.f32 1.0, %v548
      %v550 = vrcp.pop %v533
      %v551 = vmul.f32 1.0, %v550
      %v552 = vrcp.pop %v534
      %v553 = vmul.f32 1.0, %v552
      %v554 = vrcp.pop %v535
      %v555 = vmul.f32 1.0, %v554
      %v556 = vrcp.pop %v536
      %v557 = vmul.f32 1.0, %v556
      %v558 = vrcp.pop %v537
      %v559 = vmul.f32 1.0, %v558
      %v560 = vrcp.pop %v538
      %v561 = vmul.f32 1.0, %v560
      %v562 = vrcp.pop %v539
      %v563 = vmul.f32 1.0, %v562
      %v564 = vrcp.pop %v540
      %v565 = vmul.f32 1.0, %v564
      %v566 = vrcp.pop %v541
      %v567 = vmul.f32 1.0, %v566
      %v568 = vrcp.pop %v542
      %v569 = vmul.f32 1.0, %v568
      %v570 = vrcp.pop %v543
      %v571 = vmul.f32 1.0, %v570
      %v572 = vrcp.pop %v544
      %v573 = vmul.f32 1.0, %v572
      %v574 = vrcp.pop %v545
      %v575 = vmul.f32 1.0, %v574
      %v576 = vrcp.pop %v546
      %v577 = vmul.f32 1.0, %v576
      %v578 = vrcp.pop %v547
      %v579 = vmul.f32 1.0, %v578
      %v580 = vmul.f32 %v468, %v549
      %v581 = vmul.f32 %v469, %v551
      %v582 = vmul.f32 %v470, %v553
      %v583 = vmul.f32 %v471, %v555
      %v584 = vmul.f32 %v472, %v557
      %v585 = vmul.f32 %v473, %v559
      %v586 = vmul.f32 %v474, %v561
      %v587 = vmul.f32 %v475, %v563
      %v588 = vmul.f32 %v476, %v565
      %v589 = vmul.f32 %v477, %v567
      %v590 = vmul.f32 %v478, %v569
      %v591 = vmul.f32 %v479, %v571
      %v592 = vmul.f32 %v480, %v573
      %v593 = vmul.f32 %v481, %v575
      %v594 = vmul.f32 %v482, %v577
      %v595 = vmul.f32 %v483, %v579
      %596 = vst [vmem:[%s4] sm:$0xff] %v580
      %597 = vst [vmem:[%s4 + $0x8] sm:$0xff] %v581
      %598 = vst [vmem:[%s4 + $0x10] sm:$0xff] %v582
      %599 = vst [vmem:[%s4 + $0x18] sm:$0xff] %v583
      %600 = vst [vmem:[%s4 + $0x20] sm:$0xff] %v584
      %601 = vst [vmem:[%s4 + $0x28] sm:$0xff] %v585
      %602 = vst [vmem:[%s4 + $0x30] sm:$0xff] %v586
      %603 = vst [vmem:[%s4 + $0x38] sm:$0xff] %v587
      %604 = vst [vmem:[%s4 + $0x40] sm:$0xff] %v588
      %605 = vst [vmem:[%s4 + $0x48] sm:$0xff] %v589
      %606 = vst [vmem:[%s4 + $0x50] sm:$0xff] %v590
      %607 = vst [vmem:[%s4 + $0x58] sm:$0xff] %v591
      %608 = vst [vmem:[%s4 + $0x60] sm:$0xff] %v592
      %609 = vst [vmem:[%s4 + $0x68] sm:$0xff] %v593
      %610 = vst [vmem:[%s4 + $0x70] sm:$0xff] %v594
      %611 = vst [vmem:[%s4 + $0x78] sm:$0xff] %v595
    $region29: #{_lambda_.37} parent=1 // pred_fallthru
      _
    // Predicated region
    $region30: #{_lambda_.37} parent=1 // pred_check
      _
    $region31: #{_lambda_.37} parent=1 // pred_check_branch
      %613 = sbr.rel (0) target = $region33
    $region32: #{_lambda_.37} parent=1 // pred_region
      _
    $region33: #{_lambda_.37} parent=1 // pred_fallthru
      _
    // Predicated region
    $region34: #{_lambda_.37} parent=1 // pred_check
      _
    $region35: #{_lambda_.37} parent=1 // pred_check_branch
      %615 = sbr.rel (0) target = $region37
    $region36: #{_lambda_.37} parent=1 // pred_region
      _
    $region37: #{_lambda_.37} parent=1 // pred_fallthru
      _
    %616 = vsyncpa [#allocation4], 1

// kernel: _lambda_.38
$region0: #{_lambda_.38}
  #allocation0 [shape = 'u32[]', space=smem, size = 0x4, offset = 0x4, fixed_abs, tag = 'smem constant byte address 0x4 - core index']
  #allocation1 [shape = 'u32[144,128]{1,0:T(1,128)}', space=vmem, size = 0x12000, scoped, tag = 'internal scratch']
  #allocation2 [shape = 'f32[128,128]{1,0:T(8,128)}', space=vmem, size = 0x10000, scoped, tag = 'scratch operand']
  %s0 = inlined_call_operand.vmem [shape: bf16[128,128], index: 0, kind: input, shape index: {}]
  %s1 = inlined_call_operand.vmem [shape: bf16[128,128], index: 1, kind: input, shape index: {}]
  %s2 = inlined_call_operand.hbm [shape: f32[1,128], index: 2, kind: input, shape index: {}]
  %s3 = inlined_call_operand.vmem [shape: f32[1,128], index: 3, kind: input, shape index: {}]
  %s4 = inlined_call_operand.vmem [shape: f32[128,128], index: 4, kind: output, shape index: {}]
  %s5 = sld [smem:[#allocation0]]
  $region38: #{_lambda_.38} parent=0
    _
  %s7 = ssub.s32 1, %s5
  %s8 = scalar_select 0, %s7, %s5
  $region1: #{_lambda_.38} parent=0
    #allocation3 [shape = 'u8[512]{0}', space=vmem, size = 0x400, scoped, tag = 'input window, operand 2, single buffered']
    #allocation4 [shape = 's32[1]{0}', space=sflag, size = 0x4, scoped, tag = 'scoped memory for _lambda_.38']
    %9 = vsyncpa [#allocation4], 0
    // Predicated region
    $region2: #{_lambda_.38} parent=1 // pred_check
      _
    $region3: #{_lambda_.38} parent=1 // pred_check_branch
      %11 = sbr.rel (0) target = $region5
    $region4: #{_lambda_.38} parent=1 // pred_region
      _
    $region5: #{_lambda_.38} parent=1 // pred_fallthru
      _
    // Predicated region
    $region6: #{_lambda_.38} parent=1 // pred_check
      _
    $region7: #{_lambda_.38} parent=1 // pred_check_branch
      %13 = sbr.rel (0) target = $region9
    $region8: #{_lambda_.38} parent=1 // pred_region
      _
    $region9: #{_lambda_.38} parent=1 // pred_fallthru
      _
    // Predicated region
    $region10: #{_lambda_.38} parent=1 // pred_check
      _
    $region11: #{_lambda_.38} parent=1 // pred_check_branch
      %15 = sbr.rel (0) target = $region13
    $region12: #{_lambda_.38} parent=1 // pred_region
      %s17 = ssub.s32 16, 16
      %18 = vsyncadd [#allocation4], %s17
      %s20 = sshll.u32 [#allocation3], 4
      %s21 = int_to_ptr.vmem [resolvable:$true] %s20
      %23 = dma.hbm_to_vmem [thread:$0]  %s2, 16, %s21, [#allocation4]
    $region13: #{_lambda_.38} parent=1 // pred_fallthru
      _
    // Predicated region
    $region14: #{_lambda_.38} parent=1 // pred_check
      _
    $region15: #{_lambda_.38} parent=1 // pred_check_branch
      %25 = sbr.rel (0) target = $region17
    $region16: #{_lambda_.38} parent=1 // pred_region
      _
    $region17: #{_lambda_.38} parent=1 // pred_fallthru
      _
    // Predicated region
    $region18: #{_lambda_.38} parent=1 // pred_check
      _
    $region19: #{_lambda_.38} parent=1 // pred_check_branch
      %27 = sbr.rel (0) target = $region21
    $region20: #{_lambda_.38} parent=1 // pred_region
      %28 = dma.done [#allocation4], 16
    $region21: #{_lambda_.38} parent=1 // pred_fallthru
      _
    %p30 = scmp.eq.s32.totalorder 0, 0
    // Predicated region
    $region22: #{_lambda_.38} parent=1 // pred_check
      %p31 = pneg %p30
    $region23: #{_lambda_.38} parent=1 // pred_check_branch
      %33 = sbr.rel (%p31) target = $region25
    $region24: #{_lambda_.38} parent=1 // pred_region
      %34 = vst [vmem:[#allocation2] sm:$0xff] 0.0
      %35 = vst [vmem:[#allocation2 + $0x8] sm:$0xff] 0.0
      %36 = vst [vmem:[#allocation2 + $0x10] sm:$0xff] 0.0
      %37 = vst [vmem:[#allocation2 + $0x18] sm:$0xff] 0.0
      %38 = vst [vmem:[#allocation2 + $0x20] sm:$0xff] 0.0
      %39 = vst [vmem:[#allocation2 + $0x28] sm:$0xff] 0.0
      %40 = vst [vmem:[#allocation2 + $0x30] sm:$0xff] 0.0
      %41 = vst [vmem:[#allocation2 + $0x38] sm:$0xff] 0.0
      %42 = vst [vmem:[#allocation2 + $0x40] sm:$0xff] 0.0
      %43 = vst [vmem:[#allocation2 + $0x48] sm:$0xff] 0.0
      %44 = vst [vmem:[#allocation2 + $0x50] sm:$0xff] 0.0
      %45 = vst [vmem:[#allocation2 + $0x58] sm:$0xff] 0.0
      %46 = vst [vmem:[#allocation2 + $0x60] sm:$0xff] 0.0
      %47 = vst [vmem:[#allocation2 + $0x68] sm:$0xff] 0.0
      %48 = vst [vmem:[#allocation2 + $0x70] sm:$0xff] 0.0
      %49 = vst [vmem:[#allocation2 + $0x78] sm:$0xff] 0.0
    $region25: #{_lambda_.38} parent=1 // pred_fallthru
      _
    %v50 = vld [vmem:[#allocation2] sm:$0xff]
    %v51 = vld [vmem:[#allocation2 + $0x8] sm:$0xff]
    %v52 = vld [vmem:[#allocation2 + $0x10] sm:$0xff]
    %v53 = vld [vmem:[#allocation2 + $0x18] sm:$0xff]
    %v54 = vld [vmem:[#allocation2 + $0x20] sm:$0xff]
    %v55 = vld [vmem:[#allocation2 + $0x28] sm:$0xff]
    %v56 = vld [vmem:[#allocation2 + $0x30] sm:$0xff]
    %v57 = vld [vmem:[#allocation2 + $0x38] sm:$0xff]
    %v58 = vld [vmem:[#allocation2 + $0x40] sm:$0xff]
    %v59 = vld [vmem:[#allocation2 + $0x48] sm:$0xff]
    %v60 = vld [vmem:[#allocation2 + $0x50] sm:$0xff]
    %v61 = vld [vmem:[#allocation2 + $0x58] sm:$0xff]
    %v62 = vld [vmem:[#allocation2 + $0x60] sm:$0xff]
    %v63 = vld [vmem:[#allocation2 + $0x68] sm:$0xff]
    %v64 = vld [vmem:[#allocation2 + $0x70] sm:$0xff]
    %v65 = vld [vmem:[#allocation2 + $0x78] sm:$0xff]
    %v66 = vld [vmem:[%s0] sm:$0xf]
    %v67 = vld [vmem:[%s0 + $0x4] sm:$0xf]
    %v68 = vld [vmem:[%s0 + $0x8] sm:$0xf]
    %v69 = vld [vmem:[%s0 + $0xc] sm:$0xf]
    %v70 = vld [vmem:[%s0 + $0x10] sm:$0xf]
    %v71 = vld [vmem:[%s0 + $0x14] sm:$0xf]
    %v72 = vld [vmem:[%s0 + $0x18] sm:$0xf]
    %v73 = vld [vmem:[%s0 + $0x1c] sm:$0xf]
    %v74 = vld [vmem:[%s0 + $0x20] sm:$0xf]
    %v75 = vld [vmem:[%s0 + $0x24] sm:$0xf]
    %v76 = vld [vmem:[%s0 + $0x28] sm:$0xf]
    %v77 = vld [vmem:[%s0 + $0x2c] sm:$0xf]
    %v78 = vld [vmem:[%s0 + $0x30] sm:$0xf]
    %v79 = vld [vmem:[%s0 + $0x34] sm:$0xf]
    %v80 = vld [vmem:[%s0 + $0x38] sm:$0xf]
    %v81 = vld [vmem:[%s0 + $0x3c] sm:$0xf]
    %v82 = vld [vmem:[%s1] sm:$0xf]
    %v83 = vld [vmem:[%s1 + $0x4] sm:$0xf]
    %v84 = vld [vmem:[%s1 + $0x8] sm:$0xf]
    %v85 = vld [vmem:[%s1 + $0xc] sm:$0xf]
    %v86 = vld [vmem:[%s1 + $0x10] sm:$0xf]
    %v87 = vld [vmem:[%s1 + $0x14] sm:$0xf]
    %v88 = vld [vmem:[%s1 + $0x18] sm:$0xf]
    %v89 = vld [vmem:[%s1 + $0x1c] sm:$0xf]
    %v90 = vld [vmem:[%s1 + $0x20] sm:$0xf]
    %v91 = vld [vmem:[%s1 + $0x24] sm:$0xf]
    %v92 = vld [vmem:[%s1 + $0x28] sm:$0xf]
    %v93 = vld [vmem:[%s1 + $0x2c] sm:$0xf]
    %v94 = vld [vmem:[%s1 + $0x30] sm:$0xf]
    %v95 = vld [vmem:[%s1 + $0x34] sm:$0xf]
    %v96 = vld [vmem:[%s1 + $0x38] sm:$0xf]
    %v97 = vld [vmem:[%s1 + $0x3c] sm:$0xf]
    %v114 = vunpack.c.l.b16 %v66
    %v115 = vunpack.c.l.b16 %v67
    %v116 = vunpack.c.l.b16 %v68
    %v117 = vunpack.c.l.b16 %v69
    %v118 = vunpack.c.l.b16 %v70
    %v119 = vunpack.c.l.b16 %v71
    %v120 = vunpack.c.l.b16 %v72
    %v121 = vunpack.c.l.b16 %v73
    %v122 = vunpack.c.l.b16 %v74
    %v123 = vunpack.c.l.b16 %v75
    %v124 = vunpack.c.l.b16 %v76
    %v125 = vunpack.c.l.b16 %v77
    %v126 = vunpack.c.l.b16 %v78
    %v127 = vunpack.c.l.b16 %v79
    %v128 = vunpack.c.l.b16 %v80
    %v129 = vunpack.c.l.b16 %v81
    %v130 = vpack.c.b16 %v115, %v114
    %v131 = vpack.c.b16 %v117, %v116
    %v132 = vpack.c.b16 %v119, %v118
    %v133 = vpack.c.b16 %v121, %v120
    %v134 = vpack.c.b16 %v123, %v122
    %v135 = vpack.c.b16 %v125, %v124
    %v136 = vpack.c.b16 %v127, %v126
    %v137 = vpack.c.b16 %v129, %v128
    %v162 = vunpack.c.l.b16 %v82
    %v163 = vunpack.c.l.b16 %v83
    %v164 = vunpack.c.l.b16 %v84
    %v165 = vunpack.c.l.b16 %v85
    %v166 = vunpack.c.l.b16 %v86
    %v167 = vunpack.c.l.b16 %v87
    %v168 = vunpack.c.l.b16 %v88
    %v169 = vunpack.c.l.b16 %v89
    %v170 = vunpack.c.l.b16 %v90
    %v171 = vunpack.c.l.b16 %v91
    %v172 = vunpack.c.l.b16 %v92
    %v173 = vunpack.c.l.b16 %v93
    %v174 = vunpack.c.l.b16 %v94
    %v175 = vunpack.c.l.b16 %v95
    %v176 = vunpack.c.l.b16 %v96
    %v177 = vunpack.c.l.b16 %v97
    %v178 = vpack.c.b16 %v163, %v162
    %v179 = vpack.c.b16 %v165, %v164
    %v180 = vpack.c.b16 %v167, %v166
    %v181 = vpack.c.b16 %v169, %v168
    %v182 = vpack.c.b16 %v171, %v170
    %v183 = vpack.c.b16 %v173, %v172
    %v184 = vpack.c.b16 %v175, %v174
    %v185 = vpack.c.b16 %v177, %v176
    %194 = vmatprep.subr.bf16.mxu0 0
    %195 = vmatpush1.bf16.msra.mxu0 %v178
    %196 = vmatprep.subr.bf16.mxu0 0
    %197 = vmatpush1.bf16.msra.mxu0 %v179
    %198 = vmatprep.subr.bf16.mxu0 0
    %199 = vmatpush1.bf16.msra.mxu0 %v180
    %200 = vmatprep.subr.bf16.mxu0 0
    %201 = vmatpush1.bf16.msra.mxu0 %v181
    %202 = vmatprep.subr.bf16.mxu0 0
    %203 = vmatpush1.bf16.msra.mxu0 %v182
    %204 = vmatprep.subr.bf16.mxu0 0
    %205 = vmatpush1.bf16.msra.mxu0 %v183
    %206 = vmatprep.subr.bf16.mxu0 0
    %207 = vmatpush1.bf16.msra.mxu0 %v184
    %208 = vmatprep.subr.bf16.mxu0 0
    %209 = vmatpush1.bf16.msra.mxu0 %v185
    %210 = vmatprep.subr.bf16.mxu0 0
    %211 = vmatpush1.bf16.msra.mxu0 0
    %212 = vmatprep.subr.bf16.mxu0 0
    %213 = vmatpush1.bf16.msra.mxu0 0
    %214 = vmatprep.subr.bf16.mxu0 0
    %215 = vmatpush1.bf16.msra.mxu0 0
    %216 = vmatprep.subr.bf16.mxu0 0
    %217 = vmatpush1.bf16.msra.mxu0 0
    %218 = vmatprep.subr.bf16.mxu0 0
    %219 = vmatpush1.bf16.msra.mxu0 0
    %220 = vmatprep.subr.bf16.mxu0 0
    %221 = vmatpush1.bf16.msra.mxu0 0
    %222 = vmatprep.subr.bf16.mxu0 0
    %223 = vmatpush1.bf16.msra.mxu0 0
    %224 = vmatprep.subr.bf16.mxu0 0
    %225 = vmatpush1.bf16.msra.mxu0 0
    %226 = vmatprep.mubr.bf16.mxu0 0
    %227 = vmatmul.mubr.bf16.gmra.mrb[0].mxu0 %v130
    %v228 = vpop.f32.mrb[0].mxu0
    %v229 = vadd.f32 0.0, %v228
    %v230 = vpop.f32.mrb[0].mxu0
    %v231 = vpop.f32.mrb[0].mxu0
    %v232 = vadd.f32 0.0, %v231
    %v233 = vpop.f32.mrb[0].mxu0
    %234 = vmatprep.mubr.bf16.mxu0 0
    %235 = vmatmul.mubr.bf16.gmra.mrb[0].mxu0 %v131
    %v236 = vpop.f32.mrb[0].mxu0
    %v237 = vadd.f32 0.0, %v236
    %v238 = vpop.f32.mrb[0].mxu0
    %v239 = vpop.f32.mrb[0].mxu0
    %v240 = vadd.f32 0.0, %v239
    %v241 = vpop.f32.mrb[0].mxu0
    %242 = vmatprep.mubr.bf16.mxu0 0
    %243 = vmatmul.mubr.bf16.gmra.mrb[0].mxu0 %v132
    %v244 = vpop.f32.mrb[0].mxu0
    %v245 = vadd.f32 0.0, %v244
    %v246 = vpop.f32.mrb[0].mxu0
    %v247 = vpop.f32.mrb[0].mxu0
    %v248 = vadd.f32 0.0, %v247
    %v249 = vpop.f32.mrb[0].mxu0
    %250 = vmatprep.mubr.bf16.mxu0 0
    %251 = vmatmul.mubr.bf16.gmra.mrb[0].mxu0 %v133
    %v252 = vpop.f32.mrb[0].mxu0
    %v253 = vadd.f32 0.0, %v252
    %v254 = vpop.f32.mrb[0].mxu0
    %v255 = vpop.f32.mrb[0].mxu0
    %v256 = vadd.f32 0.0, %v255
    %v257 = vpop.f32.mrb[0].mxu0
    %258 = vmatprep.mubr.bf16.mxu0 0
    %259 = vmatmul.mubr.bf16.gmra.mrb[0].mxu0 %v134
    %v260 = vpop.f32.mrb[0].mxu0
    %v261 = vadd.f32 0.0, %v260
    %v262 = vpop.f32.mrb[0].mxu0
    %v263 = vpop.f32.mrb[0].mxu0
    %v264 = vadd.f32 0.0, %v263
    %v265 = vpop.f32.mrb[0].mxu0
    %266 = vmatprep.mubr.bf16.mxu0 0
    %267 = vmatmul.mubr.bf16.gmra.mrb[0].mxu0 %v135
    %v268 = vpop.f32.mrb[0].mxu0
    %v269 = vadd.f32 0.0, %v268
    %v270 = vpop.f32.mrb[0].mxu0
    %v271 = vpop.f32.mrb[0].mxu0
    %v272 = vadd.f32 0.0, %v271
    %v273 = vpop.f32.mrb[0].mxu0
    %274 = vmatprep.mubr.bf16.mxu0 0
    %275 = vmatmul.mubr.bf16.gmra.mrb[0].mxu0 %v136
    %v276 = vpop.f32.mrb[0].mxu0
    %v277 = vadd.f32 0.0, %v276
    %v278 = vpop.f32.mrb[0].mxu0
    %v279 = vpop.f32.mrb[0].mxu0
    %v280 = vadd.f32 0.0, %v279
    %v281 = vpop.f32.mrb[0].mxu0
    %282 = vmatprep.mubr.bf16.mxu0 0
    %283 = vmatmul.mubr.bf16.gmra.mrb[0].mxu0 %v137
    %v284 = vpop.f32.mrb[0].mxu0
    %v285 = vadd.f32 0.0, %v284
    %v286 = vpop.f32.mrb[0].mxu0
    %v287 = vpop.f32.mrb[0].mxu0
    %v288 = vadd.f32 0.0, %v287
    %v289 = vpop.f32.mrb[0].mxu0
    %290 = vdwg.mxu0
    %v291 = vadd.f32 %v50, %v229
    %v292 = vadd.f32 %v51, %v232
    %v293 = vadd.f32 %v52, %v237
    %v294 = vadd.f32 %v53, %v240
    %v295 = vadd.f32 %v54, %v245
    %v296 = vadd.f32 %v55, %v248
    %v297 = vadd.f32 %v56, %v253
    %v298 = vadd.f32 %v57, %v256
    %v299 = vadd.f32 %v58, %v261
    %v300 = vadd.f32 %v59, %v264
    %v301 = vadd.f32 %v60, %v269
    %v302 = vadd.f32 %v61, %v272
    %v303 = vadd.f32 %v62, %v277
    %v304 = vadd.f32 %v63, %v280
    %v305 = vadd.f32 %v64, %v285
    %v306 = vadd.f32 %v65, %v288
    %307 = vst [vmem:[#allocation2] sm:$0xff] %v291
    %308 = vst [vmem:[#allocation2 + $0x8] sm:$0xff] %v292
    %309 = vst [vmem:[#allocation2 + $0x10] sm:$0xff] %v293
    %310 = vst [vmem:[#allocation2 + $0x18] sm:$0xff] %v294
    %311 = vst [vmem:[#allocation2 + $0x20] sm:$0xff] %v295
    %312 = vst [vmem:[#allocation2 + $0x28] sm:$0xff] %v296
    %313 = vst [vmem:[#allocation2 + $0x30] sm:$0xff] %v297
    %314 = vst [vmem:[#allocation2 + $0x38] sm:$0xff] %v298
    %315 = vst [vmem:[#allocation2 + $0x40] sm:$0xff] %v299
    %316 = vst [vmem:[#allocation2 + $0x48] sm:$0xff] %v300
    %317 = vst [vmem:[#allocation2 + $0x50] sm:$0xff] %v301
    %318 = vst [vmem:[#allocation2 + $0x58] sm:$0xff] %v302
    %319 = vst [vmem:[#allocation2 + $0x60] sm:$0xff] %v303
    %320 = vst [vmem:[#allocation2 + $0x68] sm:$0xff] %v304
    %321 = vst [vmem:[#allocation2 + $0x70] sm:$0xff] %v305
    %322 = vst [vmem:[#allocation2 + $0x78] sm:$0xff] %v306
    // Predicated region
    $region26: #{_lambda_.38} parent=1 // pred_check
      %p323 = pneg %p30
    $region27: #{_lambda_.38} parent=1 // pred_check_branch
      %325 = sbr.rel (%p323) target = $region29
    $region28: #{_lambda_.38} parent=1 // pred_region
      %v326 = vld [vmem:[#allocation2] sm:$0xff]
      %v327 = vld [vmem:[#allocation2 + $0x8] sm:$0xff]
      %v328 = vld [vmem:[#allocation2 + $0x10] sm:$0xff]
      %v329 = vld [vmem:[#allocation2 + $0x18] sm:$0xff]
      %v330 = vld [vmem:[#allocation2 + $0x20] sm:$0xff]
      %v331 = vld [vmem:[#allocation2 + $0x28] sm:$0xff]
      %v332 = vld [vmem:[#allocation2 + $0x30] sm:$0xff]
      %v333 = vld [vmem:[#allocation2 + $0x38] sm:$0xff]
      %v334 = vld [vmem:[#allocation2 + $0x40] sm:$0xff]
      %v335 = vld [vmem:[#allocation2 + $0x48] sm:$0xff]
      %v336 = vld [vmem:[#allocation2 + $0x50] sm:$0xff]
      %v337 = vld [vmem:[#allocation2 + $0x58] sm:$0xff]
      %v338 = vld [vmem:[#allocation2 + $0x60] sm:$0xff]
      %v339 = vld [vmem:[#allocation2 + $0x68] sm:$0xff]
      %v340 = vld [vmem:[#allocation2 + $0x70] sm:$0xff]
      %v341 = vld [vmem:[#allocation2 + $0x78] sm:$0xff]
      %v342 = vld [vmem:[#allocation3] sm:$0x1]
      %v344 = vlaneseq
      %v345 = vshrl.u32 %v344, 7
      %v346 = vsub.s32 0, %v345
      %v347 = vrot.slane %v342, %v346
      %v349 = vmul.f32 %v326, %v347
      %v350 = vmul.f32 %v327, %v347
      %v351 = vmul.f32 %v328, %v347
      %v352 = vmul.f32 %v329, %v347
      %v353 = vmul.f32 %v330, %v347
      %v354 = vmul.f32 %v331, %v347
      %v355 = vmul.f32 %v332, %v347
      %v356 = vmul.f32 %v333, %v347
      %v357 = vmul.f32 %v334, %v347
      %v358 = vmul.f32 %v335, %v347
      %v359 = vmul.f32 %v336, %v347
      %v360 = vmul.f32 %v337, %v347
      %v361 = vmul.f32 %v338, %v347
      %v362 = vmul.f32 %v339, %v347
      %v363 = vmul.f32 %v340, %v347
      %v364 = vmul.f32 %v341, %v347
      %v365 = vld [vmem:[%s3] sm:$0x1]
      %v367 = vlaneseq
      %v368 = vshrl.u32 %v367, 7
      %v369 = vsub.s32 0, %v368
      %v370 = vrot.slane %v365, %v369
      %v372 = vadd.f32 %v349, %v370
      %v373 = vadd.f32 %v350, %v370
      %v374 = vadd.f32 %v351, %v370
      %v375 = vadd.f32 %v352, %v370
      %v376 = vadd.f32 %v353, %v370
      %v377 = vadd.f32 %v354, %v370
      %v378 = vadd.f32 %v355, %v370
      %v379 = vadd.f32 %v356, %v370
      %v380 = vadd.f32 %v357, %v370
      %v381 = vadd.f32 %v358, %v370
      %v382 = vadd.f32 %v359, %v370
      %v383 = vadd.f32 %v360, %v370
      %v384 = vadd.f32 %v361, %v370
      %v385 = vadd.f32 %v362, %v370
      %v386 = vadd.f32 %v363, %v370
      %v387 = vadd.f32 %v364, %v370
      %v388 = vsub.f32 0.0, %v372
      %v389 = vsub.f32 0.0, %v373
      %v390 = vsub.f32 0.0, %v374
      %v391 = vsub.f32 0.0, %v375
      %v392 = vsub.f32 0.0, %v376
      %v393 = vsub.f32 0.0, %v377
      %v394 = vsub.f32 0.0, %v378
      %v395 = vsub.f32 0.0, %v379
      %v396 = vsub.f32 0.0, %v380
      %v397 = vsub.f32 0.0, %v381
      %v398 = vsub.f32 0.0, %v382
      %v399 = vsub.f32 0.0, %v383
      %v400 = vsub.f32 0.0, %v384
      %v401 = vsub.f32 0.0, %v385
      %v402 = vsub.f32 0.0, %v386
      %v403 = vsub.f32 0.0, %v387
      %v404 = vmul.f32 %v388, 1.442695
      %v405 = vpow.pop %v404
      %v406 = vmul.f32 %v389, 1.442695
      %v407 = vpow.pop %v406
      %v408 = vmul.f32 %v390, 1.442695
      %v409 = vpow.pop %v408
      %v410 = vmul.f32 %v391, 1.442695
      %v411 = vpow.pop %v410
      %v412 = vmul.f32 %v392, 1.442695
      %v413 = vpow.pop %v412
      %v414 = vmul.f32 %v393, 1.442695
      %v415 = vpow.pop %v414
      %v416 = vmul.f32 %v394, 1.442695
      %v417 = vpow.pop %v416
      %v418 = vmul.f32 %v395, 1.442695
      %v419 = vpow.pop %v418
      %v420 = vmul.f32 %v396, 1.442695
      %v421 = vpow.pop %v420
      %v422 = vmul.f32 %v397, 1.442695
      %v423 = vpow.pop %v422
      %v424 = vmul.f32 %v398, 1.442695
      %v425 = vpow.pop %v424
      %v426 = vmul.f32 %v399, 1.442695
      %v427 = vpow.pop %v426
      %v428 = vmul.f32 %v400, 1.442695
      %v429 = vpow.pop %v428
      %v430 = vmul.f32 %v401, 1.442695
      %v431 = vpow.pop %v430
      %v432 = vmul.f32 %v402, 1.442695
      %v433 = vpow.pop %v432
      %v434 = vmul.f32 %v403, 1.442695
      %v435 = vpow.pop %v434
      %v436 = vadd.f32 %v405, 1.0
      %v437 = vadd.f32 %v407, 1.0
      %v438 = vadd.f32 %v409, 1.0
      %v439 = vadd.f32 %v411, 1.0
      %v440 = vadd.f32 %v413, 1.0
      %v441 = vadd.f32 %v415, 1.0
      %v442 = vadd.f32 %v417, 1.0
      %v443 = vadd.f32 %v419, 1.0
      %v444 = vadd.f32 %v421, 1.0
      %v445 = vadd.f32 %v423, 1.0
      %v446 = vadd.f32 %v425, 1.0
      %v447 = vadd.f32 %v427, 1.0
      %v448 = vadd.f32 %v429, 1.0
      %v449 = vadd.f32 %v431, 1.0
      %v450 = vadd.f32 %v433, 1.0
      %v451 = vadd.f32 %v435, 1.0
      %v452 = vrcp.pop %v436
      %v453 = vmul.f32 1.0, %v452
      %v454 = vrcp.pop %v437
      %v455 = vmul.f32 1.0, %v454
      %v456 = vrcp.pop %v438
      %v457 = vmul.f32 1.0, %v456
      %v458 = vrcp.pop %v439
      %v459 = vmul.f32 1.0, %v458
      %v460 = vrcp.pop %v440
      %v461 = vmul.f32 1.0, %v460
      %v462 = vrcp.pop %v441
      %v463 = vmul.f32 1.0, %v462
      %v464 = vrcp.pop %v442
      %v465 = vmul.f32 1.0, %v464
      %v466 = vrcp.pop %v443
      %v467 = vmul.f32 1.0, %v466
      %v468 = vrcp.pop %v444
      %v469 = vmul.f32 1.0, %v468
      %v470 = vrcp.pop %v445
      %v471 = vmul.f32 1.0, %v470
      %v472 = vrcp.pop %v446
      %v473 = vmul.f32 1.0, %v472
      %v474 = vrcp.pop %v447
      %v475 = vmul.f32 1.0, %v474
      %v476 = vrcp.pop %v448
      %v477 = vmul.f32 1.0, %v476
      %v478 = vrcp.pop %v449
      %v479 = vmul.f32 1.0, %v478
      %v480 = vrcp.pop %v450
      %v481 = vmul.f32 1.0, %v480
      %v482 = vrcp.pop %v451
      %v483 = vmul.f32 1.0, %v482
      %v484 = vmul.f32 %v372, %v453
      %v485 = vmul.f32 %v373, %v455
      %v486 = vmul.f32 %v374, %v457
      %v487 = vmul.f32 %v375, %v459
      %v488 = vmul.f32 %v376, %v461
      %v489 = vmul.f32 %v377, %v463
      %v490 = vmul.f32 %v378, %v465
      %v491 = vmul.f32 %v379, %v467
      %v492 = vmul.f32 %v380, %v469
      %v493 = vmul.f32 %v381, %v471
      %v494 = vmul.f32 %v382, %v473
      %v495 = vmul.f32 %v383, %v475
      %v496 = vmul.f32 %v384, %v477
      %v497 = vmul.f32 %v385, %v479
      %v498 = vmul.f32 %v386, %v481
      %v499 = vmul.f32 %v387, %v483
      %500 = vst [vmem:[%s4] sm:$0xff] %v484
      %501 = vst [vmem:[%s4 + $0x8] sm:$0xff] %v485
      %502 = vst [vmem:[%s4 + $0x10] sm:$0xff] %v486
      %503 = vst [vmem:[%s4 + $0x18] sm:$0xff] %v487
      %504 = vst [vmem:[%s4 + $0x20] sm:$0xff] %v488
      %505 = vst [vmem:[%s4 + $0x28] sm:$0xff] %v489
      %506 = vst [vmem:[%s4 + $0x30] sm:$0xff] %v490
      %507 = vst [vmem:[%s4 + $0x38] sm:$0xff] %v491
      %508 = vst [vmem:[%s4 + $0x40] sm:$0xff] %v492
      %509 = vst [vmem:[%s4 + $0x48] sm:$0xff] %v493
      %510 = vst [vmem:[%s4 + $0x50] sm:$0xff] %v494
      %511 = vst [vmem:[%s4 + $0x58] sm:$0xff] %v495
      %512 = vst [vmem:[%s4 + $0x60] sm:$0xff] %v496
      %513 = vst [vmem:[%s4 + $0x68] sm:$0xff] %v497
      %514 = vst [vmem:[%s4 + $0x70] sm:$0xff] %v498
      %515 = vst [vmem:[%s4 + $0x78] sm:$0xff] %v499
    $region29: #{_lambda_.38} parent=1 // pred_fallthru
      _
    // Predicated region
    $region30: #{_lambda_.38} parent=1 // pred_check
      _
    $region31: #{_lambda_.38} parent=1 // pred_check_branch
      %517 = sbr.rel (0) target = $region33
    $region32: #{_lambda_.38} parent=1 // pred_region
      _
    $region33: #{_lambda_.38} parent=1 // pred_fallthru
      _
    // Predicated region
    $region34: #{_lambda_.38} parent=1 // pred_check
      _
    $region35: #{_lambda_.38} parent=1 // pred_check_branch
      %519 = sbr.rel (0) target = $region37
    $region36: #{_lambda_.38} parent=1 // pred_region
      _
    $region37: #{_lambda_.38} parent=1 // pred_fallthru
      _
    %520 = vsyncpa [#allocation4], 1

// kernel: _lambda_.41
$region0: #{_lambda_.41}
  #allocation0 [shape = 'u32[]', space=smem, size = 0x4, offset = 0x4, fixed_abs, tag = 'smem constant byte address 0x4 - core index']
  #allocation1 [shape = 'u32[144,128]{1,0:T(1,128)}', space=vmem, size = 0x12000, scoped, tag = 'internal scratch']
  #allocation2 [shape = 'f32[128,128]{1,0:T(8,128)}', space=vmem, size = 0x10000, scoped, tag = 'scratch operand']
  %s0 = inlined_call_operand.vmem [shape: bf16[128,128], index: 0, kind: input, shape index: {}]
  %s1 = inlined_call_operand.vmem [shape: bf16[128,128], index: 1, kind: input, shape index: {}]
  %s2 = inlined_call_operand.hbm [shape: f32[1,128], index: 2, kind: input, shape index: {}]
  %s3 = inlined_call_operand.hbm [shape: f32[1,128], index: 3, kind: input, shape index: {}]
  %s4 = inlined_call_operand.vmem [shape: f32[128,128], index: 4, kind: output, shape index: {}]
  %s5 = sld [smem:[#allocation0]]
  $region42: #{_lambda_.41} parent=0
    _
  %s7 = ssub.s32 1, %s5
  %s8 = scalar_select 0, %s7, %s5
  $region1: #{_lambda_.41} parent=0
    #allocation3 [shape = 'u8[512]{0}', space=vmem, size = 0x400, scoped, tag = 'input window, operand 2, single buffered']
    #allocation4 [shape = 's32[1]{0}', space=sflag, size = 0x4, scoped, tag = 'scoped memory for _lambda_.41']
    #allocation5 [shape = 'u8[512]{0}', space=vmem, size = 0x400, scoped, tag = 'input window, operand 3, single buffered']
    #allocation6 [shape = 's32[1]{0}', space=sflag, size = 0x4, scoped, tag = 'scoped memory for _lambda_.41']
    %9 = vsyncpa [#allocation4], 0
    %10 = vsyncpa [#allocation6], 0
    // Predicated region
    $region2: #{_lambda_.41} parent=1 // pred_check
      _
    $region3: #{_lambda_.41} parent=1 // pred_check_branch
      %12 = sbr.rel (0) target = $region5
    $region4: #{_lambda_.41} parent=1 // pred_region
      _
    $region5: #{_lambda_.41} parent=1 // pred_fallthru
      _
    // Predicated region
    $region6: #{_lambda_.41} parent=1 // pred_check
      _
    $region7: #{_lambda_.41} parent=1 // pred_check_branch
      %14 = sbr.rel (0) target = $region9
    $region8: #{_lambda_.41} parent=1 // pred_region
      _
    $region9: #{_lambda_.41} parent=1 // pred_fallthru
      _
    // Predicated region
    $region10: #{_lambda_.41} parent=1 // pred_check
      _
    $region11: #{_lambda_.41} parent=1 // pred_check_branch
      %16 = sbr.rel (0) target = $region13
    $region12: #{_lambda_.41} parent=1 // pred_region
      %s18 = ssub.s32 16, 16
      %19 = vsyncadd [#allocation4], %s18
      %s21 = sshll.u32 [#allocation3], 4
      %s22 = int_to_ptr.vmem [resolvable:$true] %s21
      %24 = dma.hbm_to_vmem [thread:$0]  %s2, 16, %s22, [#allocation4]
    $region13: #{_lambda_.41} parent=1 // pred_fallthru
      _
    // Predicated region
    $region14: #{_lambda_.41} parent=1 // pred_check
      _
    $region15: #{_lambda_.41} parent=1 // pred_check_branch
      %26 = sbr.rel (0) target = $region17
    $region16: #{_lambda_.41} parent=1 // pred_region
      %s28 = ssub.s32 16, 16
      %29 = vsyncadd [#allocation6], %s28
      %s31 = sshll.u32 [#allocation5], 4
      %s32 = int_to_ptr.vmem [resolvable:$true] %s31
      %34 = dma.hbm_to_vmem [thread:$0]  %s3, 16, %s32, [#allocation6]
    $region17: #{_lambda_.41} parent=1 // pred_fallthru
      _
    // Predicated region
    $region18: #{_lambda_.41} parent=1 // pred_check
      _
    $region19: #{_lambda_.41} parent=1 // pred_check_branch
      %36 = sbr.rel (0) target = $region21
    $region20: #{_lambda_.41} parent=1 // pred_region
      %37 = dma.done [#allocation4], 16
    $region21: #{_lambda_.41} parent=1 // pred_fallthru
      _
    // Predicated region
    $region22: #{_lambda_.41} parent=1 // pred_check
      _
    $region23: #{_lambda_.41} parent=1 // pred_check_branch
      %39 = sbr.rel (0) target = $region25
    $region24: #{_lambda_.41} parent=1 // pred_region
      %40 = dma.done [#allocation6], 16
    $region25: #{_lambda_.41} parent=1 // pred_fallthru
      _
    %p42 = scmp.eq.s32.totalorder 0, 0
    // Predicated region
    $region26: #{_lambda_.41} parent=1 // pred_check
      %p43 = pneg %p42
    $region27: #{_lambda_.41} parent=1 // pred_check_branch
      %45 = sbr.rel (%p43) target = $region29
    $region28: #{_lambda_.41} parent=1 // pred_region
      %46 = vst [vmem:[#allocation2] sm:$0xff] 0.0
      %47 = vst [vmem:[#allocation2 + $0x8] sm:$0xff] 0.0
      %48 = vst [vmem:[#allocation2 + $0x10] sm:$0xff] 0.0
      %49 = vst [vmem:[#allocation2 + $0x18] sm:$0xff] 0.0
      %50 = vst [vmem:[#allocation2 + $0x20] sm:$0xff] 0.0
      %51 = vst [vmem:[#allocation2 + $0x28] sm:$0xff] 0.0
      %52 = vst [vmem:[#allocation2 + $0x30] sm:$0xff] 0.0
      %53 = vst [vmem:[#allocation2 + $0x38] sm:$0xff] 0.0
      %54 = vst [vmem:[#allocation2 + $0x40] sm:$0xff] 0.0
      %55 = vst [vmem:[#allocation2 + $0x48] sm:$0xff] 0.0
      %56 = vst [vmem:[#allocation2 + $0x50] sm:$0xff] 0.0
      %57 = vst [vmem:[#allocation2 + $0x58] sm:$0xff] 0.0
      %58 = vst [vmem:[#allocation2 + $0x60] sm:$0xff] 0.0
      %59 = vst [vmem:[#allocation2 + $0x68] sm:$0xff] 0.0
      %60 = vst [vmem:[#allocation2 + $0x70] sm:$0xff] 0.0
      %61 = vst [vmem:[#allocation2 + $0x78] sm:$0xff] 0.0
    $region29: #{_lambda_.41} parent=1 // pred_fallthru
      _
    %v62 = vld [vmem:[#allocation2] sm:$0xff]
    %v63 = vld [vmem:[#allocation2 + $0x8] sm:$0xff]
    %v64 = vld [vmem:[#allocation2 + $0x10] sm:$0xff]
    %v65 = vld [vmem:[#allocation2 + $0x18] sm:$0xff]
    %v66 = vld [vmem:[#allocation2 + $0x20] sm:$0xff]
    %v67 = vld [vmem:[#allocation2 + $0x28] sm:$0xff]
    %v68 = vld [vmem:[#allocation2 + $0x30] sm:$0xff]
    %v69 = vld [vmem:[#allocation2 + $0x38] sm:$0xff]
    %v70 = vld [vmem:[#allocation2 + $0x40] sm:$0xff]
    %v71 = vld [vmem:[#allocation2 + $0x48] sm:$0xff]
    %v72 = vld [vmem:[#allocation2 + $0x50] sm:$0xff]
    %v73 = vld [vmem:[#allocation2 + $0x58] sm:$0xff]
    %v74 = vld [vmem:[#allocation2 + $0x60] sm:$0xff]
    %v75 = vld [vmem:[#allocation2 + $0x68] sm:$0xff]
    %v76 = vld [vmem:[#allocation2 + $0x70] sm:$0xff]
    %v77 = vld [vmem:[#allocation2 + $0x78] sm:$0xff]
    %v78 = vld [vmem:[%s0] sm:$0xf]
    %v79 = vld [vmem:[%s0 + $0x4] sm:$0xf]
    %v80 = vld [vmem:[%s0 + $0x8] sm:$0xf]
    %v81 = vld [vmem:[%s0 + $0xc] sm:$0xf]
    %v82 = vld [vmem:[%s0 + $0x10] sm:$0xf]
    %v83 = vld [vmem:[%s0 + $0x14] sm:$0xf]
    %v84 = vld [vmem:[%s0 + $0x18] sm:$0xf]
    %v85 = vld [vmem:[%s0 + $0x1c] sm:$0xf]
    %v86 = vld [vmem:[%s0 + $0x20] sm:$0xf]
    %v87 = vld [vmem:[%s0 + $0x24] sm:$0xf]
    %v88 = vld [vmem:[%s0 + $0x28] sm:$0xf]
    %v89 = vld [vmem:[%s0 + $0x2c] sm:$0xf]
    %v90 = vld [vmem:[%s0 + $0x30] sm:$0xf]
    %v91 = vld [vmem:[%s0 + $0x34] sm:$0xf]
    %v92 = vld [vmem:[%s0 + $0x38] sm:$0xf]
    %v93 = vld [vmem:[%s0 + $0x3c] sm:$0xf]
    %v94 = vld [vmem:[%s1] sm:$0xf]
    %v95 = vld [vmem:[%s1 + $0x4] sm:$0xf]
    %v96 = vld [vmem:[%s1 + $0x8] sm:$0xf]
    %v97 = vld [vmem:[%s1 + $0xc] sm:$0xf]
    %v98 = vld [vmem:[%s1 + $0x10] sm:$0xf]
    %v99 = vld [vmem:[%s1 + $0x14] sm:$0xf]
    %v100 = vld [vmem:[%s1 + $0x18] sm:$0xf]
    %v101 = vld [vmem:[%s1 + $0x1c] sm:$0xf]
    %v102 = vld [vmem:[%s1 + $0x20] sm:$0xf]
    %v103 = vld [vmem:[%s1 + $0x24] sm:$0xf]
    %v104 = vld [vmem:[%s1 + $0x28] sm:$0xf]
    %v105 = vld [vmem:[%s1 + $0x2c] sm:$0xf]
    %v106 = vld [vmem:[%s1 + $0x30] sm:$0xf]
    %v107 = vld [vmem:[%s1 + $0x34] sm:$0xf]
    %v108 = vld [vmem:[%s1 + $0x38] sm:$0xf]
    %v109 = vld [vmem:[%s1 + $0x3c] sm:$0xf]
    %v126 = vunpack.c.l.b16 %v78
    %v127 = vunpack.c.l.b16 %v79
    %v128 = vunpack.c.l.b16 %v80
    %v129 = vunpack.c.l.b16 %v81
    %v130 = vunpack.c.l.b16 %v82
    %v131 = vunpack.c.l.b16 %v83
    %v132 = vunpack.c.l.b16 %v84
    %v133 = vunpack.c.l.b16 %v85
    %v134 = vunpack.c.l.b16 %v86
    %v135 = vunpack.c.l.b16 %v87
    %v136 = vunpack.c.l.b16 %v88
    %v137 = vunpack.c.l.b16 %v89
    %v138 = vunpack.c.l.b16 %v90
    %v139 = vunpack.c.l.b16 %v91
    %v140 = vunpack.c.l.b16 %v92
    %v141 = vunpack.c.l.b16 %v93
    %v142 = vpack.c.b16 %v127, %v126
    %v143 = vpack.c.b16 %v129, %v128
    %v144 = vpack.c.b16 %v131, %v130
    %v145 = vpack.c.b16 %v133, %v132
    %v146 = vpack.c.b16 %v135, %v134
    %v147 = vpack.c.b16 %v137, %v136
    %v148 = vpack.c.b16 %v139, %v138
    %v149 = vpack.c.b16 %v141, %v140
    %v174 = vunpack.c.l.b16 %v94
    %v175 = vunpack.c.l.b16 %v95
    %v176 = vunpack.c.l.b16 %v96
    %v177 = vunpack.c.l.b16 %v97
    %v178 = vunpack.c.l.b16 %v98
    %v179 = vunpack.c.l.b16 %v99
    %v180 = vunpack.c.l.b16 %v100
    %v181 = vunpack.c.l.b16 %v101
    %v182 = vunpack.c.l.b16 %v102
    %v183 = vunpack.c.l.b16 %v103
    %v184 = vunpack.c.l.b16 %v104
    %v185 = vunpack.c.l.b16 %v105
    %v186 = vunpack.c.l.b16 %v106
    %v187 = vunpack.c.l.b16 %v107
    %v188 = vunpack.c.l.b16 %v108
    %v189 = vunpack.c.l.b16 %v109
    %v190 = vpack.c.b16 %v175, %v174
    %v191 = vpack.c.b16 %v177, %v176
    %v192 = vpack.c.b16 %v179, %v178
    %v193 = vpack.c.b16 %v181, %v180
    %v194 = vpack.c.b16 %v183, %v182
    %v195 = vpack.c.b16 %v185, %v184
    %v196 = vpack.c.b16 %v187, %v186
    %v197 = vpack.c.b16 %v189, %v188
    %206 = vmatprep.subr.bf16.mxu0 0
    %207 = vmatpush1.bf16.msra.mxu0 %v190
    %208 = vmatprep.subr.bf16.mxu0 0
    %209 = vmatpush1.bf16.msra.mxu0 %v191
    %210 = vmatprep.subr.bf16.mxu0 0
    %211 = vmatpush1.bf16.msra.mxu0 %v192
    %212 = vmatprep.subr.bf16.mxu0 0
    %213 = vmatpush1.bf16.msra.mxu0 %v193
    %214 = vmatprep.subr.bf16.mxu0 0
    %215 = vmatpush1.bf16.msra.mxu0 %v194
    %216 = vmatprep.subr.bf16.mxu0 0
    %217 = vmatpush1.bf16.msra.mxu0 %v195
    %218 = vmatprep.subr.bf16.mxu0 0
    %219 = vmatpush1.bf16.msra.mxu0 %v196
    %220 = vmatprep.subr.bf16.mxu0 0
    %221 = vmatpush1.bf16.msra.mxu0 %v197
    %222 = vmatprep.subr.bf16.mxu0 0
    %223 = vmatpush1.bf16.msra.mxu0 0
    %224 = vmatprep.subr.bf16.mxu0 0
    %225 = vmatpush1.bf16.msra.mxu0 0
    %226 = vmatprep.subr.bf16.mxu0 0
    %227 = vmatpush1.bf16.msra.mxu0 0
    %228 = vmatprep.subr.bf16.mxu0 0
    %229 = vmatpush1.bf16.msra.mxu0 0
    %230 = vmatprep.subr.bf16.mxu0 0
    %231 = vmatpush1.bf16.msra.mxu0 0
    %232 = vmatprep.subr.bf16.mxu0 0
    %233 = vmatpush1.bf16.msra.mxu0 0
    %234 = vmatprep.subr.bf16.mxu0 0
    %235 = vmatpush1.bf16.msra.mxu0 0
    %236 = vmatprep.subr.bf16.mxu0 0
    %237 = vmatpush1.bf16.msra.mxu0 0
    %238 = vmatprep.mubr.bf16.mxu0 0
    %239 = vmatmul.mubr.bf16.gmra.mrb[0].mxu0 %v142
    %v240 = vpop.f32.mrb[0].mxu0
    %v241 = vadd.f32 0.0, %v240
    %v242 = vpop.f32.mrb[0].mxu0
    %v243 = vpop.f32.mrb[0].mxu0
    %v244 = vadd.f32 0.0, %v243
    %v245 = vpop.f32.mrb[0].mxu0
    %246 = vmatprep.mubr.bf16.mxu0 0
    %247 = vmatmul.mubr.bf16.gmra.mrb[0].mxu0 %v143
    %v248 = vpop.f32.mrb[0].mxu0
    %v249 = vadd.f32 0.0, %v248
    %v250 = vpop.f32.mrb[0].mxu0
    %v251 = vpop.f32.mrb[0].mxu0
    %v252 = vadd.f32 0.0, %v251
    %v253 = vpop.f32.mrb[0].mxu0
    %254 = vmatprep.mubr.bf16.mxu0 0
    %255 = vmatmul.mubr.bf16.gmra.mrb[0].mxu0 %v144
    %v256 = vpop.f32.mrb[0].mxu0
    %v257 = vadd.f32 0.0, %v256
    %v258 = vpop.f32.mrb[0].mxu0
    %v259 = vpop.f32.mrb[0].mxu0
    %v260 = vadd.f32 0.0, %v259
    %v261 = vpop.f32.mrb[0].mxu0
    %262 = vmatprep.mubr.bf16.mxu0 0
    %263 = vmatmul.mubr.bf16.gmra.mrb[0].mxu0 %v145
    %v264 = vpop.f32.mrb[0].mxu0
    %v265 = vadd.f32 0.0, %v264
    %v266 = vpop.f32.mrb[0].mxu0
    %v267 = vpop.f32.mrb[0].mxu0
    %v268 = vadd.f32 0.0, %v267
    %v269 = vpop.f32.mrb[0].mxu0
    %270 = vmatprep.mubr.bf16.mxu0 0
    %271 = vmatmul.mubr.bf16.gmra.mrb[0].mxu0 %v146
    %v272 = vpop.f32.mrb[0].mxu0
    %v273 = vadd.f32 0.0, %v272
    %v274 = vpop.f32.mrb[0].mxu0
    %v275 = vpop.f32.mrb[0].mxu0
    %v276 = vadd.f32 0.0, %v275
    %v277 = vpop.f32.mrb[0].mxu0
    %278 = vmatprep.mubr.bf16.mxu0 0
    %279 = vmatmul.mubr.bf16.gmra.mrb[0].mxu0 %v147
    %v280 = vpop.f32.mrb[0].mxu0
    %v281 = vadd.f32 0.0, %v280
    %v282 = vpop.f32.mrb[0].mxu0
    %v283 = vpop.f32.mrb[0].mxu0
    %v284 = vadd.f32 0.0, %v283
    %v285 = vpop.f32.mrb[0].mxu0
    %286 = vmatprep.mubr.bf16.mxu0 0
    %287 = vmatmul.mubr.bf16.gmra.mrb[0].mxu0 %v148
    %v288 = vpop.f32.mrb[0].mxu0
    %v289 = vadd.f32 0.0, %v288
    %v290 = vpop.f32.mrb[0].mxu0
    %v291 = vpop.f32.mrb[0].mxu0
    %v292 = vadd.f32 0.0, %v291
    %v293 = vpop.f32.mrb[0].mxu0
    %294 = vmatprep.mubr.bf16.mxu0 0
    %295 = vmatmul.mubr.bf16.gmra.mrb[0].mxu0 %v149
    %v296 = vpop.f32.mrb[0].mxu0
    %v297 = vadd.f32 0.0, %v296
    %v298 = vpop.f32.mrb[0].mxu0
    %v299 = vpop.f32.mrb[0].mxu0
    %v300 = vadd.f32 0.0, %v299
    %v301 = vpop.f32.mrb[0].mxu0
    %302 = vdwg.mxu0
    %v303 = vadd.f32 %v62, %v241
    %v304 = vadd.f32 %v63, %v244
    %v305 = vadd.f32 %v64, %v249
    %v306 = vadd.f32 %v65, %v252
    %v307 = vadd.f32 %v66, %v257
    %v308 = vadd.f32 %v67, %v260
    %v309 = vadd.f32 %v68, %v265
    %v310 = vadd.f32 %v69, %v268
    %v311 = vadd.f32 %v70, %v273
    %v312 = vadd.f32 %v71, %v276
    %v313 = vadd.f32 %v72, %v281
    %v314 = vadd.f32 %v73, %v284
    %v315 = vadd.f32 %v74, %v289
    %v316 = vadd.f32 %v75, %v292
    %v317 = vadd.f32 %v76, %v297
    %v318 = vadd.f32 %v77, %v300
    %319 = vst [vmem:[#allocation2] sm:$0xff] %v303
    %320 = vst [vmem:[#allocation2 + $0x8] sm:$0xff] %v304
    %321 = vst [vmem:[#allocation2 + $0x10] sm:$0xff] %v305
    %322 = vst [vmem:[#allocation2 + $0x18] sm:$0xff] %v306
    %323 = vst [vmem:[#allocation2 + $0x20] sm:$0xff] %v307
    %324 = vst [vmem:[#allocation2 + $0x28] sm:$0xff] %v308
    %325 = vst [vmem:[#allocation2 + $0x30] sm:$0xff] %v309
    %326 = vst [vmem:[#allocation2 + $0x38] sm:$0xff] %v310
    %327 = vst [vmem:[#allocation2 + $0x40] sm:$0xff] %v311
    %328 = vst [vmem:[#allocation2 + $0x48] sm:$0xff] %v312
    %329 = vst [vmem:[#allocation2 + $0x50] sm:$0xff] %v313
    %330 = vst [vmem:[#allocation2 + $0x58] sm:$0xff] %v314
    %331 = vst [vmem:[#allocation2 + $0x60] sm:$0xff] %v315
    %332 = vst [vmem:[#allocation2 + $0x68] sm:$0xff] %v316
    %333 = vst [vmem:[#allocation2 + $0x70] sm:$0xff] %v317
    %334 = vst [vmem:[#allocation2 + $0x78] sm:$0xff] %v318
    // Predicated region
    $region30: #{_lambda_.41} parent=1 // pred_check
      %p335 = pneg %p42
    $region31: #{_lambda_.41} parent=1 // pred_check_branch
      %337 = sbr.rel (%p335) target = $region33
    $region32: #{_lambda_.41} parent=1 // pred_region
      %v338 = vld [vmem:[#allocation2] sm:$0xff]
      %v339 = vld [vmem:[#allocation2 + $0x8] sm:$0xff]
      %v340 = vld [vmem:[#allocation2 + $0x10] sm:$0xff]
      %v341 = vld [vmem:[#allocation2 + $0x18] sm:$0xff]
      %v342 = vld [vmem:[#allocation2 + $0x20] sm:$0xff]
      %v343 = vld [vmem:[#allocation2 + $0x28] sm:$0xff]
      %v344 = vld [vmem:[#allocation2 + $0x30] sm:$0xff]
      %v345 = vld [vmem:[#allocation2 + $0x38] sm:$0xff]
      %v346 = vld [vmem:[#allocation2 + $0x40] sm:$0xff]
      %v347 = vld [vmem:[#allocation2 + $0x48] sm:$0xff]
      %v348 = vld [vmem:[#allocation2 + $0x50] sm:$0xff]
      %v349 = vld [vmem:[#allocation2 + $0x58] sm:$0xff]
      %v350 = vld [vmem:[#allocation2 + $0x60] sm:$0xff]
      %v351 = vld [vmem:[#allocation2 + $0x68] sm:$0xff]
      %v352 = vld [vmem:[#allocation2 + $0x70] sm:$0xff]
      %v353 = vld [vmem:[#allocation2 + $0x78] sm:$0xff]
      %v354 = vld [vmem:[#allocation3] sm:$0x1]
      %v356 = vlaneseq
      %v357 = vshrl.u32 %v356, 7
      %v358 = vsub.s32 0, %v357
      %v359 = vrot.slane %v354, %v358
      %v361 = vmul.f32 %v338, %v359
      %v362 = vmul.f32 %v339, %v359
      %v363 = vmul.f32 %v340, %v359
      %v364 = vmul.f32 %v341, %v359
      %v365 = vmul.f32 %v342, %v359
      %v366 = vmul.f32 %v343, %v359
      %v367 = vmul.f32 %v344, %v359
      %v368 = vmul.f32 %v345, %v359
      %v369 = vmul.f32 %v346, %v359
      %v370 = vmul.f32 %v347, %v359
      %v371 = vmul.f32 %v348, %v359
      %v372 = vmul.f32 %v349, %v359
      %v373 = vmul.f32 %v350, %v359
      %v374 = vmul.f32 %v351, %v359
      %v375 = vmul.f32 %v352, %v359
      %v376 = vmul.f32 %v353, %v359
      %v377 = vld [vmem:[#allocation5] sm:$0x1]
      %v379 = vlaneseq
      %v380 = vshrl.u32 %v379, 7
      %v381 = vsub.s32 0, %v380
      %v382 = vrot.slane %v377, %v381
      %v384 = vadd.f32 %v361, %v382
      %v385 = vadd.f32 %v362, %v382
      %v386 = vadd.f32 %v363, %v382
      %v387 = vadd.f32 %v364, %v382
      %v388 = vadd.f32 %v365, %v382
      %v389 = vadd.f32 %v366, %v382
      %v390 = vadd.f32 %v367, %v382
      %v391 = vadd.f32 %v368, %v382
      %v392 = vadd.f32 %v369, %v382
      %v393 = vadd.f32 %v370, %v382
      %v394 = vadd.f32 %v371, %v382
      %v395 = vadd.f32 %v372, %v382
      %v396 = vadd.f32 %v373, %v382
      %v397 = vadd.f32 %v374, %v382
      %v398 = vadd.f32 %v375, %v382
      %v399 = vadd.f32 %v376, %v382
      %v400 = vsub.f32 0.0, %v384
      %v401 = vsub.f32 0.0, %v385
      %v402 = vsub.f32 0.0, %v386
      %v403 = vsub.f32 0.0, %v387
      %v404 = vsub.f32 0.0, %v388
      %v405 = vsub.f32 0.0, %v389
      %v406 = vsub.f32 0.0, %v390
      %v407 = vsub.f32 0.0, %v391
      %v408 = vsub.f32 0.0, %v392
      %v409 = vsub.f32 0.0, %v393
      %v410 = vsub.f32 0.0, %v394
      %v411 = vsub.f32 0.0, %v395
      %v412 = vsub.f32 0.0, %v396
      %v413 = vsub.f32 0.0, %v397
      %v414 = vsub.f32 0.0, %v398
      %v415 = vsub.f32 0.0, %v399
      %v416 = vmul.f32 %v400, 1.442695
      %v417 = vpow.pop %v416
      %v418 = vmul.f32 %v401, 1.442695
      %v419 = vpow.pop %v418
      %v420 = vmul.f32 %v402, 1.442695
      %v421 = vpow.pop %v420
      %v422 = vmul.f32 %v403, 1.442695
      %v423 = vpow.pop %v422
      %v424 = vmul.f32 %v404, 1.442695
      %v425 = vpow.pop %v424
      %v426 = vmul.f32 %v405, 1.442695
      %v427 = vpow.pop %v426
      %v428 = vmul.f32 %v406, 1.442695
      %v429 = vpow.pop %v428
      %v430 = vmul.f32 %v407, 1.442695
      %v431 = vpow.pop %v430
      %v432 = vmul.f32 %v408, 1.442695
      %v433 = vpow.pop %v432
      %v434 = vmul.f32 %v409, 1.442695
      %v435 = vpow.pop %v434
      %v436 = vmul.f32 %v410, 1.442695
      %v437 = vpow.pop %v436
      %v438 = vmul.f32 %v411, 1.442695
      %v439 = vpow.pop %v438
      %v440 = vmul.f32 %v412, 1.442695
      %v441 = vpow.pop %v440
      %v442 = vmul.f32 %v413, 1.442695
      %v443 = vpow.pop %v442
      %v444 = vmul.f32 %v414, 1.442695
      %v445 = vpow.pop %v444
      %v446 = vmul.f32 %v415, 1.442695
      %v447 = vpow.pop %v446
      %v448 = vadd.f32 %v417, 1.0
      %v449 = vadd.f32 %v419, 1.0
      %v450 = vadd.f32 %v421, 1.0
      %v451 = vadd.f32 %v423, 1.0
      %v452 = vadd.f32 %v425, 1.0
      %v453 = vadd.f32 %v427, 1.0
      %v454 = vadd.f32 %v429, 1.0
      %v455 = vadd.f32 %v431, 1.0
      %v456 = vadd.f32 %v433, 1.0
      %v457 = vadd.f32 %v435, 1.0
      %v458 = vadd.f32 %v437, 1.0
      %v459 = vadd.f32 %v439, 1.0
      %v460 = vadd.f32 %v441, 1.0
      %v461 = vadd.f32 %v443, 1.0
      %v462 = vadd.f32 %v445, 1.0
      %v463 = vadd.f32 %v447, 1.0
      %v464 = vrcp.pop %v448
      %v465 = vmul.f32 1.0, %v464
      %v466 = vrcp.pop %v449
      %v467 = vmul.f32 1.0, %v466
      %v468 = vrcp.pop %v450
      %v469 = vmul.f32 1.0, %v468
      %v470 = vrcp.pop %v451
      %v471 = vmul.f32 1.0, %v470
      %v472 = vrcp.pop %v452
      %v473 = vmul.f32 1.0, %v472
      %v474 = vrcp.pop %v453
      %v475 = vmul.f32 1.0, %v474
      %v476 = vrcp.pop %v454
      %v477 = vmul.f32 1.0, %v476
      %v478 = vrcp.pop %v455
      %v479 = vmul.f32 1.0, %v478
      %v480 = vrcp.pop %v456
      %v481 = vmul.f32 1.0, %v480
      %v482 = vrcp.pop %v457
      %v483 = vmul.f32 1.0, %v482
      %v484 = vrcp.pop %v458
      %v485 = vmul.f32 1.0, %v484
      %v486 = vrcp.pop %v459
      %v487 = vmul.f32 1.0, %v486
      %v488 = vrcp.pop %v460
      %v489 = vmul.f32 1.0, %v488
      %v490 = vrcp.pop %v461
      %v491 = vmul.f32 1.0, %v490
      %v492 = vrcp.pop %v462
      %v493 = vmul.f32 1.0, %v492
      %v494 = vrcp.pop %v463
      %v495 = vmul.f32 1.0, %v494
      %v496 = vmul.f32 %v384, %v465
      %v497 = vmul.f32 %v385, %v467
      %v498 = vmul.f32 %v386, %v469
      %v499 = vmul.f32 %v387, %v471
      %v500 = vmul.f32 %v388, %v473
      %v501 = vmul.f32 %v389, %v475
      %v502 = vmul.f32 %v390, %v477
      %v503 = vmul.f32 %v391, %v479
      %v504 = vmul.f32 %v392, %v481
      %v505 = vmul.f32 %v393, %v483
      %v506 = vmul.f32 %v394, %v485
      %v507 = vmul.f32 %v395, %v487
      %v508 = vmul.f32 %v396, %v489
      %v509 = vmul.f32 %v397, %v491
      %v510 = vmul.f32 %v398, %v493
      %v511 = vmul.f32 %v399, %v495
      %512 = vst [vmem:[%s4] sm:$0xff] %v496
      %513 = vst [vmem:[%s4 + $0x8] sm:$0xff] %v497
      %514 = vst [vmem:[%s4 + $0x10] sm:$0xff] %v498
      %515 = vst [vmem:[%s4 + $0x18] sm:$0xff] %v499
      %516 = vst [vmem:[%s4 + $0x20] sm:$0xff] %v500
      %517 = vst [vmem:[%s4 + $0x28] sm:$0xff] %v501
      %518 = vst [vmem:[%s4 + $0x30] sm:$0xff] %v502
      %519 = vst [vmem:[%s4 + $0x38] sm:$0xff] %v503
      %520 = vst [vmem:[%s4 + $0x40] sm:$0xff] %v504
      %521 = vst [vmem:[%s4 + $0x48] sm:$0xff] %v505
      %522 = vst [vmem:[%s4 + $0x50] sm:$0xff] %v506
      %523 = vst [vmem:[%s4 + $0x58] sm:$0xff] %v507
      %524 = vst [vmem:[%s4 + $0x60] sm:$0xff] %v508
      %525 = vst [vmem:[%s4 + $0x68] sm:$0xff] %v509
      %526 = vst [vmem:[%s4 + $0x70] sm:$0xff] %v510
      %527 = vst [vmem:[%s4 + $0x78] sm:$0xff] %v511
    $region33: #{_lambda_.41} parent=1 // pred_fallthru
      _
    // Predicated region
    $region34: #{_lambda_.41} parent=1 // pred_check
      _
    $region35: #{_lambda_.41} parent=1 // pred_check_branch
      %529 = sbr.rel (0) target = $region37
    $region36: #{_lambda_.41} parent=1 // pred_region
      _
    $region37: #{_lambda_.41} parent=1 // pred_fallthru
      _
    // Predicated region
    $region38: #{_lambda_.41} parent=1 // pred_check
      _
    $region39: #{_lambda_.41} parent=1 // pred_check_branch
      %531 = sbr.rel (0) target = $region41
    $region40: #{_lambda_.41} parent=1 // pred_region
      _
    $region41: #{_lambda_.41} parent=1 // pred_fallthru
      _
    %532 = vsyncpa [#allocation4], 1
    %533 = vsyncpa [#allocation6], 1

// kernel: _lambda_.40
$region0: #{_lambda_.40}
  #allocation0 [shape = 'u32[]', space=smem, size = 0x4, offset = 0x4, fixed_abs, tag = 'smem constant byte address 0x4 - core index']
  #allocation1 [shape = 'u32[144,128]{1,0:T(1,128)}', space=vmem, size = 0x12000, scoped, tag = 'internal scratch']
  #allocation2 [shape = 'f32[128,128]{1,0:T(8,128)}', space=vmem, size = 0x10000, scoped, tag = 'scratch operand']
  %s0 = inlined_call_operand.vmem [shape: bf16[128,256], index: 0, kind: input, shape index: {}]
  %s1 = inlined_call_operand.vmem [shape: bf16[256,128], index: 1, kind: input, shape index: {}]
  %s2 = inlined_call_operand.hbm [shape: f32[1,128], index: 2, kind: input, shape index: {}]
  %s3 = inlined_call_operand.hbm [shape: f32[1,128], index: 3, kind: input, shape index: {}]
  %s4 = inlined_call_operand.vmem [shape: f32[128,128], index: 4, kind: output, shape index: {}]
  %s5 = sld [smem:[#allocation0]]
  $region42: #{_lambda_.40} parent=0
    _
  %s7 = ssub.s32 1, %s5
  %s8 = scalar_select 0, %s7, %s5
  $region1: #{_lambda_.40} parent=0
    #allocation3 [shape = 'u8[512]{0}', space=vmem, size = 0x400, scoped, tag = 'input window, operand 2, single buffered']
    #allocation4 [shape = 's32[1]{0}', space=sflag, size = 0x4, scoped, tag = 'scoped memory for _lambda_.40']
    #allocation5 [shape = 'u8[512]{0}', space=vmem, size = 0x400, scoped, tag = 'input window, operand 3, single buffered']
    #allocation6 [shape = 's32[1]{0}', space=sflag, size = 0x4, scoped, tag = 'scoped memory for _lambda_.40']
    %9 = vsyncpa [#allocation4], 0
    %10 = vsyncpa [#allocation6], 0
    // Predicated region
    $region2: #{_lambda_.40} parent=1 // pred_check
      _
    $region3: #{_lambda_.40} parent=1 // pred_check_branch
      %12 = sbr.rel (0) target = $region5
    $region4: #{_lambda_.40} parent=1 // pred_region
      _
    $region5: #{_lambda_.40} parent=1 // pred_fallthru
      _
    // Predicated region
    $region6: #{_lambda_.40} parent=1 // pred_check
      _
    $region7: #{_lambda_.40} parent=1 // pred_check_branch
      %14 = sbr.rel (0) target = $region9
    $region8: #{_lambda_.40} parent=1 // pred_region
      _
    $region9: #{_lambda_.40} parent=1 // pred_fallthru
      _
    // Predicated region
    $region10: #{_lambda_.40} parent=1 // pred_check
      _
    $region11: #{_lambda_.40} parent=1 // pred_check_branch
      %16 = sbr.rel (0) target = $region13
    $region12: #{_lambda_.40} parent=1 // pred_region
      %s18 = ssub.s32 16, 16
      %19 = vsyncadd [#allocation4], %s18
      %s21 = sshll.u32 [#allocation3], 4
      %s22 = int_to_ptr.vmem [resolvable:$true] %s21
      %24 = dma.hbm_to_vmem [thread:$0]  %s2, 16, %s22, [#allocation4]
    $region13: #{_lambda_.40} parent=1 // pred_fallthru
      _
    // Predicated region
    $region14: #{_lambda_.40} parent=1 // pred_check
      _
    $region15: #{_lambda_.40} parent=1 // pred_check_branch
      %26 = sbr.rel (0) target = $region17
    $region16: #{_lambda_.40} parent=1 // pred_region
      %s28 = ssub.s32 16, 16
      %29 = vsyncadd [#allocation6], %s28
      %s31 = sshll.u32 [#allocation5], 4
      %s32 = int_to_ptr.vmem [resolvable:$true] %s31
      %34 = dma.hbm_to_vmem [thread:$0]  %s3, 16, %s32, [#allocation6]
    $region17: #{_lambda_.40} parent=1 // pred_fallthru
      _
    // Predicated region
    $region18: #{_lambda_.40} parent=1 // pred_check
      _
    $region19: #{_lambda_.40} parent=1 // pred_check_branch
      %36 = sbr.rel (0) target = $region21
    $region20: #{_lambda_.40} parent=1 // pred_region
      %37 = dma.done [#allocation4], 16
    $region21: #{_lambda_.40} parent=1 // pred_fallthru
      _
    // Predicated region
    $region22: #{_lambda_.40} parent=1 // pred_check
      _
    $region23: #{_lambda_.40} parent=1 // pred_check_branch
      %39 = sbr.rel (0) target = $region25
    $region24: #{_lambda_.40} parent=1 // pred_region
      %40 = dma.done [#allocation6], 16
    $region25: #{_lambda_.40} parent=1 // pred_fallthru
      _
    %p42 = scmp.eq.s32.totalorder 0, 0
    // Predicated region
    $region26: #{_lambda_.40} parent=1 // pred_check
      %p43 = pneg %p42
    $region27: #{_lambda_.40} parent=1 // pred_check_branch
      %45 = sbr.rel (%p43) target = $region29
    $region28: #{_lambda_.40} parent=1 // pred_region
      %46 = vst [vmem:[#allocation2] sm:$0xff] 0.0
      %47 = vst [vmem:[#allocation2 + $0x8] sm:$0xff] 0.0
      %48 = vst [vmem:[#allocation2 + $0x10] sm:$0xff] 0.0
      %49 = vst [vmem:[#allocation2 + $0x18] sm:$0xff] 0.0
      %50 = vst [vmem:[#allocation2 + $0x20] sm:$0xff] 0.0
      %51 = vst [vmem:[#allocation2 + $0x28] sm:$0xff] 0.0
      %52 = vst [vmem:[#allocation2 + $0x30] sm:$0xff] 0.0
      %53 = vst [vmem:[#allocation2 + $0x38] sm:$0xff] 0.0
      %54 = vst [vmem:[#allocation2 + $0x40] sm:$0xff] 0.0
      %55 = vst [vmem:[#allocation2 + $0x48] sm:$0xff] 0.0
      %56 = vst [vmem:[#allocation2 + $0x50] sm:$0xff] 0.0
      %57 = vst [vmem:[#allocation2 + $0x58] sm:$0xff] 0.0
      %58 = vst [vmem:[#allocation2 + $0x60] sm:$0xff] 0.0
      %59 = vst [vmem:[#allocation2 + $0x68] sm:$0xff] 0.0
      %60 = vst [vmem:[#allocation2 + $0x70] sm:$0xff] 0.0
      %61 = vst [vmem:[#allocation2 + $0x78] sm:$0xff] 0.0
    $region29: #{_lambda_.40} parent=1 // pred_fallthru
      _
    %v62 = vld [vmem:[#allocation2] sm:$0xff]
    %v63 = vld [vmem:[#allocation2 + $0x8] sm:$0xff]
    %v64 = vld [vmem:[#allocation2 + $0x10] sm:$0xff]
    %v65 = vld [vmem:[#allocation2 + $0x18] sm:$0xff]
    %v66 = vld [vmem:[#allocation2 + $0x20] sm:$0xff]
    %v67 = vld [vmem:[#allocation2 + $0x28] sm:$0xff]
    %v68 = vld [vmem:[#allocation2 + $0x30] sm:$0xff]
    %v69 = vld [vmem:[#allocation2 + $0x38] sm:$0xff]
    %v70 = vld [vmem:[#allocation2 + $0x40] sm:$0xff]
    %v71 = vld [vmem:[#allocation2 + $0x48] sm:$0xff]
    %v72 = vld [vmem:[#allocation2 + $0x50] sm:$0xff]
    %v73 = vld [vmem:[#allocation2 + $0x58] sm:$0xff]
    %v74 = vld [vmem:[#allocation2 + $0x60] sm:$0xff]
    %v75 = vld [vmem:[#allocation2 + $0x68] sm:$0xff]
    %v76 = vld [vmem:[#allocation2 + $0x70] sm:$0xff]
    %v77 = vld [vmem:[#allocation2 + $0x78] sm:$0xff]
    %v78 = vld [vmem:[%s0] sm:$0xff]
    %v79 = vld [vmem:[%s0 + $0x8] sm:$0xff]
    %v80 = vld [vmem:[%s0 + $0x10] sm:$0xff]
    %v81 = vld [vmem:[%s0 + $0x18] sm:$0xff]
    %v82 = vld [vmem:[%s0 + $0x20] sm:$0xff]
    %v83 = vld [vmem:[%s0 + $0x28] sm:$0xff]
    %v84 = vld [vmem:[%s0 + $0x30] sm:$0xff]
    %v85 = vld [vmem:[%s0 + $0x38] sm:$0xff]
    %v86 = vld [vmem:[%s0 + $0x40] sm:$0xff]
    %v87 = vld [vmem:[%s0 + $0x48] sm:$0xff]
    %v88 = vld [vmem:[%s0 + $0x50] sm:$0xff]
    %v89 = vld [vmem:[%s0 + $0x58] sm:$0xff]
    %v90 = vld [vmem:[%s0 + $0x60] sm:$0xff]
    %v91 = vld [vmem:[%s0 + $0x68] sm:$0xff]
    %v92 = vld [vmem:[%s0 + $0x70] sm:$0xff]
    %v93 = vld [vmem:[%s0 + $0x78] sm:$0xff]
    %v94 = vld [vmem:[%s1] sm:$0xf]
    %v95 = vld [vmem:[%s1 + $0x4] sm:$0xf]
    %v96 = vld [vmem:[%s1 + $0x8] sm:$0xf]
    %v97 = vld [vmem:[%s1 + $0xc] sm:$0xf]
    %v98 = vld [vmem:[%s1 + $0x10] sm:$0xf]
    %v99 = vld [vmem:[%s1 + $0x14] sm:$0xf]
    %v100 = vld [vmem:[%s1 + $0x18] sm:$0xf]
    %v101 = vld [vmem:[%s1 + $0x1c] sm:$0xf]
    %v102 = vld [vmem:[%s1 + $0x20] sm:$0xf]
    %v103 = vld [vmem:[%s1 + $0x24] sm:$0xf]
    %v104 = vld [vmem:[%s1 + $0x28] sm:$0xf]
    %v105 = vld [vmem:[%s1 + $0x2c] sm:$0xf]
    %v106 = vld [vmem:[%s1 + $0x30] sm:$0xf]
    %v107 = vld [vmem:[%s1 + $0x34] sm:$0xf]
    %v108 = vld [vmem:[%s1 + $0x38] sm:$0xf]
    %v109 = vld [vmem:[%s1 + $0x3c] sm:$0xf]
    %v110 = vld [vmem:[%s1 + $0x40] sm:$0xf]
    %v111 = vld [vmem:[%s1 + $0x44] sm:$0xf]
    %v112 = vld [vmem:[%s1 + $0x48] sm:$0xf]
    %v113 = vld [vmem:[%s1 + $0x4c] sm:$0xf]
    %v114 = vld [vmem:[%s1 + $0x50] sm:$0xf]
    %v115 = vld [vmem:[%s1 + $0x54] sm:$0xf]
    %v116 = vld [vmem:[%s1 + $0x58] sm:$0xf]
    %v117 = vld [vmem:[%s1 + $0x5c] sm:$0xf]
    %v118 = vld [vmem:[%s1 + $0x60] sm:$0xf]
    %v119 = vld [vmem:[%s1 + $0x64] sm:$0xf]
    %v120 = vld [vmem:[%s1 + $0x68] sm:$0xf]
    %v121 = vld [vmem:[%s1 + $0x6c] sm:$0xf]
    %v122 = vld [vmem:[%s1 + $0x70] sm:$0xf]
    %v123 = vld [vmem:[%s1 + $0x74] sm:$0xf]
    %v124 = vld [vmem:[%s1 + $0x78] sm:$0xf]
    %v125 = vld [vmem:[%s1 + $0x7c] sm:$0xf]
    %v142 = vunpack.c.l.b16 %v78
    %v143 = vunpack.c.h.b16 %v78
    %v144 = vunpack.c.l.b16 %v79
    %v145 = vunpack.c.h.b16 %v79
    %v146 = vunpack.c.l.b16 %v80
    %v147 = vunpack.c.h.b16 %v80
    %v148 = vunpack.c.l.b16 %v81
    %v149 = vunpack.c.h.b16 %v81
    %v150 = vunpack.c.l.b16 %v82
    %v151 = vunpack.c.h.b16 %v82
    %v152 = vunpack.c.l.b16 %v83
    %v153 = vunpack.c.h.b16 %v83
    %v154 = vunpack.c.l.b16 %v84
    %v155 = vunpack.c.h.b16 %v84
    %v156 = vunpack.c.l.b16 %v85
    %v157 = vunpack.c.h.b16 %v85
    %v158 = vunpack.c.l.b16 %v86
    %v159 = vunpack.c.h.b16 %v86
    %v160 = vunpack.c.l.b16 %v87
    %v161 = vunpack.c.h.b16 %v87
    %v162 = vunpack.c.l.b16 %v88
    %v163 = vunpack.c.h.b16 %v88
    %v164 = vunpack.c.l.b16 %v89
    %v165 = vunpack.c.h.b16 %v89
    %v166 = vunpack.c.l.b16 %v90
    %v167 = vunpack.c.h.b16 %v90
    %v168 = vunpack.c.l.b16 %v91
    %v169 = vunpack.c.h.b16 %v91
    %v170 = vunpack.c.l.b16 %v92
    %v171 = vunpack.c.h.b16 %v92
    %v172 = vunpack.c.l.b16 %v93
    %v173 = vunpack.c.h.b16 %v93
    %v174 = vpack.c.b16 %v144, %v142
    %v175 = vpack.c.b16 %v145, %v143
    %v176 = vpack.c.b16 %v148, %v146
    %v177 = vpack.c.b16 %v149, %v147
    %v178 = vpack.c.b16 %v152, %v150
    %v179 = vpack.c.b16 %v153, %v151
    %v180 = vpack.c.b16 %v156, %v154
    %v181 = vpack.c.b16 %v157, %v155
    %v182 = vpack.c.b16 %v160, %v158
    %v183 = vpack.c.b16 %v161, %v159
    %v184 = vpack.c.b16 %v164, %v162
    %v185 = vpack.c.b16 %v165, %v163
    %v186 = vpack.c.b16 %v168, %v166
    %v187 = vpack.c.b16 %v169, %v167
    %v188 = vpack.c.b16 %v172, %v170
    %v189 = vpack.c.b16 %v173, %v171
    %v238 = vunpack.c.l.b16 %v94
    %v239 = vunpack.c.l.b16 %v95
    %v240 = vunpack.c.l.b16 %v96
    %v241 = vunpack.c.l.b16 %v97
    %v242 = vunpack.c.l.b16 %v98
    %v243 = vunpack.c.l.b16 %v99
    %v244 = vunpack.c.l.b16 %v100
    %v245 = vunpack.c.l.b16 %v101
    %v246 = vunpack.c.l.b16 %v102
    %v247 = vunpack.c.l.b16 %v103
    %v248 = vunpack.c.l.b16 %v104
    %v249 = vunpack.c.l.b16 %v105
    %v250 = vunpack.c.l.b16 %v106
    %v251 = vunpack.c.l.b16 %v107
    %v252 = vunpack.c.l.b16 %v108
    %v253 = vunpack.c.l.b16 %v109
    %v254 = vunpack.c.l.b16 %v110
    %v255 = vunpack.c.l.b16 %v111
    %v256 = vunpack.c.l.b16 %v112
    %v257 = vunpack.c.l.b16 %v113
    %v258 = vunpack.c.l.b16 %v114
    %v259 = vunpack.c.l.b16 %v115
    %v260 = vunpack.c.l.b16 %v116
    %v261 = vunpack.c.l.b16 %v117
    %v262 = vunpack.c.l.b16 %v118
    %v263 = vunpack.c.l.b16 %v119
    %v264 = vunpack.c.l.b16 %v120
    %v265 = vunpack.c.l.b16 %v121
    %v266 = vunpack.c.l.b16 %v122
    %v267 = vunpack.c.l.b16 %v123
    %v268 = vunpack.c.l.b16 %v124
    %v269 = vunpack.c.l.b16 %v125
    %v270 = vpack.c.b16 %v239, %v238
    %v271 = vpack.c.b16 %v241, %v240
    %v272 = vpack.c.b16 %v243, %v242
    %v273 = vpack.c.b16 %v245, %v244
    %v274 = vpack.c.b16 %v247, %v246
    %v275 = vpack.c.b16 %v249, %v248
    %v276 = vpack.c.b16 %v251, %v250
    %v277 = vpack.c.b16 %v253, %v252
    %v278 = vpack.c.b16 %v255, %v254
    %v279 = vpack.c.b16 %v257, %v256
    %v280 = vpack.c.b16 %v259, %v258
    %v281 = vpack.c.b16 %v261, %v260
    %v282 = vpack.c.b16 %v263, %v262
    %v283 = vpack.c.b16 %v265, %v264
    %v284 = vpack.c.b16 %v267, %v266
    %v285 = vpack.c.b16 %v269, %v268
    %302 = vmatprep.subr.bf16.mxu0 0
    %303 = vmatpush1.bf16.msra.mxu0 %v270
    %304 = vmatprep.subr.bf16.mxu0 0
    %305 = vmatpush1.bf16.msra.mxu0 %v271
    %306 = vmatprep.subr.bf16.mxu0 0
    %307 = vmatpush1.bf16.msra.mxu0 %v272
    %308 = vmatprep.subr.bf16.mxu0 0
    %309 = vmatpush1.bf16.msra.mxu0 %v273
    %310 = vmatprep.subr.bf16.mxu0 0
    %311 = vmatpush1.bf16.msra.mxu0 %v274
    %312 = vmatprep.subr.bf16.mxu0 0
    %313 = vmatpush1.bf16.msra.mxu0 %v275
    %314 = vmatprep.subr.bf16.mxu0 0
    %315 = vmatpush1.bf16.msra.mxu0 %v276
    %316 = vmatprep.subr.bf16.mxu0 0
    %317 = vmatpush1.bf16.msra.mxu0 %v277
    %318 = vmatprep.subr.bf16.mxu0 0
    %319 = vmatpush1.bf16.msra.mxu0 %v278
    %320 = vmatprep.subr.bf16.mxu0 0
    %321 = vmatpush1.bf16.msra.mxu0 %v279
    %322 = vmatprep.subr.bf16.mxu0 0
    %323 = vmatpush1.bf16.msra.mxu0 %v280
    %324 = vmatprep.subr.bf16.mxu0 0
    %325 = vmatpush1.bf16.msra.mxu0 %v281
    %326 = vmatprep.subr.bf16.mxu0 0
    %327 = vmatpush1.bf16.msra.mxu0 %v282
    %328 = vmatprep.subr.bf16.mxu0 0
    %329 = vmatpush1.bf16.msra.mxu0 %v283
    %330 = vmatprep.subr.bf16.mxu0 0
    %331 = vmatpush1.bf16.msra.mxu0 %v284
    %332 = vmatprep.subr.bf16.mxu0 0
    %333 = vmatpush1.bf16.msra.mxu0 %v285
    %334 = vmatprep.mubr.bf16.mxu0 %v175
    %335 = vmatmul.mubr.bf16.gmra.mrb[0].mxu0 %v174
    %v336 = vpop.f32.mrb[0].mxu0
    %v337 = vadd.f32 0.0, %v336
    %v338 = vpop.f32.mrb[0].mxu0
    %v339 = vpop.f32.mrb[0].mxu0
    %v340 = vadd.f32 0.0, %v339
    %v341 = vpop.f32.mrb[0].mxu0
    %342 = vmatprep.mubr.bf16.mxu0 %v177
    %343 = vmatmul.mubr.bf16.gmra.mrb[0].mxu0 %v176
    %v344 = vpop.f32.mrb[0].mxu0
    %v345 = vadd.f32 0.0, %v344
    %v346 = vpop.f32.mrb[0].mxu0
    %v347 = vpop.f32.mrb[0].mxu0
    %v348 = vadd.f32 0.0, %v347
    %v349 = vpop.f32.mrb[0].mxu0
    %350 = vmatprep.mubr.bf16.mxu0 %v179
    %351 = vmatmul.mubr.bf16.gmra.mrb[0].mxu0 %v178
    %v352 = vpop.f32.mrb[0].mxu0
    %v353 = vadd.f32 0.0, %v352
    %v354 = vpop.f32.mrb[0].mxu0
    %v355 = vpop.f32.mrb[0].mxu0
    %v356 = vadd.f32 0.0, %v355
    %v357 = vpop.f32.mrb[0].mxu0
    %358 = vmatprep.mubr.bf16.mxu0 %v181
    %359 = vmatmul.mubr.bf16.gmra.mrb[0].mxu0 %v180
    %v360 = vpop.f32.mrb[0].mxu0
    %v361 = vadd.f32 0.0, %v360
    %v362 = vpop.f32.mrb[0].mxu0
    %v363 = vpop.f32.mrb[0].mxu0
    %v364 = vadd.f32 0.0, %v363
    %v365 = vpop.f32.mrb[0].mxu0
    %366 = vmatprep.mubr.bf16.mxu0 %v183
    %367 = vmatmul.mubr.bf16.gmra.mrb[0].mxu0 %v182
    %v368 = vpop.f32.mrb[0].mxu0
    %v369 = vadd.f32 0.0, %v368
    %v370 = vpop.f32.mrb[0].mxu0
    %v371 = vpop.f32.mrb[0].mxu0
    %v372 = vadd.f32 0.0, %v371
    %v373 = vpop.f32.mrb[0].mxu0
    %374 = vmatprep.mubr.bf16.mxu0 %v185
    %375 = vmatmul.mubr.bf16.gmra.mrb[0].mxu0 %v184
    %v376 = vpop.f32.mrb[0].mxu0
    %v377 = vadd.f32 0.0, %v376
    %v378 = vpop.f32.mrb[0].mxu0
    %v379 = vpop.f32.mrb[0].mxu0
    %v380 = vadd.f32 0.0, %v379
    %v381 = vpop.f32.mrb[0].mxu0
    %382 = vmatprep.mubr.bf16.mxu0 %v187
    %383 = vmatmul.mubr.bf16.gmra.mrb[0].mxu0 %v186
    %v384 = vpop.f32.mrb[0].mxu0
    %v385 = vadd.f32 0.0, %v384
    %v386 = vpop.f32.mrb[0].mxu0
    %v387 = vpop.f32.mrb[0].mxu0
    %v388 = vadd.f32 0.0, %v387
    %v389 = vpop.f32.mrb[0].mxu0
    %390 = vmatprep.mubr.bf16.mxu0 %v189
    %391 = vmatmul.mubr.bf16.gmra.mrb[0].mxu0 %v188
    %v392 = vpop.f32.mrb[0].mxu0
    %v393 = vadd.f32 0.0, %v392
    %v394 = vpop.f32.mrb[0].mxu0
    %v395 = vpop.f32.mrb[0].mxu0
    %v396 = vadd.f32 0.0, %v395
    %v397 = vpop.f32.mrb[0].mxu0
    %398 = vdwg.mxu0
    %v399 = vadd.f32 %v62, %v337
    %v400 = vadd.f32 %v63, %v340
    %v401 = vadd.f32 %v64, %v345
    %v402 = vadd.f32 %v65, %v348
    %v403 = vadd.f32 %v66, %v353
    %v404 = vadd.f32 %v67, %v356
    %v405 = vadd.f32 %v68, %v361
    %v406 = vadd.f32 %v69, %v364
    %v407 = vadd.f32 %v70, %v369
    %v408 = vadd.f32 %v71, %v372
    %v409 = vadd.f32 %v72, %v377
    %v410 = vadd.f32 %v73, %v380
    %v411 = vadd.f32 %v74, %v385
    %v412 = vadd.f32 %v75, %v388
    %v413 = vadd.f32 %v76, %v393
    %v414 = vadd.f32 %v77, %v396
    %415 = vst [vmem:[#allocation2] sm:$0xff] %v399
    %416 = vst [vmem:[#allocation2 + $0x8] sm:$0xff] %v400
    %417 = vst [vmem:[#allocation2 + $0x10] sm:$0xff] %v401
    %418 = vst [vmem:[#allocation2 + $0x18] sm:$0xff] %v402
    %419 = vst [vmem:[#allocation2 + $0x20] sm:$0xff] %v403
    %420 = vst [vmem:[#allocation2 + $0x28] sm:$0xff] %v404
    %421 = vst [vmem:[#allocation2 + $0x30] sm:$0xff] %v405
    %422 = vst [vmem:[#allocation2 + $0x38] sm:$0xff] %v406
    %423 = vst [vmem:[#allocation2 + $0x40] sm:$0xff] %v407
    %424 = vst [vmem:[#allocation2 + $0x48] sm:$0xff] %v408
    %425 = vst [vmem:[#allocation2 + $0x50] sm:$0xff] %v409
    %426 = vst [vmem:[#allocation2 + $0x58] sm:$0xff] %v410
    %427 = vst [vmem:[#allocation2 + $0x60] sm:$0xff] %v411
    %428 = vst [vmem:[#allocation2 + $0x68] sm:$0xff] %v412
    %429 = vst [vmem:[#allocation2 + $0x70] sm:$0xff] %v413
    %430 = vst [vmem:[#allocation2 + $0x78] sm:$0xff] %v414
    // Predicated region
    $region30: #{_lambda_.40} parent=1 // pred_check
      %p431 = pneg %p42
    $region31: #{_lambda_.40} parent=1 // pred_check_branch
      %433 = sbr.rel (%p431) target = $region33
    $region32: #{_lambda_.40} parent=1 // pred_region
      %v434 = vld [vmem:[#allocation2] sm:$0xff]
      %v435 = vld [vmem:[#allocation2 + $0x8] sm:$0xff]
      %v436 = vld [vmem:[#allocation2 + $0x10] sm:$0xff]
      %v437 = vld [vmem:[#allocation2 + $0x18] sm:$0xff]
      %v438 = vld [vmem:[#allocation2 + $0x20] sm:$0xff]
      %v439 = vld [vmem:[#allocation2 + $0x28] sm:$0xff]
      %v440 = vld [vmem:[#allocation2 + $0x30] sm:$0xff]
      %v441 = vld [vmem:[#allocation2 + $0x38] sm:$0xff]
      %v442 = vld [vmem:[#allocation2 + $0x40] sm:$0xff]
      %v443 = vld [vmem:[#allocation2 + $0x48] sm:$0xff]
      %v444 = vld [vmem:[#allocation2 + $0x50] sm:$0xff]
      %v445 = vld [vmem:[#allocation2 + $0x58] sm:$0xff]
      %v446 = vld [vmem:[#allocation2 + $0x60] sm:$0xff]
      %v447 = vld [vmem:[#allocation2 + $0x68] sm:$0xff]
      %v448 = vld [vmem:[#allocation2 + $0x70] sm:$0xff]
      %v449 = vld [vmem:[#allocation2 + $0x78] sm:$0xff]
      %v450 = vld [vmem:[#allocation3] sm:$0x1]
      %v452 = vlaneseq
      %v453 = vshrl.u32 %v452, 7
      %v454 = vsub.s32 0, %v453
      %v455 = vrot.slane %v450, %v454
      %v457 = vmul.f32 %v434, %v455
      %v458 = vmul.f32 %v435, %v455
      %v459 = vmul.f32 %v436, %v455
      %v460 = vmul.f32 %v437, %v455
      %v461 = vmul.f32 %v438, %v455
      %v462 = vmul.f32 %v439, %v455
      %v463 = vmul.f32 %v440, %v455
      %v464 = vmul.f32 %v441, %v455
      %v465 = vmul.f32 %v442, %v455
      %v466 = vmul.f32 %v443, %v455
      %v467 = vmul.f32 %v444, %v455
      %v468 = vmul.f32 %v445, %v455
      %v469 = vmul.f32 %v446, %v455
      %v470 = vmul.f32 %v447, %v455
      %v471 = vmul.f32 %v448, %v455
      %v472 = vmul.f32 %v449, %v455
      %v473 = vld [vmem:[#allocation5] sm:$0x1]
      %v475 = vlaneseq
      %v476 = vshrl.u32 %v475, 7
      %v477 = vsub.s32 0, %v476
      %v478 = vrot.slane %v473, %v477
      %v480 = vadd.f32 %v457, %v478
      %v481 = vadd.f32 %v458, %v478
      %v482 = vadd.f32 %v459, %v478
      %v483 = vadd.f32 %v460, %v478
      %v484 = vadd.f32 %v461, %v478
      %v485 = vadd.f32 %v462, %v478
      %v486 = vadd.f32 %v463, %v478
      %v487 = vadd.f32 %v464, %v478
      %v488 = vadd.f32 %v465, %v478
      %v489 = vadd.f32 %v466, %v478
      %v490 = vadd.f32 %v467, %v478
      %v491 = vadd.f32 %v468, %v478
      %v492 = vadd.f32 %v469, %v478
      %v493 = vadd.f32 %v470, %v478
      %v494 = vadd.f32 %v471, %v478
      %v495 = vadd.f32 %v472, %v478
      %v496 = vsub.f32 0.0, %v480
      %v497 = vsub.f32 0.0, %v481
      %v498 = vsub.f32 0.0, %v482
      %v499 = vsub.f32 0.0, %v483
      %v500 = vsub.f32 0.0, %v484
      %v501 = vsub.f32 0.0, %v485
      %v502 = vsub.f32 0.0, %v486
      %v503 = vsub.f32 0.0, %v487
      %v504 = vsub.f32 0.0, %v488
      %v505 = vsub.f32 0.0, %v489
      %v506 = vsub.f32 0.0, %v490
      %v507 = vsub.f32 0.0, %v491
      %v508 = vsub.f32 0.0, %v492
      %v509 = vsub.f32 0.0, %v493
      %v510 = vsub.f32 0.0, %v494
      %v511 = vsub.f32 0.0, %v495
      %v512 = vmul.f32 %v496, 1.442695
      %v513 = vpow.pop %v512
      %v514 = vmul.f32 %v497, 1.442695
      %v515 = vpow.pop %v514
      %v516 = vmul.f32 %v498, 1.442695
      %v517 = vpow.pop %v516
      %v518 = vmul.f32 %v499, 1.442695
      %v519 = vpow.pop %v518
      %v520 = vmul.f32 %v500, 1.442695
      %v521 = vpow.pop %v520
      %v522 = vmul.f32 %v501, 1.442695
      %v523 = vpow.pop %v522
      %v524 = vmul.f32 %v502, 1.442695
      %v525 = vpow.pop %v524
      %v526 = vmul.f32 %v503, 1.442695
      %v527 = vpow.pop %v526
      %v528 = vmul.f32 %v504, 1.442695
      %v529 = vpow.pop %v528
      %v530 = vmul.f32 %v505, 1.442695
      %v531 = vpow.pop %v530
      %v532 = vmul.f32 %v506, 1.442695
      %v533 = vpow.pop %v532
      %v534 = vmul.f32 %v507, 1.442695
      %v535 = vpow.pop %v534
      %v536 = vmul.f32 %v508, 1.442695
      %v537 = vpow.pop %v536
      %v538 = vmul.f32 %v509, 1.442695
      %v539 = vpow.pop %v538
      %v540 = vmul.f32 %v510, 1.442695
      %v541 = vpow.pop %v540
      %v542 = vmul.f32 %v511, 1.442695
      %v543 = vpow.pop %v542
      %v544 = vadd.f32 %v513, 1.0
      %v545 = vadd.f32 %v515, 1.0
      %v546 = vadd.f32 %v517, 1.0
      %v547 = vadd.f32 %v519, 1.0
      %v548 = vadd.f32 %v521, 1.0
      %v549 = vadd.f32 %v523, 1.0
      %v550 = vadd.f32 %v525, 1.0
      %v551 = vadd.f32 %v527, 1.0
      %v552 = vadd.f32 %v529, 1.0
      %v553 = vadd.f32 %v531, 1.0
      %v554 = vadd.f32 %v533, 1.0
      %v555 = vadd.f32 %v535, 1.0
      %v556 = vadd.f32 %v537, 1.0
      %v557 = vadd.f32 %v539, 1.0
      %v558 = vadd.f32 %v541, 1.0
      %v559 = vadd.f32 %v543, 1.0
      %v560 = vrcp.pop %v544
      %v561 = vmul.f32 1.0, %v560
      %v562 = vrcp.pop %v545
      %v563 = vmul.f32 1.0, %v562
      %v564 = vrcp.pop %v546
      %v565 = vmul.f32 1.0, %v564
      %v566 = vrcp.pop %v547
      %v567 = vmul.f32 1.0, %v566
      %v568 = vrcp.pop %v548
      %v569 = vmul.f32 1.0, %v568
      %v570 = vrcp.pop %v549
      %v571 = vmul.f32 1.0, %v570
      %v572 = vrcp.pop %v550
      %v573 = vmul.f32 1.0, %v572
      %v574 = vrcp.pop %v551
      %v575 = vmul.f32 1.0, %v574
      %v576 = vrcp.pop %v552
      %v577 = vmul.f32 1.0, %v576
      %v578 = vrcp.pop %v553
      %v579 = vmul.f32 1.0, %v578
      %v580 = vrcp.pop %v554
      %v581 = vmul.f32 1.0, %v580
      %v582 = vrcp.pop %v555
      %v583 = vmul.f32 1.0, %v582
      %v584 = vrcp.pop %v556
      %v585 = vmul.f32 1.0, %v584
      %v586 = vrcp.pop %v557
      %v587 = vmul.f32 1.0, %v586
      %v588 = vrcp.pop %v558
      %v589 = vmul.f32 1.0, %v588
      %v590 = vrcp.pop %v559
      %v591 = vmul.f32 1.0, %v590
      %v592 = vmul.f32 %v480, %v561
      %v593 = vmul.f32 %v481, %v563
      %v594 = vmul.f32 %v482, %v565
      %v595 = vmul.f32 %v483, %v567
      %v596 = vmul.f32 %v484, %v569
      %v597 = vmul.f32 %v485, %v571
      %v598 = vmul.f32 %v486, %v573
      %v599 = vmul.f32 %v487, %v575
      %v600 = vmul.f32 %v488, %v577
      %v601 = vmul.f32 %v489, %v579
      %v602 = vmul.f32 %v490, %v581
      %v603 = vmul.f32 %v491, %v583
      %v604 = vmul.f32 %v492, %v585
      %v605 = vmul.f32 %v493, %v587
      %v606 = vmul.f32 %v494, %v589
      %v607 = vmul.f32 %v495, %v591
      %608 = vst [vmem:[%s4] sm:$0xff] %v592
      %609 = vst [vmem:[%s4 + $0x8] sm:$0xff] %v593
      %610 = vst [vmem:[%s4 + $0x10] sm:$0xff] %v594
      %611 = vst [vmem:[%s4 + $0x18] sm:$0xff] %v595
      %612 = vst [vmem:[%s4 + $0x20] sm:$0xff] %v596
      %613 = vst [vmem:[%s4 + $0x28] sm:$0xff] %v597
      %614 = vst [vmem:[%s4 + $0x30] sm:$0xff] %v598
      %615 = vst [vmem:[%s4 + $0x38] sm:$0xff] %v599
      %616 = vst [vmem:[%s4 + $0x40] sm:$0xff] %v600
      %617 = vst [vmem:[%s4 + $0x48] sm:$0xff] %v601
      %618 = vst [vmem:[%s4 + $0x50] sm:$0xff] %v602
      %619 = vst [vmem:[%s4 + $0x58] sm:$0xff] %v603
      %620 = vst [vmem:[%s4 + $0x60] sm:$0xff] %v604
      %621 = vst [vmem:[%s4 + $0x68] sm:$0xff] %v605
      %622 = vst [vmem:[%s4 + $0x70] sm:$0xff] %v606
      %623 = vst [vmem:[%s4 + $0x78] sm:$0xff] %v607
    $region33: #{_lambda_.40} parent=1 // pred_fallthru
      _
    // Predicated region
    $region34: #{_lambda_.40} parent=1 // pred_check
      _
    $region35: #{_lambda_.40} parent=1 // pred_check_branch
      %625 = sbr.rel (0) target = $region37
    $region36: #{_lambda_.40} parent=1 // pred_region
      _
    $region37: #{_lambda_.40} parent=1 // pred_fallthru
      _
    // Predicated region
    $region38: #{_lambda_.40} parent=1 // pred_check
      _
    $region39: #{_lambda_.40} parent=1 // pred_check_branch
      %627 = sbr.rel (0) target = $region41
    $region40: #{_lambda_.40} parent=1 // pred_region
      _
    $region41: #{_lambda_.40} parent=1 // pred_fallthru
      _
    %628 = vsyncpa [#allocation4], 1
    %629 = vsyncpa [#allocation6], 1

// kernel: _lambda_.45
$region0: #{_lambda_.45}
  #allocation0 [shape = 'u32[]', space=smem, size = 0x4, offset = 0x4, fixed_abs, tag = 'smem constant byte address 0x4 - core index']
  #allocation1 [shape = 'u32[144,128]{1,0:T(1,128)}', space=vmem, size = 0x12000, scoped, tag = 'internal scratch']
  #allocation2 [shape = 'f32[32,128]{1,0:T(8,128)}', space=vmem, size = 0x4000, scoped, tag = 'scratch operand']
  %s0 = inlined_call_operand.vmem [shape: bf16[32,128], index: 0, kind: input, shape index: {}]
  %s1 = inlined_call_operand.vmem [shape: bf16[128,128], index: 1, kind: input, shape index: {}]
  %s2 = inlined_call_operand.vmem [shape: f32[1,128], index: 2, kind: input, shape index: {}]
  %s3 = inlined_call_operand.vmem [shape: f32[1,128], index: 3, kind: input, shape index: {}]
  %s4 = inlined_call_operand.vmem [shape: f32[32,128], index: 4, kind: output, shape index: {}]
  %s5 = sld [smem:[#allocation0]]
  $region34: #{_lambda_.45} parent=0
    _
  %s7 = ssub.s32 1, %s5
  %s8 = scalar_select 0, %s7, %s5
  // Predicated region
  $region2: #{_lambda_.45} parent=0 // pred_check
    _
  $region3: #{_lambda_.45} parent=0 // pred_check_branch
    %10 = sbr.rel (0) target = $region5
  $region4: #{_lambda_.45} parent=0 // pred_region
    _
  $region5: #{_lambda_.45} parent=0 // pred_fallthru
    _
  // Predicated region
  $region6: #{_lambda_.45} parent=0 // pred_check
    _
  $region7: #{_lambda_.45} parent=0 // pred_check_branch
    %12 = sbr.rel (0) target = $region9
  $region8: #{_lambda_.45} parent=0 // pred_region
    _
  $region9: #{_lambda_.45} parent=0 // pred_fallthru
    _
  // Predicated region
  $region10: #{_lambda_.45} parent=0 // pred_check
    _
  $region11: #{_lambda_.45} parent=0 // pred_check_branch
    %14 = sbr.rel (0) target = $region13
  $region12: #{_lambda_.45} parent=0 // pred_region
    _
  $region13: #{_lambda_.45} parent=0 // pred_fallthru
    _
  // Predicated region
  $region14: #{_lambda_.45} parent=0 // pred_check
    _
  $region15: #{_lambda_.45} parent=0 // pred_check_branch
    %16 = sbr.rel (0) target = $region17
  $region16: #{_lambda_.45} parent=0 // pred_region
    _
  $region17: #{_lambda_.45} parent=0 // pred_fallthru
    _
  %p18 = scmp.eq.s32.totalorder 0, 0
  // Predicated region
  $region18: #{_lambda_.45} parent=0 // pred_check
    %p19 = pneg %p18
  $region19: #{_lambda_.45} parent=0 // pred_check_branch
    %21 = sbr.rel (%p19) target = $region21
  $region20: #{_lambda_.45} parent=0 // pred_region
    %22 = vst [vmem:[#allocation2] sm:$0xff] 0.0
    %23 = vst [vmem:[#allocation2 + $0x8] sm:$0xff] 0.0
    %24 = vst [vmem:[#allocation2 + $0x10] sm:$0xff] 0.0
    %25 = vst [vmem:[#allocation2 + $0x18] sm:$0xff] 0.0
  $region21: #{_lambda_.45} parent=0 // pred_fallthru
    _
  %v26 = vld [vmem:[#allocation2] sm:$0xff]
  %v27 = vld [vmem:[#allocation2 + $0x8] sm:$0xff]
  %v28 = vld [vmem:[#allocation2 + $0x10] sm:$0xff]
  %v29 = vld [vmem:[#allocation2 + $0x18] sm:$0xff]
  %v30 = vld [vmem:[%s0] sm:$0xf]
  %v31 = vld [vmem:[%s0 + $0x4] sm:$0xf]
  %v32 = vld [vmem:[%s0 + $0x8] sm:$0xf]
  %v33 = vld [vmem:[%s0 + $0xc] sm:$0xf]
  %v34 = vld [vmem:[%s1] sm:$0xf]
  %v35 = vld [vmem:[%s1 + $0x4] sm:$0xf]
  %v36 = vld [vmem:[%s1 + $0x8] sm:$0xf]
  %v37 = vld [vmem:[%s1 + $0xc] sm:$0xf]
  %v38 = vld [vmem:[%s1 + $0x10] sm:$0xf]
  %v39 = vld [vmem:[%s1 + $0x14] sm:$0xf]
  %v40 = vld [vmem:[%s1 + $0x18] sm:$0xf]
  %v41 = vld [vmem:[%s1 + $0x1c] sm:$0xf]
  %v42 = vld [vmem:[%s1 + $0x20] sm:$0xf]
  %v43 = vld [vmem:[%s1 + $0x24] sm:$0xf]
  %v44 = vld [vmem:[%s1 + $0x28] sm:$0xf]
  %v45 = vld [vmem:[%s1 + $0x2c] sm:$0xf]
  %v46 = vld [vmem:[%s1 + $0x30] sm:$0xf]
  %v47 = vld [vmem:[%s1 + $0x34] sm:$0xf]
  %v48 = vld [vmem:[%s1 + $0x38] sm:$0xf]
  %v49 = vld [vmem:[%s1 + $0x3c] sm:$0xf]
  %v54 = vunpack.c.l.b16 %v30
  %v55 = vunpack.c.l.b16 %v31
  %v56 = vunpack.c.l.b16 %v32
  %v57 = vunpack.c.l.b16 %v33
  %v58 = vpack.c.b16 %v55, %v54
  %v59 = vpack.c.b16 %v57, %v56
  %v78 = vunpack.c.l.b16 %v34
  %v79 = vunpack.c.l.b16 %v35
  %v80 = vunpack.c.l.b16 %v36
  %v81 = vunpack.c.l.b16 %v37
  %v82 = vunpack.c.l.b16 %v38
  %v83 = vunpack.c.l.b16 %v39
  %v84 = vunpack.c.l.b16 %v40
  %v85 = vunpack.c.l.b16 %v41
  %v86 = vunpack.c.l.b16 %v42
  %v87 = vunpack.c.l.b16 %v43
  %v88 = vunpack.c.l.b16 %v44
  %v89 = vunpack.c.l.b16 %v45
  %v90 = vunpack.c.l.b16 %v46
  %v91 = vunpack.c.l.b16 %v47
  %v92 = vunpack.c.l.b16 %v48
  %v93 = vunpack.c.l.b16 %v49
  %v94 = vpack.c.b16 %v79, %v78
  %v95 = vpack.c.b16 %v81, %v80
  %v96 = vpack.c.b16 %v83, %v82
  %v97 = vpack.c.b16 %v85, %v84
  %v98 = vpack.c.b16 %v87, %v86
  %v99 = vpack.c.b16 %v89, %v88
  %v100 = vpack.c.b16 %v91, %v90
  %v101 = vpack.c.b16 %v93, %v92
  %110 = vmatprep.subr.bf16.mxu0 0
  %111 = vmatpush1.bf16.msra.mxu0 %v94
  %112 = vmatprep.subr.bf16.mxu0 0
  %113 = vmatpush1.bf16.msra.mxu0 %v95
  %114 = vmatprep.subr.bf16.mxu0 0
  %115 = vmatpush1.bf16.msra.mxu0 %v96
  %116 = vmatprep.subr.bf16.mxu0 0
  %117 = vmatpush1.bf16.msra.mxu0 %v97
  %118 = vmatprep.subr.bf16.mxu0 0
  %119 = vmatpush1.bf16.msra.mxu0 %v98
  %120 = vmatprep.subr.bf16.mxu0 0
  %121 = vmatpush1.bf16.msra.mxu0 %v99
  %122 = vmatprep.subr.bf16.mxu0 0
  %123 = vmatpush1.bf16.msra.mxu0 %v100
  %124 = vmatprep.subr.bf16.mxu0 0
  %125 = vmatpush1.bf16.msra.mxu0 %v101
  %126 = vmatprep.subr.bf16.mxu0 0
  %127 = vmatpush1.bf16.msra.mxu0 0
  %128 = vmatprep.subr.bf16.mxu0 0
  %129 = vmatpush1.bf16.msra.mxu0 0
  %130 = vmatprep.subr.bf16.mxu0 0
  %131 = vmatpush1.bf16.msra.mxu0 0
  %132 = vmatprep.subr.bf16.mxu0 0
  %133 = vmatpush1.bf16.msra.mxu0 0
  %134 = vmatprep.subr.bf16.mxu0 0
  %135 = vmatpush1.bf16.msra.mxu0 0
  %136 = vmatprep.subr.bf16.mxu0 0
  %137 = vmatpush1.bf16.msra.mxu0 0
  %138 = vmatprep.subr.bf16.mxu0 0
  %139 = vmatpush1.bf16.msra.mxu0 0
  %140 = vmatprep.subr.bf16.mxu0 0
  %141 = vmatpush1.bf16.msra.mxu0 0
  %142 = vmatprep.mubr.bf16.mxu0 0
  %143 = vmatmul.mubr.bf16.gmra.mrb[0].mxu0 %v58
  %v144 = vpop.f32.mrb[0].mxu0
  %v145 = vadd.f32 0.0, %v144
  %v146 = vpop.f32.mrb[0].mxu0
  %v147 = vpop.f32.mrb[0].mxu0
  %v148 = vadd.f32 0.0, %v147
  %v149 = vpop.f32.mrb[0].mxu0
  %150 = vmatprep.mubr.bf16.mxu0 0
  %151 = vmatmul.mubr.bf16.gmra.mrb[0].mxu0 %v59
  %v152 = vpop.f32.mrb[0].mxu0
  %v153 = vadd.f32 0.0, %v152
  %v154 = vpop.f32.mrb[0].mxu0
  %v155 = vpop.f32.mrb[0].mxu0
  %v156 = vadd.f32 0.0, %v155
  %v157 = vpop.f32.mrb[0].mxu0
  %158 = vdwg.mxu0
  %v159 = vadd.f32 %v26, %v145
  %v160 = vadd.f32 %v27, %v148
  %v161 = vadd.f32 %v28, %v153
  %v162 = vadd.f32 %v29, %v156
  %163 = vst [vmem:[#allocation2] sm:$0xff] %v159
  %164 = vst [vmem:[#allocation2 + $0x8] sm:$0xff] %v160
  %165 = vst [vmem:[#allocation2 + $0x10] sm:$0xff] %v161
  %166 = vst [vmem:[#allocation2 + $0x18] sm:$0xff] %v162
  // Predicated region
  $region22: #{_lambda_.45} parent=0 // pred_check
    %p167 = pneg %p18
  $region23: #{_lambda_.45} parent=0 // pred_check_branch
    %169 = sbr.rel (%p167) target = $region25
  $region24: #{_lambda_.45} parent=0 // pred_region
    %v170 = vld [vmem:[#allocation2] sm:$0xff]
    %v171 = vld [vmem:[#allocation2 + $0x8] sm:$0xff]
    %v172 = vld [vmem:[#allocation2 + $0x10] sm:$0xff]
    %v173 = vld [vmem:[#allocation2 + $0x18] sm:$0xff]
    %v174 = vld [vmem:[%s2] sm:$0x1]
    %v176 = vlaneseq
    %v177 = vshrl.u32 %v176, 7
    %v178 = vsub.s32 0, %v177
    %v179 = vrot.slane %v174, %v178
    %v181 = vmul.f32 %v170, %v179
    %v182 = vmul.f32 %v171, %v179
    %v183 = vmul.f32 %v172, %v179
    %v184 = vmul.f32 %v173, %v179
    %v185 = vld [vmem:[%s3] sm:$0x1]
    %v187 = vlaneseq
    %v188 = vshrl.u32 %v187, 7
    %v189 = vsub.s32 0, %v188
    %v190 = vrot.slane %v185, %v189
    %v192 = vadd.f32 %v181, %v190
    %v193 = vadd.f32 %v182, %v190
    %v194 = vadd.f32 %v183, %v190
    %v195 = vadd.f32 %v184, %v190
    %v196 = vsub.f32 0.0, %v192
    %v197 = vsub.f32 0.0, %v193
    %v198 = vsub.f32 0.0, %v194
    %v199 = vsub.f32 0.0, %v195
    %v200 = vmul.f32 %v196, 1.442695
    %v201 = vpow.pop %v200
    %v202 = vmul.f32 %v197, 1.442695
    %v203 = vpow.pop %v202
    %v204 = vmul.f32 %v198, 1.442695
    %v205 = vpow.pop %v204
    %v206 = vmul.f32 %v199, 1.442695
    %v207 = vpow.pop %v206
    %v208 = vadd.f32 %v201, 1.0
    %v209 = vadd.f32 %v203, 1.0
    %v210 = vadd.f32 %v205, 1.0
    %v211 = vadd.f32 %v207, 1.0
    %v212 = vrcp.pop %v208
    %v213 = vmul.f32 1.0, %v212
    %v214 = vrcp.pop %v209
    %v215 = vmul.f32 1.0, %v214
    %v216 = vrcp.pop %v210
    %v217 = vmul.f32 1.0, %v216
    %v218 = vrcp.pop %v211
    %v219 = vmul.f32 1.0, %v218
    %v220 = vmul.f32 %v192, %v213
    %v221 = vmul.f32 %v193, %v215
    %v222 = vmul.f32 %v194, %v217
    %v223 = vmul.f32 %v195, %v219
    %224 = vst [vmem:[%s4] sm:$0xff] %v220
    %225 = vst [vmem:[%s4 + $0x8] sm:$0xff] %v221
    %226 = vst [vmem:[%s4 + $0x10] sm:$0xff] %v222
    %227 = vst [vmem:[%s4 + $0x18] sm:$0xff] %v223
  $region25: #{_lambda_.45} parent=0 // pred_fallthru
    _
  // Predicated region
  $region26: #{_lambda_.45} parent=0 // pred_check
    _
  $region27: #{_lambda_.45} parent=0 // pred_check_branch
    %229 = sbr.rel (0) target = $region29
  $region28: #{_lambda_.45} parent=0 // pred_region
    _
  $region29: #{_lambda_.45} parent=0 // pred_fallthru
    _
  // Predicated region
  $region30: #{_lambda_.45} parent=0 // pred_check
    _
  $region31: #{_lambda_.45} parent=0 // pred_check_branch
    %231 = sbr.rel (0) target = $region33
  $region32: #{_lambda_.45} parent=0 // pred_region
    _
  $region33: #{_lambda_.45} parent=0 // pred_fallthru
    _

// kernel: _lambda_.44
$region0: #{_lambda_.44}
  #allocation0 [shape = 'u32[]', space=smem, size = 0x4, offset = 0x4, fixed_abs, tag = 'smem constant byte address 0x4 - core index']
  #allocation1 [shape = 'u32[144,128]{1,0:T(1,128)}', space=vmem, size = 0x12000, scoped, tag = 'internal scratch']
  #allocation2 [shape = 'f32[32,128]{1,0:T(8,128)}', space=vmem, size = 0x4000, scoped, tag = 'scratch operand']
  %s0 = inlined_call_operand.vmem [shape: bf16[32,128], index: 0, kind: input, shape index: {}]
  %s1 = inlined_call_operand.vmem [shape: bf16[128,128], index: 1, kind: input, shape index: {}]
  %s2 = inlined_call_operand.hbm [shape: f32[1,128], index: 2, kind: input, shape index: {}]
  %s3 = inlined_call_operand.hbm [shape: f32[1,128], index: 3, kind: input, shape index: {}]
  %s4 = inlined_call_operand.vmem [shape: f32[32,128], index: 4, kind: output, shape index: {}]
  %s5 = sld [smem:[#allocation0]]
  $region42: #{_lambda_.44} parent=0
    _
  %s7 = ssub.s32 1, %s5
  %s8 = scalar_select 0, %s7, %s5
  $region1: #{_lambda_.44} parent=0
    #allocation3 [shape = 'u8[512]{0}', space=vmem, size = 0x400, scoped, tag = 'input window, operand 2, single buffered']
    #allocation4 [shape = 's32[1]{0}', space=sflag, size = 0x4, scoped, tag = 'scoped memory for _lambda_.44']
    #allocation5 [shape = 'u8[512]{0}', space=vmem, size = 0x400, scoped, tag = 'input window, operand 3, single buffered']
    #allocation6 [shape = 's32[1]{0}', space=sflag, size = 0x4, scoped, tag = 'scoped memory for _lambda_.44']
    %9 = vsyncpa [#allocation4], 0
    %10 = vsyncpa [#allocation6], 0
    // Predicated region
    $region2: #{_lambda_.44} parent=1 // pred_check
      _
    $region3: #{_lambda_.44} parent=1 // pred_check_branch
      %12 = sbr.rel (0) target = $region5
    $region4: #{_lambda_.44} parent=1 // pred_region
      _
    $region5: #{_lambda_.44} parent=1 // pred_fallthru
      _
    // Predicated region
    $region6: #{_lambda_.44} parent=1 // pred_check
      _
    $region7: #{_lambda_.44} parent=1 // pred_check_branch
      %14 = sbr.rel (0) target = $region9
    $region8: #{_lambda_.44} parent=1 // pred_region
      _
    $region9: #{_lambda_.44} parent=1 // pred_fallthru
      _
    // Predicated region
    $region10: #{_lambda_.44} parent=1 // pred_check
      _
    $region11: #{_lambda_.44} parent=1 // pred_check_branch
      %16 = sbr.rel (0) target = $region13
    $region12: #{_lambda_.44} parent=1 // pred_region
      %s18 = ssub.s32 16, 16
      %19 = vsyncadd [#allocation4], %s18
      %s21 = sshll.u32 [#allocation3], 4
      %s22 = int_to_ptr.vmem [resolvable:$true] %s21
      %24 = dma.hbm_to_vmem [thread:$0]  %s2, 16, %s22, [#allocation4]
    $region13: #{_lambda_.44} parent=1 // pred_fallthru
      _
    // Predicated region
    $region14: #{_lambda_.44} parent=1 // pred_check
      _
    $region15: #{_lambda_.44} parent=1 // pred_check_branch
      %26 = sbr.rel (0) target = $region17
    $region16: #{_lambda_.44} parent=1 // pred_region
      %s28 = ssub.s32 16, 16
      %29 = vsyncadd [#allocation6], %s28
      %s31 = sshll.u32 [#allocation5], 4
      %s32 = int_to_ptr.vmem [resolvable:$true] %s31
      %34 = dma.hbm_to_vmem [thread:$0]  %s3, 16, %s32, [#allocation6]
    $region17: #{_lambda_.44} parent=1 // pred_fallthru
      _
    // Predicated region
    $region18: #{_lambda_.44} parent=1 // pred_check
      _
    $region19: #{_lambda_.44} parent=1 // pred_check_branch
      %36 = sbr.rel (0) target = $region21
    $region20: #{_lambda_.44} parent=1 // pred_region
      %37 = dma.done [#allocation4], 16
    $region21: #{_lambda_.44} parent=1 // pred_fallthru
      _
    // Predicated region
    $region22: #{_lambda_.44} parent=1 // pred_check
      _
    $region23: #{_lambda_.44} parent=1 // pred_check_branch
      %39 = sbr.rel (0) target = $region25
    $region24: #{_lambda_.44} parent=1 // pred_region
      %40 = dma.done [#allocation6], 16
    $region25: #{_lambda_.44} parent=1 // pred_fallthru
      _
    %p42 = scmp.eq.s32.totalorder 0, 0
    // Predicated region
    $region26: #{_lambda_.44} parent=1 // pred_check
      %p43 = pneg %p42
    $region27: #{_lambda_.44} parent=1 // pred_check_branch
      %45 = sbr.rel (%p43) target = $region29
    $region28: #{_lambda_.44} parent=1 // pred_region
      %46 = vst [vmem:[#allocation2] sm:$0xff] 0.0
      %47 = vst [vmem:[#allocation2 + $0x8] sm:$0xff] 0.0
      %48 = vst [vmem:[#allocation2 + $0x10] sm:$0xff] 0.0
      %49 = vst [vmem:[#allocation2 + $0x18] sm:$0xff] 0.0
    $region29: #{_lambda_.44} parent=1 // pred_fallthru
      _
    %v50 = vld [vmem:[#allocation2] sm:$0xff]
    %v51 = vld [vmem:[#allocation2 + $0x8] sm:$0xff]
    %v52 = vld [vmem:[#allocation2 + $0x10] sm:$0xff]
    %v53 = vld [vmem:[#allocation2 + $0x18] sm:$0xff]
    %v54 = vld [vmem:[%s0] sm:$0xf]
    %v55 = vld [vmem:[%s0 + $0x4] sm:$0xf]
    %v56 = vld [vmem:[%s0 + $0x8] sm:$0xf]
    %v57 = vld [vmem:[%s0 + $0xc] sm:$0xf]
    %v58 = vld [vmem:[%s1] sm:$0xf]
    %v59 = vld [vmem:[%s1 + $0x4] sm:$0xf]
    %v60 = vld [vmem:[%s1 + $0x8] sm:$0xf]
    %v61 = vld [vmem:[%s1 + $0xc] sm:$0xf]
    %v62 = vld [vmem:[%s1 + $0x10] sm:$0xf]
    %v63 = vld [vmem:[%s1 + $0x14] sm:$0xf]
    %v64 = vld [vmem:[%s1 + $0x18] sm:$0xf]
    %v65 = vld [vmem:[%s1 + $0x1c] sm:$0xf]
    %v66 = vld [vmem:[%s1 + $0x20] sm:$0xf]
    %v67 = vld [vmem:[%s1 + $0x24] sm:$0xf]
    %v68 = vld [vmem:[%s1 + $0x28] sm:$0xf]
    %v69 = vld [vmem:[%s1 + $0x2c] sm:$0xf]
    %v70 = vld [vmem:[%s1 + $0x30] sm:$0xf]
    %v71 = vld [vmem:[%s1 + $0x34] sm:$0xf]
    %v72 = vld [vmem:[%s1 + $0x38] sm:$0xf]
    %v73 = vld [vmem:[%s1 + $0x3c] sm:$0xf]
    %v78 = vunpack.c.l.b16 %v54
    %v79 = vunpack.c.l.b16 %v55
    %v80 = vunpack.c.l.b16 %v56
    %v81 = vunpack.c.l.b16 %v57
    %v82 = vpack.c.b16 %v79, %v78
    %v83 = vpack.c.b16 %v81, %v80
    %v102 = vunpack.c.l.b16 %v58
    %v103 = vunpack.c.l.b16 %v59
    %v104 = vunpack.c.l.b16 %v60
    %v105 = vunpack.c.l.b16 %v61
    %v106 = vunpack.c.l.b16 %v62
    %v107 = vunpack.c.l.b16 %v63
    %v108 = vunpack.c.l.b16 %v64
    %v109 = vunpack.c.l.b16 %v65
    %v110 = vunpack.c.l.b16 %v66
    %v111 = vunpack.c.l.b16 %v67
    %v112 = vunpack.c.l.b16 %v68
    %v113 = vunpack.c.l.b16 %v69
    %v114 = vunpack.c.l.b16 %v70
    %v115 = vunpack.c.l.b16 %v71
    %v116 = vunpack.c.l.b16 %v72
    %v117 = vunpack.c.l.b16 %v73
    %v118 = vpack.c.b16 %v103, %v102
    %v119 = vpack.c.b16 %v105, %v104
    %v120 = vpack.c.b16 %v107, %v106
    %v121 = vpack.c.b16 %v109, %v108
    %v122 = vpack.c.b16 %v111, %v110
    %v123 = vpack.c.b16 %v113, %v112
    %v124 = vpack.c.b16 %v115, %v114
    %v125 = vpack.c.b16 %v117, %v116
    %134 = vmatprep.subr.bf16.mxu0 0
    %135 = vmatpush1.bf16.msra.mxu0 %v118
    %136 = vmatprep.subr.bf16.mxu0 0
    %137 = vmatpush1.bf16.msra.mxu0 %v119
    %138 = vmatprep.subr.bf16.mxu0 0
    %139 = vmatpush1.bf16.msra.mxu0 %v120
    %140 = vmatprep.subr.bf16.mxu0 0
    %141 = vmatpush1.bf16.msra.mxu0 %v121
    %142 = vmatprep.subr.bf16.mxu0 0
    %143 = vmatpush1.bf16.msra.mxu0 %v122
    %144 = vmatprep.subr.bf16.mxu0 0
    %145 = vmatpush1.bf16.msra.mxu0 %v123
    %146 = vmatprep.subr.bf16.mxu0 0
    %147 = vmatpush1.bf16.msra.mxu0 %v124
    %148 = vmatprep.subr.bf16.mxu0 0
    %149 = vmatpush1.bf16.msra.mxu0 %v125
    %150 = vmatprep.subr.bf16.mxu0 0
    %151 = vmatpush1.bf16.msra.mxu0 0
    %152 = vmatprep.subr.bf16.mxu0 0
    %153 = vmatpush1.bf16.msra.mxu0 0
    %154 = vmatprep.subr.bf16.mxu0 0
    %155 = vmatpush1.bf16.msra.mxu0 0
    %156 = vmatprep.subr.bf16.mxu0 0
    %157 = vmatpush1.bf16.msra.mxu0 0
    %158 = vmatprep.subr.bf16.mxu0 0
    %159 = vmatpush1.bf16.msra.mxu0 0
    %160 = vmatprep.subr.bf16.mxu0 0
    %161 = vmatpush1.bf16.msra.mxu0 0
    %162 = vmatprep.subr.bf16.mxu0 0
    %163 = vmatpush1.bf16.msra.mxu0 0
    %164 = vmatprep.subr.bf16.mxu0 0
    %165 = vmatpush1.bf16.msra.mxu0 0
    %166 = vmatprep.mubr.bf16.mxu0 0
    %167 = vmatmul.mubr.bf16.gmra.mrb[0].mxu0 %v82
    %v168 = vpop.f32.mrb[0].mxu0
    %v169 = vadd.f32 0.0, %v168
    %v170 = vpop.f32.mrb[0].mxu0
    %v171 = vpop.f32.mrb[0].mxu0
    %v172 = vadd.f32 0.0, %v171
    %v173 = vpop.f32.mrb[0].mxu0
    %174 = vmatprep.mubr.bf16.mxu0 0
    %175 = vmatmul.mubr.bf16.gmra.mrb[0].mxu0 %v83
    %v176 = vpop.f32.mrb[0].mxu0
    %v177 = vadd.f32 0.0, %v176
    %v178 = vpop.f32.mrb[0].mxu0
    %v179 = vpop.f32.mrb[0].mxu0
    %v180 = vadd.f32 0.0, %v179
    %v181 = vpop.f32.mrb[0].mxu0
    %182 = vdwg.mxu0
    %v183 = vadd.f32 %v50, %v169
    %v184 = vadd.f32 %v51, %v172
    %v185 = vadd.f32 %v52, %v177
    %v186 = vadd.f32 %v53, %v180
    %187 = vst [vmem:[#allocation2] sm:$0xff] %v183
    %188 = vst [vmem:[#allocation2 + $0x8] sm:$0xff] %v184
    %189 = vst [vmem:[#allocation2 + $0x10] sm:$0xff] %v185
    %190 = vst [vmem:[#allocation2 + $0x18] sm:$0xff] %v186
    // Predicated region
    $region30: #{_lambda_.44} parent=1 // pred_check
      %p191 = pneg %p42
    $region31: #{_lambda_.44} parent=1 // pred_check_branch
      %193 = sbr.rel (%p191) target = $region33
    $region32: #{_lambda_.44} parent=1 // pred_region
      %v194 = vld [vmem:[#allocation2] sm:$0xff]
      %v195 = vld [vmem:[#allocation2 + $0x8] sm:$0xff]
      %v196 = vld [vmem:[#allocation2 + $0x10] sm:$0xff]
      %v197 = vld [vmem:[#allocation2 + $0x18] sm:$0xff]
      %v198 = vld [vmem:[#allocation3] sm:$0x1]
      %v200 = vlaneseq
      %v201 = vshrl.u32 %v200, 7
      %v202 = vsub.s32 0, %v201
      %v203 = vrot.slane %v198, %v202
      %v205 = vmul.f32 %v194, %v203
      %v206 = vmul.f32 %v195, %v203
      %v207 = vmul.f32 %v196, %v203
      %v208 = vmul.f32 %v197, %v203
      %v209 = vld [vmem:[#allocation5] sm:$0x1]
      %v211 = vlaneseq
      %v212 = vshrl.u32 %v211, 7
      %v213 = vsub.s32 0, %v212
      %v214 = vrot.slane %v209, %v213
      %v216 = vadd.f32 %v205, %v214
      %v217 = vadd.f32 %v206, %v214
      %v218 = vadd.f32 %v207, %v214
      %v219 = vadd.f32 %v208, %v214
      %v220 = vsub.f32 0.0, %v216
      %v221 = vsub.f32 0.0, %v217
      %v222 = vsub.f32 0.0, %v218
      %v223 = vsub.f32 0.0, %v219
      %v224 = vmul.f32 %v220, 1.442695
      %v225 = vpow.pop %v224
      %v226 = vmul.f32 %v221, 1.442695
      %v227 = vpow.pop %v226
      %v228 = vmul.f32 %v222, 1.442695
      %v229 = vpow.pop %v228
      %v230 = vmul.f32 %v223, 1.442695
      %v231 = vpow.pop %v230
      %v232 = vadd.f32 %v225, 1.0
      %v233 = vadd.f32 %v227, 1.0
      %v234 = vadd.f32 %v229, 1.0
      %v235 = vadd.f32 %v231, 1.0
      %v236 = vrcp.pop %v232
      %v237 = vmul.f32 1.0, %v236
      %v238 = vrcp.pop %v233
      %v239 = vmul.f32 1.0, %v238
      %v240 = vrcp.pop %v234
      %v241 = vmul.f32 1.0, %v240
      %v242 = vrcp.pop %v235
      %v243 = vmul.f32 1.0, %v242
      %v244 = vmul.f32 %v216, %v237
      %v245 = vmul.f32 %v217, %v239
      %v246 = vmul.f32 %v218, %v241
      %v247 = vmul.f32 %v219, %v243
      %248 = vst [vmem:[%s4] sm:$0xff] %v244
      %249 = vst [vmem:[%s4 + $0x8] sm:$0xff] %v245
      %250 = vst [vmem:[%s4 + $0x10] sm:$0xff] %v246
      %251 = vst [vmem:[%s4 + $0x18] sm:$0xff] %v247
    $region33: #{_lambda_.44} parent=1 // pred_fallthru
      _
    // Predicated region
    $region34: #{_lambda_.44} parent=1 // pred_check
      _
    $region35: #{_lambda_.44} parent=1 // pred_check_branch
      %253 = sbr.rel (0) target = $region37
    $region36: #{_lambda_.44} parent=1 // pred_region
      _
    $region37: #{_lambda_.44} parent=1 // pred_fallthru
      _
    // Predicated region
    $region38: #{_lambda_.44} parent=1 // pred_check
      _
    $region39: #{_lambda_.44} parent=1 // pred_check_branch
      %255 = sbr.rel (0) target = $region41
    $region40: #{_lambda_.44} parent=1 // pred_region
      _
    $region41: #{_lambda_.44} parent=1 // pred_fallthru
      _
    %256 = vsyncpa [#allocation4], 1
    %257 = vsyncpa [#allocation6], 1

// kernel: _lambda_.43
$region0: #{_lambda_.43}
  #allocation0 [shape = 'u32[]', space=smem, size = 0x4, offset = 0x4, fixed_abs, tag = 'smem constant byte address 0x4 - core index']
  #allocation1 [shape = 'u32[144,128]{1,0:T(1,128)}', space=vmem, size = 0x12000, scoped, tag = 'internal scratch']
  #allocation2 [shape = 'f32[32,128]{1,0:T(8,128)}', space=vmem, size = 0x4000, scoped, tag = 'scratch operand']
  %s0 = inlined_call_operand.vmem [shape: bf16[32,384], index: 0, kind: input, shape index: {}]
  %s1 = inlined_call_operand.vmem [shape: bf16[384,128], index: 1, kind: input, shape index: {}]
  %s2 = inlined_call_operand.hbm [shape: f32[1,128], index: 2, kind: input, shape index: {}]
  %s3 = inlined_call_operand.hbm [shape: f32[1,128], index: 3, kind: input, shape index: {}]
  %s4 = inlined_call_operand.vmem [shape: f32[32,128], index: 4, kind: output, shape index: {}]
  %s5 = sld [smem:[#allocation0]]
  $region42: #{_lambda_.43} parent=0
    _
  %s7 = ssub.s32 1, %s5
  %s8 = scalar_select 0, %s7, %s5
  $region1: #{_lambda_.43} parent=0
    #allocation3 [shape = 'u8[512]{0}', space=vmem, size = 0x400, scoped, tag = 'input window, operand 2, single buffered']
    #allocation4 [shape = 's32[1]{0}', space=sflag, size = 0x4, scoped, tag = 'scoped memory for _lambda_.43']
    #allocation5 [shape = 'u8[512]{0}', space=vmem, size = 0x400, scoped, tag = 'input window, operand 3, single buffered']
    #allocation6 [shape = 's32[1]{0}', space=sflag, size = 0x4, scoped, tag = 'scoped memory for _lambda_.43']
    %9 = vsyncpa [#allocation4], 0
    %10 = vsyncpa [#allocation6], 0
    // Predicated region
    $region2: #{_lambda_.43} parent=1 // pred_check
      _
    $region3: #{_lambda_.43} parent=1 // pred_check_branch
      %12 = sbr.rel (0) target = $region5
    $region4: #{_lambda_.43} parent=1 // pred_region
      _
    $region5: #{_lambda_.43} parent=1 // pred_fallthru
      _
    // Predicated region
    $region6: #{_lambda_.43} parent=1 // pred_check
      _
    $region7: #{_lambda_.43} parent=1 // pred_check_branch
      %14 = sbr.rel (0) target = $region9
    $region8: #{_lambda_.43} parent=1 // pred_region
      _
    $region9: #{_lambda_.43} parent=1 // pred_fallthru
      _
    // Predicated region
    $region10: #{_lambda_.43} parent=1 // pred_check
      _
    $region11: #{_lambda_.43} parent=1 // pred_check_branch
      %16 = sbr.rel (0) target = $region13
    $region12: #{_lambda_.43} parent=1 // pred_region
      %s18 = ssub.s32 16, 16
      %19 = vsyncadd [#allocation4], %s18
      %s21 = sshll.u32 [#allocation3], 4
      %s22 = int_to_ptr.vmem [resolvable:$true] %s21
      %24 = dma.hbm_to_vmem [thread:$0]  %s2, 16, %s22, [#allocation4]
    $region13: #{_lambda_.43} parent=1 // pred_fallthru
      _
    // Predicated region
    $region14: #{_lambda_.43} parent=1 // pred_check
      _
    $region15: #{_lambda_.43} parent=1 // pred_check_branch
      %26 = sbr.rel (0) target = $region17
    $region16: #{_lambda_.43} parent=1 // pred_region
      %s28 = ssub.s32 16, 16
      %29 = vsyncadd [#allocation6], %s28
      %s31 = sshll.u32 [#allocation5], 4
      %s32 = int_to_ptr.vmem [resolvable:$true] %s31
      %34 = dma.hbm_to_vmem [thread:$0]  %s3, 16, %s32, [#allocation6]
    $region17: #{_lambda_.43} parent=1 // pred_fallthru
      _
    // Predicated region
    $region18: #{_lambda_.43} parent=1 // pred_check
      _
    $region19: #{_lambda_.43} parent=1 // pred_check_branch
      %36 = sbr.rel (0) target = $region21
    $region20: #{_lambda_.43} parent=1 // pred_region
      %37 = dma.done [#allocation4], 16
    $region21: #{_lambda_.43} parent=1 // pred_fallthru
      _
    // Predicated region
    $region22: #{_lambda_.43} parent=1 // pred_check
      _
    $region23: #{_lambda_.43} parent=1 // pred_check_branch
      %39 = sbr.rel (0) target = $region25
    $region24: #{_lambda_.43} parent=1 // pred_region
      %40 = dma.done [#allocation6], 16
    $region25: #{_lambda_.43} parent=1 // pred_fallthru
      _
    %p42 = scmp.eq.s32.totalorder 0, 0
    // Predicated region
    $region26: #{_lambda_.43} parent=1 // pred_check
      %p43 = pneg %p42
    $region27: #{_lambda_.43} parent=1 // pred_check_branch
      %45 = sbr.rel (%p43) target = $region29
    $region28: #{_lambda_.43} parent=1 // pred_region
      %46 = vst [vmem:[#allocation2] sm:$0xff] 0.0
      %47 = vst [vmem:[#allocation2 + $0x8] sm:$0xff] 0.0
      %48 = vst [vmem:[#allocation2 + $0x10] sm:$0xff] 0.0
      %49 = vst [vmem:[#allocation2 + $0x18] sm:$0xff] 0.0
    $region29: #{_lambda_.43} parent=1 // pred_fallthru
      _
    %v50 = vld [vmem:[#allocation2] sm:$0xff]
    %v51 = vld [vmem:[#allocation2 + $0x8] sm:$0xff]
    %v52 = vld [vmem:[#allocation2 + $0x10] sm:$0xff]
    %v53 = vld [vmem:[#allocation2 + $0x18] sm:$0xff]
    %v54 = vld [vmem:[%s0] sm:$0xff]
    %v55 = vld [vmem:[%s0 + $0x8] sm:$0xf]
    %v56 = vld [vmem:[%s0 + $0xc] sm:$0xff]
    %v57 = vld [vmem:[%s0 + $0x14] sm:$0xf]
    %v58 = vld [vmem:[%s0 + $0x18] sm:$0xff]
    %v59 = vld [vmem:[%s0 + $0x20] sm:$0xf]
    %v60 = vld [vmem:[%s0 + $0x24] sm:$0xff]
    %v61 = vld [vmem:[%s0 + $0x2c] sm:$0xf]
    %v62 = vld [vmem:[%s1] sm:$0xf]
    %v63 = vld [vmem:[%s1 + $0x4] sm:$0xf]
    %v64 = vld [vmem:[%s1 + $0x8] sm:$0xf]
    %v65 = vld [vmem:[%s1 + $0xc] sm:$0xf]
    %v66 = vld [vmem:[%s1 + $0x10] sm:$0xf]
    %v67 = vld [vmem:[%s1 + $0x14] sm:$0xf]
    %v68 = vld [vmem:[%s1 + $0x18] sm:$0xf]
    %v69 = vld [vmem:[%s1 + $0x1c] sm:$0xf]
    %v70 = vld [vmem:[%s1 + $0x20] sm:$0xf]
    %v71 = vld [vmem:[%s1 + $0x24] sm:$0xf]
    %v72 = vld [vmem:[%s1 + $0x28] sm:$0xf]
    %v73 = vld [vmem:[%s1 + $0x2c] sm:$0xf]
    %v74 = vld [vmem:[%s1 + $0x30] sm:$0xf]
    %v75 = vld [vmem:[%s1 + $0x34] sm:$0xf]
    %v76 = vld [vmem:[%s1 + $0x38] sm:$0xf]
    %v77 = vld [vmem:[%s1 + $0x3c] sm:$0xf]
    %v78 = vld [vmem:[%s1 + $0x40] sm:$0xf]
    %v79 = vld [vmem:[%s1 + $0x44] sm:$0xf]
    %v80 = vld [vmem:[%s1 + $0x48] sm:$0xf]
    %v81 = vld [vmem:[%s1 + $0x4c] sm:$0xf]
    %v82 = vld [vmem:[%s1 + $0x50] sm:$0xf]
    %v83 = vld [vmem:[%s1 + $0x54] sm:$0xf]
    %v84 = vld [vmem:[%s1 + $0x58] sm:$0xf]
    %v85 = vld [vmem:[%s1 + $0x5c] sm:$0xf]
    %v86 = vld [vmem:[%s1 + $0x60] sm:$0xf]
    %v87 = vld [vmem:[%s1 + $0x64] sm:$0xf]
    %v88 = vld [vmem:[%s1 + $0x68] sm:$0xf]
    %v89 = vld [vmem:[%s1 + $0x6c] sm:$0xf]
    %v90 = vld [vmem:[%s1 + $0x70] sm:$0xf]
    %v91 = vld [vmem:[%s1 + $0x74] sm:$0xf]
    %v92 = vld [vmem:[%s1 + $0x78] sm:$0xf]
    %v93 = vld [vmem:[%s1 + $0x7c] sm:$0xf]
    %v94 = vld [vmem:[%s1 + $0x80] sm:$0xf]
    %v95 = vld [vmem:[%s1 + $0x84] sm:$0xf]
    %v96 = vld [vmem:[%s1 + $0x88] sm:$0xf]
    %v97 = vld [vmem:[%s1 + $0x8c] sm:$0xf]
    %v98 = vld [vmem:[%s1 + $0x90] sm:$0xf]
    %v99 = vld [vmem:[%s1 + $0x94] sm:$0xf]
    %v100 = vld [vmem:[%s1 + $0x98] sm:$0xf]
    %v101 = vld [vmem:[%s1 + $0x9c] sm:$0xf]
    %v102 = vld [vmem:[%s1 + $0xa0] sm:$0xf]
    %v103 = vld [vmem:[%s1 + $0xa4] sm:$0xf]
    %v104 = vld [vmem:[%s1 + $0xa8] sm:$0xf]
    %v105 = vld [vmem:[%s1 + $0xac] sm:$0xf]
    %v106 = vld [vmem:[%s1 + $0xb0] sm:$0xf]
    %v107 = vld [vmem:[%s1 + $0xb4] sm:$0xf]
    %v108 = vld [vmem:[%s1 + $0xb8] sm:$0xf]
    %v109 = vld [vmem:[%s1 + $0xbc] sm:$0xf]
    %v118 = vunpack.c.l.b16 %v54
    %v119 = vunpack.c.h.b16 %v54
    %v120 = vunpack.c.l.b16 %v55
    %v121 = vunpack.c.l.b16 %v56
    %v122 = vunpack.c.h.b16 %v56
    %v123 = vunpack.c.l.b16 %v57
    %v124 = vunpack.c.l.b16 %v58
    %v125 = vunpack.c.h.b16 %v58
    %v126 = vunpack.c.l.b16 %v59
    %v127 = vunpack.c.l.b16 %v60
    %v128 = vunpack.c.h.b16 %v60
    %v129 = vunpack.c.l.b16 %v61
    %v130 = vpack.c.b16 %v121, %v118
    %v131 = vpack.c.b16 %v122, %v119
    %v132 = vpack.c.b16 %v123, %v120
    %v133 = vpack.c.b16 %v127, %v124
    %v134 = vpack.c.b16 %v128, %v125
    %v135 = vpack.c.b16 %v129, %v126
    %v190 = vunpack.c.l.b16 %v62
    %v191 = vunpack.c.l.b16 %v63
    %v192 = vunpack.c.l.b16 %v64
    %v193 = vunpack.c.l.b16 %v65
    %v194 = vunpack.c.l.b16 %v66
    %v195 = vunpack.c.l.b16 %v67
    %v196 = vunpack.c.l.b16 %v68
    %v197 = vunpack.c.l.b16 %v69
    %v198 = vunpack.c.l.b16 %v70
    %v199 = vunpack.c.l.b16 %v71
    %v200 = vunpack.c.l.b16 %v72
    %v201 = vunpack.c.l.b16 %v73
    %v202 = vunpack.c.l.b16 %v74
    %v203 = vunpack.c.l.b16 %v75
    %v204 = vunpack.c.l.b16 %v76
    %v205 = vunpack.c.l.b16 %v77
    %v206 = vunpack.c.l.b16 %v78
    %v207 = vunpack.c.l.b16 %v79
    %v208 = vunpack.c.l.b16 %v80
    %v209 = vunpack.c.l.b16 %v81
    %v210 = vunpack.c.l.b16 %v82
    %v211 = vunpack.c.l.b16 %v83
    %v212 = vunpack.c.l.b16 %v84
    %v213 = vunpack.c.l.b16 %v85
    %v214 = vunpack.c.l.b16 %v86
    %v215 = vunpack.c.l.b16 %v87
    %v216 = vunpack.c.l.b16 %v88
    %v217 = vunpack.c.l.b16 %v89
    %v218 = vunpack.c.l.b16 %v90
    %v219 = vunpack.c.l.b16 %v91
    %v220 = vunpack.c.l.b16 %v92
    %v221 = vunpack.c.l.b16 %v93
    %v222 = vunpack.c.l.b16 %v94
    %v223 = vunpack.c.l.b16 %v95
    %v224 = vunpack.c.l.b16 %v96
    %v225 = vunpack.c.l.b16 %v97
    %v226 = vunpack.c.l.b16 %v98
    %v227 = vunpack.c.l.b16 %v99
    %v228 = vunpack.c.l.b16 %v100
    %v229 = vunpack.c.l.b16 %v101
    %v230 = vunpack.c.l.b16 %v102
    %v231 = vunpack.c.l.b16 %v103
    %v232 = vunpack.c.l.b16 %v104
    %v233 = vunpack.c.l.b16 %v105
    %v234 = vunpack.c.l.b16 %v106
    %v235 = vunpack.c.l.b16 %v107
    %v236 = vunpack.c.l.b16 %v108
    %v237 = vunpack.c.l.b16 %v109
    %v238 = vpack.c.b16 %v191, %v190
    %v239 = vpack.c.b16 %v193, %v192
    %v240 = vpack.c.b16 %v195, %v194
    %v241 = vpack.c.b16 %v197, %v196
    %v242 = vpack.c.b16 %v199, %v198
    %v243 = vpack.c.b16 %v201, %v200
    %v244 = vpack.c.b16 %v203, %v202
    %v245 = vpack.c.b16 %v205, %v204
    %v246 = vpack.c.b16 %v207, %v206
    %v247 = vpack.c.b16 %v209, %v208
    %v248 = vpack.c.b16 %v211, %v210
    %v249 = vpack.c.b16 %v213, %v212
    %v250 = vpack.c.b16 %v215, %v214
    %v251 = vpack.c.b16 %v217, %v216
    %v252 = vpack.c.b16 %v219, %v218
    %v253 = vpack.c.b16 %v221, %v220
    %v254 = vpack.c.b16 %v223, %v222
    %v255 = vpack.c.b16 %v225, %v224
    %v256 = vpack.c.b16 %v227, %v226
    %v257 = vpack.c.b16 %v229, %v228
    %v258 = vpack.c.b16 %v231, %v230
    %v259 = vpack.c.b16 %v233, %v232
    %v260 = vpack.c.b16 %v235, %v234
    %v261 = vpack.c.b16 %v237, %v236
    %286 = vmatprep.subr.bf16.mxu0 0
    %287 = vmatpush1.bf16.msra.mxu0 %v238
    %288 = vmatprep.subr.bf16.mxu0 0
    %289 = vmatpush1.bf16.msra.mxu0 %v239
    %290 = vmatprep.subr.bf16.mxu0 0
    %291 = vmatpush1.bf16.msra.mxu0 %v240
    %292 = vmatprep.subr.bf16.mxu0 0
    %293 = vmatpush1.bf16.msra.mxu0 %v241
    %294 = vmatprep.subr.bf16.mxu0 0
    %295 = vmatpush1.bf16.msra.mxu0 %v242
    %296 = vmatprep.subr.bf16.mxu0 0
    %297 = vmatpush1.bf16.msra.mxu0 %v243
    %298 = vmatprep.subr.bf16.mxu0 0
    %299 = vmatpush1.bf16.msra.mxu0 %v244
    %300 = vmatprep.subr.bf16.mxu0 0
    %301 = vmatpush1.bf16.msra.mxu0 %v245
    %302 = vmatprep.subr.bf16.mxu0 0
    %303 = vmatpush1.bf16.msra.mxu0 %v246
    %304 = vmatprep.subr.bf16.mxu0 0
    %305 = vmatpush1.bf16.msra.mxu0 %v247
    %306 = vmatprep.subr.bf16.mxu0 0
    %307 = vmatpush1.bf16.msra.mxu0 %v248
    %308 = vmatprep.subr.bf16.mxu0 0
    %309 = vmatpush1.bf16.msra.mxu0 %v249
    %310 = vmatprep.subr.bf16.mxu0 0
    %311 = vmatpush1.bf16.msra.mxu0 %v250
    %312 = vmatprep.subr.bf16.mxu0 0
    %313 = vmatpush1.bf16.msra.mxu0 %v251
    %314 = vmatprep.subr.bf16.mxu0 0
    %315 = vmatpush1.bf16.msra.mxu0 %v252
    %316 = vmatprep.subr.bf16.mxu0 0
    %317 = vmatpush1.bf16.msra.mxu0 %v253
    %318 = vmatprep.mubr.bf16.mxu0 %v131
    %319 = vmatmul.mubr.bf16.gmra.mrb[0].mxu0 %v130
    %v320 = vpop.f32.mrb[0].mxu0
    %v321 = vadd.f32 0.0, %v320
    %v322 = vpop.f32.mrb[0].mxu0
    %v323 = vpop.f32.mrb[0].mxu0
    %v324 = vadd.f32 0.0, %v323
    %v325 = vpop.f32.mrb[0].mxu0
    %326 = vmatprep.mubr.bf16.mxu0 %v134
    %327 = vmatmul.mubr.bf16.gmra.mrb[0].mxu0 %v133
    %v328 = vpop.f32.mrb[0].mxu0
    %v329 = vadd.f32 0.0, %v328
    %v330 = vpop.f32.mrb[0].mxu0
    %v331 = vpop.f32.mrb[0].mxu0
    %v332 = vadd.f32 0.0, %v331
    %v333 = vpop.f32.mrb[0].mxu0
    %334 = vdwg.mxu0
    %335 = vmatprep.subr.bf16.mxu0 0
    %336 = vmatpush1.bf16.msra.mxu0 %v254
    %337 = vmatprep.subr.bf16.mxu0 0
    %338 = vmatpush1.bf16.msra.mxu0 %v255
    %339 = vmatprep.subr.bf16.mxu0 0
    %340 = vmatpush1.bf16.msra.mxu0 %v256
    %341 = vmatprep.subr.bf16.mxu0 0
    %342 = vmatpush1.bf16.msra.mxu0 %v257
    %343 = vmatprep.subr.bf16.mxu0 0
    %344 = vmatpush1.bf16.msra.mxu0 %v258
    %345 = vmatprep.subr.bf16.mxu0 0
    %346 = vmatpush1.bf16.msra.mxu0 %v259
    %347 = vmatprep.subr.bf16.mxu0 0
    %348 = vmatpush1.bf16.msra.mxu0 %v260
    %349 = vmatprep.subr.bf16.mxu0 0
    %350 = vmatpush1.bf16.msra.mxu0 %v261
    %351 = vmatprep.subr.bf16.mxu0 0
    %352 = vmatpush1.bf16.msra.mxu0 0
    %353 = vmatprep.subr.bf16.mxu0 0
    %354 = vmatpush1.bf16.msra.mxu0 0
    %355 = vmatprep.subr.bf16.mxu0 0
    %356 = vmatpush1.bf16.msra.mxu0 0
    %357 = vmatprep.subr.bf16.mxu0 0
    %358 = vmatpush1.bf16.msra.mxu0 0
    %359 = vmatprep.subr.bf16.mxu0 0
    %360 = vmatpush1.bf16.msra.mxu0 0
    %361 = vmatprep.subr.bf16.mxu0 0
    %362 = vmatpush1.bf16.msra.mxu0 0
    %363 = vmatprep.subr.bf16.mxu0 0
    %364 = vmatpush1.bf16.msra.mxu0 0
    %365 = vmatprep.subr.bf16.mxu0 0
    %366 = vmatpush1.bf16.msra.mxu0 0
    %367 = vmatprep.mubr.bf16.mxu0 0
    %368 = vmatmul.mubr.bf16.gmra.mrb[0].mxu0 %v132
    %v369 = vpop.f32.mrb[0].mxu0
    %v370 = vadd.f32 %v321, %v369
    %v371 = vpop.f32.mrb[0].mxu0
    %v372 = vpop.f32.mrb[0].mxu0
    %v373 = vadd.f32 %v324, %v372
    %v374 = vpop.f32.mrb[0].mxu0
    %375 = vmatprep.mubr.bf16.mxu0 0
    %376 = vmatmul.mubr.bf16.gmra.mrb[0].mxu0 %v135
    %v377 = vpop.f32.mrb[0].mxu0
    %v378 = vadd.f32 %v329, %v377
    %v379 = vpop.f32.mrb[0].mxu0
    %v380 = vpop.f32.mrb[0].mxu0
    %v381 = vadd.f32 %v332, %v380
    %v382 = vpop.f32.mrb[0].mxu0
    %383 = vdwg.mxu0
    %v384 = vadd.f32 %v50, %v370
    %v385 = vadd.f32 %v51, %v373
    %v386 = vadd.f32 %v52, %v378
    %v387 = vadd.f32 %v53, %v381
    %388 = vst [vmem:[#allocation2] sm:$0xff] %v384
    %389 = vst [vmem:[#allocation2 + $0x8] sm:$0xff] %v385
    %390 = vst [vmem:[#allocation2 + $0x10] sm:$0xff] %v386
    %391 = vst [vmem:[#allocation2 + $0x18] sm:$0xff] %v387
    // Predicated region
    $region30: #{_lambda_.43} parent=1 // pred_check
      %p392 = pneg %p42
    $region31: #{_lambda_.43} parent=1 // pred_check_branch
      %394 = sbr.rel (%p392) target = $region33
    $region32: #{_lambda_.43} parent=1 // pred_region
      %v395 = vld [vmem:[#allocation2] sm:$0xff]
      %v396 = vld [vmem:[#allocation2 + $0x8] sm:$0xff]
      %v397 = vld [vmem:[#allocation2 + $0x10] sm:$0xff]
      %v398 = vld [vmem:[#allocation2 + $0x18] sm:$0xff]
      %v399 = vld [vmem:[#allocation3] sm:$0x1]
      %v401 = vlaneseq
      %v402 = vshrl.u32 %v401, 7
      %v403 = vsub.s32 0, %v402
      %v404 = vrot.slane %v399, %v403
      %v406 = vmul.f32 %v395, %v404
      %v407 = vmul.f32 %v396, %v404
      %v408 = vmul.f32 %v397, %v404
      %v409 = vmul.f32 %v398, %v404
      %v410 = vld [vmem:[#allocation5] sm:$0x1]
      %v412 = vlaneseq
      %v413 = vshrl.u32 %v412, 7
      %v414 = vsub.s32 0, %v413
      %v415 = vrot.slane %v410, %v414
      %v417 = vadd.f32 %v406, %v415
      %v418 = vadd.f32 %v407, %v415
      %v419 = vadd.f32 %v408, %v415
      %v420 = vadd.f32 %v409, %v415
      %v421 = vsub.f32 0.0, %v417
      %v422 = vsub.f32 0.0, %v418
      %v423 = vsub.f32 0.0, %v419
      %v424 = vsub.f32 0.0, %v420
      %v425 = vmul.f32 %v421, 1.442695
      %v426 = vpow.pop %v425
      %v427 = vmul.f32 %v422, 1.442695
      %v428 = vpow.pop %v427
      %v429 = vmul.f32 %v423, 1.442695
      %v430 = vpow.pop %v429
      %v431 = vmul.f32 %v424, 1.442695
      %v432 = vpow.pop %v431
      %v433 = vadd.f32 %v426, 1.0
      %v434 = vadd.f32 %v428, 1.0
      %v435 = vadd.f32 %v430, 1.0
      %v436 = vadd.f32 %v432, 1.0
      %v437 = vrcp.pop %v433
      %v438 = vmul.f32 1.0, %v437
      %v439 = vrcp.pop %v434
      %v440 = vmul.f32 1.0, %v439
      %v441 = vrcp.pop %v435
      %v442 = vmul.f32 1.0, %v441
      %v443 = vrcp.pop %v436
      %v444 = vmul.f32 1.0, %v443
      %v445 = vmul.f32 %v417, %v438
      %v446 = vmul.f32 %v418, %v440
      %v447 = vmul.f32 %v419, %v442
      %v448 = vmul.f32 %v420, %v444
      %449 = vst [vmem:[%s4] sm:$0xff] %v445
      %450 = vst [vmem:[%s4 + $0x8] sm:$0xff] %v446
      %451 = vst [vmem:[%s4 + $0x10] sm:$0xff] %v447
      %452 = vst [vmem:[%s4 + $0x18] sm:$0xff] %v448
    $region33: #{_lambda_.43} parent=1 // pred_fallthru
      _
    // Predicated region
    $region34: #{_lambda_.43} parent=1 // pred_check
      _
    $region35: #{_lambda_.43} parent=1 // pred_check_branch
      %454 = sbr.rel (0) target = $region37
    $region36: #{_lambda_.43} parent=1 // pred_region
      _
    $region37: #{_lambda_.43} parent=1 // pred_fallthru
      _
    // Predicated region
    $region38: #{_lambda_.43} parent=1 // pred_check
      _
    $region39: #{_lambda_.43} parent=1 // pred_check_branch
      %456 = sbr.rel (0) target = $region41
    $region40: #{_lambda_.43} parent=1 // pred_region
      _
    $region41: #{_lambda_.43} parent=1 // pred_fallthru
      _
    %457 = vsyncpa [#allocation4], 1
    %458 = vsyncpa [#allocation6], 1

// kernel: _lambda_.46
$region0: #{_lambda_.46}
  #allocation0 [shape = 'u32[]', space=smem, size = 0x4, offset = 0x4, fixed_abs, tag = 'smem constant byte address 0x4 - core index']
  #allocation1 [shape = 'u32[144,128]{1,0:T(1,128)}', space=vmem, size = 0x12000, scoped, tag = 'internal scratch']
  #allocation2 [shape = 'f32[32,128]{1,0:T(8,128)}', space=vmem, size = 0x4000, scoped, tag = 'scratch operand']
  %s0 = inlined_call_operand.vmem [shape: bf16[32,384], index: 0, kind: input, shape index: {}]
  %s1 = inlined_call_operand.vmem [shape: bf16[384,128], index: 1, kind: input, shape index: {}]
  %s2 = inlined_call_operand.vmem [shape: f32[1,128], index: 2, kind: input, shape index: {}]
  %s3 = inlined_call_operand.vmem [shape: f32[1,128], index: 3, kind: input, shape index: {}]
  %s4 = inlined_call_operand.vmem [shape: f32[32,128], index: 4, kind: output, shape index: {}]
  %s5 = sld [smem:[#allocation0]]
  $region34: #{_lambda_.46} parent=0
    _
  %s7 = ssub.s32 1, %s5
  %s8 = scalar_select 0, %s7, %s5
  // Predicated region
  $region2: #{_lambda_.46} parent=0 // pred_check
    _
  $region3: #{_lambda_.46} parent=0 // pred_check_branch
    %10 = sbr.rel (0) target = $region5
  $region4: #{_lambda_.46} parent=0 // pred_region
    _
  $region5: #{_lambda_.46} parent=0 // pred_fallthru
    _
  // Predicated region
  $region6: #{_lambda_.46} parent=0 // pred_check
    _
  $region7: #{_lambda_.46} parent=0 // pred_check_branch
    %12 = sbr.rel (0) target = $region9
  $region8: #{_lambda_.46} parent=0 // pred_region
    _
  $region9: #{_lambda_.46} parent=0 // pred_fallthru
    _
  // Predicated region
  $region10: #{_lambda_.46} parent=0 // pred_check
    _
  $region11: #{_lambda_.46} parent=0 // pred_check_branch
    %14 = sbr.rel (0) target = $region13
  $region12: #{_lambda_.46} parent=0 // pred_region
    _
  $region13: #{_lambda_.46} parent=0 // pred_fallthru
    _
  // Predicated region
  $region14: #{_lambda_.46} parent=0 // pred_check
    _
  $region15: #{_lambda_.46} parent=0 // pred_check_branch
    %16 = sbr.rel (0) target = $region17
  $region16: #{_lambda_.46} parent=0 // pred_region
    _
  $region17: #{_lambda_.46} parent=0 // pred_fallthru
    _
  %p18 = scmp.eq.s32.totalorder 0, 0
  // Predicated region
  $region18: #{_lambda_.46} parent=0 // pred_check
    %p19 = pneg %p18
  $region19: #{_lambda_.46} parent=0 // pred_check_branch
    %21 = sbr.rel (%p19) target = $region21
  $region20: #{_lambda_.46} parent=0 // pred_region
    %22 = vst [vmem:[#allocation2] sm:$0xff] 0.0
    %23 = vst [vmem:[#allocation2 + $0x8] sm:$0xff] 0.0
    %24 = vst [vmem:[#allocation2 + $0x10] sm:$0xff] 0.0
    %25 = vst [vmem:[#allocation2 + $0x18] sm:$0xff] 0.0
  $region21: #{_lambda_.46} parent=0 // pred_fallthru
    _
  %v26 = vld [vmem:[#allocation2] sm:$0xff]
  %v27 = vld [vmem:[#allocation2 + $0x8] sm:$0xff]
  %v28 = vld [vmem:[#allocation2 + $0x10] sm:$0xff]
  %v29 = vld [vmem:[#allocation2 + $0x18] sm:$0xff]
  %v30 = vld [vmem:[%s0] sm:$0xff]
  %v31 = vld [vmem:[%s0 + $0x8] sm:$0xf]
  %v32 = vld [vmem:[%s0 + $0xc] sm:$0xff]
  %v33 = vld [vmem:[%s0 + $0x14] sm:$0xf]
  %v34 = vld [vmem:[%s0 + $0x18] sm:$0xff]
  %v35 = vld [vmem:[%s0 + $0x20] sm:$0xf]
  %v36 = vld [vmem:[%s0 + $0x24] sm:$0xff]
  %v37 = vld [vmem:[%s0 + $0x2c] sm:$0xf]
  %v38 = vld [vmem:[%s1] sm:$0xf]
  %v39 = vld [vmem:[%s1 + $0x4] sm:$0xf]
  %v40 = vld [vmem:[%s1 + $0x8] sm:$0xf]
  %v41 = vld [vmem:[%s1 + $0xc] sm:$0xf]
  %v42 = vld [vmem:[%s1 + $0x10] sm:$0xf]
  %v43 = vld [vmem:[%s1 + $0x14] sm:$0xf]
  %v44 = vld [vmem:[%s1 + $0x18] sm:$0xf]
  %v45 = vld [vmem:[%s1 + $0x1c] sm:$0xf]
  %v46 = vld [vmem:[%s1 + $0x20] sm:$0xf]
  %v47 = vld [vmem:[%s1 + $0x24] sm:$0xf]
  %v48 = vld [vmem:[%s1 + $0x28] sm:$0xf]
  %v49 = vld [vmem:[%s1 + $0x2c] sm:$0xf]
  %v50 = vld [vmem:[%s1 + $0x30] sm:$0xf]
  %v51 = vld [vmem:[%s1 + $0x34] sm:$0xf]
  %v52 = vld [vmem:[%s1 + $0x38] sm:$0xf]
  %v53 = vld [vmem:[%s1 + $0x3c] sm:$0xf]
  %v54 = vld [vmem:[%s1 + $0x40] sm:$0xf]
  %v55 = vld [vmem:[%s1 + $0x44] sm:$0xf]
  %v56 = vld [vmem:[%s1 + $0x48] sm:$0xf]
  %v57 = vld [vmem:[%s1 + $0x4c] sm:$0xf]
  %v58 = vld [vmem:[%s1 + $0x50] sm:$0xf]
  %v59 = vld [vmem:[%s1 + $0x54] sm:$0xf]
  %v60 = vld [vmem:[%s1 + $0x58] sm:$0xf]
  %v61 = vld [vmem:[%s1 + $0x5c] sm:$0xf]
  %v62 = vld [vmem:[%s1 + $0x60] sm:$0xf]
  %v63 = vld [vmem:[%s1 + $0x64] sm:$0xf]
  %v64 = vld [vmem:[%s1 + $0x68] sm:$0xf]
  %v65 = vld [vmem:[%s1 + $0x6c] sm:$0xf]
  %v66 = vld [vmem:[%s1 + $0x70] sm:$0xf]
  %v67 = vld [vmem:[%s1 + $0x74] sm:$0xf]
  %v68 = vld [vmem:[%s1 + $0x78] sm:$0xf]
  %v69 = vld [vmem:[%s1 + $0x7c] sm:$0xf]
  %v70 = vld [vmem:[%s1 + $0x80] sm:$0xf]
  %v71 = vld [vmem:[%s1 + $0x84] sm:$0xf]
  %v72 = vld [vmem:[%s1 + $0x88] sm:$0xf]
  %v73 = vld [vmem:[%s1 + $0x8c] sm:$0xf]
  %v74 = vld [vmem:[%s1 + $0x90] sm:$0xf]
  %v75 = vld [vmem:[%s1 + $0x94] sm:$0xf]
  %v76 = vld [vmem:[%s1 + $0x98] sm:$0xf]
  %v77 = vld [vmem:[%s1 + $0x9c] sm:$0xf]
  %v78 = vld [vmem:[%s1 + $0xa0] sm:$0xf]
  %v79 = vld [vmem:[%s1 + $0xa4] sm:$0xf]
  %v80 = vld [vmem:[%s1 + $0xa8] sm:$0xf]
  %v81 = vld [vmem:[%s1 + $0xac] sm:$0xf]
  %v82 = vld [vmem:[%s1 + $0xb0] sm:$0xf]
  %v83 = vld [vmem:[%s1 + $0xb4] sm:$0xf]
  %v84 = vld [vmem:[%s1 + $0xb8] sm:$0xf]
  %v85 = vld [vmem:[%s1 + $0xbc] sm:$0xf]
  %v94 = vunpack.c.l.b16 %v30
  %v95 = vunpack.c.h.b16 %v30
  %v96 = vunpack.c.l.b16 %v31
  %v97 = vunpack.c.l.b16 %v32
  %v98 = vunpack.c.h.b16 %v32
  %v99 = vunpack.c.l.b16 %v33
  %v100 = vunpack.c.l.b16 %v34
  %v101 = vunpack.c.h.b16 %v34
  %v102 = vunpack.c.l.b16 %v35
  %v103 = vunpack.c.l.b16 %v36
  %v104 = vunpack.c.h.b16 %v36
  %v105 = vunpack.c.l.b16 %v37
  %v106 = vpack.c.b16 %v97, %v94
  %v107 = vpack.c.b16 %v98, %v95
  %v108 = vpack.c.b16 %v99, %v96
  %v109 = vpack.c.b16 %v103, %v100
  %v110 = vpack.c.b16 %v104, %v101
  %v111 = vpack.c.b16 %v105, %v102
  %v166 = vunpack.c.l.b16 %v38
  %v167 = vunpack.c.l.b16 %v39
  %v168 = vunpack.c.l.b16 %v40
  %v169 = vunpack.c.l.b16 %v41
  %v170 = vunpack.c.l.b16 %v42
  %v171 = vunpack.c.l.b16 %v43
  %v172 = vunpack.c.l.b16 %v44
  %v173 = vunpack.c.l.b16 %v45
  %v174 = vunpack.c.l.b16 %v46
  %v175 = vunpack.c.l.b16 %v47
  %v176 = vunpack.c.l.b16 %v48
  %v177 = vunpack.c.l.b16 %v49
  %v178 = vunpack.c.l.b16 %v50
  %v179 = vunpack.c.l.b16 %v51
  %v180 = vunpack.c.l.b16 %v52
  %v181 = vunpack.c.l.b16 %v53
  %v182 = vunpack.c.l.b16 %v54
  %v183 = vunpack.c.l.b16 %v55
  %v184 = vunpack.c.l.b16 %v56
  %v185 = vunpack.c.l.b16 %v57
  %v186 = vunpack.c.l.b16 %v58
  %v187 = vunpack.c.l.b16 %v59
  %v188 = vunpack.c.l.b16 %v60
  %v189 = vunpack.c.l.b16 %v61
  %v190 = vunpack.c.l.b16 %v62
  %v191 = vunpack.c.l.b16 %v63
  %v192 = vunpack.c.l.b16 %v64
  %v193 = vunpack.c.l.b16 %v65
  %v194 = vunpack.c.l.b16 %v66
  %v195 = vunpack.c.l.b16 %v67
  %v196 = vunpack.c.l.b16 %v68
  %v197 = vunpack.c.l.b16 %v69
  %v198 = vunpack.c.l.b16 %v70
  %v199 = vunpack.c.l.b16 %v71
  %v200 = vunpack.c.l.b16 %v72
  %v201 = vunpack.c.l.b16 %v73
  %v202 = vunpack.c.l.b16 %v74
  %v203 = vunpack.c.l.b16 %v75
  %v204 = vunpack.c.l.b16 %v76
  %v205 = vunpack.c.l.b16 %v77
  %v206 = vunpack.c.l.b16 %v78
  %v207 = vunpack.c.l.b16 %v79
  %v208 = vunpack.c.l.b16 %v80
  %v209 = vunpack.c.l.b16 %v81
  %v210 = vunpack.c.l.b16 %v82
  %v211 = vunpack.c.l.b16 %v83
  %v212 = vunpack.c.l.b16 %v84
  %v213 = vunpack.c.l.b16 %v85
  %v214 = vpack.c.b16 %v167, %v166
  %v215 = vpack.c.b16 %v169, %v168
  %v216 = vpack.c.b16 %v171, %v170
  %v217 = vpack.c.b16 %v173, %v172
  %v218 = vpack.c.b16 %v175, %v174
  %v219 = vpack.c.b16 %v177, %v176
  %v220 = vpack.c.b16 %v179, %v178
  %v221 = vpack.c.b16 %v181, %v180
  %v222 = vpack.c.b16 %v183, %v182
  %v223 = vpack.c.b16 %v185, %v184
  %v224 = vpack.c.b16 %v187, %v186
  %v225 = vpack.c.b16 %v189, %v188
  %v226 = vpack.c.b16 %v191, %v190
  %v227 = vpack.c.b16 %v193, %v192
  %v228 = vpack.c.b16 %v195, %v194
  %v229 = vpack.c.b16 %v197, %v196
  %v230 = vpack.c.b16 %v199, %v198
  %v231 = vpack.c.b16 %v201, %v200
  %v232 = vpack.c.b16 %v203, %v202
  %v233 = vpack.c.b16 %v205, %v204
  %v234 = vpack.c.b16 %v207, %v206
  %v235 = vpack.c.b16 %v209, %v208
  %v236 = vpack.c.b16 %v211, %v210
  %v237 = vpack.c.b16 %v213, %v212
  %262 = vmatprep.subr.bf16.mxu0 0
  %263 = vmatpush1.bf16.msra.mxu0 %v214
  %264 = vmatprep.subr.bf16.mxu0 0
  %265 = vmatpush1.bf16.msra.mxu0 %v215
  %266 = vmatprep.subr.bf16.mxu0 0
  %267 = vmatpush1.bf16.msra.mxu0 %v216
  %268 = vmatprep.subr.bf16.mxu0 0
  %269 = vmatpush1.bf16.msra.mxu0 %v217
  %270 = vmatprep.subr.bf16.mxu0 0
  %271 = vmatpush1.bf16.msra.mxu0 %v218
  %272 = vmatprep.subr.bf16.mxu0 0
  %273 = vmatpush1.bf16.msra.mxu0 %v219
  %274 = vmatprep.subr.bf16.mxu0 0
  %275 = vmatpush1.bf16.msra.mxu0 %v220
  %276 = vmatprep.subr.bf16.mxu0 0
  %277 = vmatpush1.bf16.msra.mxu0 %v221
  %278 = vmatprep.subr.bf16.mxu0 0
  %279 = vmatpush1.bf16.msra.mxu0 %v222
  %280 = vmatprep.subr.bf16.mxu0 0
  %281 = vmatpush1.bf16.msra.mxu0 %v223
  %282 = vmatprep.subr.bf16.mxu0 0
  %283 = vmatpush1.bf16.msra.mxu0 %v224
  %284 = vmatprep.subr.bf16.mxu0 0
  %285 = vmatpush1.bf16.msra.mxu0 %v225
  %286 = vmatprep.subr.bf16.mxu0 0
  %287 = vmatpush1.bf16.msra.mxu0 %v226
  %288 = vmatprep.subr.bf16.mxu0 0
  %289 = vmatpush1.bf16.msra.mxu0 %v227
  %290 = vmatprep.subr.bf16.mxu0 0
  %291 = vmatpush1.bf16.msra.mxu0 %v228
  %292 = vmatprep.subr.bf16.mxu0 0
  %293 = vmatpush1.bf16.msra.mxu0 %v229
  %294 = vmatprep.mubr.bf16.mxu0 %v107
  %295 = vmatmul.mubr.bf16.gmra.mrb[0].mxu0 %v106
  %v296 = vpop.f32.mrb[0].mxu0
  %v297 = vadd.f32 0.0, %v296
  %v298 = vpop.f32.mrb[0].mxu0
  %v299 = vpop.f32.mrb[0].mxu0
  %v300 = vadd.f32 0.0, %v299
  %v301 = vpop.f32.mrb[0].mxu0
  %302 = vmatprep.mubr.bf16.mxu0 %v110
  %303 = vmatmul.mubr.bf16.gmra.mrb[0].mxu0 %v109
  %v304 = vpop.f32.mrb[0].mxu0
  %v305 = vadd.f32 0.0, %v304
  %v306 = vpop.f32.mrb[0].mxu0
  %v307 = vpop.f32.mrb[0].mxu0
  %v308 = vadd.f32 0.0, %v307
  %v309 = vpop.f32.mrb[0].mxu0
  %310 = vdwg.mxu0
  %311 = vmatprep.subr.bf16.mxu0 0
  %312 = vmatpush1.bf16.msra.mxu0 %v230
  %313 = vmatprep.subr.bf16.mxu0 0
  %314 = vmatpush1.bf16.msra.mxu0 %v231
  %315 = vmatprep.subr.bf16.mxu0 0
  %316 = vmatpush1.bf16.msra.mxu0 %v232
  %317 = vmatprep.subr.bf16.mxu0 0
  %318 = vmatpush1.bf16.msra.mxu0 %v233
  %319 = vmatprep.subr.bf16.mxu0 0
  %320 = vmatpush1.bf16.msra.mxu0 %v234
  %321 = vmatprep.subr.bf16.mxu0 0
  %322 = vmatpush1.bf16.msra.mxu0 %v235
  %323 = vmatprep.subr.bf16.mxu0 0
  %324 = vmatpush1.bf16.msra.mxu0 %v236
  %325 = vmatprep.subr.bf16.mxu0 0
  %326 = vmatpush1.bf16.msra.mxu0 %v237
  %327 = vmatprep.subr.bf16.mxu0 0
  %328 = vmatpush1.bf16.msra.mxu0 0
  %329 = vmatprep.subr.bf16.mxu0 0
  %330 = vmatpush1.bf16.msra.mxu0 0
  %331 = vmatprep.subr.bf16.mxu0 0
  %332 = vmatpush1.bf16.msra.mxu0 0
  %333 = vmatprep.subr.bf16.mxu0 0
  %334 = vmatpush1.bf16.msra.mxu0 0
  %335 = vmatprep.subr.bf16.mxu0 0
  %336 = vmatpush1.bf16.msra.mxu0 0
  %337 = vmatprep.subr.bf16.mxu0 0
  %338 = vmatpush1.bf16.msra.mxu0 0
  %339 = vmatprep.subr.bf16.mxu0 0
  %340 = vmatpush1.bf16.msra.mxu0 0
  %341 = vmatprep.subr.bf16.mxu0 0
  %342 = vmatpush1.bf16.msra.mxu0 0
  %343 = vmatprep.mubr.bf16.mxu0 0
  %344 = vmatmul.mubr.bf16.gmra.mrb[0].mxu0 %v108
  %v345 = vpop.f32.mrb[0].mxu0
  %v346 = vadd.f32 %v297, %v345
  %v347 = vpop.f32.mrb[0].mxu0
  %v348 = vpop.f32.mrb[0].mxu0
  %v349 = vadd.f32 %v300, %v348
  %v350 = vpop.f32.mrb[0].mxu0
  %351 = vmatprep.mubr.bf16.mxu0 0
  %352 = vmatmul.mubr.bf16.gmra.mrb[0].mxu0 %v111
  %v353 = vpop.f32.mrb[0].mxu0
  %v354 = vadd.f32 %v305, %v353
  %v355 = vpop.f32.mrb[0].mxu0
  %v356 = vpop.f32.mrb[0].mxu0
  %v357 = vadd.f32 %v308, %v356
  %v358 = vpop.f32.mrb[0].mxu0
  %359 = vdwg.mxu0
  %v360 = vadd.f32 %v26, %v346
  %v361 = vadd.f32 %v27, %v349
  %v362 = vadd.f32 %v28, %v354
  %v363 = vadd.f32 %v29, %v357
  %364 = vst [vmem:[#allocation2] sm:$0xff] %v360
  %365 = vst [vmem:[#allocation2 + $0x8] sm:$0xff] %v361
  %366 = vst [vmem:[#allocation2 + $0x10] sm:$0xff] %v362
  %367 = vst [vmem:[#allocation2 + $0x18] sm:$0xff] %v363
  // Predicated region
  $region22: #{_lambda_.46} parent=0 // pred_check
    %p368 = pneg %p18
  $region23: #{_lambda_.46} parent=0 // pred_check_branch
    %370 = sbr.rel (%p368) target = $region25
  $region24: #{_lambda_.46} parent=0 // pred_region
    %v371 = vld [vmem:[#allocation2] sm:$0xff]
    %v372 = vld [vmem:[#allocation2 + $0x8] sm:$0xff]
    %v373 = vld [vmem:[#allocation2 + $0x10] sm:$0xff]
    %v374 = vld [vmem:[#allocation2 + $0x18] sm:$0xff]
    %v375 = vld [vmem:[%s2] sm:$0x1]
    %v377 = vlaneseq
    %v378 = vshrl.u32 %v377, 7
    %v379 = vsub.s32 0, %v378
    %v380 = vrot.slane %v375, %v379
    %v382 = vmul.f32 %v371, %v380
    %v383 = vmul.f32 %v372, %v380
    %v384 = vmul.f32 %v373, %v380
    %v385 = vmul.f32 %v374, %v380
    %v386 = vld [vmem:[%s3] sm:$0x1]
    %v388 = vlaneseq
    %v389 = vshrl.u32 %v388, 7
    %v390 = vsub.s32 0, %v389
    %v391 = vrot.slane %v386, %v390
    %v393 = vadd.f32 %v382, %v391
    %v394 = vadd.f32 %v383, %v391
    %v395 = vadd.f32 %v384, %v391
    %v396 = vadd.f32 %v385, %v391
    %v397 = vsub.f32 0.0, %v393
    %v398 = vsub.f32 0.0, %v394
    %v399 = vsub.f32 0.0, %v395
    %v400 = vsub.f32 0.0, %v396
    %v401 = vmul.f32 %v397, 1.442695
    %v402 = vpow.pop %v401
    %v403 = vmul.f32 %v398, 1.442695
    %v404 = vpow.pop %v403
    %v405 = vmul.f32 %v399, 1.442695
    %v406 = vpow.pop %v405
    %v407 = vmul.f32 %v400, 1.442695
    %v408 = vpow.pop %v407
    %v409 = vadd.f32 %v402, 1.0
    %v410 = vadd.f32 %v404, 1.0
    %v411 = vadd.f32 %v406, 1.0
    %v412 = vadd.f32 %v408, 1.0
    %v413 = vrcp.pop %v409
    %v414 = vmul.f32 1.0, %v413
    %v415 = vrcp.pop %v410
    %v416 = vmul.f32 1.0, %v415
    %v417 = vrcp.pop %v411
    %v418 = vmul.f32 1.0, %v417
    %v419 = vrcp.pop %v412
    %v420 = vmul.f32 1.0, %v419
    %v421 = vmul.f32 %v393, %v414
    %v422 = vmul.f32 %v394, %v416
    %v423 = vmul.f32 %v395, %v418
    %v424 = vmul.f32 %v396, %v420
    %425 = vst [vmem:[%s4] sm:$0xff] %v421
    %426 = vst [vmem:[%s4 + $0x8] sm:$0xff] %v422
    %427 = vst [vmem:[%s4 + $0x10] sm:$0xff] %v423
    %428 = vst [vmem:[%s4 + $0x18] sm:$0xff] %v424
  $region25: #{_lambda_.46} parent=0 // pred_fallthru
    _
  // Predicated region
  $region26: #{_lambda_.46} parent=0 // pred_check
    _
  $region27: #{_lambda_.46} parent=0 // pred_check_branch
    %430 = sbr.rel (0) target = $region29
  $region28: #{_lambda_.46} parent=0 // pred_region
    _
  $region29: #{_lambda_.46} parent=0 // pred_fallthru
    _
  // Predicated region
  $region30: #{_lambda_.46} parent=0 // pred_check
    _
  $region31: #{_lambda_.46} parent=0 // pred_check_branch
    %432 = sbr.rel (0) target = $region33
  $region32: #{_lambda_.46} parent=0 // pred_region
    _
  $region33: #{_lambda_.46} parent=0 // pred_fallthru
    _

// kernel: _lambda_.49
$region0: #{_lambda_.49}
  #allocation0 [shape = 'u32[]', space=smem, size = 0x4, offset = 0x4, fixed_abs, tag = 'smem constant byte address 0x4 - core index']
  #allocation1 [shape = 'u32[144,128]{1,0:T(1,128)}', space=vmem, size = 0x12000, scoped, tag = 'internal scratch']
  #allocation2 [shape = 'f32[8,128]{1,0:T(8,128)}', space=vmem, size = 0x1000, scoped, tag = 'scratch operand']
  %s0 = inlined_call_operand.vmem [shape: bf16[8,640], index: 0, kind: input, shape index: {}]
  %s1 = inlined_call_operand.vmem [shape: bf16[640,128], index: 1, kind: input, shape index: {}]
  %s2 = inlined_call_operand.vmem [shape: f32[1,128], index: 2, kind: input, shape index: {}]
  %s3 = inlined_call_operand.vmem [shape: f32[1,128], index: 3, kind: input, shape index: {}]
  %s4 = inlined_call_operand.vmem [shape: f32[8,128], index: 4, kind: output, shape index: {}]
  %s5 = sld [smem:[#allocation0]]
  $region34: #{_lambda_.49} parent=0
    _
  %s7 = ssub.s32 1, %s5
  %s8 = scalar_select 0, %s7, %s5
  // Predicated region
  $region2: #{_lambda_.49} parent=0 // pred_check
    _
  $region3: #{_lambda_.49} parent=0 // pred_check_branch
    %10 = sbr.rel (0) target = $region5
  $region4: #{_lambda_.49} parent=0 // pred_region
    _
  $region5: #{_lambda_.49} parent=0 // pred_fallthru
    _
  // Predicated region
  $region6: #{_lambda_.49} parent=0 // pred_check
    _
  $region7: #{_lambda_.49} parent=0 // pred_check_branch
    %12 = sbr.rel (0) target = $region9
  $region8: #{_lambda_.49} parent=0 // pred_region
    _
  $region9: #{_lambda_.49} parent=0 // pred_fallthru
    _
  // Predicated region
  $region10: #{_lambda_.49} parent=0 // pred_check
    _
  $region11: #{_lambda_.49} parent=0 // pred_check_branch
    %14 = sbr.rel (0) target = $region13
  $region12: #{_lambda_.49} parent=0 // pred_region
    _
  $region13: #{_lambda_.49} parent=0 // pred_fallthru
    _
  // Predicated region
  $region14: #{_lambda_.49} parent=0 // pred_check
    _
  $region15: #{_lambda_.49} parent=0 // pred_check_branch
    %16 = sbr.rel (0) target = $region17
  $region16: #{_lambda_.49} parent=0 // pred_region
    _
  $region17: #{_lambda_.49} parent=0 // pred_fallthru
    _
  %p18 = scmp.eq.s32.totalorder 0, 0
  // Predicated region
  $region18: #{_lambda_.49} parent=0 // pred_check
    %p19 = pneg %p18
  $region19: #{_lambda_.49} parent=0 // pred_check_branch
    %21 = sbr.rel (%p19) target = $region21
  $region20: #{_lambda_.49} parent=0 // pred_region
    %22 = vst [vmem:[#allocation2] sm:$0xff] 0.0
  $region21: #{_lambda_.49} parent=0 // pred_fallthru
    _
  %v23 = vld [vmem:[#allocation2] sm:$0xff]
  %v24 = vld [vmem:[%s0] sm:$0xff]
  %v25 = vld [vmem:[%s0 + $0x8] sm:$0xff]
  %v26 = vld [vmem:[%s0 + $0x10] sm:$0xf]
  %v27 = vld [vmem:[%s1] sm:$0xf]
  %v28 = vld [vmem:[%s1 + $0x4] sm:$0xf]
  %v29 = vld [vmem:[%s1 + $0x8] sm:$0xf]
  %v30 = vld [vmem:[%s1 + $0xc] sm:$0xf]
  %v31 = vld [vmem:[%s1 + $0x10] sm:$0xf]
  %v32 = vld [vmem:[%s1 + $0x14] sm:$0xf]
  %v33 = vld [vmem:[%s1 + $0x18] sm:$0xf]
  %v34 = vld [vmem:[%s1 + $0x1c] sm:$0xf]
  %v35 = vld [vmem:[%s1 + $0x20] sm:$0xf]
  %v36 = vld [vmem:[%s1 + $0x24] sm:$0xf]
  %v37 = vld [vmem:[%s1 + $0x28] sm:$0xf]
  %v38 = vld [vmem:[%s1 + $0x2c] sm:$0xf]
  %v39 = vld [vmem:[%s1 + $0x30] sm:$0xf]
  %v40 = vld [vmem:[%s1 + $0x34] sm:$0xf]
  %v41 = vld [vmem:[%s1 + $0x38] sm:$0xf]
  %v42 = vld [vmem:[%s1 + $0x3c] sm:$0xf]
  %v43 = vld [vmem:[%s1 + $0x40] sm:$0xf]
  %v44 = vld [vmem:[%s1 + $0x44] sm:$0xf]
  %v45 = vld [vmem:[%s1 + $0x48] sm:$0xf]
  %v46 = vld [vmem:[%s1 + $0x4c] sm:$0xf]
  %v47 = vld [vmem:[%s1 + $0x50] sm:$0xf]
  %v48 = vld [vmem:[%s1 + $0x54] sm:$0xf]
  %v49 = vld [vmem:[%s1 + $0x58] sm:$0xf]
  %v50 = vld [vmem:[%s1 + $0x5c] sm:$0xf]
  %v51 = vld [vmem:[%s1 + $0x60] sm:$0xf]
  %v52 = vld [vmem:[%s1 + $0x64] sm:$0xf]
  %v53 = vld [vmem:[%s1 + $0x68] sm:$0xf]
  %v54 = vld [vmem:[%s1 + $0x6c] sm:$0xf]
  %v55 = vld [vmem:[%s1 + $0x70] sm:$0xf]
  %v56 = vld [vmem:[%s1 + $0x74] sm:$0xf]
  %v57 = vld [vmem:[%s1 + $0x78] sm:$0xf]
  %v58 = vld [vmem:[%s1 + $0x7c] sm:$0xf]
  %v59 = vld [vmem:[%s1 + $0x80] sm:$0xf]
  %v60 = vld [vmem:[%s1 + $0x84] sm:$0xf]
  %v61 = vld [vmem:[%s1 + $0x88] sm:$0xf]
  %v62 = vld [vmem:[%s1 + $0x8c] sm:$0xf]
  %v63 = vld [vmem:[%s1 + $0x90] sm:$0xf]
  %v64 = vld [vmem:[%s1 + $0x94] sm:$0xf]
  %v65 = vld [vmem:[%s1 + $0x98] sm:$0xf]
  %v66 = vld [vmem:[%s1 + $0x9c] sm:$0xf]
  %v67 = vld [vmem:[%s1 + $0xa0] sm:$0xf]
  %v68 = vld [vmem:[%s1 + $0xa4] sm:$0xf]
  %v69 = vld [vmem:[%s1 + $0xa8] sm:$0xf]
  %v70 = vld [vmem:[%s1 + $0xac] sm:$0xf]
  %v71 = vld [vmem:[%s1 + $0xb0] sm:$0xf]
  %v72 = vld [vmem:[%s1 + $0xb4] sm:$0xf]
  %v73 = vld [vmem:[%s1 + $0xb8] sm:$0xf]
  %v74 = vld [vmem:[%s1 + $0xbc] sm:$0xf]
  %v75 = vld [vmem:[%s1 + $0xc0] sm:$0xf]
  %v76 = vld [vmem:[%s1 + $0xc4] sm:$0xf]
  %v77 = vld [vmem:[%s1 + $0xc8] sm:$0xf]
  %v78 = vld [vmem:[%s1 + $0xcc] sm:$0xf]
  %v79 = vld [vmem:[%s1 + $0xd0] sm:$0xf]
  %v80 = vld [vmem:[%s1 + $0xd4] sm:$0xf]
  %v81 = vld [vmem:[%s1 + $0xd8] sm:$0xf]
  %v82 = vld [vmem:[%s1 + $0xdc] sm:$0xf]
  %v83 = vld [vmem:[%s1 + $0xe0] sm:$0xf]
  %v84 = vld [vmem:[%s1 + $0xe4] sm:$0xf]
  %v85 = vld [vmem:[%s1 + $0xe8] sm:$0xf]
  %v86 = vld [vmem:[%s1 + $0xec] sm:$0xf]
  %v87 = vld [vmem:[%s1 + $0xf0] sm:$0xf]
  %v88 = vld [vmem:[%s1 + $0xf4] sm:$0xf]
  %v89 = vld [vmem:[%s1 + $0xf8] sm:$0xf]
  %v90 = vld [vmem:[%s1 + $0xfc] sm:$0xf]
  %v91 = vld [vmem:[%s1 + $0x100] sm:$0xf]
  %v92 = vld [vmem:[%s1 + $0x104] sm:$0xf]
  %v93 = vld [vmem:[%s1 + $0x108] sm:$0xf]
  %v94 = vld [vmem:[%s1 + $0x10c] sm:$0xf]
  %v95 = vld [vmem:[%s1 + $0x110] sm:$0xf]
  %v96 = vld [vmem:[%s1 + $0x114] sm:$0xf]
  %v97 = vld [vmem:[%s1 + $0x118] sm:$0xf]
  %v98 = vld [vmem:[%s1 + $0x11c] sm:$0xf]
  %v99 = vld [vmem:[%s1 + $0x120] sm:$0xf]
  %v100 = vld [vmem:[%s1 + $0x124] sm:$0xf]
  %v101 = vld [vmem:[%s1 + $0x128] sm:$0xf]
  %v102 = vld [vmem:[%s1 + $0x12c] sm:$0xf]
  %v103 = vld [vmem:[%s1 + $0x130] sm:$0xf]
  %v104 = vld [vmem:[%s1 + $0x134] sm:$0xf]
  %v105 = vld [vmem:[%s1 + $0x138] sm:$0xf]
  %v106 = vld [vmem:[%s1 + $0x13c] sm:$0xf]
  %v110 = vunpack.c.l.b16 %v24
  %v111 = vunpack.c.h.b16 %v24
  %v112 = vunpack.c.l.b16 %v25
  %v113 = vunpack.c.h.b16 %v25
  %v114 = vunpack.c.l.b16 %v26
  %v115 = vpack.c.b16 %v110, %v110
  %v116 = vpack.c.b16 %v111, %v111
  %v117 = vpack.c.b16 %v112, %v112
  %v118 = vpack.c.b16 %v113, %v113
  %v119 = vpack.c.b16 %v114, %v114
  %v205 = vunpack.c.l.b16 %v27
  %v206 = vunpack.c.l.b16 %v28
  %v207 = vunpack.c.l.b16 %v29
  %v208 = vunpack.c.l.b16 %v30
  %v209 = vunpack.c.l.b16 %v31
  %v210 = vunpack.c.l.b16 %v32
  %v211 = vunpack.c.l.b16 %v33
  %v212 = vunpack.c.l.b16 %v34
  %v213 = vunpack.c.l.b16 %v35
  %v214 = vunpack.c.l.b16 %v36
  %v215 = vunpack.c.l.b16 %v37
  %v216 = vunpack.c.l.b16 %v38
  %v217 = vunpack.c.l.b16 %v39
  %v218 = vunpack.c.l.b16 %v40
  %v219 = vunpack.c.l.b16 %v41
  %v220 = vunpack.c.l.b16 %v42
  %v221 = vunpack.c.l.b16 %v43
  %v222 = vunpack.c.l.b16 %v44
  %v223 = vunpack.c.l.b16 %v45
  %v224 = vunpack.c.l.b16 %v46
  %v225 = vunpack.c.l.b16 %v47
  %v226 = vunpack.c.l.b16 %v48
  %v227 = vunpack.c.l.b16 %v49
  %v228 = vunpack.c.l.b16 %v50
  %v229 = vunpack.c.l.b16 %v51
  %v230 = vunpack.c.l.b16 %v52
  %v231 = vunpack.c.l.b16 %v53
  %v232 = vunpack.c.l.b16 %v54
  %v233 = vunpack.c.l.b16 %v55
  %v234 = vunpack.c.l.b16 %v56
  %v235 = vunpack.c.l.b16 %v57
  %v236 = vunpack.c.l.b16 %v58
  %v237 = vunpack.c.l.b16 %v59
  %v238 = vunpack.c.l.b16 %v60
  %v239 = vunpack.c.l.b16 %v61
  %v240 = vunpack.c.l.b16 %v62
  %v241 = vunpack.c.l.b16 %v63
  %v242 = vunpack.c.l.b16 %v64
  %v243 = vunpack.c.l.b16 %v65
  %v244 = vunpack.c.l.b16 %v66
  %v245 = vunpack.c.l.b16 %v67
  %v246 = vunpack.c.l.b16 %v68
  %v247 = vunpack.c.l.b16 %v69
  %v248 = vunpack.c.l.b16 %v70
  %v249 = vunpack.c.l.b16 %v71
  %v250 = vunpack.c.l.b16 %v72
  %v251 = vunpack.c.l.b16 %v73
  %v252 = vunpack.c.l.b16 %v74
  %v253 = vunpack.c.l.b16 %v75
  %v254 = vunpack.c.l.b16 %v76
  %v255 = vunpack.c.l.b16 %v77
  %v256 = vunpack.c.l.b16 %v78
  %v257 = vunpack.c.l.b16 %v79
  %v258 = vunpack.c.l.b16 %v80
  %v259 = vunpack.c.l.b16 %v81
  %v260 = vunpack.c.l.b16 %v82
  %v261 = vunpack.c.l.b16 %v83
  %v262 = vunpack.c.l.b16 %v84
  %v263 = vunpack.c.l.b16 %v85
  %v264 = vunpack.c.l.b16 %v86
  %v265 = vunpack.c.l.b16 %v87
  %v266 = vunpack.c.l.b16 %v88
  %v267 = vunpack.c.l.b16 %v89
  %v268 = vunpack.c.l.b16 %v90
  %v269 = vunpack.c.l.b16 %v91
  %v270 = vunpack.c.l.b16 %v92
  %v271 = vunpack.c.l.b16 %v93
  %v272 = vunpack.c.l.b16 %v94
  %v273 = vunpack.c.l.b16 %v95
  %v274 = vunpack.c.l.b16 %v96
  %v275 = vunpack.c.l.b16 %v97
  %v276 = vunpack.c.l.b16 %v98
  %v277 = vunpack.c.l.b16 %v99
  %v278 = vunpack.c.l.b16 %v100
  %v279 = vunpack.c.l.b16 %v101
  %v280 = vunpack.c.l.b16 %v102
  %v281 = vunpack.c.l.b16 %v103
  %v282 = vunpack.c.l.b16 %v104
  %v283 = vunpack.c.l.b16 %v105
  %v284 = vunpack.c.l.b16 %v106
  %v285 = vpack.c.b16 %v206, %v205
  %v286 = vpack.c.b16 %v208, %v207
  %v287 = vpack.c.b16 %v210, %v209
  %v288 = vpack.c.b16 %v212, %v211
  %v289 = vpack.c.b16 %v214, %v213
  %v290 = vpack.c.b16 %v216, %v215
  %v291 = vpack.c.b16 %v218, %v217
  %v292 = vpack.c.b16 %v220, %v219
  %v293 = vpack.c.b16 %v222, %v221
  %v294 = vpack.c.b16 %v224, %v223
  %v295 = vpack.c.b16 %v226, %v225
  %v296 = vpack.c.b16 %v228, %v227
  %v297 = vpack.c.b16 %v230, %v229
  %v298 = vpack.c.b16 %v232, %v231
  %v299 = vpack.c.b16 %v234, %v233
  %v300 = vpack.c.b16 %v236, %v235
  %v301 = vpack.c.b16 %v238, %v237
  %v302 = vpack.c.b16 %v240, %v239
  %v303 = vpack.c.b16 %v242, %v241
  %v304 = vpack.c.b16 %v244, %v243
  %v305 = vpack.c.b16 %v246, %v245
  %v306 = vpack.c.b16 %v248, %v247
  %v307 = vpack.c.b16 %v250, %v249
  %v308 = vpack.c.b16 %v252, %v251
  %v309 = vpack.c.b16 %v254, %v253
  %v310 = vpack.c.b16 %v256, %v255
  %v311 = vpack.c.b16 %v258, %v257
  %v312 = vpack.c.b16 %v260, %v259
  %v313 = vpack.c.b16 %v262, %v261
  %v314 = vpack.c.b16 %v264, %v263
  %v315 = vpack.c.b16 %v266, %v265
  %v316 = vpack.c.b16 %v268, %v267
  %v317 = vpack.c.b16 %v270, %v269
  %v318 = vpack.c.b16 %v272, %v271
  %v319 = vpack.c.b16 %v274, %v273
  %v320 = vpack.c.b16 %v276, %v275
  %v321 = vpack.c.b16 %v278, %v277
  %v322 = vpack.c.b16 %v280, %v279
  %v323 = vpack.c.b16 %v282, %v281
  %v324 = vpack.c.b16 %v284, %v283
  %365 = vmatprep.subr.bf16.mxu0 0
  %366 = vmatpush1.bf16.msra.mxu0 %v285
  %367 = vmatprep.subr.bf16.mxu0 0
  %368 = vmatpush1.bf16.msra.mxu0 %v286
  %369 = vmatprep.subr.bf16.mxu0 0
  %370 = vmatpush1.bf16.msra.mxu0 %v287
  %371 = vmatprep.subr.bf16.mxu0 0
  %372 = vmatpush1.bf16.msra.mxu0 %v288
  %373 = vmatprep.subr.bf16.mxu0 0
  %374 = vmatpush1.bf16.msra.mxu0 %v289
  %375 = vmatprep.subr.bf16.mxu0 0
  %376 = vmatpush1.bf16.msra.mxu0 %v290
  %377 = vmatprep.subr.bf16.mxu0 0
  %378 = vmatpush1.bf16.msra.mxu0 %v291
  %379 = vmatprep.subr.bf16.mxu0 0
  %380 = vmatpush1.bf16.msra.mxu0 %v292
  %381 = vmatprep.subr.bf16.mxu0 0
  %382 = vmatpush1.bf16.msra.mxu0 %v293
  %383 = vmatprep.subr.bf16.mxu0 0
  %384 = vmatpush1.bf16.msra.mxu0 %v294
  %385 = vmatprep.subr.bf16.mxu0 0
  %386 = vmatpush1.bf16.msra.mxu0 %v295
  %387 = vmatprep.subr.bf16.mxu0 0
  %388 = vmatpush1.bf16.msra.mxu0 %v296
  %389 = vmatprep.subr.bf16.mxu0 0
  %390 = vmatpush1.bf16.msra.mxu0 %v297
  %391 = vmatprep.subr.bf16.mxu0 0
  %392 = vmatpush1.bf16.msra.mxu0 %v298
  %393 = vmatprep.subr.bf16.mxu0 0
  %394 = vmatpush1.bf16.msra.mxu0 %v299
  %395 = vmatprep.subr.bf16.mxu0 0
  %396 = vmatpush1.bf16.msra.mxu0 %v300
  %397 = vmatprep.mubr.bf16.mxu0 %v116
  %398 = vmatmul.mubr.bf16.gmra.mrb[0].mxu0 %v115
  %v399 = vpop.f32.mrb[0].mxu0
  %v400 = vadd.f32 0.0, %v399
  %v401 = vpop.f32.mrb[0].mxu0
  %v402 = vpop.f32.mrb[0].mxu0
  %v403 = vpop.f32.mrb[0].mxu0
  %404 = vdwg.mxu0
  %405 = vmatprep.subr.bf16.mxu0 0
  %406 = vmatpush1.bf16.msra.mxu0 %v301
  %407 = vmatprep.subr.bf16.mxu0 0
  %408 = vmatpush1.bf16.msra.mxu0 %v302
  %409 = vmatprep.subr.bf16.mxu0 0
  %410 = vmatpush1.bf16.msra.mxu0 %v303
  %411 = vmatprep.subr.bf16.mxu0 0
  %412 = vmatpush1.bf16.msra.mxu0 %v304
  %413 = vmatprep.subr.bf16.mxu0 0
  %414 = vmatpush1.bf16.msra.mxu0 %v305
  %415 = vmatprep.subr.bf16.mxu0 0
  %416 = vmatpush1.bf16.msra.mxu0 %v306
  %417 = vmatprep.subr.bf16.mxu0 0
  %418 = vmatpush1.bf16.msra.mxu0 %v307
  %419 = vmatprep.subr.bf16.mxu0 0
  %420 = vmatpush1.bf16.msra.mxu0 %v308
  %421 = vmatprep.subr.bf16.mxu0 0
  %422 = vmatpush1.bf16.msra.mxu0 %v309
  %423 = vmatprep.subr.bf16.mxu0 0
  %424 = vmatpush1.bf16.msra.mxu0 %v310
  %425 = vmatprep.subr.bf16.mxu0 0
  %426 = vmatpush1.bf16.msra.mxu0 %v311
  %427 = vmatprep.subr.bf16.mxu0 0
  %428 = vmatpush1.bf16.msra.mxu0 %v312
  %429 = vmatprep.subr.bf16.mxu0 0
  %430 = vmatpush1.bf16.msra.mxu0 %v313
  %431 = vmatprep.subr.bf16.mxu0 0
  %432 = vmatpush1.bf16.msra.mxu0 %v314
  %433 = vmatprep.subr.bf16.mxu0 0
  %434 = vmatpush1.bf16.msra.mxu0 %v315
  %435 = vmatprep.subr.bf16.mxu0 0
  %436 = vmatpush1.bf16.msra.mxu0 %v316
  %437 = vmatprep.mubr.bf16.mxu0 %v118
  %438 = vmatmul.mubr.bf16.gmra.mrb[0].mxu0 %v117
  %v439 = vpop.f32.mrb[0].mxu0
  %v440 = vadd.f32 %v400, %v439
  %v441 = vpop.f32.mrb[0].mxu0
  %v442 = vpop.f32.mrb[0].mxu0
  %v443 = vpop.f32.mrb[0].mxu0
  %444 = vdwg.mxu0
  %445 = vmatprep.subr.bf16.mxu0 0
  %446 = vmatpush1.bf16.msra.mxu0 %v317
  %447 = vmatprep.subr.bf16.mxu0 0
  %448 = vmatpush1.bf16.msra.mxu0 %v318
  %449 = vmatprep.subr.bf16.mxu0 0
  %450 = vmatpush1.bf16.msra.mxu0 %v319
  %451 = vmatprep.subr.bf16.mxu0 0
  %452 = vmatpush1.bf16.msra.mxu0 %v320
  %453 = vmatprep.subr.bf16.mxu0 0
  %454 = vmatpush1.bf16.msra.mxu0 %v321
  %455 = vmatprep.subr.bf16.mxu0 0
  %456 = vmatpush1.bf16.msra.mxu0 %v322
  %457 = vmatprep.subr.bf16.mxu0 0
  %458 = vmatpush1.bf16.msra.mxu0 %v323
  %459 = vmatprep.subr.bf16.mxu0 0
  %460 = vmatpush1.bf16.msra.mxu0 %v324
  %461 = vmatprep.subr.bf16.mxu0 0
  %462 = vmatpush1.bf16.msra.mxu0 0
  %463 = vmatprep.subr.bf16.mxu0 0
  %464 = vmatpush1.bf16.msra.mxu0 0
  %465 = vmatprep.subr.bf16.mxu0 0
  %466 = vmatpush1.bf16.msra.mxu0 0
  %467 = vmatprep.subr.bf16.mxu0 0
  %468 = vmatpush1.bf16.msra.mxu0 0
  %469 = vmatprep.subr.bf16.mxu0 0
  %470 = vmatpush1.bf16.msra.mxu0 0
  %471 = vmatprep.subr.bf16.mxu0 0
  %472 = vmatpush1.bf16.msra.mxu0 0
  %473 = vmatprep.subr.bf16.mxu0 0
  %474 = vmatpush1.bf16.msra.mxu0 0
  %475 = vmatprep.subr.bf16.mxu0 0
  %476 = vmatpush1.bf16.msra.mxu0 0
  %477 = vmatprep.mubr.bf16.mxu0 0
  %478 = vmatmul.mubr.bf16.gmra.mrb[0].mxu0 %v119
  %v479 = vpop.f32.mrb[0].mxu0
  %v480 = vadd.f32 %v440, %v479
  %v481 = vpop.f32.mrb[0].mxu0
  %v482 = vpop.f32.mrb[0].mxu0
  %v483 = vpop.f32.mrb[0].mxu0
  %484 = vdwg.mxu0
  %v485 = vadd.f32 %v23, %v480
  %486 = vst [vmem:[#allocation2] sm:$0xff] %v485
  // Predicated region
  $region22: #{_lambda_.49} parent=0 // pred_check
    %p487 = pneg %p18
  $region23: #{_lambda_.49} parent=0 // pred_check_branch
    %489 = sbr.rel (%p487) target = $region25
  $region24: #{_lambda_.49} parent=0 // pred_region
    %v490 = vld [vmem:[#allocation2] sm:$0xff]
    %v491 = vld [vmem:[%s2] sm:$0x1]
    %v493 = vlaneseq
    %v494 = vshrl.u32 %v493, 7
    %v495 = vsub.s32 0, %v494
    %v496 = vrot.slane %v491, %v495
    %v498 = vmul.f32 %v490, %v496
    %v499 = vld [vmem:[%s3] sm:$0x1]
    %v501 = vlaneseq
    %v502 = vshrl.u32 %v501, 7
    %v503 = vsub.s32 0, %v502
    %v504 = vrot.slane %v499, %v503
    %v506 = vadd.f32 %v498, %v504
    %v507 = vsub.f32 0.0, %v506
    %v508 = vmul.f32 %v507, 1.442695
    %v509 = vpow.pop %v508
    %v510 = vadd.f32 %v509, 1.0
    %v511 = vrcp.pop %v510
    %v512 = vmul.f32 1.0, %v511
    %v513 = vmul.f32 %v506, %v512
    %514 = vst [vmem:[%s4] sm:$0xff] %v513
  $region25: #{_lambda_.49} parent=0 // pred_fallthru
    _
  // Predicated region
  $region26: #{_lambda_.49} parent=0 // pred_check
    _
  $region27: #{_lambda_.49} parent=0 // pred_check_branch
    %516 = sbr.rel (0) target = $region29
  $region28: #{_lambda_.49} parent=0 // pred_region
    _
  $region29: #{_lambda_.49} parent=0 // pred_fallthru
    _
  // Predicated region
  $region30: #{_lambda_.49} parent=0 // pred_check
    _
  $region31: #{_lambda_.49} parent=0 // pred_check_branch
    %518 = sbr.rel (0) target = $region33
  $region32: #{_lambda_.49} parent=0 // pred_region
    _
  $region33: #{_lambda_.49} parent=0 // pred_fallthru
    _

// kernel: _lambda_.50
$region0: #{_lambda_.50}
  #allocation0 [shape = 'u32[]', space=smem, size = 0x4, offset = 0x4, fixed_abs, tag = 'smem constant byte address 0x4 - core index']
  #allocation1 [shape = 'u32[144,128]{1,0:T(1,128)}', space=vmem, size = 0x12000, scoped, tag = 'internal scratch']
  #allocation2 [shape = 'f32[8,128]{1,0:T(8,128)}', space=vmem, size = 0x1000, scoped, tag = 'scratch operand']
  %s0 = inlined_call_operand.vmem [shape: bf16[8,128], index: 0, kind: input, shape index: {}]
  %s1 = inlined_call_operand.vmem [shape: bf16[128,128], index: 1, kind: input, shape index: {}]
  %s2 = inlined_call_operand.vmem [shape: f32[1,128], index: 2, kind: input, shape index: {}]
  %s3 = inlined_call_operand.vmem [shape: f32[1,128], index: 3, kind: input, shape index: {}]
  %s4 = inlined_call_operand.vmem [shape: f32[8,128], index: 4, kind: output, shape index: {}]
  %s5 = sld [smem:[#allocation0]]
  $region34: #{_lambda_.50} parent=0
    _
  %s7 = ssub.s32 1, %s5
  %s8 = scalar_select 0, %s7, %s5
  // Predicated region
  $region2: #{_lambda_.50} parent=0 // pred_check
    _
  $region3: #{_lambda_.50} parent=0 // pred_check_branch
    %10 = sbr.rel (0) target = $region5
  $region4: #{_lambda_.50} parent=0 // pred_region
    _
  $region5: #{_lambda_.50} parent=0 // pred_fallthru
    _
  // Predicated region
  $region6: #{_lambda_.50} parent=0 // pred_check
    _
  $region7: #{_lambda_.50} parent=0 // pred_check_branch
    %12 = sbr.rel (0) target = $region9
  $region8: #{_lambda_.50} parent=0 // pred_region
    _
  $region9: #{_lambda_.50} parent=0 // pred_fallthru
    _
  // Predicated region
  $region10: #{_lambda_.50} parent=0 // pred_check
    _
  $region11: #{_lambda_.50} parent=0 // pred_check_branch
    %14 = sbr.rel (0) target = $region13
  $region12: #{_lambda_.50} parent=0 // pred_region
    _
  $region13: #{_lambda_.50} parent=0 // pred_fallthru
    _
  // Predicated region
  $region14: #{_lambda_.50} parent=0 // pred_check
    _
  $region15: #{_lambda_.50} parent=0 // pred_check_branch
    %16 = sbr.rel (0) target = $region17
  $region16: #{_lambda_.50} parent=0 // pred_region
    _
  $region17: #{_lambda_.50} parent=0 // pred_fallthru
    _
  %p18 = scmp.eq.s32.totalorder 0, 0
  // Predicated region
  $region18: #{_lambda_.50} parent=0 // pred_check
    %p19 = pneg %p18
  $region19: #{_lambda_.50} parent=0 // pred_check_branch
    %21 = sbr.rel (%p19) target = $region21
  $region20: #{_lambda_.50} parent=0 // pred_region
    %22 = vst [vmem:[#allocation2] sm:$0xff] 0.0
  $region21: #{_lambda_.50} parent=0 // pred_fallthru
    _
  %v23 = vld [vmem:[#allocation2] sm:$0xff]
  %v24 = vld [vmem:[%s0] sm:$0xf]
  %v25 = vld [vmem:[%s1] sm:$0xf]
  %v26 = vld [vmem:[%s1 + $0x4] sm:$0xf]
  %v27 = vld [vmem:[%s1 + $0x8] sm:$0xf]
  %v28 = vld [vmem:[%s1 + $0xc] sm:$0xf]
  %v29 = vld [vmem:[%s1 + $0x10] sm:$0xf]
  %v30 = vld [vmem:[%s1 + $0x14] sm:$0xf]
  %v31 = vld [vmem:[%s1 + $0x18] sm:$0xf]
  %v32 = vld [vmem:[%s1 + $0x1c] sm:$0xf]
  %v33 = vld [vmem:[%s1 + $0x20] sm:$0xf]
  %v34 = vld [vmem:[%s1 + $0x24] sm:$0xf]
  %v35 = vld [vmem:[%s1 + $0x28] sm:$0xf]
  %v36 = vld [vmem:[%s1 + $0x2c] sm:$0xf]
  %v37 = vld [vmem:[%s1 + $0x30] sm:$0xf]
  %v38 = vld [vmem:[%s1 + $0x34] sm:$0xf]
  %v39 = vld [vmem:[%s1 + $0x38] sm:$0xf]
  %v40 = vld [vmem:[%s1 + $0x3c] sm:$0xf]
  %v57 = vunpack.c.l.b16 %v25
  %v58 = vunpack.c.l.b16 %v26
  %v59 = vunpack.c.l.b16 %v27
  %v60 = vunpack.c.l.b16 %v28
  %v61 = vunpack.c.l.b16 %v29
  %v62 = vunpack.c.l.b16 %v30
  %v63 = vunpack.c.l.b16 %v31
  %v64 = vunpack.c.l.b16 %v32
  %v65 = vunpack.c.l.b16 %v33
  %v66 = vunpack.c.l.b16 %v34
  %v67 = vunpack.c.l.b16 %v35
  %v68 = vunpack.c.l.b16 %v36
  %v69 = vunpack.c.l.b16 %v37
  %v70 = vunpack.c.l.b16 %v38
  %v71 = vunpack.c.l.b16 %v39
  %v72 = vunpack.c.l.b16 %v40
  %v73 = vpack.c.b16 %v58, %v57
  %v74 = vpack.c.b16 %v60, %v59
  %v75 = vpack.c.b16 %v62, %v61
  %v76 = vpack.c.b16 %v64, %v63
  %v77 = vpack.c.b16 %v66, %v65
  %v78 = vpack.c.b16 %v68, %v67
  %v79 = vpack.c.b16 %v70, %v69
  %v80 = vpack.c.b16 %v72, %v71
  %89 = vmatprep.subr.bf16.mxu0 0
  %90 = vmatpush1.bf16.msra.mxu0 %v73
  %91 = vmatprep.subr.bf16.mxu0 0
  %92 = vmatpush1.bf16.msra.mxu0 %v74
  %93 = vmatprep.subr.bf16.mxu0 0
  %94 = vmatpush1.bf16.msra.mxu0 %v75
  %95 = vmatprep.subr.bf16.mxu0 0
  %96 = vmatpush1.bf16.msra.mxu0 %v76
  %97 = vmatprep.subr.bf16.mxu0 0
  %98 = vmatpush1.bf16.msra.mxu0 %v77
  %99 = vmatprep.subr.bf16.mxu0 0
  %100 = vmatpush1.bf16.msra.mxu0 %v78
  %101 = vmatprep.subr.bf16.mxu0 0
  %102 = vmatpush1.bf16.msra.mxu0 %v79
  %103 = vmatprep.subr.bf16.mxu0 0
  %104 = vmatpush1.bf16.msra.mxu0 %v80
  %105 = vmatprep.subr.bf16.mxu0 0
  %106 = vmatpush1.bf16.msra.mxu0 0
  %107 = vmatprep.subr.bf16.mxu0 0
  %108 = vmatpush1.bf16.msra.mxu0 0
  %109 = vmatprep.subr.bf16.mxu0 0
  %110 = vmatpush1.bf16.msra.mxu0 0
  %111 = vmatprep.subr.bf16.mxu0 0
  %112 = vmatpush1.bf16.msra.mxu0 0
  %113 = vmatprep.subr.bf16.mxu0 0
  %114 = vmatpush1.bf16.msra.mxu0 0
  %115 = vmatprep.subr.bf16.mxu0 0
  %116 = vmatpush1.bf16.msra.mxu0 0
  %117 = vmatprep.subr.bf16.mxu0 0
  %118 = vmatpush1.bf16.msra.mxu0 0
  %119 = vmatprep.subr.bf16.mxu0 0
  %120 = vmatpush1.bf16.msra.mxu0 0
  %121 = vmatprep.mubr.bf16.mxu0 0
  %122 = vmatmul.mubr.bf16.gmra.mrb[0].mxu0 %v24
  %v123 = vpop.f32.mrb[0].mxu0
  %v124 = vadd.f32 0.0, %v123
  %v125 = vpop.f32.mrb[0].mxu0
  %v126 = vpop.f32.mrb[0].mxu0
  %v127 = vpop.f32.mrb[0].mxu0
  %128 = vdwg.mxu0
  %v129 = vadd.f32 %v23, %v124
  %130 = vst [vmem:[#allocation2] sm:$0xff] %v129
  // Predicated region
  $region22: #{_lambda_.50} parent=0 // pred_check
    %p131 = pneg %p18
  $region23: #{_lambda_.50} parent=0 // pred_check_branch
    %133 = sbr.rel (%p131) target = $region25
  $region24: #{_lambda_.50} parent=0 // pred_region
    %v134 = vld [vmem:[#allocation2] sm:$0xff]
    %v135 = vld [vmem:[%s2] sm:$0x1]
    %v137 = vlaneseq
    %v138 = vshrl.u32 %v137, 7
    %v139 = vsub.s32 0, %v138
    %v140 = vrot.slane %v135, %v139
    %v142 = vmul.f32 %v134, %v140
    %v143 = vld [vmem:[%s3] sm:$0x1]
    %v145 = vlaneseq
    %v146 = vshrl.u32 %v145, 7
    %v147 = vsub.s32 0, %v146
    %v148 = vrot.slane %v143, %v147
    %v150 = vadd.f32 %v142, %v148
    %v151 = vsub.f32 0.0, %v150
    %v152 = vmul.f32 %v151, 1.442695
    %v153 = vpow.pop %v152
    %v154 = vadd.f32 %v153, 1.0
    %v155 = vrcp.pop %v154
    %v156 = vmul.f32 1.0, %v155
    %v157 = vmul.f32 %v150, %v156
    %158 = vst [vmem:[%s4] sm:$0xff] %v157
  $region25: #{_lambda_.50} parent=0 // pred_fallthru
    _
  // Predicated region
  $region26: #{_lambda_.50} parent=0 // pred_check
    _
  $region27: #{_lambda_.50} parent=0 // pred_check_branch
    %160 = sbr.rel (0) target = $region29
  $region28: #{_lambda_.50} parent=0 // pred_region
    _
  $region29: #{_lambda_.50} parent=0 // pred_fallthru
    _
  // Predicated region
  $region30: #{_lambda_.50} parent=0 // pred_check
    _
  $region31: #{_lambda_.50} parent=0 // pred_check_branch
    %162 = sbr.rel (0) target = $region33
  $region32: #{_lambda_.50} parent=0 // pred_region
    _
  $region33: #{_lambda_.50} parent=0 // pred_fallthru
    _

// kernel: _lambda_.59
$region0: #{_lambda_.59}
  #allocation0 [shape = 'u32[]', space=smem, size = 0x4, offset = 0x4, fixed_abs, tag = 'smem constant byte address 0x4 - core index']
  #allocation1 [shape = 'u32[144,128]{1,0:T(1,128)}', space=vmem, size = 0x12000, scoped, tag = 'internal scratch']
  #allocation2 [shape = 'f32[8,128]{1,0:T(8,128)}', space=vmem, size = 0x1000, scoped, tag = 'scratch operand']
  %s0 = inlined_call_operand.vmem [shape: bf16[8,128], index: 0, kind: input, shape index: {}]
  %s1 = inlined_call_operand.vmem [shape: bf16[128,128], index: 1, kind: input, shape index: {}]
  %s2 = inlined_call_operand.vmem [shape: f32[1,128], index: 2, kind: input, shape index: {}]
  %s3 = inlined_call_operand.vmem [shape: f32[1,128], index: 3, kind: input, shape index: {}]
  %s4 = inlined_call_operand.hbm [shape: f32[8,128], index: 4, kind: output, shape index: {}]
  %s5 = sld [smem:[#allocation0]]
  $region34: #{_lambda_.59} parent=0
    _
  %s7 = ssub.s32 1, %s5
  %s8 = scalar_select 0, %s7, %s5
  $region1: #{_lambda_.59} parent=0
    #allocation3 [shape = 'u8[4096]{0}', space=vmem, size = 0x1000, scoped, tag = 'output window, operand 0, single buffered']
    #allocation4 [shape = 's32[1]{0}', space=sflag, size = 0x4, scoped, tag = 'scoped memory for _lambda_.59']
    %9 = vsyncpa [#allocation4], 0
    // Predicated region
    $region2: #{_lambda_.59} parent=1 // pred_check
      _
    $region3: #{_lambda_.59} parent=1 // pred_check_branch
      %11 = sbr.rel (0) target = $region5
    $region4: #{_lambda_.59} parent=1 // pred_region
      _
    $region5: #{_lambda_.59} parent=1 // pred_fallthru
      _
    // Predicated region
    $region6: #{_lambda_.59} parent=1 // pred_check
      _
    $region7: #{_lambda_.59} parent=1 // pred_check_branch
      %13 = sbr.rel (0) target = $region9
    $region8: #{_lambda_.59} parent=1 // pred_region
      _
    $region9: #{_lambda_.59} parent=1 // pred_fallthru
      _
    // Predicated region
    $region10: #{_lambda_.59} parent=1 // pred_check
      _
    $region11: #{_lambda_.59} parent=1 // pred_check_branch
      %15 = sbr.rel (0) target = $region13
    $region12: #{_lambda_.59} parent=1 // pred_region
      _
    $region13: #{_lambda_.59} parent=1 // pred_fallthru
      _
    // Predicated region
    $region14: #{_lambda_.59} parent=1 // pred_check
      _
    $region15: #{_lambda_.59} parent=1 // pred_check_branch
      %17 = sbr.rel (0) target = $region17
    $region16: #{_lambda_.59} parent=1 // pred_region
      _
    $region17: #{_lambda_.59} parent=1 // pred_fallthru
      _
    %p19 = scmp.eq.s32.totalorder 0, 0
    // Predicated region
    $region18: #{_lambda_.59} parent=1 // pred_check
      %p20 = pneg %p19
    $region19: #{_lambda_.59} parent=1 // pred_check_branch
      %22 = sbr.rel (%p20) target = $region21
    $region20: #{_lambda_.59} parent=1 // pred_region
      %23 = vst [vmem:[#allocation2] sm:$0xff] 0.0
    $region21: #{_lambda_.59} parent=1 // pred_fallthru
      _
    %v24 = vld [vmem:[#allocation2] sm:$0xff]
    %v25 = vld [vmem:[%s0] sm:$0xf]
    %v26 = vld [vmem:[%s1] sm:$0xf]
    %v27 = vld [vmem:[%s1 + $0x4] sm:$0xf]
    %v28 = vld [vmem:[%s1 + $0x8] sm:$0xf]
    %v29 = vld [vmem:[%s1 + $0xc] sm:$0xf]
    %v30 = vld [vmem:[%s1 + $0x10] sm:$0xf]
    %v31 = vld [vmem:[%s1 + $0x14] sm:$0xf]
    %v32 = vld [vmem:[%s1 + $0x18] sm:$0xf]
    %v33 = vld [vmem:[%s1 + $0x1c] sm:$0xf]
    %v34 = vld [vmem:[%s1 + $0x20] sm:$0xf]
    %v35 = vld [vmem:[%s1 + $0x24] sm:$0xf]
    %v36 = vld [vmem:[%s1 + $0x28] sm:$0xf]
    %v37 = vld [vmem:[%s1 + $0x2c] sm:$0xf]
    %v38 = vld [vmem:[%s1 + $0x30] sm:$0xf]
    %v39 = vld [vmem:[%s1 + $0x34] sm:$0xf]
    %v40 = vld [vmem:[%s1 + $0x38] sm:$0xf]
    %v41 = vld [vmem:[%s1 + $0x3c] sm:$0xf]
    %v58 = vunpack.c.l.b16 %v26
    %v59 = vunpack.c.l.b16 %v27
    %v60 = vunpack.c.l.b16 %v28
    %v61 = vunpack.c.l.b16 %v29
    %v62 = vunpack.c.l.b16 %v30
    %v63 = vunpack.c.l.b16 %v31
    %v64 = vunpack.c.l.b16 %v32
    %v65 = vunpack.c.l.b16 %v33
    %v66 = vunpack.c.l.b16 %v34
    %v67 = vunpack.c.l.b16 %v35
    %v68 = vunpack.c.l.b16 %v36
    %v69 = vunpack.c.l.b16 %v37
    %v70 = vunpack.c.l.b16 %v38
    %v71 = vunpack.c.l.b16 %v39
    %v72 = vunpack.c.l.b16 %v40
    %v73 = vunpack.c.l.b16 %v41
    %v74 = vpack.c.b16 %v59, %v58
    %v75 = vpack.c.b16 %v61, %v60
    %v76 = vpack.c.b16 %v63, %v62
    %v77 = vpack.c.b16 %v65, %v64
    %v78 = vpack.c.b16 %v67, %v66
    %v79 = vpack.c.b16 %v69, %v68
    %v80 = vpack.c.b16 %v71, %v70
    %v81 = vpack.c.b16 %v73, %v72
    %90 = vmatprep.subr.bf16.mxu0 0
    %91 = vmatpush1.bf16.msra.mxu0 %v74
    %92 = vmatprep.subr.bf16.mxu0 0
    %93 = vmatpush1.bf16.msra.mxu0 %v75
    %94 = vmatprep.subr.bf16.mxu0 0
    %95 = vmatpush1.bf16.msra.mxu0 %v76
    %96 = vmatprep.subr.bf16.mxu0 0
    %97 = vmatpush1.bf16.msra.mxu0 %v77
    %98 = vmatprep.subr.bf16.mxu0 0
    %99 = vmatpush1.bf16.msra.mxu0 %v78
    %100 = vmatprep.subr.bf16.mxu0 0
    %101 = vmatpush1.bf16.msra.mxu0 %v79
    %102 = vmatprep.subr.bf16.mxu0 0
    %103 = vmatpush1.bf16.msra.mxu0 %v80
    %104 = vmatprep.subr.bf16.mxu0 0
    %105 = vmatpush1.bf16.msra.mxu0 %v81
    %106 = vmatprep.subr.bf16.mxu0 0
    %107 = vmatpush1.bf16.msra.mxu0 0
    %108 = vmatprep.subr.bf16.mxu0 0
    %109 = vmatpush1.bf16.msra.mxu0 0
    %110 = vmatprep.subr.bf16.mxu0 0
    %111 = vmatpush1.bf16.msra.mxu0 0
    %112 = vmatprep.subr.bf16.mxu0 0
    %113 = vmatpush1.bf16.msra.mxu0 0
    %114 = vmatprep.subr.bf16.mxu0 0
    %115 = vmatpush1.bf16.msra.mxu0 0
    %116 = vmatprep.subr.bf16.mxu0 0
    %117 = vmatpush1.bf16.msra.mxu0 0
    %118 = vmatprep.subr.bf16.mxu0 0
    %119 = vmatpush1.bf16.msra.mxu0 0
    %120 = vmatprep.subr.bf16.mxu0 0
    %121 = vmatpush1.bf16.msra.mxu0 0
    %122 = vmatprep.mubr.bf16.mxu0 0
    %123 = vmatmul.mubr.bf16.gmra.mrb[0].mxu0 %v25
    %v124 = vpop.f32.mrb[0].mxu0
    %v125 = vadd.f32 0.0, %v124
    %v126 = vpop.f32.mrb[0].mxu0
    %v127 = vpop.f32.mrb[0].mxu0
    %v128 = vpop.f32.mrb[0].mxu0
    %129 = vdwg.mxu0
    %v130 = vadd.f32 %v24, %v125
    %131 = vst [vmem:[#allocation2] sm:$0xff] %v130
    // Predicated region
    $region22: #{_lambda_.59} parent=1 // pred_check
      %p132 = pneg %p19
    $region23: #{_lambda_.59} parent=1 // pred_check_branch
      %134 = sbr.rel (%p132) target = $region25
    $region24: #{_lambda_.59} parent=1 // pred_region
      %v135 = vld [vmem:[#allocation2] sm:$0xff]
      %v136 = vld [vmem:[%s2] sm:$0x1]
      %v138 = vlaneseq
      %v139 = vshrl.u32 %v138, 7
      %v140 = vsub.s32 0, %v139
      %v141 = vrot.slane %v136, %v140
      %v143 = vmul.f32 %v135, %v141
      %v144 = vld [vmem:[%s3] sm:$0x1]
      %v146 = vlaneseq
      %v147 = vshrl.u32 %v146, 7
      %v148 = vsub.s32 0, %v147
      %v149 = vrot.slane %v144, %v148
      %v151 = vadd.f32 %v143, %v149
      %v152 = vsub.f32 0.0, %v151
      %v153 = vmul.f32 %v152, 1.442695
      %v154 = vpow.pop %v153
      %v155 = vadd.f32 %v154, 1.0
      %v156 = vrcp.pop %v155
      %v157 = vmul.f32 1.0, %v156
      %v158 = vmul.f32 %v151, %v157
      %159 = vst [vmem:[#allocation3] sm:$0xff] %v158
    $region25: #{_lambda_.59} parent=1 // pred_fallthru
      _
    // Predicated region
    $region26: #{_lambda_.59} parent=1 // pred_check
      _
    $region27: #{_lambda_.59} parent=1 // pred_check_branch
      %161 = sbr.rel (0) target = $region29
    $region28: #{_lambda_.59} parent=1 // pred_region
      %s163 = ssub.s32 128, 128
      %164 = vsyncadd [#allocation4], %s163
      %s166 = sshll.u32 [#allocation3], 4
      %s167 = int_to_ptr.vmem [resolvable:$true] %s166
      %169 = dma.vmem_to_hbm [thread:$0]  %s167, 128, %s4, [#allocation4]
    $region29: #{_lambda_.59} parent=1 // pred_fallthru
      _
    // Predicated region
    $region30: #{_lambda_.59} parent=1 // pred_check
      _
    $region31: #{_lambda_.59} parent=1 // pred_check_branch
      %171 = sbr.rel (0) target = $region33
    $region32: #{_lambda_.59} parent=1 // pred_region
      %172 = dma.done [#allocation4], 128
    $region33: #{_lambda_.59} parent=1 // pred_fallthru
      _
    %173 = vsyncpa [#allocation4], 1

// kernel: _lambda_.56
$region0: #{_lambda_.56}
  #allocation0 [shape = 'u32[]', space=smem, size = 0x4, offset = 0x4, fixed_abs, tag = 'smem constant byte address 0x4 - core index']
  #allocation1 [shape = 'u32[144,128]{1,0:T(1,128)}', space=vmem, size = 0x12000, scoped, tag = 'internal scratch']
  %s0 = inlined_call_operand.vmem [shape: f32[2,6,6,32], index: 0, kind: input, shape index: {}]
  %s1 = inlined_call_operand.vmem [shape: f32[2,2,2,32], index: 1, kind: output, shape index: {}]
  %s2 = sld [smem:[#allocation0]]
  $region37: #{_lambda_.56} parent=0
    _
  %s4 = ssub.s32 1, %s2
  %s5 = scalar_select 0, %s4, %s2
  loop: start=0, step=1, limit=4
  $region2: #{_lambda_.56} parent=0 // loop_pre_header
    _
  $region3: #{_lambda_.56} parent=0 // loop_header
    %s7 = sphi 0, %s11
    %p8 = scmp.ge.s32.totalorder %s7, 4
    %s17 = sphi 0, %s19
    %s20 = sphi 0, %s17
    %s21 = sphi 0, %s20
    %s37 = sphi 0, %s21
    %s43 = sphi 0, %s45
    %s46 = sphi 0, %s43
    %s47 = sphi 0, %s46
    %s63 = sphi 0, %s47
  $region4: #{_lambda_.56} parent=0 // loop_header_branch
    %10 = sbr.rel (%p8) target = $region8
  $region5: #{_lambda_.56} parent=0 // loop_body
    %s12 = ssub.s32 %s7, 1
    %s13 = ssub.s32 %s7, 2
    %s14 = sadd.s32 %s7, 1
    %s15 = ssub.s32 %s7, %s14
    %p16 = scmp.eq.s32.totalorder %s15, 0
    %s18 = sadd.s32 %s17, 1
    %s19 = scalar_select %p16, %s17, %s18
    %p22 = pneg %p16
    %p23 = scmp.eq.s32.totalorder %s7, 1
    %p24 = por %p22, %p23
    %p25 = scmp.ne.s32.totalorder %s17, %s20
    %p26 = scmp.eq.s32.totalorder %s7, 0
    %p27 = por %p25, %p26
    %p28 = scmp.ne.s32.totalorder %s17, %s20
    %p29 = scmp.eq.s32.totalorder %s12, 1
    %p30 = por %p28, %p29
    %p31 = scmp.ne.s32.totalorder %s20, %s21
    %p32 = scmp.eq.s32.totalorder %s12, 0
    %p33 = por %p31, %p32
    %p34 = scmp.ne.s32.totalorder %s20, %s21
    %p35 = scmp.eq.s32.totalorder %s13, 1
    %p36 = por %p34, %p35
    %p38 = scmp.ne.s32.totalorder %s21, %s37
    %p39 = scmp.eq.s32.totalorder %s13, 0
    %p40 = por %p38, %p39
    %s41 = ssub.s32 %s7, %s14
    %p42 = scmp.eq.s32.totalorder %s41, 0
    %s44 = sadd.s32 %s43, 1
    %s45 = scalar_select %p42, %s43, %s44
    %p48 = pneg %p42
    %p49 = scmp.eq.s32.totalorder %s7, 1
    %p50 = por %p48, %p49
    %p51 = scmp.ne.s32.totalorder %s43, %s46
    %p52 = scmp.eq.s32.totalorder %s7, 0
    %p53 = por %p51, %p52
    %p54 = scmp.ne.s32.totalorder %s43, %s46
    %p55 = scmp.eq.s32.totalorder %s12, 1
    %p56 = por %p54, %p55
    %p57 = scmp.ne.s32.totalorder %s46, %s47
    %p58 = scmp.eq.s32.totalorder %s12, 0
    %p59 = por %p57, %p58
    %p60 = scmp.ne.s32.totalorder %s46, %s47
    %p61 = scmp.eq.s32.totalorder %s13, 1
    %p62 = por %p60, %p61
    %p64 = scmp.ne.s32.totalorder %s47, %s63
    %p65 = scmp.eq.s32.totalorder %s13, 0
    %p66 = por %p64, %p65
    %p67 = scmp.le.s32.totalorder 1, %s7
    %p68 = scmp.lt.s32.totalorder %s7, 3
    %p69 = pnand %p67, %p68
    %p70 = pneg %p69
    // Predicated region
    $region9: #{_lambda_.56} parent=5 // pred_check
      _
    $region10: #{_lambda_.56} parent=5 // pred_check_branch
      %72 = sbr.rel (%p69) target = $region12
    $region11: #{_lambda_.56} parent=5 // pred_region
      %s73 = ssub.s32 %s7, 1
    $region12: #{_lambda_.56} parent=5 // pred_fallthru
      _
    %p74 = scmp.lt.s32.totalorder %s7, 2
    // Predicated region
    $region13: #{_lambda_.56} parent=5 // pred_check
      %p75 = pneg %p74
    $region14: #{_lambda_.56} parent=5 // pred_check_branch
      %77 = sbr.rel (%p75) target = $region16
    $region15: #{_lambda_.56} parent=5 // pred_region
      // Predicated region
      $region17: #{_lambda_.56} parent=15 // pred_check
        %p78 = pneg %p27
      $region18: #{_lambda_.56} parent=15 // pred_check_branch
        %80 = sbr.rel (%p78) target = $region20
      $region19: #{_lambda_.56} parent=15 // pred_region
        %p81 = scmp.lt.s32.totalorder %s7, 1
        %s82 = scalar_select %p81, %s7, 1
        %s83 = smul.addr %s82, 6
        %s84 = smul.addr %s83, 8
        %s85 = scalar_lea.vmem %s0, %s84
      $region20: #{_lambda_.56} parent=15 // pred_fallthru
        _
    $region16: #{_lambda_.56} parent=5 // pred_fallthru
      _
    %p86 = scmp.le.s32.totalorder 1, %s7
    %p87 = scmp.lt.s32.totalorder %s7, 3
    %p88 = pnand %p86, %p87
    %p89 = pneg %p88
    // Predicated region
    $region21: #{_lambda_.56} parent=5 // pred_check
      _
    $region22: #{_lambda_.56} parent=5 // pred_check_branch
      %91 = sbr.rel (%p88) target = $region24
    $region23: #{_lambda_.56} parent=5 // pred_region
      %s92 = ssub.s32 %s7, 1
      %p93 = scmp.lt.s32.totalorder %s12, 1
      %s94 = scalar_select %p93, %s12, 1
      %s95 = smul.addr %s94, 6
      %s96 = smul.addr %s95, 8
      %s97 = scalar_lea.vmem %s0, %s96
      %p98 = pneg %p33
      %p99 = pneg %p30
      %p100 = pneg %p59
      %p101 = pneg %p56
      %p102 = scmp.lt.s32.totalorder %s12, 1
      %s103 = scalar_select %p102, %s12, 1
      %s104 = smul.addr %s103, 2
      %s105 = smul.addr %s104, 2
      %s106 = scalar_lea.vmem %s1, %s105
      %p107 = scmp.lt.s32.totalorder %s12, 1
      %s108 = scalar_select %p107, %s12, 1
      %s109 = smul.addr %s108, 6
      %s110 = smul.addr %s109, 8
      %s111 = scalar_lea.vmem %s0, %s110
      %p112 = scmp.lt.s32.totalorder %s12, 1
      %s113 = scalar_select %p112, %s12, 1
      %s114 = smul.addr %s113, 2
      %s115 = smul.addr %s114, 2
      %s116 = scalar_lea.vmem %s1, %s115
      %v117 = vld [vmem:[%s111] sm:$0x3f]
      %v118 = vld [vmem:[%s111 + $0x8] sm:$0x3f]
      %v119 = vld [vmem:[%s111 + $0x10] sm:$0x3f]
      %v120 = vld [vmem:[%s111 + $0x18] sm:$0x3f]
      %v121 = vld [vmem:[%s111 + $0x20] sm:$0x3f]
      %v122 = vld [vmem:[%s111 + $0x28] sm:$0x3f]
      %v125 = vrot.slane %v117, 1
      %v126 = vrot.slane %v118, 1
      %v129 = vmax.f32 %v117, %v125
      %v130 = vmax.f32 %v118, %v126
      %v131 = vrot.slane %v117, 2
      %v132 = vrot.slane %v118, 2
      %v135 = vmax.f32 %v129, %v131
      %v136 = vmax.f32 %v130, %v132
      %v137 = vrot.slane %v117, 3
      %v138 = vrot.slane %v118, 3
      %v141 = vmax.f32 %v135, %v137
      %v142 = vmax.f32 %v136, %v138
      %v143 = vrot.slane %v117, 4
      %v144 = vrot.slane %v118, 4
      %v147 = vmax.f32 %v141, %v143
      %v148 = vmax.f32 %v142, %v144
      %v149 = vmax.f32 %v147, %v118
      %v150 = vmax.f32 %v148, %v119
      %v152 = vrot.slane %v119, 1
      %v154 = vmax.f32 %v149, %v126
      %v155 = vmax.f32 %v150, %v152
      %v156 = vrot.slane %v119, 2
      %v158 = vmax.f32 %v154, %v132
      %v159 = vmax.f32 %v155, %v156
      %v160 = vrot.slane %v119, 3
      %v162 = vmax.f32 %v158, %v138
      %v163 = vmax.f32 %v159, %v160
      %v164 = vrot.slane %v119, 4
      %v166 = vmax.f32 %v162, %v144
      %v167 = vmax.f32 %v163, %v164
      %v168 = vmax.f32 %v166, %v119
      %v169 = vmax.f32 %v167, %v120
      %v171 = vrot.slane %v120, 1
      %v173 = vmax.f32 %v168, %v152
      %v174 = vmax.f32 %v169, %v171
      %v175 = vrot.slane %v120, 2
      %v177 = vmax.f32 %v173, %v156
      %v178 = vmax.f32 %v174, %v175
      %v179 = vrot.slane %v120, 3
      %v181 = vmax.f32 %v177, %v160
      %v182 = vmax.f32 %v178, %v179
      %v183 = vrot.slane %v120, 4
      %v185 = vmax.f32 %v181, %v164
      %v186 = vmax.f32 %v182, %v183
      %v187 = vmax.f32 %v185, %v120
      %v188 = vmax.f32 %v186, %v121
      %v190 = vrot.slane %v121, 1
      %v192 = vmax.f32 %v187, %v171
      %v193 = vmax.f32 %v188, %v190
      %v194 = vrot.slane %v121, 2
      %v196 = vmax.f32 %v192, %v175
      %v197 = vmax.f32 %v193, %v194
      %v198 = vrot.slane %v121, 3
      %v200 = vmax.f32 %v196, %v179
      %v201 = vmax.f32 %v197, %v198
      %v202 = vrot.slane %v121, 4
      %v204 = vmax.f32 %v200, %v183
      %v205 = vmax.f32 %v201, %v202
      %v206 = vmax.f32 %v204, %v121
      %v207 = vmax.f32 %v205, %v122
      %v209 = vrot.slane %v122, 1
      %v211 = vmax.f32 %v206, %v190
      %v212 = vmax.f32 %v207, %v209
      %v213 = vrot.slane %v122, 2
      %v215 = vmax.f32 %v211, %v194
      %v216 = vmax.f32 %v212, %v213
      %v217 = vrot.slane %v122, 3
      %v219 = vmax.f32 %v215, %v198
      %v220 = vmax.f32 %v216, %v217
      %v221 = vrot.slane %v122, 4
      %v223 = vmax.f32 %v219, %v202
      %v224 = vmax.f32 %v220, %v221
      %vm225 = vcmask 254976
      %226 = vst.msk [vmem:[%s116] sm:$0x3] %vm225, %v223
      %227 = vst.msk [vmem:[%s116 + $0x2] sm:$0x3] %vm225, %v224
      %p228 = scmp.lt.s32.totalorder %s12, 1
      %s229 = scalar_select %p228, %s12, 1
      %s230 = smul.addr %s229, 2
      %s231 = smul.addr %s230, 2
      %s232 = scalar_lea.vmem %s1, %s231
      // Predicated region
      $region25: #{_lambda_.56} parent=23 // pred_check
        %p233 = pneg %p56
      $region26: #{_lambda_.56} parent=23 // pred_check_branch
        %235 = sbr.rel (%p233) target = $region28
      $region27: #{_lambda_.56} parent=23 // pred_region
        _
      $region28: #{_lambda_.56} parent=23 // pred_fallthru
        _
    $region24: #{_lambda_.56} parent=5 // pred_fallthru
      _
    %p236 = scmp.le.s32.totalorder 2, %s7
    // Predicated region
    $region29: #{_lambda_.56} parent=5 // pred_check
      %p237 = pneg %p236
    $region30: #{_lambda_.56} parent=5 // pred_check_branch
      %239 = sbr.rel (%p237) target = $region32
    $region31: #{_lambda_.56} parent=5 // pred_region
      %s240 = ssub.s32 %s7, 2
      // Predicated region
      $region33: #{_lambda_.56} parent=31 // pred_check
        %p241 = pneg %p62
      $region34: #{_lambda_.56} parent=31 // pred_check_branch
        %243 = sbr.rel (%p241) target = $region36
      $region35: #{_lambda_.56} parent=31 // pred_region
        %p244 = scmp.lt.s32.totalorder %s13, 1
        %s245 = scalar_select %p244, %s13, 1
        %s246 = smul.addr %s245, 2
        %s247 = smul.addr %s246, 2
        %s248 = scalar_lea.vmem %s1, %s247
      $region36: #{_lambda_.56} parent=31 // pred_fallthru
        _
    $region32: #{_lambda_.56} parent=5 // pred_fallthru
      _
  $region6: #{_lambda_.56} parent=0 // loop_footer
    %s11 = sadd.s32 1, %s7
  $region7: #{_lambda_.56} parent=0 // loop_footer_branch
    %6 = sbr.rel target = $region3
  $region8: #{_lambda_.56} parent=0 // loop_exit
    _

</llo_original>
